<compile_context>
chip_gen: v7x
topology: tpu7x:2x2x1
jax: 0.10.0
libtpu: 0.0.40
codegen_flags: <defaults>
</compile_context>

<pallas_src>
import functools

import jax
import jax.numpy as jnp
from jax.experimental import pallas as pl
from jax.experimental.pallas import tpu as pltpu


# ----------------------------- Pallas kernels ----------------------------- #

def conv_pool_kernel(p_ref, w_ref, b_ref, o_ref):
    # p_ref: (4, MB, K)  bf16 pooled-window im2col patches (rows ordered (n, p)
    #                    inside each pool-offset slab; MB is a multiple of 16)
    # w_ref: (K, Cout)   bf16 conv weight flattened as (kh, kw, cin) -> K
    # b_ref: (1, Cout)   f32
    # o_ref: (MB, Cout)  bf16 = maxpool2x2(relu(conv(x)+b)), spatial flattened
    q4, mb, k = p_ref.shape
    x = p_ref[...].reshape(q4 * mb, k)                 # tile-aligned merge
    acc = jnp.dot(x, w_ref[...], preferred_element_type=jnp.float32)
    acc = acc.reshape(q4, mb, acc.shape[-1])
    pooled = jnp.max(acc, axis=0)                      # max over 2x2 pool window
    o_ref[...] = jnp.maximum(pooled + b_ref[...], 0.0).astype(o_ref.dtype)


def conv3_head_kernel(p_ref, w3_ref, b3_ref, w1_ref, b1_ref, w2_ref, b2_ref,
                      o_ref, *, n, p3):
    # p_ref: (4*p3*n, K3) bf16 patches, rows ordered (pool_offset, pool_pos, sample)
    # w3: (K3, 128) bf16 ; b3: (1, 128) f32
    # w1: (p3*128, 512) bf16 (rows permuted to (pool_pos, channel) order)
    # b1: (1, 512) f32 ; w2: (512, 2) bf16 ; b2: (1, 2) f32 ; o: (n, 2) f32
    cout = w3_ref.shape[-1]
    acc = jnp.dot(p_ref[...], w3_ref[...],
                  preferred_element_type=jnp.float32)          # (4*p3*n, 128)
    acc = acc.reshape(4, p3 * n, cout)
    y = jnp.maximum(jnp.max(acc, axis=0) + b3_ref[...], 0.0)   # (p3*n, 128)
    # features in (pool_pos, channel) order -> matches the permuted w1 rows
    feat = jnp.concatenate([y[i * n:(i + 1) * n, :] for i in range(p3)],
                           axis=1)                             # (n, p3*128)
    h = jnp.dot(feat.astype(w1_ref.dtype), w1_ref[...],
                preferred_element_type=jnp.float32) + b1_ref[...]
    h = jnp.maximum(h, 0.0)
    logits = jnp.dot(h.astype(w2_ref.dtype), w2_ref[...],
                     preferred_element_type=jnp.float32) + b2_ref[...]
    m = jnp.max(logits, axis=1, keepdims=True)
    e = jnp.exp(logits - m)
    o_ref[...] = (e / jnp.sum(e, axis=1, keepdims=True)).astype(o_ref.dtype)


# ------------------------------- JAX glue --------------------------------- #

def _round_up(x, m):
    return (x + m - 1) // m * m


def _batch_chunk(n, cap=8):
    """Largest divisor of n that is <= cap (grid chunking over the batch)."""
    if n <= cap:
        return n
    for nb in range(cap, 0, -1):
        if n % nb == 0:
            return nb
    return 1


def _pooled_patches_raw(x, KH, KW):
    """x: (N, H, W, Cin) -> (4, N, P, K); one patch set per 2x2-pool offset."""
    N, H, W, Cin = x.shape
    Ho, Wo = H - KH + 1, W - KW + 1
    Hp, Wp = Ho // 2, Wo // 2            # floor, matches F.max_pool2d default
    K = KH * KW * Cin
    P = Hp * Wp
    qs = []
    for di in range(2):
        for dj in range(2):
            taps = []
            for kh in range(KH):
                for kw in range(KW):
                    taps.append(
                        x[:, di + kh: di + kh + 2 * Hp: 2,
                             dj + kw: dj + kw + 2 * Wp: 2, :]
                    )                                   # (N, Hp, Wp, Cin)
            t = jnp.stack(taps, axis=3)                 # (N, Hp, Wp, KH*KW, Cin)
            qs.append(t.reshape(N, P, K))               # (kh, kw, cin) order
    return jnp.stack(qs, axis=0), Hp, Wp                # (4, N, P, K)


def conv_relu_pool(x, w, b):
    """x: (N,H,W,Cin); w: (KH*KW*Cin, Cout); b: (Cout,) -> (N,Hp,Wp,Cout) bf16."""
    KH = KW = 5
    N = x.shape[0]
    K, Cout = w.shape
    raw, Hp, Wp = _pooled_patches_raw(x, KH, KW)        # (4, N, P, K)
    P = Hp * Wp
    P_pad = _round_up(P, 16)                            # sublane-tile aligned (bf16)
    patches = jnp.pad(raw, ((0, 0), (0, 0), (0, P_pad - P), (0, 0)))
    patches = patches.reshape(4, N * P_pad, K).astype(jnp.bfloat16)

    NB = _batch_chunk(N, 8)
    MB = NB * P_pad
    grid = (N // NB,)

    out = pl.pallas_call(
        conv_pool_kernel,
        out_shape=jax.ShapeDtypeStruct((N * P_pad, Cout), jnp.bfloat16),
        grid=grid,
        in_specs=[
            pl.BlockSpec((4, MB, K), lambda c: (0, c, 0)),
            pl.BlockSpec((K, Cout), lambda c: (0, 0)),
            pl.BlockSpec((1, Cout), lambda c: (0, 0)),
        ],
        out_specs=pl.BlockSpec((MB, Cout), lambda c: (c, 0)),
        compiler_params=pltpu.CompilerParams(
            dimension_semantics=("parallel",),
            vmem_limit_bytes=32 * 1024 * 1024,
        ),
    )(patches, w.astype(jnp.bfloat16), b.reshape(1, Cout).astype(jnp.float32))

    out = out.reshape(N, P_pad, Cout)[:, :P, :].reshape(N, Hp, Wp, Cout)
    return out


def conv3_and_head(x, w3, b3, w1_hwc, b1, w2, b2):
    """Fused conv3+ReLU+pool + flatten + fc1+ReLU + fc2 + softmax."""
    N = x.shape[0]
    K3, C3 = w3.shape
    Hdim = w1_hwc.shape[1]
    C = w2.shape[1]
    raw, Hp, Wp = _pooled_patches_raw(x, 5, 5)          # (4, N, P3, K3)
    P3 = Hp * Wp                                        # = 4
    # rows ordered (pool_offset, pool_pos, sample)
    patches = jnp.transpose(raw, (0, 2, 1, 3)).reshape(4 * P3 * N, K3)
    patches = patches.astype(jnp.bfloat16)

    kern = functools.partial(conv3_head_kernel, n=N, p3=P3)
    return pl.pallas_call(
        kern,
        out_shape=jax.ShapeDtypeStruct((N, C), jnp.float32),
        grid=(1,),
        in_specs=[
            pl.BlockSpec((4 * P3 * N, K3), lambda i: (0, 0)),
            pl.BlockSpec((K3, C3), lambda i: (0, 0)),
            pl.BlockSpec((1, C3), lambda i: (0, 0)),
            pl.BlockSpec((P3 * C3, Hdim), lambda i: (0, 0)),
            pl.BlockSpec((1, Hdim), lambda i: (0, 0)),
            pl.BlockSpec((Hdim, C), lambda i: (0, 0)),
            pl.BlockSpec((1, C), lambda i: (0, 0)),
        ],
        out_specs=pl.BlockSpec((N, C), lambda i: (0, 0)),
        compiler_params=pltpu.CompilerParams(
            dimension_semantics=("arbitrary",),
            vmem_limit_bytes=32 * 1024 * 1024,
        ),
    )(patches,
      w3.astype(jnp.bfloat16), b3.reshape(1, C3).astype(jnp.float32),
      w1_hwc.astype(jnp.bfloat16), b1.reshape(1, Hdim).astype(jnp.float32),
      w2.astype(jnp.bfloat16), b2.reshape(1, C).astype(jnp.float32))


# --------------------------- params & forward ------------------------------ #

def init_params(key):
    ks = jax.random.split(key, 10)

    def u(k, shape, fan_in):  # PyTorch-style uniform(-1/sqrt(fan_in), 1/sqrt(fan_in))
        bound = 1.0 / (fan_in ** 0.5)
        return jax.random.uniform(k, shape, jnp.float32, -bound, bound)

    p = {}
    # conv weights as (KH, KW, Cin, Cout) flattened to (KH*KW*Cin, Cout)
    p["w1c"] = u(ks[0], (5, 5, 1, 32), 25).reshape(25, 32)
    p["b1c"] = u(ks[1], (32,), 25)
    p["w2c"] = u(ks[2], (5, 5, 32, 64), 800).reshape(800, 64)
    p["b2c"] = u(ks[3], (64,), 800)
    p["w3c"] = u(ks[4], (5, 5, 64, 128), 1600).reshape(1600, 128)
    p["b3c"] = u(ks[5], (128,), 1600)
    # fc1 stored in torch convention: input index ordered as (C, H, W) flatten
    p["wfc1"] = u(ks[6], (512, 512), 512)   # (in, out)
    p["bfc1"] = u(ks[7], (512,), 512)
    p["wfc2"] = u(ks[8], (512, 2), 512)
    p["bfc2"] = u(ks[9], (2,), 512)
    return p


@jax.jit
def net_forward(params, x_nchw):
    # x_nchw: (N, 1, 50, 50) float32, same convention as the PyTorch module.
    x = jnp.transpose(x_nchw, (0, 2, 3, 1))                 # NCHW -> NHWC
    x = conv_relu_pool(x, params["w1c"], params["b1c"])     # (N, 23, 23, 32)
    x = conv_relu_pool(x, params["w2c"], params["b2c"])     # (N, 9, 9, 64)
    # permute fc1 weight rows from torch (C,H,W)-flatten order to the
    # (pool_pos, channel) order produced inside the fused conv3+head kernel.
    c3 = params["w3c"].shape[1]
    fin = params["wfc1"].shape[0]
    p3 = fin // c3
    w1_hwc = jnp.transpose(params["wfc1"].reshape(c3, p3, -1),
                           (1, 0, 2)).reshape(fin, -1)
    return conv3_and_head(x, params["w3c"], params["b3c"],
                          w1_hwc, params["bfc1"],
                          params["wfc2"], params["bfc2"])   # (N, 2) softmax probs


if __name__ == "__main__":
    key = jax.random.PRNGKey(0)
    kp, kx = jax.random.split(key)
    params = init_params(kp)
    # spatial size must be 50x50 (fc1 input dim 512 = 128*2*2 implies it)
    x = jax.random.normal(kx, (2, 1, 50, 50), jnp.float32)
    out = net_forward(params, x)
    jax.block_until_ready(out)
    assert out.shape == (2, 2)
    assert bool(jnp.all(jnp.isfinite(out)))
    assert bool(jnp.all(jnp.abs(jnp.sum(out, axis=1) - 1.0) < 1e-3))
    print("KERNEL_OK")
</pallas_src>

<mosaic_0001>
module attributes {stable_mosaic.version = 11 : i64} {
  func.func @conv_pool_kernel(%arg0: i32, %arg1: memref<4x1088x25xbf16, #tpu.memory_space<vmem>>, %arg2: memref<25x32xbf16, #tpu.memory_space<vmem>>, %arg3: memref<1x32xf32, #tpu.memory_space<vmem>>, %arg4: memref<1088x32xbf16, #tpu.memory_space<vmem>>) attributes {dimension_semantics = [#tpu.dimension_semantics<parallel>], iteration_bounds = array<i64: 1>, scalar_prefetch = 0 : i64, scratch_operands = 0 : i64, tpu.core_type = #tpu.core_type<tc>, window_params = [{transform_indices = @transform_0, window_bounds = array<i64: 4, 1088, 25>}, {pipeline_mode = #tpu.pipeline_mode<synchronous>, transform_indices = @transform_1, window_bounds = array<i64: 25, 32>}, {pipeline_mode = #tpu.pipeline_mode<synchronous>, transform_indices = @transform_2, window_bounds = array<i64: 1, 32>}, {transform_indices = @transform_3, window_bounds = array<i64: 1088, 32>}]} {
    %c0 = arith.constant 0 : index
    %c0_0 = arith.constant 0 : index
    %c0_1 = arith.constant 0 : index
    %0 = vector.load %arg1[%c0, %c0_0, %c0_1] : memref<4x1088x25xbf16, #tpu.memory_space<vmem>>, vector<4x1088x25xbf16>
    %1 = vector.shape_cast %0 : vector<4x1088x25xbf16> to vector<4352x25xbf16>
    %c0_2 = arith.constant 0 : index
    %c0_3 = arith.constant 0 : index
    %2 = vector.load %arg2[%c0_2, %c0_3] : memref<25x32xbf16, #tpu.memory_space<vmem>>, vector<25x32xbf16>
    %cst = arith.constant dense<0.000000e+00> : vector<4352x32xf32>
    %3 = tpu.matmul %1, %2, %cst {dimension_numbers = #tpu.dot_dimension_numbers<[1], [0], [0], [1], [0, 0, 1, 1], [], []>} : vector<4352x25xbf16>, vector<25x32xbf16>, vector<4352x32xf32> -> vector<4352x32xf32>
    %4 = vector.shape_cast %3 : vector<4352x32xf32> to vector<4x1088x32xf32>
    %cst_4 = arith.constant dense<0xFF800000> : vector<1088x32xf32>
    %5 = vector.multi_reduction <maximumf>, %4, %cst_4 [0] : vector<4x1088x32xf32> to vector<1088x32xf32>
    %c0_5 = arith.constant 0 : index
    %c0_6 = arith.constant 0 : index
    %6 = vector.load %arg3[%c0_5, %c0_6] : memref<1x32xf32, #tpu.memory_space<vmem>>, vector<1x32xf32>
    %7 = vector.broadcast %6 : vector<1x32xf32> to vector<1088x32xf32>
    %8 = arith.addf %5, %7 : vector<1088x32xf32>
    %cst_7 = arith.constant 0.000000e+00 : f32
    %9 = vector.broadcast %cst_7 : f32 to vector<1088x32xf32>
    %10 = arith.maximumf %8, %9 : vector<1088x32xf32>
    %11 = arith.truncf %10 : vector<1088x32xf32> to vector<1088x32xbf16>
    %c0_8 = arith.constant 0 : index
    %c0_9 = arith.constant 0 : index
    %12 = vector.load %arg4[%c0_8, %c0_9] : memref<1088x32xbf16, #tpu.memory_space<vmem>>, vector<1088x32xbf16>
    tpu.vector_store %arg4[%c0_8, %c0_9], %11 {strides = array<i32>} : memref<1088x32xbf16, #tpu.memory_space<vmem>>, vector<1088x32xbf16>,
    return
  }
  func.func @transform_0(%arg0: i32) -> (i32, i32, i32) {
    %c0_i32 = arith.constant 0 : i32
    %c0_i32_0 = arith.constant 0 : i32
    %c0_i32_1 = arith.constant 0 : i32
    return %c0_i32, %arg0, %c0_i32_0 : i32, i32, i32
  }
  func.func @transform_1(%arg0: i32) -> (i32, i32) {
    %c0_i32 = arith.constant 0 : i32
    %c0_i32_0 = arith.constant 0 : i32
    %c0_i32_1 = arith.constant 0 : i32
    return %c0_i32, %c0_i32_0 : i32, i32
  }
  func.func @transform_2(%arg0: i32) -> (i32, i32) {
    %c0_i32 = arith.constant 0 : i32
    %c0_i32_0 = arith.constant 0 : i32
    %c0_i32_1 = arith.constant 0 : i32
    return %c0_i32, %c0_i32_0 : i32, i32
  }
  func.func @transform_3(%arg0: i32) -> (i32, i32) {
    %c0_i32 = arith.constant 0 : i32
    %c0_i32_0 = arith.constant 0 : i32
    return %arg0, %c0_i32 : i32, i32
  }
}

module attributes {stable_mosaic.version = 11 : i64} {
  func.func @conv_pool_kernel(%arg0: i32, %arg1: memref<4x192x800xbf16, #tpu.memory_space<vmem>>, %arg2: memref<800x64xbf16, #tpu.memory_space<vmem>>, %arg3: memref<1x64xf32, #tpu.memory_space<vmem>>, %arg4: memref<192x64xbf16, #tpu.memory_space<vmem>>) attributes {dimension_semantics = [#tpu.dimension_semantics<parallel>], iteration_bounds = array<i64: 1>, scalar_prefetch = 0 : i64, scratch_operands = 0 : i64, tpu.core_type = #tpu.core_type<tc>, window_params = [{transform_indices = @transform_0, window_bounds = array<i64: 4, 192, 800>}, {pipeline_mode = #tpu.pipeline_mode<synchronous>, transform_indices = @transform_1, window_bounds = array<i64: 800, 64>}, {pipeline_mode = #tpu.pipeline_mode<synchronous>, transform_indices = @transform_2, window_bounds = array<i64: 1, 64>}, {transform_indices = @transform_3, window_bounds = array<i64: 192, 64>}]} {
    %c0 = arith.constant 0 : index
    %c0_0 = arith.constant 0 : index
    %c0_1 = arith.constant 0 : index
    %0 = vector.load %arg1[%c0, %c0_0, %c0_1] : memref<4x192x800xbf16, #tpu.memory_space<vmem>>, vector<4x192x800xbf16>
    %1 = vector.shape_cast %0 : vector<4x192x800xbf16> to vector<768x800xbf16>
    %c0_2 = arith.constant 0 : index
    %c0_3 = arith.constant 0 : index
    %2 = vector.load %arg2[%c0_2, %c0_3] : memref<800x64xbf16, #tpu.memory_space<vmem>>, vector<800x64xbf16>
    %cst = arith.constant dense<0.000000e+00> : vector<768x64xf32>
    %3 = tpu.matmul %1, %2, %cst {dimension_numbers = #tpu.dot_dimension_numbers<[1], [0], [0], [1], [0, 0, 1, 1], [], []>} : vector<768x800xbf16>, vector<800x64xbf16>, vector<768x64xf32> -> vector<768x64xf32>
    %4 = vector.shape_cast %3 : vector<768x64xf32> to vector<4x192x64xf32>
    %cst_4 = arith.constant dense<0xFF800000> : vector<192x64xf32>
    %5 = vector.multi_reduction <maximumf>, %4, %cst_4 [0] : vector<4x192x64xf32> to vector<192x64xf32>
    %c0_5 = arith.constant 0 : index
    %c0_6 = arith.constant 0 : index
    %6 = vector.load %arg3[%c0_5, %c0_6] : memref<1x64xf32, #tpu.memory_space<vmem>>, vector<1x64xf32>
    %7 = vector.broadcast %6 : vector<1x64xf32> to vector<192x64xf32>
    %8 = arith.addf %5, %7 : vector<192x64xf32>
    %cst_7 = arith.constant 0.000000e+00 : f32
    %9 = vector.broadcast %cst_7 : f32 to vector<192x64xf32>
    %10 = arith.maximumf %8, %9 : vector<192x64xf32>
    %11 = arith.truncf %10 : vector<192x64xf32> to vector<192x64xbf16>
    %c0_8 = arith.constant 0 : index
    %c0_9 = arith.constant 0 : index
    %12 = vector.load %arg4[%c0_8, %c0_9] : memref<192x64xbf16, #tpu.memory_space<vmem>>, vector<192x64xbf16>
    tpu.vector_store %arg4[%c0_8, %c0_9], %11 {strides = array<i32>} : memref<192x64xbf16, #tpu.memory_space<vmem>>, vector<192x64xbf16>,
    return
  }
  func.func @transform_0(%arg0: i32) -> (i32, i32, i32) {
    %c0_i32 = arith.constant 0 : i32
    %c0_i32_0 = arith.constant 0 : i32
    %c0_i32_1 = arith.constant 0 : i32
    return %c0_i32, %arg0, %c0_i32_0 : i32, i32, i32
  }
  func.func @transform_1(%arg0: i32) -> (i32, i32) {
    %c0_i32 = arith.constant 0 : i32
    %c0_i32_0 = arith.constant 0 : i32
    %c0_i32_1 = arith.constant 0 : i32
    return %c0_i32, %c0_i32_0 : i32, i32
  }
  func.func @transform_2(%arg0: i32) -> (i32, i32) {
    %c0_i32 = arith.constant 0 : i32
    %c0_i32_0 = arith.constant 0 : i32
    %c0_i32_1 = arith.constant 0 : i32
    return %c0_i32, %c0_i32_0 : i32, i32
  }
  func.func @transform_3(%arg0: i32) -> (i32, i32) {
    %c0_i32 = arith.constant 0 : i32
    %c0_i32_0 = arith.constant 0 : i32
    return %arg0, %c0_i32 : i32, i32
  }
}

module attributes {stable_mosaic.version = 11 : i64} {
  func.func @conv3_head_kernel(%arg0: i32, %arg1: memref<32x1600xbf16, #tpu.memory_space<vmem>>, %arg2: memref<1600x128xbf16, #tpu.memory_space<vmem>>, %arg3: memref<1x128xf32, #tpu.memory_space<vmem>>, %arg4: memref<512x512xbf16, #tpu.memory_space<vmem>>, %arg5: memref<1x512xf32, #tpu.memory_space<vmem>>, %arg6: memref<512x2xbf16, #tpu.memory_space<vmem>>, %arg7: memref<1x2xf32, #tpu.memory_space<vmem>>, %arg8: memref<2x2xf32, #tpu.memory_space<vmem>>) attributes {dimension_semantics = [#tpu.dimension_semantics<arbitrary>], iteration_bounds = array<i64: 1>, scalar_prefetch = 0 : i64, scratch_operands = 0 : i64, tpu.core_type = #tpu.core_type<tc>, window_params = [{pipeline_mode = #tpu.pipeline_mode<synchronous>, transform_indices = @transform_0, window_bounds = array<i64: 32, 1600>}, {pipeline_mode = #tpu.pipeline_mode<synchronous>, transform_indices = @transform_1, window_bounds = array<i64: 1600, 128>}, {pipeline_mode = #tpu.pipeline_mode<synchronous>, transform_indices = @transform_2, window_bounds = array<i64: 1, 128>}, {pipeline_mode = #tpu.pipeline_mode<synchronous>, transform_indices = @transform_3, window_bounds = array<i64: 512, 512>}, {pipeline_mode = #tpu.pipeline_mode<synchronous>, transform_indices = @transform_4, window_bounds = array<i64: 1, 512>}, {pipeline_mode = #tpu.pipeline_mode<synchronous>, transform_indices = @transform_5, window_bounds = array<i64: 512, 2>}, {pipeline_mode = #tpu.pipeline_mode<synchronous>, transform_indices = @transform_6, window_bounds = array<i64: 1, 2>}, {pipeline_mode = #tpu.pipeline_mode<synchronous>, transform_indices = @transform_7, window_bounds = array<i64: 2, 2>}]} {
    %c0 = arith.constant 0 : index
    %c0_0 = arith.constant 0 : index
    %0 = vector.load %arg1[%c0, %c0_0] : memref<32x1600xbf16, #tpu.memory_space<vmem>>, vector<32x1600xbf16>
    %c0_1 = arith.constant 0 : index
    %c0_2 = arith.constant 0 : index
    %1 = vector.load %arg2[%c0_1, %c0_2] : memref<1600x128xbf16, #tpu.memory_space<vmem>>, vector<1600x128xbf16>
    %cst = arith.constant dense<0.000000e+00> : vector<32x128xf32>
    %2 = tpu.matmul %0, %1, %cst {dimension_numbers = #tpu.dot_dimension_numbers<[1], [0], [0], [1], [0, 0, 1, 1], [], []>} : vector<32x1600xbf16>, vector<1600x128xbf16>, vector<32x128xf32> -> vector<32x128xf32>
    %3 = vector.shape_cast %2 : vector<32x128xf32> to vector<4x8x128xf32>
    %cst_3 = arith.constant dense<0xFF800000> : vector<8x128xf32>
    %4 = vector.multi_reduction <maximumf>, %3, %cst_3 [0] : vector<4x8x128xf32> to vector<8x128xf32>
    %c0_4 = arith.constant 0 : index
    %c0_5 = arith.constant 0 : index
    %5 = vector.load %arg3[%c0_4, %c0_5] : memref<1x128xf32, #tpu.memory_space<vmem>>, vector<1x128xf32>
    %6 = vector.broadcast %5 : vector<1x128xf32> to vector<8x128xf32>
    %7 = arith.addf %4, %6 : vector<8x128xf32>
    %cst_6 = arith.constant 0.000000e+00 : f32
    %8 = vector.broadcast %cst_6 : f32 to vector<8x128xf32>
    %9 = arith.maximumf %7, %8 : vector<8x128xf32>
    %10 = vector.extract_strided_slice %9 {offsets = [0, 0], sizes = [2, 128], strides = [1, 1]} : vector<8x128xf32> to vector<2x128xf32>
    %11 = vector.extract_strided_slice %9 {offsets = [2, 0], sizes = [2, 128], strides = [1, 1]} : vector<8x128xf32> to vector<2x128xf32>
    %12 = vector.extract_strided_slice %9 {offsets = [4, 0], sizes = [2, 128], strides = [1, 1]} : vector<8x128xf32> to vector<2x128xf32>
    %13 = vector.extract_strided_slice %9 {offsets = [6, 0], sizes = [2, 128], strides = [1, 1]} : vector<8x128xf32> to vector<2x128xf32>
    %14 = tpu.concatenate %10, %11, %12, %13 in 1 : vector<2x128xf32>, vector<2x128xf32>, vector<2x128xf32>, vector<2x128xf32> -> vector<2x512xf32>
    %15 = arith.truncf %14 : vector<2x512xf32> to vector<2x512xbf16>
    %c0_7 = arith.constant 0 : index
    %c0_8 = arith.constant 0 : index
    %16 = vector.load %arg4[%c0_7, %c0_8] : memref<512x512xbf16, #tpu.memory_space<vmem>>, vector<512x512xbf16>
    %cst_9 = arith.constant dense<0.000000e+00> : vector<2x512xf32>
    %17 = tpu.matmul %15, %16, %cst_9 {dimension_numbers = #tpu.dot_dimension_numbers<[1], [0], [0], [1], [0, 0, 1, 1], [], []>} : vector<2x512xbf16>, vector<512x512xbf16>, vector<2x512xf32> -> vector<2x512xf32>
    %c0_10 = arith.constant 0 : index
    %c0_11 = arith.constant 0 : index
    %18 = vector.load %arg5[%c0_10, %c0_11] : memref<1x512xf32, #tpu.memory_space<vmem>>, vector<1x512xf32>
    %19 = vector.broadcast %18 : vector<1x512xf32> to vector<2x512xf32>
    %20 = arith.addf %17, %19 : vector<2x512xf32>
    %cst_12 = arith.constant 0.000000e+00 : f32
    %21 = vector.broadcast %cst_12 : f32 to vector<2x512xf32>
    %22 = arith.maximumf %20, %21 : vector<2x512xf32>
    %23 = arith.truncf %22 : vector<2x512xf32> to vector<2x512xbf16>
    %c0_13 = arith.constant 0 : index
    %c0_14 = arith.constant 0 : index
    %24 = vector.load %arg6[%c0_13, %c0_14] : memref<512x2xbf16, #tpu.memory_space<vmem>>, vector<512x2xbf16>
    %cst_15 = arith.constant dense<0.000000e+00> : vector<2x2xf32>
    %25 = tpu.matmul %23, %24, %cst_15 {dimension_numbers = #tpu.dot_dimension_numbers<[1], [0], [0], [1], [0, 0, 1, 1], [], []>} : vector<2x512xbf16>, vector<512x2xbf16>, vector<2x2xf32> -> vector<2x2xf32>
    %c0_16 = arith.constant 0 : index
    %c0_17 = arith.constant 0 : index
    %26 = vector.load %arg7[%c0_16, %c0_17] : memref<1x2xf32, #tpu.memory_space<vmem>>, vector<1x2xf32>
    %27 = vector.broadcast %26 : vector<1x2xf32> to vector<2x2xf32>
    %28 = arith.addf %25, %27 : vector<2x2xf32>
    %cst_18 = arith.constant dense<0xFF800000> : vector<2xf32>
    %29 = vector.multi_reduction <maximumf>, %28, %cst_18 [1] : vector<2x2xf32> to vector<2xf32>
    %30 = vector.shape_cast %29 : vector<2xf32> to vector<2x1xf32>
    %31 = vector.broadcast %30 : vector<2x1xf32> to vector<2x2xf32>
    %32 = arith.subf %28, %31 : vector<2x2xf32>
    %33 = math.exp %32 : vector<2x2xf32>
    %cst_19 = arith.constant dense<0.000000e+00> : vector<2xf32>
    %34 = vector.multi_reduction <add>, %33, %cst_19 [1] : vector<2x2xf32> to vector<2xf32>
    %35 = vector.shape_cast %34 : vector<2xf32> to vector<2x1xf32>
    %36 = vector.broadcast %35 : vector<2x1xf32> to vector<2x2xf32>
    %37 = arith.divf %33, %36 : vector<2x2xf32>
    %c0_20 = arith.constant 0 : index
    %c0_21 = arith.constant 0 : index
    %38 = vector.load %arg8[%c0_20, %c0_21] : memref<2x2xf32, #tpu.memory_space<vmem>>, vector<2x2xf32>
    tpu.vector_store %arg8[%c0_20, %c0_21], %37 {strides = array<i32>} : memref<2x2xf32, #tpu.memory_space<vmem>>, vector<2x2xf32>,
    return
  }
  func.func @transform_0(%arg0: i32) -> (i32, i32) {
    %c0_i32 = arith.constant 0 : i32
    %c0_i32_0 = arith.constant 0 : i32
    %c0_i32_1 = arith.constant 0 : i32
    return %c0_i32, %c0_i32_0 : i32, i32
  }
  func.func @transform_1(%arg0: i32) -> (i32, i32) {
    %c0_i32 = arith.constant 0 : i32
    %c0_i32_0 = arith.constant 0 : i32
    %c0_i32_1 = arith.constant 0 : i32
    return %c0_i32, %c0_i32_0 : i32, i32
  }
  func.func @transform_2(%arg0: i32) -> (i32, i32) {
    %c0_i32 = arith.constant 0 : i32
    %c0_i32_0 = arith.constant 0 : i32
    %c0_i32_1 = arith.constant 0 : i32
    return %c0_i32, %c0_i32_0 : i32, i32
  }
  func.func @transform_3(%arg0: i32) -> (i32, i32) {
    %c0_i32 = arith.constant 0 : i32
    %c0_i32_0 = arith.constant 0 : i32
    %c0_i32_1 = arith.constant 0 : i32
    return %c0_i32, %c0_i32_0 : i32, i32
  }
  func.func @transform_4(%arg0: i32) -> (i32, i32) {
    %c0_i32 = arith.constant 0 : i32
    %c0_i32_0 = arith.constant 0 : i32
    %c0_i32_1 = arith.constant 0 : i32
    return %c0_i32, %c0_i32_0 : i32, i32
  }
  func.func @transform_5(%arg0: i32) -> (i32, i32) {
    %c0_i32 = arith.constant 0 : i32
    %c0_i32_0 = arith.constant 0 : i32
    %c0_i32_1 = arith.constant 0 : i32
    return %c0_i32, %c0_i32_0 : i32, i32
  }
  func.func @transform_6(%arg0: i32) -> (i32, i32) {
    %c0_i32 = arith.constant 0 : i32
    %c0_i32_0 = arith.constant 0 : i32
    %c0_i32_1 = arith.constant 0 : i32
    return %c0_i32, %c0_i32_0 : i32, i32
  }
  func.func @transform_7(%arg0: i32) -> (i32, i32) {
    %c0_i32 = arith.constant 0 : i32
    %c0_i32_0 = arith.constant 0 : i32
    %c0_i32_1 = arith.constant 0 : i32
    return %c0_i32, %c0_i32_0 : i32, i32
  }
}

</mosaic_0001>

<llo_original>
// kernel: net_forward.3
$region0: #{net_forward.3}
  #allocation0 [shape = 'u32[]', space=smem, size = 0x4, offset = 0x4, fixed_abs, tag = 'smem constant byte address 0x4 - core index']
  #allocation1 [shape = 'u32[144,128]{1,0:T(1,128)}', space=vmem, size = 0x12000, scoped, tag = 'internal scratch']
  %s0 = inlined_call_operand.vmem [shape: bf16[4,1088,25], index: 0, kind: input, shape index: {}]
  %s1 = inlined_call_operand.vmem [shape: bf16[25,32], index: 1, kind: input, shape index: {}]
  %s2 = inlined_call_operand.vmem [shape: f32[1,32], index: 2, kind: input, shape index: {}]
  %s3 = inlined_call_operand.vmem [shape: bf16[1088,32], index: 3, kind: output, shape index: {}]
  %s4 = sld [smem:[#allocation0]]
  $region22: #{net_forward.3} parent=0
    _
  %s6 = ssub.s32 1, %s4
  %s7 = scalar_select 0, %s6, %s4
  // Predicated region
  $region2: #{net_forward.3} parent=0 // pred_check
    _
  $region3: #{net_forward.3} parent=0 // pred_check_branch
    %9 = sbr.rel (0) target = $region5
  $region4: #{net_forward.3} parent=0 // pred_region
    _
  $region5: #{net_forward.3} parent=0 // pred_fallthru
    _
  // Predicated region
  $region6: #{net_forward.3} parent=0 // pred_check
    _
  $region7: #{net_forward.3} parent=0 // pred_check_branch
    %11 = sbr.rel (0) target = $region9
  $region8: #{net_forward.3} parent=0 // pred_region
    _
  $region9: #{net_forward.3} parent=0 // pred_fallthru
    _
  // Predicated region
  $region10: #{net_forward.3} parent=0 // pred_check
    _
  $region11: #{net_forward.3} parent=0 // pred_check_branch
    %13 = sbr.rel (0) target = $region13
  $region12: #{net_forward.3} parent=0 // pred_region
    _
  $region13: #{net_forward.3} parent=0 // pred_fallthru
    _
  %v15 = vld [vmem:[%s0] sm:$0xf]
  %v16 = vld [vmem:[%s0 + $0x4] sm:$0xf]
  %v17 = vld [vmem:[%s0 + $0x8] sm:$0xf]
  %v18 = vld [vmem:[%s0 + $0xc] sm:$0xf]
  %v19 = vld [vmem:[%s0 + $0x10] sm:$0xf]
  %v20 = vld [vmem:[%s0 + $0x14] sm:$0xf]
  %v21 = vld [vmem:[%s0 + $0x18] sm:$0xf]
  %v22 = vld [vmem:[%s0 + $0x1c] sm:$0xf]
  %v23 = vld [vmem:[%s0 + $0x20] sm:$0xf]
  %v24 = vld [vmem:[%s0 + $0x24] sm:$0xf]
  %v25 = vld [vmem:[%s0 + $0x28] sm:$0xf]
  %v26 = vld [vmem:[%s0 + $0x2c] sm:$0xf]
  %v27 = vld [vmem:[%s0 + $0x30] sm:$0xf]
  %v28 = vld [vmem:[%s0 + $0x34] sm:$0xf]
  %v29 = vld [vmem:[%s0 + $0x38] sm:$0xf]
  %v30 = vld [vmem:[%s0 + $0x3c] sm:$0xf]
  %v31 = vld [vmem:[%s0 + $0x40] sm:$0xf]
  %v32 = vld [vmem:[%s0 + $0x44] sm:$0xf]
  %v33 = vld [vmem:[%s0 + $0x48] sm:$0xf]
  %v34 = vld [vmem:[%s0 + $0x4c] sm:$0xf]
  %v35 = vld [vmem:[%s0 + $0x50] sm:$0xf]
  %v36 = vld [vmem:[%s0 + $0x54] sm:$0xf]
  %v37 = vld [vmem:[%s0 + $0x58] sm:$0xf]
  %v38 = vld [vmem:[%s0 + $0x5c] sm:$0xf]
  %v39 = vld [vmem:[%s0 + $0x60] sm:$0xf]
  %v40 = vld [vmem:[%s0 + $0x64] sm:$0xf]
  %v41 = vld [vmem:[%s0 + $0x68] sm:$0xf]
  %v42 = vld [vmem:[%s0 + $0x6c] sm:$0xf]
  %v43 = vld [vmem:[%s0 + $0x70] sm:$0xf]
  %v44 = vld [vmem:[%s0 + $0x74] sm:$0xf]
  %v45 = vld [vmem:[%s0 + $0x78] sm:$0xf]
  %v46 = vld [vmem:[%s0 + $0x7c] sm:$0xf]
  %v47 = vld [vmem:[%s0 + $0x80] sm:$0xf]
  %v48 = vld [vmem:[%s0 + $0x84] sm:$0xf]
  %v49 = vld [vmem:[%s0 + $0x88] sm:$0xf]
  %v50 = vld [vmem:[%s0 + $0x8c] sm:$0xf]
  %v51 = vld [vmem:[%s0 + $0x90] sm:$0xf]
  %v52 = vld [vmem:[%s0 + $0x94] sm:$0xf]
  %v53 = vld [vmem:[%s0 + $0x98] sm:$0xf]
  %v54 = vld [vmem:[%s0 + $0x9c] sm:$0xf]
  %v55 = vld [vmem:[%s0 + $0xa0] sm:$0xf]
  %v56 = vld [vmem:[%s0 + $0xa4] sm:$0xf]
  %v57 = vld [vmem:[%s0 + $0xa8] sm:$0xf]
  %v58 = vld [vmem:[%s0 + $0xac] sm:$0xf]
  %v59 = vld [vmem:[%s0 + $0xb0] sm:$0xf]
  %v60 = vld [vmem:[%s0 + $0xb4] sm:$0xf]
  %v61 = vld [vmem:[%s0 + $0xb8] sm:$0xf]
  %v62 = vld [vmem:[%s0 + $0xbc] sm:$0xf]
  %v63 = vld [vmem:[%s0 + $0xc0] sm:$0xf]
  %v64 = vld [vmem:[%s0 + $0xc4] sm:$0xf]
  %v65 = vld [vmem:[%s0 + $0xc8] sm:$0xf]
  %v66 = vld [vmem:[%s0 + $0xcc] sm:$0xf]
  %v67 = vld [vmem:[%s0 + $0xd0] sm:$0xf]
  %v68 = vld [vmem:[%s0 + $0xd4] sm:$0xf]
  %v69 = vld [vmem:[%s0 + $0xd8] sm:$0xf]
  %v70 = vld [vmem:[%s0 + $0xdc] sm:$0xf]
  %v71 = vld [vmem:[%s0 + $0xe0] sm:$0xf]
  %v72 = vld [vmem:[%s0 + $0xe4] sm:$0xf]
  %v73 = vld [vmem:[%s0 + $0xe8] sm:$0xf]
  %v74 = vld [vmem:[%s0 + $0xec] sm:$0xf]
  %v75 = vld [vmem:[%s0 + $0xf0] sm:$0xf]
  %v76 = vld [vmem:[%s0 + $0xf4] sm:$0xf]
  %v77 = vld [vmem:[%s0 + $0xf8] sm:$0xf]
  %v78 = vld [vmem:[%s0 + $0xfc] sm:$0xf]
  %v79 = vld [vmem:[%s0 + $0x100] sm:$0xf]
  %v80 = vld [vmem:[%s0 + $0x104] sm:$0xf]
  %v81 = vld [vmem:[%s0 + $0x108] sm:$0xf]
  %v82 = vld [vmem:[%s0 + $0x10c] sm:$0xf]
  %v83 = vld [vmem:[%s0 + $0x110] sm:$0xf]
  %v84 = vld [vmem:[%s0 + $0x114] sm:$0xf]
  %v85 = vld [vmem:[%s0 + $0x118] sm:$0xf]
  %v86 = vld [vmem:[%s0 + $0x11c] sm:$0xf]
  %v87 = vld [vmem:[%s0 + $0x120] sm:$0xf]
  %v88 = vld [vmem:[%s0 + $0x124] sm:$0xf]
  %v89 = vld [vmem:[%s0 + $0x128] sm:$0xf]
  %v90 = vld [vmem:[%s0 + $0x12c] sm:$0xf]
  %v91 = vld [vmem:[%s0 + $0x130] sm:$0xf]
  %v92 = vld [vmem:[%s0 + $0x134] sm:$0xf]
  %v93 = vld [vmem:[%s0 + $0x138] sm:$0xf]
  %v94 = vld [vmem:[%s0 + $0x13c] sm:$0xf]
  %v95 = vld [vmem:[%s0 + $0x140] sm:$0xf]
  %v96 = vld [vmem:[%s0 + $0x144] sm:$0xf]
  %v97 = vld [vmem:[%s0 + $0x148] sm:$0xf]
  %v98 = vld [vmem:[%s0 + $0x14c] sm:$0xf]
  %v99 = vld [vmem:[%s0 + $0x150] sm:$0xf]
  %v100 = vld [vmem:[%s0 + $0x154] sm:$0xf]
  %v101 = vld [vmem:[%s0 + $0x158] sm:$0xf]
  %v102 = vld [vmem:[%s0 + $0x15c] sm:$0xf]
  %v103 = vld [vmem:[%s0 + $0x160] sm:$0xf]
  %v104 = vld [vmem:[%s0 + $0x164] sm:$0xf]
  %v105 = vld [vmem:[%s0 + $0x168] sm:$0xf]
  %v106 = vld [vmem:[%s0 + $0x16c] sm:$0xf]
  %v107 = vld [vmem:[%s0 + $0x170] sm:$0xf]
  %v108 = vld [vmem:[%s0 + $0x174] sm:$0xf]
  %v109 = vld [vmem:[%s0 + $0x178] sm:$0xf]
  %v110 = vld [vmem:[%s0 + $0x17c] sm:$0xf]
  %v111 = vld [vmem:[%s0 + $0x180] sm:$0xf]
  %v112 = vld [vmem:[%s0 + $0x184] sm:$0xf]
  %v113 = vld [vmem:[%s0 + $0x188] sm:$0xf]
  %v114 = vld [vmem:[%s0 + $0x18c] sm:$0xf]
  %v115 = vld [vmem:[%s0 + $0x190] sm:$0xf]
  %v116 = vld [vmem:[%s0 + $0x194] sm:$0xf]
  %v117 = vld [vmem:[%s0 + $0x198] sm:$0xf]
  %v118 = vld [vmem:[%s0 + $0x19c] sm:$0xf]
  %v119 = vld [vmem:[%s0 + $0x1a0] sm:$0xf]
  %v120 = vld [vmem:[%s0 + $0x1a4] sm:$0xf]
  %v121 = vld [vmem:[%s0 + $0x1a8] sm:$0xf]
  %v122 = vld [vmem:[%s0 + $0x1ac] sm:$0xf]
  %v123 = vld [vmem:[%s0 + $0x1b0] sm:$0xf]
  %v124 = vld [vmem:[%s0 + $0x1b4] sm:$0xf]
  %v125 = vld [vmem:[%s0 + $0x1b8] sm:$0xf]
  %v126 = vld [vmem:[%s0 + $0x1bc] sm:$0xf]
  %v127 = vld [vmem:[%s0 + $0x1c0] sm:$0xf]
  %v128 = vld [vmem:[%s0 + $0x1c4] sm:$0xf]
  %v129 = vld [vmem:[%s0 + $0x1c8] sm:$0xf]
  %v130 = vld [vmem:[%s0 + $0x1cc] sm:$0xf]
  %v131 = vld [vmem:[%s0 + $0x1d0] sm:$0xf]
  %v132 = vld [vmem:[%s0 + $0x1d4] sm:$0xf]
  %v133 = vld [vmem:[%s0 + $0x1d8] sm:$0xf]
  %v134 = vld [vmem:[%s0 + $0x1dc] sm:$0xf]
  %v135 = vld [vmem:[%s0 + $0x1e0] sm:$0xf]
  %v136 = vld [vmem:[%s0 + $0x1e4] sm:$0xf]
  %v137 = vld [vmem:[%s0 + $0x1e8] sm:$0xf]
  %v138 = vld [vmem:[%s0 + $0x1ec] sm:$0xf]
  %v139 = vld [vmem:[%s0 + $0x1f0] sm:$0xf]
  %v140 = vld [vmem:[%s0 + $0x1f4] sm:$0xf]
  %v141 = vld [vmem:[%s0 + $0x1f8] sm:$0xf]
  %v142 = vld [vmem:[%s0 + $0x1fc] sm:$0xf]
  %v143 = vld [vmem:[%s0 + $0x200] sm:$0xf]
  %v144 = vld [vmem:[%s0 + $0x204] sm:$0xf]
  %v145 = vld [vmem:[%s0 + $0x208] sm:$0xf]
  %v146 = vld [vmem:[%s0 + $0x20c] sm:$0xf]
  %v147 = vld [vmem:[%s0 + $0x210] sm:$0xf]
  %v148 = vld [vmem:[%s0 + $0x214] sm:$0xf]
  %v149 = vld [vmem:[%s0 + $0x218] sm:$0xf]
  %v150 = vld [vmem:[%s0 + $0x21c] sm:$0xf]
  %v151 = vld [vmem:[%s0 + $0x220] sm:$0xf]
  %v152 = vld [vmem:[%s0 + $0x224] sm:$0xf]
  %v153 = vld [vmem:[%s0 + $0x228] sm:$0xf]
  %v154 = vld [vmem:[%s0 + $0x22c] sm:$0xf]
  %v155 = vld [vmem:[%s0 + $0x230] sm:$0xf]
  %v156 = vld [vmem:[%s0 + $0x234] sm:$0xf]
  %v157 = vld [vmem:[%s0 + $0x238] sm:$0xf]
  %v158 = vld [vmem:[%s0 + $0x23c] sm:$0xf]
  %v159 = vld [vmem:[%s0 + $0x240] sm:$0xf]
  %v160 = vld [vmem:[%s0 + $0x244] sm:$0xf]
  %v161 = vld [vmem:[%s0 + $0x248] sm:$0xf]
  %v162 = vld [vmem:[%s0 + $0x24c] sm:$0xf]
  %v163 = vld [vmem:[%s0 + $0x250] sm:$0xf]
  %v164 = vld [vmem:[%s0 + $0x254] sm:$0xf]
  %v165 = vld [vmem:[%s0 + $0x258] sm:$0xf]
  %v166 = vld [vmem:[%s0 + $0x25c] sm:$0xf]
  %v167 = vld [vmem:[%s0 + $0x260] sm:$0xf]
  %v168 = vld [vmem:[%s0 + $0x264] sm:$0xf]
  %v169 = vld [vmem:[%s0 + $0x268] sm:$0xf]
  %v170 = vld [vmem:[%s0 + $0x26c] sm:$0xf]
  %v171 = vld [vmem:[%s0 + $0x270] sm:$0xf]
  %v172 = vld [vmem:[%s0 + $0x274] sm:$0xf]
  %v173 = vld [vmem:[%s0 + $0x278] sm:$0xf]
  %v174 = vld [vmem:[%s0 + $0x27c] sm:$0xf]
  %v175 = vld [vmem:[%s0 + $0x280] sm:$0xf]
  %v176 = vld [vmem:[%s0 + $0x284] sm:$0xf]
  %v177 = vld [vmem:[%s0 + $0x288] sm:$0xf]
  %v178 = vld [vmem:[%s0 + $0x28c] sm:$0xf]
  %v179 = vld [vmem:[%s0 + $0x290] sm:$0xf]
  %v180 = vld [vmem:[%s0 + $0x294] sm:$0xf]
  %v181 = vld [vmem:[%s0 + $0x298] sm:$0xf]
  %v182 = vld [vmem:[%s0 + $0x29c] sm:$0xf]
  %v183 = vld [vmem:[%s0 + $0x2a0] sm:$0xf]
  %v184 = vld [vmem:[%s0 + $0x2a4] sm:$0xf]
  %v185 = vld [vmem:[%s0 + $0x2a8] sm:$0xf]
  %v186 = vld [vmem:[%s0 + $0x2ac] sm:$0xf]
  %v187 = vld [vmem:[%s0 + $0x2b0] sm:$0xf]
  %v188 = vld [vmem:[%s0 + $0x2b4] sm:$0xf]
  %v189 = vld [vmem:[%s0 + $0x2b8] sm:$0xf]
  %v190 = vld [vmem:[%s0 + $0x2bc] sm:$0xf]
  %v191 = vld [vmem:[%s0 + $0x2c0] sm:$0xf]
  %v192 = vld [vmem:[%s0 + $0x2c4] sm:$0xf]
  %v193 = vld [vmem:[%s0 + $0x2c8] sm:$0xf]
  %v194 = vld [vmem:[%s0 + $0x2cc] sm:$0xf]
  %v195 = vld [vmem:[%s0 + $0x2d0] sm:$0xf]
  %v196 = vld [vmem:[%s0 + $0x2d4] sm:$0xf]
  %v197 = vld [vmem:[%s0 + $0x2d8] sm:$0xf]
  %v198 = vld [vmem:[%s0 + $0x2dc] sm:$0xf]
  %v199 = vld [vmem:[%s0 + $0x2e0] sm:$0xf]
  %v200 = vld [vmem:[%s0 + $0x2e4] sm:$0xf]
  %v201 = vld [vmem:[%s0 + $0x2e8] sm:$0xf]
  %v202 = vld [vmem:[%s0 + $0x2ec] sm:$0xf]
  %v203 = vld [vmem:[%s0 + $0x2f0] sm:$0xf]
  %v204 = vld [vmem:[%s0 + $0x2f4] sm:$0xf]
  %v205 = vld [vmem:[%s0 + $0x2f8] sm:$0xf]
  %v206 = vld [vmem:[%s0 + $0x2fc] sm:$0xf]
  %v207 = vld [vmem:[%s0 + $0x300] sm:$0xf]
  %v208 = vld [vmem:[%s0 + $0x304] sm:$0xf]
  %v209 = vld [vmem:[%s0 + $0x308] sm:$0xf]
  %v210 = vld [vmem:[%s0 + $0x30c] sm:$0xf]
  %v211 = vld [vmem:[%s0 + $0x310] sm:$0xf]
  %v212 = vld [vmem:[%s0 + $0x314] sm:$0xf]
  %v213 = vld [vmem:[%s0 + $0x318] sm:$0xf]
  %v214 = vld [vmem:[%s0 + $0x31c] sm:$0xf]
  %v215 = vld [vmem:[%s0 + $0x320] sm:$0xf]
  %v216 = vld [vmem:[%s0 + $0x324] sm:$0xf]
  %v217 = vld [vmem:[%s0 + $0x328] sm:$0xf]
  %v218 = vld [vmem:[%s0 + $0x32c] sm:$0xf]
  %v219 = vld [vmem:[%s0 + $0x330] sm:$0xf]
  %v220 = vld [vmem:[%s0 + $0x334] sm:$0xf]
  %v221 = vld [vmem:[%s0 + $0x338] sm:$0xf]
  %v222 = vld [vmem:[%s0 + $0x33c] sm:$0xf]
  %v223 = vld [vmem:[%s0 + $0x340] sm:$0xf]
  %v224 = vld [vmem:[%s0 + $0x344] sm:$0xf]
  %v225 = vld [vmem:[%s0 + $0x348] sm:$0xf]
  %v226 = vld [vmem:[%s0 + $0x34c] sm:$0xf]
  %v227 = vld [vmem:[%s0 + $0x350] sm:$0xf]
  %v228 = vld [vmem:[%s0 + $0x354] sm:$0xf]
  %v229 = vld [vmem:[%s0 + $0x358] sm:$0xf]
  %v230 = vld [vmem:[%s0 + $0x35c] sm:$0xf]
  %v231 = vld [vmem:[%s0 + $0x360] sm:$0xf]
  %v232 = vld [vmem:[%s0 + $0x364] sm:$0xf]
  %v233 = vld [vmem:[%s0 + $0x368] sm:$0xf]
  %v234 = vld [vmem:[%s0 + $0x36c] sm:$0xf]
  %v235 = vld [vmem:[%s0 + $0x370] sm:$0xf]
  %v236 = vld [vmem:[%s0 + $0x374] sm:$0xf]
  %v237 = vld [vmem:[%s0 + $0x378] sm:$0xf]
  %v238 = vld [vmem:[%s0 + $0x37c] sm:$0xf]
  %v239 = vld [vmem:[%s0 + $0x380] sm:$0xf]
  %v240 = vld [vmem:[%s0 + $0x384] sm:$0xf]
  %v241 = vld [vmem:[%s0 + $0x388] sm:$0xf]
  %v242 = vld [vmem:[%s0 + $0x38c] sm:$0xf]
  %v243 = vld [vmem:[%s0 + $0x390] sm:$0xf]
  %v244 = vld [vmem:[%s0 + $0x394] sm:$0xf]
  %v245 = vld [vmem:[%s0 + $0x398] sm:$0xf]
  %v246 = vld [vmem:[%s0 + $0x39c] sm:$0xf]
  %v247 = vld [vmem:[%s0 + $0x3a0] sm:$0xf]
  %v248 = vld [vmem:[%s0 + $0x3a4] sm:$0xf]
  %v249 = vld [vmem:[%s0 + $0x3a8] sm:$0xf]
  %v250 = vld [vmem:[%s0 + $0x3ac] sm:$0xf]
  %v251 = vld [vmem:[%s0 + $0x3b0] sm:$0xf]
  %v252 = vld [vmem:[%s0 + $0x3b4] sm:$0xf]
  %v253 = vld [vmem:[%s0 + $0x3b8] sm:$0xf]
  %v254 = vld [vmem:[%s0 + $0x3bc] sm:$0xf]
  %v255 = vld [vmem:[%s0 + $0x3c0] sm:$0xf]
  %v256 = vld [vmem:[%s0 + $0x3c4] sm:$0xf]
  %v257 = vld [vmem:[%s0 + $0x3c8] sm:$0xf]
  %v258 = vld [vmem:[%s0 + $0x3cc] sm:$0xf]
  %v259 = vld [vmem:[%s0 + $0x3d0] sm:$0xf]
  %v260 = vld [vmem:[%s0 + $0x3d4] sm:$0xf]
  %v261 = vld [vmem:[%s0 + $0x3d8] sm:$0xf]
  %v262 = vld [vmem:[%s0 + $0x3dc] sm:$0xf]
  %v263 = vld [vmem:[%s0 + $0x3e0] sm:$0xf]
  %v264 = vld [vmem:[%s0 + $0x3e4] sm:$0xf]
  %v265 = vld [vmem:[%s0 + $0x3e8] sm:$0xf]
  %v266 = vld [vmem:[%s0 + $0x3ec] sm:$0xf]
  %v267 = vld [vmem:[%s0 + $0x3f0] sm:$0xf]
  %v268 = vld [vmem:[%s0 + $0x3f4] sm:$0xf]
  %v269 = vld [vmem:[%s0 + $0x3f8] sm:$0xf]
  %v270 = vld [vmem:[%s0 + $0x3fc] sm:$0xf]
  %v271 = vld [vmem:[%s0 + $0x400] sm:$0xf]
  %v272 = vld [vmem:[%s0 + $0x404] sm:$0xf]
  %v273 = vld [vmem:[%s0 + $0x408] sm:$0xf]
  %v274 = vld [vmem:[%s0 + $0x40c] sm:$0xf]
  %v275 = vld [vmem:[%s0 + $0x410] sm:$0xf]
  %v276 = vld [vmem:[%s0 + $0x414] sm:$0xf]
  %v277 = vld [vmem:[%s0 + $0x418] sm:$0xf]
  %v278 = vld [vmem:[%s0 + $0x41c] sm:$0xf]
  %v279 = vld [vmem:[%s0 + $0x420] sm:$0xf]
  %v280 = vld [vmem:[%s0 + $0x424] sm:$0xf]
  %v281 = vld [vmem:[%s0 + $0x428] sm:$0xf]
  %v282 = vld [vmem:[%s0 + $0x42c] sm:$0xf]
  %v283 = vld [vmem:[%s0 + $0x430] sm:$0xf]
  %v284 = vld [vmem:[%s0 + $0x434] sm:$0xf]
  %v285 = vld [vmem:[%s0 + $0x438] sm:$0xf]
  %v286 = vld [vmem:[%s0 + $0x43c] sm:$0xf]
  %v287 = vld [vmem:[%s0 + $0x440] sm:$0xf]
  %v288 = vld [vmem:[%s0 + $0x444] sm:$0xf]
  %v289 = vld [vmem:[%s0 + $0x448] sm:$0xf]
  %v290 = vld [vmem:[%s0 + $0x44c] sm:$0xf]
  %v291 = vld [vmem:[%s0 + $0x450] sm:$0xf]
  %v292 = vld [vmem:[%s0 + $0x454] sm:$0xf]
  %v293 = vld [vmem:[%s0 + $0x458] sm:$0xf]
  %v294 = vld [vmem:[%s0 + $0x45c] sm:$0xf]
  %v295 = vld [vmem:[%s0 + $0x460] sm:$0xf]
  %v296 = vld [vmem:[%s0 + $0x464] sm:$0xf]
  %v297 = vld [vmem:[%s0 + $0x468] sm:$0xf]
  %v298 = vld [vmem:[%s0 + $0x46c] sm:$0xf]
  %v299 = vld [vmem:[%s0 + $0x470] sm:$0xf]
  %v300 = vld [vmem:[%s0 + $0x474] sm:$0xf]
  %v301 = vld [vmem:[%s0 + $0x478] sm:$0xf]
  %v302 = vld [vmem:[%s0 + $0x47c] sm:$0xf]
  %v303 = vld [vmem:[%s0 + $0x480] sm:$0xf]
  %v304 = vld [vmem:[%s0 + $0x484] sm:$0xf]
  %v305 = vld [vmem:[%s0 + $0x488] sm:$0xf]
  %v306 = vld [vmem:[%s0 + $0x48c] sm:$0xf]
  %v307 = vld [vmem:[%s0 + $0x490] sm:$0xf]
  %v308 = vld [vmem:[%s0 + $0x494] sm:$0xf]
  %v309 = vld [vmem:[%s0 + $0x498] sm:$0xf]
  %v310 = vld [vmem:[%s0 + $0x49c] sm:$0xf]
  %v311 = vld [vmem:[%s0 + $0x4a0] sm:$0xf]
  %v312 = vld [vmem:[%s0 + $0x4a4] sm:$0xf]
  %v313 = vld [vmem:[%s0 + $0x4a8] sm:$0xf]
  %v314 = vld [vmem:[%s0 + $0x4ac] sm:$0xf]
  %v315 = vld [vmem:[%s0 + $0x4b0] sm:$0xf]
  %v316 = vld [vmem:[%s0 + $0x4b4] sm:$0xf]
  %v317 = vld [vmem:[%s0 + $0x4b8] sm:$0xf]
  %v318 = vld [vmem:[%s0 + $0x4bc] sm:$0xf]
  %v319 = vld [vmem:[%s0 + $0x4c0] sm:$0xf]
  %v320 = vld [vmem:[%s0 + $0x4c4] sm:$0xf]
  %v321 = vld [vmem:[%s0 + $0x4c8] sm:$0xf]
  %v322 = vld [vmem:[%s0 + $0x4cc] sm:$0xf]
  %v323 = vld [vmem:[%s0 + $0x4d0] sm:$0xf]
  %v324 = vld [vmem:[%s0 + $0x4d4] sm:$0xf]
  %v325 = vld [vmem:[%s0 + $0x4d8] sm:$0xf]
  %v326 = vld [vmem:[%s0 + $0x4dc] sm:$0xf]
  %v327 = vld [vmem:[%s0 + $0x4e0] sm:$0xf]
  %v328 = vld [vmem:[%s0 + $0x4e4] sm:$0xf]
  %v329 = vld [vmem:[%s0 + $0x4e8] sm:$0xf]
  %v330 = vld [vmem:[%s0 + $0x4ec] sm:$0xf]
  %v331 = vld [vmem:[%s0 + $0x4f0] sm:$0xf]
  %v332 = vld [vmem:[%s0 + $0x4f4] sm:$0xf]
  %v333 = vld [vmem:[%s0 + $0x4f8] sm:$0xf]
  %v334 = vld [vmem:[%s0 + $0x4fc] sm:$0xf]
  %v335 = vld [vmem:[%s0 + $0x500] sm:$0xf]
  %v336 = vld [vmem:[%s0 + $0x504] sm:$0xf]
  %v337 = vld [vmem:[%s0 + $0x508] sm:$0xf]
  %v338 = vld [vmem:[%s0 + $0x50c] sm:$0xf]
  %v339 = vld [vmem:[%s0 + $0x510] sm:$0xf]
  %v340 = vld [vmem:[%s0 + $0x514] sm:$0xf]
  %v341 = vld [vmem:[%s0 + $0x518] sm:$0xf]
  %v342 = vld [vmem:[%s0 + $0x51c] sm:$0xf]
  %v343 = vld [vmem:[%s0 + $0x520] sm:$0xf]
  %v344 = vld [vmem:[%s0 + $0x524] sm:$0xf]
  %v345 = vld [vmem:[%s0 + $0x528] sm:$0xf]
  %v346 = vld [vmem:[%s0 + $0x52c] sm:$0xf]
  %v347 = vld [vmem:[%s0 + $0x530] sm:$0xf]
  %v348 = vld [vmem:[%s0 + $0x534] sm:$0xf]
  %v349 = vld [vmem:[%s0 + $0x538] sm:$0xf]
  %v350 = vld [vmem:[%s0 + $0x53c] sm:$0xf]
  %v351 = vld [vmem:[%s0 + $0x540] sm:$0xf]
  %v352 = vld [vmem:[%s0 + $0x544] sm:$0xf]
  %v353 = vld [vmem:[%s0 + $0x548] sm:$0xf]
  %v354 = vld [vmem:[%s0 + $0x54c] sm:$0xf]
  %v355 = vld [vmem:[%s0 + $0x550] sm:$0xf]
  %v356 = vld [vmem:[%s0 + $0x554] sm:$0xf]
  %v357 = vld [vmem:[%s0 + $0x558] sm:$0xf]
  %v358 = vld [vmem:[%s0 + $0x55c] sm:$0xf]
  %v359 = vld [vmem:[%s0 + $0x560] sm:$0xf]
  %v360 = vld [vmem:[%s0 + $0x564] sm:$0xf]
  %v361 = vld [vmem:[%s0 + $0x568] sm:$0xf]
  %v362 = vld [vmem:[%s0 + $0x56c] sm:$0xf]
  %v363 = vld [vmem:[%s0 + $0x570] sm:$0xf]
  %v364 = vld [vmem:[%s0 + $0x574] sm:$0xf]
  %v365 = vld [vmem:[%s0 + $0x578] sm:$0xf]
  %v366 = vld [vmem:[%s0 + $0x57c] sm:$0xf]
  %v367 = vld [vmem:[%s0 + $0x580] sm:$0xf]
  %v368 = vld [vmem:[%s0 + $0x584] sm:$0xf]
  %v369 = vld [vmem:[%s0 + $0x588] sm:$0xf]
  %v370 = vld [vmem:[%s0 + $0x58c] sm:$0xf]
  %v371 = vld [vmem:[%s0 + $0x590] sm:$0xf]
  %v372 = vld [vmem:[%s0 + $0x594] sm:$0xf]
  %v373 = vld [vmem:[%s0 + $0x598] sm:$0xf]
  %v374 = vld [vmem:[%s0 + $0x59c] sm:$0xf]
  %v375 = vld [vmem:[%s0 + $0x5a0] sm:$0xf]
  %v376 = vld [vmem:[%s0 + $0x5a4] sm:$0xf]
  %v377 = vld [vmem:[%s0 + $0x5a8] sm:$0xf]
  %v378 = vld [vmem:[%s0 + $0x5ac] sm:$0xf]
  %v379 = vld [vmem:[%s0 + $0x5b0] sm:$0xf]
  %v380 = vld [vmem:[%s0 + $0x5b4] sm:$0xf]
  %v381 = vld [vmem:[%s0 + $0x5b8] sm:$0xf]
  %v382 = vld [vmem:[%s0 + $0x5bc] sm:$0xf]
  %v383 = vld [vmem:[%s0 + $0x5c0] sm:$0xf]
  %v384 = vld [vmem:[%s0 + $0x5c4] sm:$0xf]
  %v385 = vld [vmem:[%s0 + $0x5c8] sm:$0xf]
  %v386 = vld [vmem:[%s0 + $0x5cc] sm:$0xf]
  %v387 = vld [vmem:[%s0 + $0x5d0] sm:$0xf]
  %v388 = vld [vmem:[%s0 + $0x5d4] sm:$0xf]
  %v389 = vld [vmem:[%s0 + $0x5d8] sm:$0xf]
  %v390 = vld [vmem:[%s0 + $0x5dc] sm:$0xf]
  %v391 = vld [vmem:[%s0 + $0x5e0] sm:$0xf]
  %v392 = vld [vmem:[%s0 + $0x5e4] sm:$0xf]
  %v393 = vld [vmem:[%s0 + $0x5e8] sm:$0xf]
  %v394 = vld [vmem:[%s0 + $0x5ec] sm:$0xf]
  %v395 = vld [vmem:[%s0 + $0x5f0] sm:$0xf]
  %v396 = vld [vmem:[%s0 + $0x5f4] sm:$0xf]
  %v397 = vld [vmem:[%s0 + $0x5f8] sm:$0xf]
  %v398 = vld [vmem:[%s0 + $0x5fc] sm:$0xf]
  %v399 = vld [vmem:[%s0 + $0x600] sm:$0xf]
  %v400 = vld [vmem:[%s0 + $0x604] sm:$0xf]
  %v401 = vld [vmem:[%s0 + $0x608] sm:$0xf]
  %v402 = vld [vmem:[%s0 + $0x60c] sm:$0xf]
  %v403 = vld [vmem:[%s0 + $0x610] sm:$0xf]
  %v404 = vld [vmem:[%s0 + $0x614] sm:$0xf]
  %v405 = vld [vmem:[%s0 + $0x618] sm:$0xf]
  %v406 = vld [vmem:[%s0 + $0x61c] sm:$0xf]
  %v407 = vld [vmem:[%s0 + $0x620] sm:$0xf]
  %v408 = vld [vmem:[%s0 + $0x624] sm:$0xf]
  %v409 = vld [vmem:[%s0 + $0x628] sm:$0xf]
  %v410 = vld [vmem:[%s0 + $0x62c] sm:$0xf]
  %v411 = vld [vmem:[%s0 + $0x630] sm:$0xf]
  %v412 = vld [vmem:[%s0 + $0x634] sm:$0xf]
  %v413 = vld [vmem:[%s0 + $0x638] sm:$0xf]
  %v414 = vld [vmem:[%s0 + $0x63c] sm:$0xf]
  %v415 = vld [vmem:[%s0 + $0x640] sm:$0xf]
  %v416 = vld [vmem:[%s0 + $0x644] sm:$0xf]
  %v417 = vld [vmem:[%s0 + $0x648] sm:$0xf]
  %v418 = vld [vmem:[%s0 + $0x64c] sm:$0xf]
  %v419 = vld [vmem:[%s0 + $0x650] sm:$0xf]
  %v420 = vld [vmem:[%s0 + $0x654] sm:$0xf]
  %v421 = vld [vmem:[%s0 + $0x658] sm:$0xf]
  %v422 = vld [vmem:[%s0 + $0x65c] sm:$0xf]
  %v423 = vld [vmem:[%s0 + $0x660] sm:$0xf]
  %v424 = vld [vmem:[%s0 + $0x664] sm:$0xf]
  %v425 = vld [vmem:[%s0 + $0x668] sm:$0xf]
  %v426 = vld [vmem:[%s0 + $0x66c] sm:$0xf]
  %v427 = vld [vmem:[%s0 + $0x670] sm:$0xf]
  %v428 = vld [vmem:[%s0 + $0x674] sm:$0xf]
  %v429 = vld [vmem:[%s0 + $0x678] sm:$0xf]
  %v430 = vld [vmem:[%s0 + $0x67c] sm:$0xf]
  %v431 = vld [vmem:[%s0 + $0x680] sm:$0xf]
  %v432 = vld [vmem:[%s0 + $0x684] sm:$0xf]
  %v433 = vld [vmem:[%s0 + $0x688] sm:$0xf]
  %v434 = vld [vmem:[%s0 + $0x68c] sm:$0xf]
  %v435 = vld [vmem:[%s0 + $0x690] sm:$0xf]
  %v436 = vld [vmem:[%s0 + $0x694] sm:$0xf]
  %v437 = vld [vmem:[%s0 + $0x698] sm:$0xf]
  %v438 = vld [vmem:[%s0 + $0x69c] sm:$0xf]
  %v439 = vld [vmem:[%s0 + $0x6a0] sm:$0xf]
  %v440 = vld [vmem:[%s0 + $0x6a4] sm:$0xf]
  %v441 = vld [vmem:[%s0 + $0x6a8] sm:$0xf]
  %v442 = vld [vmem:[%s0 + $0x6ac] sm:$0xf]
  %v443 = vld [vmem:[%s0 + $0x6b0] sm:$0xf]
  %v444 = vld [vmem:[%s0 + $0x6b4] sm:$0xf]
  %v445 = vld [vmem:[%s0 + $0x6b8] sm:$0xf]
  %v446 = vld [vmem:[%s0 + $0x6bc] sm:$0xf]
  %v447 = vld [vmem:[%s0 + $0x6c0] sm:$0xf]
  %v448 = vld [vmem:[%s0 + $0x6c4] sm:$0xf]
  %v449 = vld [vmem:[%s0 + $0x6c8] sm:$0xf]
  %v450 = vld [vmem:[%s0 + $0x6cc] sm:$0xf]
  %v451 = vld [vmem:[%s0 + $0x6d0] sm:$0xf]
  %v452 = vld [vmem:[%s0 + $0x6d4] sm:$0xf]
  %v453 = vld [vmem:[%s0 + $0x6d8] sm:$0xf]
  %v454 = vld [vmem:[%s0 + $0x6dc] sm:$0xf]
  %v455 = vld [vmem:[%s0 + $0x6e0] sm:$0xf]
  %v456 = vld [vmem:[%s0 + $0x6e4] sm:$0xf]
  %v457 = vld [vmem:[%s0 + $0x6e8] sm:$0xf]
  %v458 = vld [vmem:[%s0 + $0x6ec] sm:$0xf]
  %v459 = vld [vmem:[%s0 + $0x6f0] sm:$0xf]
  %v460 = vld [vmem:[%s0 + $0x6f4] sm:$0xf]
  %v461 = vld [vmem:[%s0 + $0x6f8] sm:$0xf]
  %v462 = vld [vmem:[%s0 + $0x6fc] sm:$0xf]
  %v463 = vld [vmem:[%s0 + $0x700] sm:$0xf]
  %v464 = vld [vmem:[%s0 + $0x704] sm:$0xf]
  %v465 = vld [vmem:[%s0 + $0x708] sm:$0xf]
  %v466 = vld [vmem:[%s0 + $0x70c] sm:$0xf]
  %v467 = vld [vmem:[%s0 + $0x710] sm:$0xf]
  %v468 = vld [vmem:[%s0 + $0x714] sm:$0xf]
  %v469 = vld [vmem:[%s0 + $0x718] sm:$0xf]
  %v470 = vld [vmem:[%s0 + $0x71c] sm:$0xf]
  %v471 = vld [vmem:[%s0 + $0x720] sm:$0xf]
  %v472 = vld [vmem:[%s0 + $0x724] sm:$0xf]
  %v473 = vld [vmem:[%s0 + $0x728] sm:$0xf]
  %v474 = vld [vmem:[%s0 + $0x72c] sm:$0xf]
  %v475 = vld [vmem:[%s0 + $0x730] sm:$0xf]
  %v476 = vld [vmem:[%s0 + $0x734] sm:$0xf]
  %v477 = vld [vmem:[%s0 + $0x738] sm:$0xf]
  %v478 = vld [vmem:[%s0 + $0x73c] sm:$0xf]
  %v479 = vld [vmem:[%s0 + $0x740] sm:$0xf]
  %v480 = vld [vmem:[%s0 + $0x744] sm:$0xf]
  %v481 = vld [vmem:[%s0 + $0x748] sm:$0xf]
  %v482 = vld [vmem:[%s0 + $0x74c] sm:$0xf]
  %v483 = vld [vmem:[%s0 + $0x750] sm:$0xf]
  %v484 = vld [vmem:[%s0 + $0x754] sm:$0xf]
  %v485 = vld [vmem:[%s0 + $0x758] sm:$0xf]
  %v486 = vld [vmem:[%s0 + $0x75c] sm:$0xf]
  %v487 = vld [vmem:[%s0 + $0x760] sm:$0xf]
  %v488 = vld [vmem:[%s0 + $0x764] sm:$0xf]
  %v489 = vld [vmem:[%s0 + $0x768] sm:$0xf]
  %v490 = vld [vmem:[%s0 + $0x76c] sm:$0xf]
  %v491 = vld [vmem:[%s0 + $0x770] sm:$0xf]
  %v492 = vld [vmem:[%s0 + $0x774] sm:$0xf]
  %v493 = vld [vmem:[%s0 + $0x778] sm:$0xf]
  %v494 = vld [vmem:[%s0 + $0x77c] sm:$0xf]
  %v495 = vld [vmem:[%s0 + $0x780] sm:$0xf]
  %v496 = vld [vmem:[%s0 + $0x784] sm:$0xf]
  %v497 = vld [vmem:[%s0 + $0x788] sm:$0xf]
  %v498 = vld [vmem:[%s0 + $0x78c] sm:$0xf]
  %v499 = vld [vmem:[%s0 + $0x790] sm:$0xf]
  %v500 = vld [vmem:[%s0 + $0x794] sm:$0xf]
  %v501 = vld [vmem:[%s0 + $0x798] sm:$0xf]
  %v502 = vld [vmem:[%s0 + $0x79c] sm:$0xf]
  %v503 = vld [vmem:[%s0 + $0x7a0] sm:$0xf]
  %v504 = vld [vmem:[%s0 + $0x7a4] sm:$0xf]
  %v505 = vld [vmem:[%s0 + $0x7a8] sm:$0xf]
  %v506 = vld [vmem:[%s0 + $0x7ac] sm:$0xf]
  %v507 = vld [vmem:[%s0 + $0x7b0] sm:$0xf]
  %v508 = vld [vmem:[%s0 + $0x7b4] sm:$0xf]
  %v509 = vld [vmem:[%s0 + $0x7b8] sm:$0xf]
  %v510 = vld [vmem:[%s0 + $0x7bc] sm:$0xf]
  %v511 = vld [vmem:[%s0 + $0x7c0] sm:$0xf]
  %v512 = vld [vmem:[%s0 + $0x7c4] sm:$0xf]
  %v513 = vld [vmem:[%s0 + $0x7c8] sm:$0xf]
  %v514 = vld [vmem:[%s0 + $0x7cc] sm:$0xf]
  %v515 = vld [vmem:[%s0 + $0x7d0] sm:$0xf]
  %v516 = vld [vmem:[%s0 + $0x7d4] sm:$0xf]
  %v517 = vld [vmem:[%s0 + $0x7d8] sm:$0xf]
  %v518 = vld [vmem:[%s0 + $0x7dc] sm:$0xf]
  %v519 = vld [vmem:[%s0 + $0x7e0] sm:$0xf]
  %v520 = vld [vmem:[%s0 + $0x7e4] sm:$0xf]
  %v521 = vld [vmem:[%s0 + $0x7e8] sm:$0xf]
  %v522 = vld [vmem:[%s0 + $0x7ec] sm:$0xf]
  %v523 = vld [vmem:[%s0 + $0x7f0] sm:$0xf]
  %v524 = vld [vmem:[%s0 + $0x7f4] sm:$0xf]
  %v525 = vld [vmem:[%s0 + $0x7f8] sm:$0xf]
  %v526 = vld [vmem:[%s0 + $0x7fc] sm:$0xf]
  %v527 = vld [vmem:[%s0 + $0x800] sm:$0xf]
  %v528 = vld [vmem:[%s0 + $0x804] sm:$0xf]
  %v529 = vld [vmem:[%s0 + $0x808] sm:$0xf]
  %v530 = vld [vmem:[%s0 + $0x80c] sm:$0xf]
  %v531 = vld [vmem:[%s0 + $0x810] sm:$0xf]
  %v532 = vld [vmem:[%s0 + $0x814] sm:$0xf]
  %v533 = vld [vmem:[%s0 + $0x818] sm:$0xf]
  %v534 = vld [vmem:[%s0 + $0x81c] sm:$0xf]
  %v535 = vld [vmem:[%s0 + $0x820] sm:$0xf]
  %v536 = vld [vmem:[%s0 + $0x824] sm:$0xf]
  %v537 = vld [vmem:[%s0 + $0x828] sm:$0xf]
  %v538 = vld [vmem:[%s0 + $0x82c] sm:$0xf]
  %v539 = vld [vmem:[%s0 + $0x830] sm:$0xf]
  %v540 = vld [vmem:[%s0 + $0x834] sm:$0xf]
  %v541 = vld [vmem:[%s0 + $0x838] sm:$0xf]
  %v542 = vld [vmem:[%s0 + $0x83c] sm:$0xf]
  %v543 = vld [vmem:[%s0 + $0x840] sm:$0xf]
  %v544 = vld [vmem:[%s0 + $0x844] sm:$0xf]
  %v545 = vld [vmem:[%s0 + $0x848] sm:$0xf]
  %v546 = vld [vmem:[%s0 + $0x84c] sm:$0xf]
  %v547 = vld [vmem:[%s0 + $0x850] sm:$0xf]
  %v548 = vld [vmem:[%s0 + $0x854] sm:$0xf]
  %v549 = vld [vmem:[%s0 + $0x858] sm:$0xf]
  %v550 = vld [vmem:[%s0 + $0x85c] sm:$0xf]
  %v551 = vld [vmem:[%s0 + $0x860] sm:$0xf]
  %v552 = vld [vmem:[%s0 + $0x864] sm:$0xf]
  %v553 = vld [vmem:[%s0 + $0x868] sm:$0xf]
  %v554 = vld [vmem:[%s0 + $0x86c] sm:$0xf]
  %v555 = vld [vmem:[%s0 + $0x870] sm:$0xf]
  %v556 = vld [vmem:[%s0 + $0x874] sm:$0xf]
  %v557 = vld [vmem:[%s0 + $0x878] sm:$0xf]
  %v558 = vld [vmem:[%s0 + $0x87c] sm:$0xf]
  %v559 = vld [vmem:[%s1] sm:$0xf]
  %v560 = vld [vmem:[%s1 + $0x4] sm:$0xf]
  %v561 = vld [vmem:[%s1 + $0x8] sm:$0xf]
  %v562 = vld [vmem:[%s1 + $0xc] sm:$0x1]
  %v1107 = vunpack.c.l.b16 %v15
  %v1108 = vunpack.c.l.b16 %v16
  %v1109 = vunpack.c.l.b16 %v17
  %v1110 = vunpack.c.l.b16 %v18
  %v1111 = vunpack.c.l.b16 %v19
  %v1112 = vunpack.c.l.b16 %v20
  %v1113 = vunpack.c.l.b16 %v21
  %v1114 = vunpack.c.l.b16 %v22
  %v1115 = vunpack.c.l.b16 %v23
  %v1116 = vunpack.c.l.b16 %v24
  %v1117 = vunpack.c.l.b16 %v25
  %v1118 = vunpack.c.l.b16 %v26
  %v1119 = vunpack.c.l.b16 %v27
  %v1120 = vunpack.c.l.b16 %v28
  %v1121 = vunpack.c.l.b16 %v29
  %v1122 = vunpack.c.l.b16 %v30
  %v1123 = vunpack.c.l.b16 %v31
  %v1124 = vunpack.c.l.b16 %v32
  %v1125 = vunpack.c.l.b16 %v33
  %v1126 = vunpack.c.l.b16 %v34
  %v1127 = vunpack.c.l.b16 %v35
  %v1128 = vunpack.c.l.b16 %v36
  %v1129 = vunpack.c.l.b16 %v37
  %v1130 = vunpack.c.l.b16 %v38
  %v1131 = vunpack.c.l.b16 %v39
  %v1132 = vunpack.c.l.b16 %v40
  %v1133 = vunpack.c.l.b16 %v41
  %v1134 = vunpack.c.l.b16 %v42
  %v1135 = vunpack.c.l.b16 %v43
  %v1136 = vunpack.c.l.b16 %v44
  %v1137 = vunpack.c.l.b16 %v45
  %v1138 = vunpack.c.l.b16 %v46
  %v1139 = vunpack.c.l.b16 %v47
  %v1140 = vunpack.c.l.b16 %v48
  %v1141 = vunpack.c.l.b16 %v49
  %v1142 = vunpack.c.l.b16 %v50
  %v1143 = vunpack.c.l.b16 %v51
  %v1144 = vunpack.c.l.b16 %v52
  %v1145 = vunpack.c.l.b16 %v53
  %v1146 = vunpack.c.l.b16 %v54
  %v1147 = vunpack.c.l.b16 %v55
  %v1148 = vunpack.c.l.b16 %v56
  %v1149 = vunpack.c.l.b16 %v57
  %v1150 = vunpack.c.l.b16 %v58
  %v1151 = vunpack.c.l.b16 %v59
  %v1152 = vunpack.c.l.b16 %v60
  %v1153 = vunpack.c.l.b16 %v61
  %v1154 = vunpack.c.l.b16 %v62
  %v1155 = vunpack.c.l.b16 %v63
  %v1156 = vunpack.c.l.b16 %v64
  %v1157 = vunpack.c.l.b16 %v65
  %v1158 = vunpack.c.l.b16 %v66
  %v1159 = vunpack.c.l.b16 %v67
  %v1160 = vunpack.c.l.b16 %v68
  %v1161 = vunpack.c.l.b16 %v69
  %v1162 = vunpack.c.l.b16 %v70
  %v1163 = vunpack.c.l.b16 %v71
  %v1164 = vunpack.c.l.b16 %v72
  %v1165 = vunpack.c.l.b16 %v73
  %v1166 = vunpack.c.l.b16 %v74
  %v1167 = vunpack.c.l.b16 %v75
  %v1168 = vunpack.c.l.b16 %v76
  %v1169 = vunpack.c.l.b16 %v77
  %v1170 = vunpack.c.l.b16 %v78
  %v1171 = vunpack.c.l.b16 %v79
  %v1172 = vunpack.c.l.b16 %v80
  %v1173 = vunpack.c.l.b16 %v81
  %v1174 = vunpack.c.l.b16 %v82
  %v1175 = vunpack.c.l.b16 %v83
  %v1176 = vunpack.c.l.b16 %v84
  %v1177 = vunpack.c.l.b16 %v85
  %v1178 = vunpack.c.l.b16 %v86
  %v1179 = vunpack.c.l.b16 %v87
  %v1180 = vunpack.c.l.b16 %v88
  %v1181 = vunpack.c.l.b16 %v89
  %v1182 = vunpack.c.l.b16 %v90
  %v1183 = vunpack.c.l.b16 %v91
  %v1184 = vunpack.c.l.b16 %v92
  %v1185 = vunpack.c.l.b16 %v93
  %v1186 = vunpack.c.l.b16 %v94
  %v1187 = vunpack.c.l.b16 %v95
  %v1188 = vunpack.c.l.b16 %v96
  %v1189 = vunpack.c.l.b16 %v97
  %v1190 = vunpack.c.l.b16 %v98
  %v1191 = vunpack.c.l.b16 %v99
  %v1192 = vunpack.c.l.b16 %v100
  %v1193 = vunpack.c.l.b16 %v101
  %v1194 = vunpack.c.l.b16 %v102
  %v1195 = vunpack.c.l.b16 %v103
  %v1196 = vunpack.c.l.b16 %v104
  %v1197 = vunpack.c.l.b16 %v105
  %v1198 = vunpack.c.l.b16 %v106
  %v1199 = vunpack.c.l.b16 %v107
  %v1200 = vunpack.c.l.b16 %v108
  %v1201 = vunpack.c.l.b16 %v109
  %v1202 = vunpack.c.l.b16 %v110
  %v1203 = vunpack.c.l.b16 %v111
  %v1204 = vunpack.c.l.b16 %v112
  %v1205 = vunpack.c.l.b16 %v113
  %v1206 = vunpack.c.l.b16 %v114
  %v1207 = vunpack.c.l.b16 %v115
  %v1208 = vunpack.c.l.b16 %v116
  %v1209 = vunpack.c.l.b16 %v117
  %v1210 = vunpack.c.l.b16 %v118
  %v1211 = vunpack.c.l.b16 %v119
  %v1212 = vunpack.c.l.b16 %v120
  %v1213 = vunpack.c.l.b16 %v121
  %v1214 = vunpack.c.l.b16 %v122
  %v1215 = vunpack.c.l.b16 %v123
  %v1216 = vunpack.c.l.b16 %v124
  %v1217 = vunpack.c.l.b16 %v125
  %v1218 = vunpack.c.l.b16 %v126
  %v1219 = vunpack.c.l.b16 %v127
  %v1220 = vunpack.c.l.b16 %v128
  %v1221 = vunpack.c.l.b16 %v129
  %v1222 = vunpack.c.l.b16 %v130
  %v1223 = vunpack.c.l.b16 %v131
  %v1224 = vunpack.c.l.b16 %v132
  %v1225 = vunpack.c.l.b16 %v133
  %v1226 = vunpack.c.l.b16 %v134
  %v1227 = vunpack.c.l.b16 %v135
  %v1228 = vunpack.c.l.b16 %v136
  %v1229 = vunpack.c.l.b16 %v137
  %v1230 = vunpack.c.l.b16 %v138
  %v1231 = vunpack.c.l.b16 %v139
  %v1232 = vunpack.c.l.b16 %v140
  %v1233 = vunpack.c.l.b16 %v141
  %v1234 = vunpack.c.l.b16 %v142
  %v1235 = vunpack.c.l.b16 %v143
  %v1236 = vunpack.c.l.b16 %v144
  %v1237 = vunpack.c.l.b16 %v145
  %v1238 = vunpack.c.l.b16 %v146
  %v1239 = vunpack.c.l.b16 %v147
  %v1240 = vunpack.c.l.b16 %v148
  %v1241 = vunpack.c.l.b16 %v149
  %v1242 = vunpack.c.l.b16 %v150
  %v1243 = vunpack.c.l.b16 %v151
  %v1244 = vunpack.c.l.b16 %v152
  %v1245 = vunpack.c.l.b16 %v153
  %v1246 = vunpack.c.l.b16 %v154
  %v1247 = vunpack.c.l.b16 %v155
  %v1248 = vunpack.c.l.b16 %v156
  %v1249 = vunpack.c.l.b16 %v157
  %v1250 = vunpack.c.l.b16 %v158
  %v1251 = vunpack.c.l.b16 %v159
  %v1252 = vunpack.c.l.b16 %v160
  %v1253 = vunpack.c.l.b16 %v161
  %v1254 = vunpack.c.l.b16 %v162
  %v1255 = vunpack.c.l.b16 %v163
  %v1256 = vunpack.c.l.b16 %v164
  %v1257 = vunpack.c.l.b16 %v165
  %v1258 = vunpack.c.l.b16 %v166
  %v1259 = vunpack.c.l.b16 %v167
  %v1260 = vunpack.c.l.b16 %v168
  %v1261 = vunpack.c.l.b16 %v169
  %v1262 = vunpack.c.l.b16 %v170
  %v1263 = vunpack.c.l.b16 %v171
  %v1264 = vunpack.c.l.b16 %v172
  %v1265 = vunpack.c.l.b16 %v173
  %v1266 = vunpack.c.l.b16 %v174
  %v1267 = vunpack.c.l.b16 %v175
  %v1268 = vunpack.c.l.b16 %v176
  %v1269 = vunpack.c.l.b16 %v177
  %v1270 = vunpack.c.l.b16 %v178
  %v1271 = vunpack.c.l.b16 %v179
  %v1272 = vunpack.c.l.b16 %v180
  %v1273 = vunpack.c.l.b16 %v181
  %v1274 = vunpack.c.l.b16 %v182
  %v1275 = vunpack.c.l.b16 %v183
  %v1276 = vunpack.c.l.b16 %v184
  %v1277 = vunpack.c.l.b16 %v185
  %v1278 = vunpack.c.l.b16 %v186
  %v1279 = vunpack.c.l.b16 %v187
  %v1280 = vunpack.c.l.b16 %v188
  %v1281 = vunpack.c.l.b16 %v189
  %v1282 = vunpack.c.l.b16 %v190
  %v1283 = vunpack.c.l.b16 %v191
  %v1284 = vunpack.c.l.b16 %v192
  %v1285 = vunpack.c.l.b16 %v193
  %v1286 = vunpack.c.l.b16 %v194
  %v1287 = vunpack.c.l.b16 %v195
  %v1288 = vunpack.c.l.b16 %v196
  %v1289 = vunpack.c.l.b16 %v197
  %v1290 = vunpack.c.l.b16 %v198
  %v1291 = vunpack.c.l.b16 %v199
  %v1292 = vunpack.c.l.b16 %v200
  %v1293 = vunpack.c.l.b16 %v201
  %v1294 = vunpack.c.l.b16 %v202
  %v1295 = vunpack.c.l.b16 %v203
  %v1296 = vunpack.c.l.b16 %v204
  %v1297 = vunpack.c.l.b16 %v205
  %v1298 = vunpack.c.l.b16 %v206
  %v1299 = vunpack.c.l.b16 %v207
  %v1300 = vunpack.c.l.b16 %v208
  %v1301 = vunpack.c.l.b16 %v209
  %v1302 = vunpack.c.l.b16 %v210
  %v1303 = vunpack.c.l.b16 %v211
  %v1304 = vunpack.c.l.b16 %v212
  %v1305 = vunpack.c.l.b16 %v213
  %v1306 = vunpack.c.l.b16 %v214
  %v1307 = vunpack.c.l.b16 %v215
  %v1308 = vunpack.c.l.b16 %v216
  %v1309 = vunpack.c.l.b16 %v217
  %v1310 = vunpack.c.l.b16 %v218
  %v1311 = vunpack.c.l.b16 %v219
  %v1312 = vunpack.c.l.b16 %v220
  %v1313 = vunpack.c.l.b16 %v221
  %v1314 = vunpack.c.l.b16 %v222
  %v1315 = vunpack.c.l.b16 %v223
  %v1316 = vunpack.c.l.b16 %v224
  %v1317 = vunpack.c.l.b16 %v225
  %v1318 = vunpack.c.l.b16 %v226
  %v1319 = vunpack.c.l.b16 %v227
  %v1320 = vunpack.c.l.b16 %v228
  %v1321 = vunpack.c.l.b16 %v229
  %v1322 = vunpack.c.l.b16 %v230
  %v1323 = vunpack.c.l.b16 %v231
  %v1324 = vunpack.c.l.b16 %v232
  %v1325 = vunpack.c.l.b16 %v233
  %v1326 = vunpack.c.l.b16 %v234
  %v1327 = vunpack.c.l.b16 %v235
  %v1328 = vunpack.c.l.b16 %v236
  %v1329 = vunpack.c.l.b16 %v237
  %v1330 = vunpack.c.l.b16 %v238
  %v1331 = vunpack.c.l.b16 %v239
  %v1332 = vunpack.c.l.b16 %v240
  %v1333 = vunpack.c.l.b16 %v241
  %v1334 = vunpack.c.l.b16 %v242
  %v1335 = vunpack.c.l.b16 %v243
  %v1336 = vunpack.c.l.b16 %v244
  %v1337 = vunpack.c.l.b16 %v245
  %v1338 = vunpack.c.l.b16 %v246
  %v1339 = vunpack.c.l.b16 %v247
  %v1340 = vunpack.c.l.b16 %v248
  %v1341 = vunpack.c.l.b16 %v249
  %v1342 = vunpack.c.l.b16 %v250
  %v1343 = vunpack.c.l.b16 %v251
  %v1344 = vunpack.c.l.b16 %v252
  %v1345 = vunpack.c.l.b16 %v253
  %v1346 = vunpack.c.l.b16 %v254
  %v1347 = vunpack.c.l.b16 %v255
  %v1348 = vunpack.c.l.b16 %v256
  %v1349 = vunpack.c.l.b16 %v257
  %v1350 = vunpack.c.l.b16 %v258
  %v1351 = vunpack.c.l.b16 %v259
  %v1352 = vunpack.c.l.b16 %v260
  %v1353 = vunpack.c.l.b16 %v261
  %v1354 = vunpack.c.l.b16 %v262
  %v1355 = vunpack.c.l.b16 %v263
  %v1356 = vunpack.c.l.b16 %v264
  %v1357 = vunpack.c.l.b16 %v265
  %v1358 = vunpack.c.l.b16 %v266
  %v1359 = vunpack.c.l.b16 %v267
  %v1360 = vunpack.c.l.b16 %v268
  %v1361 = vunpack.c.l.b16 %v269
  %v1362 = vunpack.c.l.b16 %v270
  %v1363 = vunpack.c.l.b16 %v271
  %v1364 = vunpack.c.l.b16 %v272
  %v1365 = vunpack.c.l.b16 %v273
  %v1366 = vunpack.c.l.b16 %v274
  %v1367 = vunpack.c.l.b16 %v275
  %v1368 = vunpack.c.l.b16 %v276
  %v1369 = vunpack.c.l.b16 %v277
  %v1370 = vunpack.c.l.b16 %v278
  %v1371 = vunpack.c.l.b16 %v279
  %v1372 = vunpack.c.l.b16 %v280
  %v1373 = vunpack.c.l.b16 %v281
  %v1374 = vunpack.c.l.b16 %v282
  %v1375 = vunpack.c.l.b16 %v283
  %v1376 = vunpack.c.l.b16 %v284
  %v1377 = vunpack.c.l.b16 %v285
  %v1378 = vunpack.c.l.b16 %v286
  %v1379 = vunpack.c.l.b16 %v287
  %v1380 = vunpack.c.l.b16 %v288
  %v1381 = vunpack.c.l.b16 %v289
  %v1382 = vunpack.c.l.b16 %v290
  %v1383 = vunpack.c.l.b16 %v291
  %v1384 = vunpack.c.l.b16 %v292
  %v1385 = vunpack.c.l.b16 %v293
  %v1386 = vunpack.c.l.b16 %v294
  %v1387 = vunpack.c.l.b16 %v295
  %v1388 = vunpack.c.l.b16 %v296
  %v1389 = vunpack.c.l.b16 %v297
  %v1390 = vunpack.c.l.b16 %v298
  %v1391 = vunpack.c.l.b16 %v299
  %v1392 = vunpack.c.l.b16 %v300
  %v1393 = vunpack.c.l.b16 %v301
  %v1394 = vunpack.c.l.b16 %v302
  %v1395 = vunpack.c.l.b16 %v303
  %v1396 = vunpack.c.l.b16 %v304
  %v1397 = vunpack.c.l.b16 %v305
  %v1398 = vunpack.c.l.b16 %v306
  %v1399 = vunpack.c.l.b16 %v307
  %v1400 = vunpack.c.l.b16 %v308
  %v1401 = vunpack.c.l.b16 %v309
  %v1402 = vunpack.c.l.b16 %v310
  %v1403 = vunpack.c.l.b16 %v311
  %v1404 = vunpack.c.l.b16 %v312
  %v1405 = vunpack.c.l.b16 %v313
  %v1406 = vunpack.c.l.b16 %v314
  %v1407 = vunpack.c.l.b16 %v315
  %v1408 = vunpack.c.l.b16 %v316
  %v1409 = vunpack.c.l.b16 %v317
  %v1410 = vunpack.c.l.b16 %v318
  %v1411 = vunpack.c.l.b16 %v319
  %v1412 = vunpack.c.l.b16 %v320
  %v1413 = vunpack.c.l.b16 %v321
  %v1414 = vunpack.c.l.b16 %v322
  %v1415 = vunpack.c.l.b16 %v323
  %v1416 = vunpack.c.l.b16 %v324
  %v1417 = vunpack.c.l.b16 %v325
  %v1418 = vunpack.c.l.b16 %v326
  %v1419 = vunpack.c.l.b16 %v327
  %v1420 = vunpack.c.l.b16 %v328
  %v1421 = vunpack.c.l.b16 %v329
  %v1422 = vunpack.c.l.b16 %v330
  %v1423 = vunpack.c.l.b16 %v331
  %v1424 = vunpack.c.l.b16 %v332
  %v1425 = vunpack.c.l.b16 %v333
  %v1426 = vunpack.c.l.b16 %v334
  %v1427 = vunpack.c.l.b16 %v335
  %v1428 = vunpack.c.l.b16 %v336
  %v1429 = vunpack.c.l.b16 %v337
  %v1430 = vunpack.c.l.b16 %v338
  %v1431 = vunpack.c.l.b16 %v339
  %v1432 = vunpack.c.l.b16 %v340
  %v1433 = vunpack.c.l.b16 %v341
  %v1434 = vunpack.c.l.b16 %v342
  %v1435 = vunpack.c.l.b16 %v343
  %v1436 = vunpack.c.l.b16 %v344
  %v1437 = vunpack.c.l.b16 %v345
  %v1438 = vunpack.c.l.b16 %v346
  %v1439 = vunpack.c.l.b16 %v347
  %v1440 = vunpack.c.l.b16 %v348
  %v1441 = vunpack.c.l.b16 %v349
  %v1442 = vunpack.c.l.b16 %v350
  %v1443 = vunpack.c.l.b16 %v351
  %v1444 = vunpack.c.l.b16 %v352
  %v1445 = vunpack.c.l.b16 %v353
  %v1446 = vunpack.c.l.b16 %v354
  %v1447 = vunpack.c.l.b16 %v355
  %v1448 = vunpack.c.l.b16 %v356
  %v1449 = vunpack.c.l.b16 %v357
  %v1450 = vunpack.c.l.b16 %v358
  %v1451 = vunpack.c.l.b16 %v359
  %v1452 = vunpack.c.l.b16 %v360
  %v1453 = vunpack.c.l.b16 %v361
  %v1454 = vunpack.c.l.b16 %v362
  %v1455 = vunpack.c.l.b16 %v363
  %v1456 = vunpack.c.l.b16 %v364
  %v1457 = vunpack.c.l.b16 %v365
  %v1458 = vunpack.c.l.b16 %v366
  %v1459 = vunpack.c.l.b16 %v367
  %v1460 = vunpack.c.l.b16 %v368
  %v1461 = vunpack.c.l.b16 %v369
  %v1462 = vunpack.c.l.b16 %v370
  %v1463 = vunpack.c.l.b16 %v371
  %v1464 = vunpack.c.l.b16 %v372
  %v1465 = vunpack.c.l.b16 %v373
  %v1466 = vunpack.c.l.b16 %v374
  %v1467 = vunpack.c.l.b16 %v375
  %v1468 = vunpack.c.l.b16 %v376
  %v1469 = vunpack.c.l.b16 %v377
  %v1470 = vunpack.c.l.b16 %v378
  %v1471 = vunpack.c.l.b16 %v379
  %v1472 = vunpack.c.l.b16 %v380
  %v1473 = vunpack.c.l.b16 %v381
  %v1474 = vunpack.c.l.b16 %v382
  %v1475 = vunpack.c.l.b16 %v383
  %v1476 = vunpack.c.l.b16 %v384
  %v1477 = vunpack.c.l.b16 %v385
  %v1478 = vunpack.c.l.b16 %v386
  %v1479 = vunpack.c.l.b16 %v387
  %v1480 = vunpack.c.l.b16 %v388
  %v1481 = vunpack.c.l.b16 %v389
  %v1482 = vunpack.c.l.b16 %v390
  %v1483 = vunpack.c.l.b16 %v391
  %v1484 = vunpack.c.l.b16 %v392
  %v1485 = vunpack.c.l.b16 %v393
  %v1486 = vunpack.c.l.b16 %v394
  %v1487 = vunpack.c.l.b16 %v395
  %v1488 = vunpack.c.l.b16 %v396
  %v1489 = vunpack.c.l.b16 %v397
  %v1490 = vunpack.c.l.b16 %v398
  %v1491 = vunpack.c.l.b16 %v399
  %v1492 = vunpack.c.l.b16 %v400
  %v1493 = vunpack.c.l.b16 %v401
  %v1494 = vunpack.c.l.b16 %v402
  %v1495 = vunpack.c.l.b16 %v403
  %v1496 = vunpack.c.l.b16 %v404
  %v1497 = vunpack.c.l.b16 %v405
  %v1498 = vunpack.c.l.b16 %v406
  %v1499 = vunpack.c.l.b16 %v407
  %v1500 = vunpack.c.l.b16 %v408
  %v1501 = vunpack.c.l.b16 %v409
  %v1502 = vunpack.c.l.b16 %v410
  %v1503 = vunpack.c.l.b16 %v411
  %v1504 = vunpack.c.l.b16 %v412
  %v1505 = vunpack.c.l.b16 %v413
  %v1506 = vunpack.c.l.b16 %v414
  %v1507 = vunpack.c.l.b16 %v415
  %v1508 = vunpack.c.l.b16 %v416
  %v1509 = vunpack.c.l.b16 %v417
  %v1510 = vunpack.c.l.b16 %v418
  %v1511 = vunpack.c.l.b16 %v419
  %v1512 = vunpack.c.l.b16 %v420
  %v1513 = vunpack.c.l.b16 %v421
  %v1514 = vunpack.c.l.b16 %v422
  %v1515 = vunpack.c.l.b16 %v423
  %v1516 = vunpack.c.l.b16 %v424
  %v1517 = vunpack.c.l.b16 %v425
  %v1518 = vunpack.c.l.b16 %v426
  %v1519 = vunpack.c.l.b16 %v427
  %v1520 = vunpack.c.l.b16 %v428
  %v1521 = vunpack.c.l.b16 %v429
  %v1522 = vunpack.c.l.b16 %v430
  %v1523 = vunpack.c.l.b16 %v431
  %v1524 = vunpack.c.l.b16 %v432
  %v1525 = vunpack.c.l.b16 %v433
  %v1526 = vunpack.c.l.b16 %v434
  %v1527 = vunpack.c.l.b16 %v435
  %v1528 = vunpack.c.l.b16 %v436
  %v1529 = vunpack.c.l.b16 %v437
  %v1530 = vunpack.c.l.b16 %v438
  %v1531 = vunpack.c.l.b16 %v439
  %v1532 = vunpack.c.l.b16 %v440
  %v1533 = vunpack.c.l.b16 %v441
  %v1534 = vunpack.c.l.b16 %v442
  %v1535 = vunpack.c.l.b16 %v443
  %v1536 = vunpack.c.l.b16 %v444
  %v1537 = vunpack.c.l.b16 %v445
  %v1538 = vunpack.c.l.b16 %v446
  %v1539 = vunpack.c.l.b16 %v447
  %v1540 = vunpack.c.l.b16 %v448
  %v1541 = vunpack.c.l.b16 %v449
  %v1542 = vunpack.c.l.b16 %v450
  %v1543 = vunpack.c.l.b16 %v451
  %v1544 = vunpack.c.l.b16 %v452
  %v1545 = vunpack.c.l.b16 %v453
  %v1546 = vunpack.c.l.b16 %v454
  %v1547 = vunpack.c.l.b16 %v455
  %v1548 = vunpack.c.l.b16 %v456
  %v1549 = vunpack.c.l.b16 %v457
  %v1550 = vunpack.c.l.b16 %v458
  %v1551 = vunpack.c.l.b16 %v459
  %v1552 = vunpack.c.l.b16 %v460
  %v1553 = vunpack.c.l.b16 %v461
  %v1554 = vunpack.c.l.b16 %v462
  %v1555 = vunpack.c.l.b16 %v463
  %v1556 = vunpack.c.l.b16 %v464
  %v1557 = vunpack.c.l.b16 %v465
  %v1558 = vunpack.c.l.b16 %v466
  %v1559 = vunpack.c.l.b16 %v467
  %v1560 = vunpack.c.l.b16 %v468
  %v1561 = vunpack.c.l.b16 %v469
  %v1562 = vunpack.c.l.b16 %v470
  %v1563 = vunpack.c.l.b16 %v471
  %v1564 = vunpack.c.l.b16 %v472
  %v1565 = vunpack.c.l.b16 %v473
  %v1566 = vunpack.c.l.b16 %v474
  %v1567 = vunpack.c.l.b16 %v475
  %v1568 = vunpack.c.l.b16 %v476
  %v1569 = vunpack.c.l.b16 %v477
  %v1570 = vunpack.c.l.b16 %v478
  %v1571 = vunpack.c.l.b16 %v479
  %v1572 = vunpack.c.l.b16 %v480
  %v1573 = vunpack.c.l.b16 %v481
  %v1574 = vunpack.c.l.b16 %v482
  %v1575 = vunpack.c.l.b16 %v483
  %v1576 = vunpack.c.l.b16 %v484
  %v1577 = vunpack.c.l.b16 %v485
  %v1578 = vunpack.c.l.b16 %v486
  %v1579 = vunpack.c.l.b16 %v487
  %v1580 = vunpack.c.l.b16 %v488
  %v1581 = vunpack.c.l.b16 %v489
  %v1582 = vunpack.c.l.b16 %v490
  %v1583 = vunpack.c.l.b16 %v491
  %v1584 = vunpack.c.l.b16 %v492
  %v1585 = vunpack.c.l.b16 %v493
  %v1586 = vunpack.c.l.b16 %v494
  %v1587 = vunpack.c.l.b16 %v495
  %v1588 = vunpack.c.l.b16 %v496
  %v1589 = vunpack.c.l.b16 %v497
  %v1590 = vunpack.c.l.b16 %v498
  %v1591 = vunpack.c.l.b16 %v499
  %v1592 = vunpack.c.l.b16 %v500
  %v1593 = vunpack.c.l.b16 %v501
  %v1594 = vunpack.c.l.b16 %v502
  %v1595 = vunpack.c.l.b16 %v503
  %v1596 = vunpack.c.l.b16 %v504
  %v1597 = vunpack.c.l.b16 %v505
  %v1598 = vunpack.c.l.b16 %v506
  %v1599 = vunpack.c.l.b16 %v507
  %v1600 = vunpack.c.l.b16 %v508
  %v1601 = vunpack.c.l.b16 %v509
  %v1602 = vunpack.c.l.b16 %v510
  %v1603 = vunpack.c.l.b16 %v511
  %v1604 = vunpack.c.l.b16 %v512
  %v1605 = vunpack.c.l.b16 %v513
  %v1606 = vunpack.c.l.b16 %v514
  %v1607 = vunpack.c.l.b16 %v515
  %v1608 = vunpack.c.l.b16 %v516
  %v1609 = vunpack.c.l.b16 %v517
  %v1610 = vunpack.c.l.b16 %v518
  %v1611 = vunpack.c.l.b16 %v519
  %v1612 = vunpack.c.l.b16 %v520
  %v1613 = vunpack.c.l.b16 %v521
  %v1614 = vunpack.c.l.b16 %v522
  %v1615 = vunpack.c.l.b16 %v523
  %v1616 = vunpack.c.l.b16 %v524
  %v1617 = vunpack.c.l.b16 %v525
  %v1618 = vunpack.c.l.b16 %v526
  %v1619 = vunpack.c.l.b16 %v527
  %v1620 = vunpack.c.l.b16 %v528
  %v1621 = vunpack.c.l.b16 %v529
  %v1622 = vunpack.c.l.b16 %v530
  %v1623 = vunpack.c.l.b16 %v531
  %v1624 = vunpack.c.l.b16 %v532
  %v1625 = vunpack.c.l.b16 %v533
  %v1626 = vunpack.c.l.b16 %v534
  %v1627 = vunpack.c.l.b16 %v535
  %v1628 = vunpack.c.l.b16 %v536
  %v1629 = vunpack.c.l.b16 %v537
  %v1630 = vunpack.c.l.b16 %v538
  %v1631 = vunpack.c.l.b16 %v539
  %v1632 = vunpack.c.l.b16 %v540
  %v1633 = vunpack.c.l.b16 %v541
  %v1634 = vunpack.c.l.b16 %v542
  %v1635 = vunpack.c.l.b16 %v543
  %v1636 = vunpack.c.l.b16 %v544
  %v1637 = vunpack.c.l.b16 %v545
  %v1638 = vunpack.c.l.b16 %v546
  %v1639 = vunpack.c.l.b16 %v547
  %v1640 = vunpack.c.l.b16 %v548
  %v1641 = vunpack.c.l.b16 %v549
  %v1642 = vunpack.c.l.b16 %v550
  %v1643 = vunpack.c.l.b16 %v551
  %v1644 = vunpack.c.l.b16 %v552
  %v1645 = vunpack.c.l.b16 %v553
  %v1646 = vunpack.c.l.b16 %v554
  %v1647 = vunpack.c.l.b16 %v555
  %v1648 = vunpack.c.l.b16 %v556
  %v1649 = vunpack.c.l.b16 %v557
  %v1650 = vunpack.c.l.b16 %v558
  %v1651 = vpack.c.b16 %v1108, %v1107
  %v1652 = vpack.c.b16 %v1110, %v1109
  %v1653 = vpack.c.b16 %v1112, %v1111
  %v1654 = vpack.c.b16 %v1114, %v1113
  %v1655 = vpack.c.b16 %v1116, %v1115
  %v1656 = vpack.c.b16 %v1118, %v1117
  %v1657 = vpack.c.b16 %v1120, %v1119
  %v1658 = vpack.c.b16 %v1122, %v1121
  %v1659 = vpack.c.b16 %v1124, %v1123
  %v1660 = vpack.c.b16 %v1126, %v1125
  %v1661 = vpack.c.b16 %v1128, %v1127
  %v1662 = vpack.c.b16 %v1130, %v1129
  %v1663 = vpack.c.b16 %v1132, %v1131
  %v1664 = vpack.c.b16 %v1134, %v1133
  %v1665 = vpack.c.b16 %v1136, %v1135
  %v1666 = vpack.c.b16 %v1138, %v1137
  %v1667 = vpack.c.b16 %v1140, %v1139
  %v1668 = vpack.c.b16 %v1142, %v1141
  %v1669 = vpack.c.b16 %v1144, %v1143
  %v1670 = vpack.c.b16 %v1146, %v1145
  %v1671 = vpack.c.b16 %v1148, %v1147
  %v1672 = vpack.c.b16 %v1150, %v1149
  %v1673 = vpack.c.b16 %v1152, %v1151
  %v1674 = vpack.c.b16 %v1154, %v1153
  %v1675 = vpack.c.b16 %v1156, %v1155
  %v1676 = vpack.c.b16 %v1158, %v1157
  %v1677 = vpack.c.b16 %v1160, %v1159
  %v1678 = vpack.c.b16 %v1162, %v1161
  %v1679 = vpack.c.b16 %v1164, %v1163
  %v1680 = vpack.c.b16 %v1166, %v1165
  %v1681 = vpack.c.b16 %v1168, %v1167
  %v1682 = vpack.c.b16 %v1170, %v1169
  %v1683 = vpack.c.b16 %v1172, %v1171
  %v1684 = vpack.c.b16 %v1174, %v1173
  %v1685 = vpack.c.b16 %v1176, %v1175
  %v1686 = vpack.c.b16 %v1178, %v1177
  %v1687 = vpack.c.b16 %v1180, %v1179
  %v1688 = vpack.c.b16 %v1182, %v1181
  %v1689 = vpack.c.b16 %v1184, %v1183
  %v1690 = vpack.c.b16 %v1186, %v1185
  %v1691 = vpack.c.b16 %v1188, %v1187
  %v1692 = vpack.c.b16 %v1190, %v1189
  %v1693 = vpack.c.b16 %v1192, %v1191
  %v1694 = vpack.c.b16 %v1194, %v1193
  %v1695 = vpack.c.b16 %v1196, %v1195
  %v1696 = vpack.c.b16 %v1198, %v1197
  %v1697 = vpack.c.b16 %v1200, %v1199
  %v1698 = vpack.c.b16 %v1202, %v1201
  %v1699 = vpack.c.b16 %v1204, %v1203
  %v1700 = vpack.c.b16 %v1206, %v1205
  %v1701 = vpack.c.b16 %v1208, %v1207
  %v1702 = vpack.c.b16 %v1210, %v1209
  %v1703 = vpack.c.b16 %v1212, %v1211
  %v1704 = vpack.c.b16 %v1214, %v1213
  %v1705 = vpack.c.b16 %v1216, %v1215
  %v1706 = vpack.c.b16 %v1218, %v1217
  %v1707 = vpack.c.b16 %v1220, %v1219
  %v1708 = vpack.c.b16 %v1222, %v1221
  %v1709 = vpack.c.b16 %v1224, %v1223
  %v1710 = vpack.c.b16 %v1226, %v1225
  %v1711 = vpack.c.b16 %v1228, %v1227
  %v1712 = vpack.c.b16 %v1230, %v1229
  %v1713 = vpack.c.b16 %v1232, %v1231
  %v1714 = vpack.c.b16 %v1234, %v1233
  %v1715 = vpack.c.b16 %v1236, %v1235
  %v1716 = vpack.c.b16 %v1238, %v1237
  %v1717 = vpack.c.b16 %v1240, %v1239
  %v1718 = vpack.c.b16 %v1242, %v1241
  %v1719 = vpack.c.b16 %v1244, %v1243
  %v1720 = vpack.c.b16 %v1246, %v1245
  %v1721 = vpack.c.b16 %v1248, %v1247
  %v1722 = vpack.c.b16 %v1250, %v1249
  %v1723 = vpack.c.b16 %v1252, %v1251
  %v1724 = vpack.c.b16 %v1254, %v1253
  %v1725 = vpack.c.b16 %v1256, %v1255
  %v1726 = vpack.c.b16 %v1258, %v1257
  %v1727 = vpack.c.b16 %v1260, %v1259
  %v1728 = vpack.c.b16 %v1262, %v1261
  %v1729 = vpack.c.b16 %v1264, %v1263
  %v1730 = vpack.c.b16 %v1266, %v1265
  %v1731 = vpack.c.b16 %v1268, %v1267
  %v1732 = vpack.c.b16 %v1270, %v1269
  %v1733 = vpack.c.b16 %v1272, %v1271
  %v1734 = vpack.c.b16 %v1274, %v1273
  %v1735 = vpack.c.b16 %v1276, %v1275
  %v1736 = vpack.c.b16 %v1278, %v1277
  %v1737 = vpack.c.b16 %v1280, %v1279
  %v1738 = vpack.c.b16 %v1282, %v1281
  %v1739 = vpack.c.b16 %v1284, %v1283
  %v1740 = vpack.c.b16 %v1286, %v1285
  %v1741 = vpack.c.b16 %v1288, %v1287
  %v1742 = vpack.c.b16 %v1290, %v1289
  %v1743 = vpack.c.b16 %v1292, %v1291
  %v1744 = vpack.c.b16 %v1294, %v1293
  %v1745 = vpack.c.b16 %v1296, %v1295
  %v1746 = vpack.c.b16 %v1298, %v1297
  %v1747 = vpack.c.b16 %v1300, %v1299
  %v1748 = vpack.c.b16 %v1302, %v1301
  %v1749 = vpack.c.b16 %v1304, %v1303
  %v1750 = vpack.c.b16 %v1306, %v1305
  %v1751 = vpack.c.b16 %v1308, %v1307
  %v1752 = vpack.c.b16 %v1310, %v1309
  %v1753 = vpack.c.b16 %v1312, %v1311
  %v1754 = vpack.c.b16 %v1314, %v1313
  %v1755 = vpack.c.b16 %v1316, %v1315
  %v1756 = vpack.c.b16 %v1318, %v1317
  %v1757 = vpack.c.b16 %v1320, %v1319
  %v1758 = vpack.c.b16 %v1322, %v1321
  %v1759 = vpack.c.b16 %v1324, %v1323
  %v1760 = vpack.c.b16 %v1326, %v1325
  %v1761 = vpack.c.b16 %v1328, %v1327
  %v1762 = vpack.c.b16 %v1330, %v1329
  %v1763 = vpack.c.b16 %v1332, %v1331
  %v1764 = vpack.c.b16 %v1334, %v1333
  %v1765 = vpack.c.b16 %v1336, %v1335
  %v1766 = vpack.c.b16 %v1338, %v1337
  %v1767 = vpack.c.b16 %v1340, %v1339
  %v1768 = vpack.c.b16 %v1342, %v1341
  %v1769 = vpack.c.b16 %v1344, %v1343
  %v1770 = vpack.c.b16 %v1346, %v1345
  %v1771 = vpack.c.b16 %v1348, %v1347
  %v1772 = vpack.c.b16 %v1350, %v1349
  %v1773 = vpack.c.b16 %v1352, %v1351
  %v1774 = vpack.c.b16 %v1354, %v1353
  %v1775 = vpack.c.b16 %v1356, %v1355
  %v1776 = vpack.c.b16 %v1358, %v1357
  %v1777 = vpack.c.b16 %v1360, %v1359
  %v1778 = vpack.c.b16 %v1362, %v1361
  %v1779 = vpack.c.b16 %v1364, %v1363
  %v1780 = vpack.c.b16 %v1366, %v1365
  %v1781 = vpack.c.b16 %v1368, %v1367
  %v1782 = vpack.c.b16 %v1370, %v1369
  %v1783 = vpack.c.b16 %v1372, %v1371
  %v1784 = vpack.c.b16 %v1374, %v1373
  %v1785 = vpack.c.b16 %v1376, %v1375
  %v1786 = vpack.c.b16 %v1378, %v1377
  %v1787 = vpack.c.b16 %v1380, %v1379
  %v1788 = vpack.c.b16 %v1382, %v1381
  %v1789 = vpack.c.b16 %v1384, %v1383
  %v1790 = vpack.c.b16 %v1386, %v1385
  %v1791 = vpack.c.b16 %v1388, %v1387
  %v1792 = vpack.c.b16 %v1390, %v1389
  %v1793 = vpack.c.b16 %v1392, %v1391
  %v1794 = vpack.c.b16 %v1394, %v1393
  %v1795 = vpack.c.b16 %v1396, %v1395
  %v1796 = vpack.c.b16 %v1398, %v1397
  %v1797 = vpack.c.b16 %v1400, %v1399
  %v1798 = vpack.c.b16 %v1402, %v1401
  %v1799 = vpack.c.b16 %v1404, %v1403
  %v1800 = vpack.c.b16 %v1406, %v1405
  %v1801 = vpack.c.b16 %v1408, %v1407
  %v1802 = vpack.c.b16 %v1410, %v1409
  %v1803 = vpack.c.b16 %v1412, %v1411
  %v1804 = vpack.c.b16 %v1414, %v1413
  %v1805 = vpack.c.b16 %v1416, %v1415
  %v1806 = vpack.c.b16 %v1418, %v1417
  %v1807 = vpack.c.b16 %v1420, %v1419
  %v1808 = vpack.c.b16 %v1422, %v1421
  %v1809 = vpack.c.b16 %v1424, %v1423
  %v1810 = vpack.c.b16 %v1426, %v1425
  %v1811 = vpack.c.b16 %v1428, %v1427
  %v1812 = vpack.c.b16 %v1430, %v1429
  %v1813 = vpack.c.b16 %v1432, %v1431
  %v1814 = vpack.c.b16 %v1434, %v1433
  %v1815 = vpack.c.b16 %v1436, %v1435
  %v1816 = vpack.c.b16 %v1438, %v1437
  %v1817 = vpack.c.b16 %v1440, %v1439
  %v1818 = vpack.c.b16 %v1442, %v1441
  %v1819 = vpack.c.b16 %v1444, %v1443
  %v1820 = vpack.c.b16 %v1446, %v1445
  %v1821 = vpack.c.b16 %v1448, %v1447
  %v1822 = vpack.c.b16 %v1450, %v1449
  %v1823 = vpack.c.b16 %v1452, %v1451
  %v1824 = vpack.c.b16 %v1454, %v1453
  %v1825 = vpack.c.b16 %v1456, %v1455
  %v1826 = vpack.c.b16 %v1458, %v1457
  %v1827 = vpack.c.b16 %v1460, %v1459
  %v1828 = vpack.c.b16 %v1462, %v1461
  %v1829 = vpack.c.b16 %v1464, %v1463
  %v1830 = vpack.c.b16 %v1466, %v1465
  %v1831 = vpack.c.b16 %v1468, %v1467
  %v1832 = vpack.c.b16 %v1470, %v1469
  %v1833 = vpack.c.b16 %v1472, %v1471
  %v1834 = vpack.c.b16 %v1474, %v1473
  %v1835 = vpack.c.b16 %v1476, %v1475
  %v1836 = vpack.c.b16 %v1478, %v1477
  %v1837 = vpack.c.b16 %v1480, %v1479
  %v1838 = vpack.c.b16 %v1482, %v1481
  %v1839 = vpack.c.b16 %v1484, %v1483
  %v1840 = vpack.c.b16 %v1486, %v1485
  %v1841 = vpack.c.b16 %v1488, %v1487
  %v1842 = vpack.c.b16 %v1490, %v1489
  %v1843 = vpack.c.b16 %v1492, %v1491
  %v1844 = vpack.c.b16 %v1494, %v1493
  %v1845 = vpack.c.b16 %v1496, %v1495
  %v1846 = vpack.c.b16 %v1498, %v1497
  %v1847 = vpack.c.b16 %v1500, %v1499
  %v1848 = vpack.c.b16 %v1502, %v1501
  %v1849 = vpack.c.b16 %v1504, %v1503
  %v1850 = vpack.c.b16 %v1506, %v1505
  %v1851 = vpack.c.b16 %v1508, %v1507
  %v1852 = vpack.c.b16 %v1510, %v1509
  %v1853 = vpack.c.b16 %v1512, %v1511
  %v1854 = vpack.c.b16 %v1514, %v1513
  %v1855 = vpack.c.b16 %v1516, %v1515
  %v1856 = vpack.c.b16 %v1518, %v1517
  %v1857 = vpack.c.b16 %v1520, %v1519
  %v1858 = vpack.c.b16 %v1522, %v1521
  %v1859 = vpack.c.b16 %v1524, %v1523
  %v1860 = vpack.c.b16 %v1526, %v1525
  %v1861 = vpack.c.b16 %v1528, %v1527
  %v1862 = vpack.c.b16 %v1530, %v1529
  %v1863 = vpack.c.b16 %v1532, %v1531
  %v1864 = vpack.c.b16 %v1534, %v1533
  %v1865 = vpack.c.b16 %v1536, %v1535
  %v1866 = vpack.c.b16 %v1538, %v1537
  %v1867 = vpack.c.b16 %v1540, %v1539
  %v1868 = vpack.c.b16 %v1542, %v1541
  %v1869 = vpack.c.b16 %v1544, %v1543
  %v1870 = vpack.c.b16 %v1546, %v1545
  %v1871 = vpack.c.b16 %v1548, %v1547
  %v1872 = vpack.c.b16 %v1550, %v1549
  %v1873 = vpack.c.b16 %v1552, %v1551
  %v1874 = vpack.c.b16 %v1554, %v1553
  %v1875 = vpack.c.b16 %v1556, %v1555
  %v1876 = vpack.c.b16 %v1558, %v1557
  %v1877 = vpack.c.b16 %v1560, %v1559
  %v1878 = vpack.c.b16 %v1562, %v1561
  %v1879 = vpack.c.b16 %v1564, %v1563
  %v1880 = vpack.c.b16 %v1566, %v1565
  %v1881 = vpack.c.b16 %v1568, %v1567
  %v1882 = vpack.c.b16 %v1570, %v1569
  %v1883 = vpack.c.b16 %v1572, %v1571
  %v1884 = vpack.c.b16 %v1574, %v1573
  %v1885 = vpack.c.b16 %v1576, %v1575
  %v1886 = vpack.c.b16 %v1578, %v1577
  %v1887 = vpack.c.b16 %v1580, %v1579
  %v1888 = vpack.c.b16 %v1582, %v1581
  %v1889 = vpack.c.b16 %v1584, %v1583
  %v1890 = vpack.c.b16 %v1586, %v1585
  %v1891 = vpack.c.b16 %v1588, %v1587
  %v1892 = vpack.c.b16 %v1590, %v1589
  %v1893 = vpack.c.b16 %v1592, %v1591
  %v1894 = vpack.c.b16 %v1594, %v1593
  %v1895 = vpack.c.b16 %v1596, %v1595
  %v1896 = vpack.c.b16 %v1598, %v1597
  %v1897 = vpack.c.b16 %v1600, %v1599
  %v1898 = vpack.c.b16 %v1602, %v1601
  %v1899 = vpack.c.b16 %v1604, %v1603
  %v1900 = vpack.c.b16 %v1606, %v1605
  %v1901 = vpack.c.b16 %v1608, %v1607
  %v1902 = vpack.c.b16 %v1610, %v1609
  %v1903 = vpack.c.b16 %v1612, %v1611
  %v1904 = vpack.c.b16 %v1614, %v1613
  %v1905 = vpack.c.b16 %v1616, %v1615
  %v1906 = vpack.c.b16 %v1618, %v1617
  %v1907 = vpack.c.b16 %v1620, %v1619
  %v1908 = vpack.c.b16 %v1622, %v1621
  %v1909 = vpack.c.b16 %v1624, %v1623
  %v1910 = vpack.c.b16 %v1626, %v1625
  %v1911 = vpack.c.b16 %v1628, %v1627
  %v1912 = vpack.c.b16 %v1630, %v1629
  %v1913 = vpack.c.b16 %v1632, %v1631
  %v1914 = vpack.c.b16 %v1634, %v1633
  %v1915 = vpack.c.b16 %v1636, %v1635
  %v1916 = vpack.c.b16 %v1638, %v1637
  %v1917 = vpack.c.b16 %v1640, %v1639
  %v1918 = vpack.c.b16 %v1642, %v1641
  %v1919 = vpack.c.b16 %v1644, %v1643
  %v1920 = vpack.c.b16 %v1646, %v1645
  %v1921 = vpack.c.b16 %v1648, %v1647
  %v1922 = vpack.c.b16 %v1650, %v1649
  %v1927 = vunpack.c.l.b16 %v559
  %v1928 = vunpack.c.l.b16 %v560
  %v1929 = vunpack.c.l.b16 %v561
  %v1930 = vunpack.c.l.b16 %v562
  %v1931 = vpack.c.b16 %v1928, %v1927
  %v1932 = vpack.c.b16 %v1930, %v1929
  %vm1934 = vcmask 203776
  %v1936 = vsel %vm1934, %v1651, 0
  %v1939 = vsel %vm1934, %v1652, 0
  %v1942 = vsel %vm1934, %v1653, 0
  %v1945 = vsel %vm1934, %v1654, 0
  %v1948 = vsel %vm1934, %v1655, 0
  %v1951 = vsel %vm1934, %v1656, 0
  %v1954 = vsel %vm1934, %v1657, 0
  %v1957 = vsel %vm1934, %v1658, 0
  %v1960 = vsel %vm1934, %v1659, 0
  %v1963 = vsel %vm1934, %v1660, 0
  %v1966 = vsel %vm1934, %v1661, 0
  %v1969 = vsel %vm1934, %v1662, 0
  %v1972 = vsel %vm1934, %v1663, 0
  %v1975 = vsel %vm1934, %v1664, 0
  %v1978 = vsel %vm1934, %v1665, 0
  %v1981 = vsel %vm1934, %v1666, 0
  %v1984 = vsel %vm1934, %v1667, 0
  %v1987 = vsel %vm1934, %v1668, 0
  %v1990 = vsel %vm1934, %v1669, 0
  %v1993 = vsel %vm1934, %v1670, 0
  %v1996 = vsel %vm1934, %v1671, 0
  %v1999 = vsel %vm1934, %v1672, 0
  %v2002 = vsel %vm1934, %v1673, 0
  %v2005 = vsel %vm1934, %v1674, 0
  %v2008 = vsel %vm1934, %v1675, 0
  %v2011 = vsel %vm1934, %v1676, 0
  %v2014 = vsel %vm1934, %v1677, 0
  %v2017 = vsel %vm1934, %v1678, 0
  %v2020 = vsel %vm1934, %v1679, 0
  %v2023 = vsel %vm1934, %v1680, 0
  %v2026 = vsel %vm1934, %v1681, 0
  %v2029 = vsel %vm1934, %v1682, 0
  %v2032 = vsel %vm1934, %v1683, 0
  %v2035 = vsel %vm1934, %v1684, 0
  %v2038 = vsel %vm1934, %v1685, 0
  %v2041 = vsel %vm1934, %v1686, 0
  %v2044 = vsel %vm1934, %v1687, 0
  %v2047 = vsel %vm1934, %v1688, 0
  %v2050 = vsel %vm1934, %v1689, 0
  %v2053 = vsel %vm1934, %v1690, 0
  %v2056 = vsel %vm1934, %v1691, 0
  %v2059 = vsel %vm1934, %v1692, 0
  %v2062 = vsel %vm1934, %v1693, 0
  %v2065 = vsel %vm1934, %v1694, 0
  %v2068 = vsel %vm1934, %v1695, 0
  %v2071 = vsel %vm1934, %v1696, 0
  %v2074 = vsel %vm1934, %v1697, 0
  %v2077 = vsel %vm1934, %v1698, 0
  %v2080 = vsel %vm1934, %v1699, 0
  %v2083 = vsel %vm1934, %v1700, 0
  %v2086 = vsel %vm1934, %v1701, 0
  %v2089 = vsel %vm1934, %v1702, 0
  %v2092 = vsel %vm1934, %v1703, 0
  %v2095 = vsel %vm1934, %v1704, 0
  %v2098 = vsel %vm1934, %v1705, 0
  %v2101 = vsel %vm1934, %v1706, 0
  %v2104 = vsel %vm1934, %v1707, 0
  %v2107 = vsel %vm1934, %v1708, 0
  %v2110 = vsel %vm1934, %v1709, 0
  %v2113 = vsel %vm1934, %v1710, 0
  %v2116 = vsel %vm1934, %v1711, 0
  %v2119 = vsel %vm1934, %v1712, 0
  %v2122 = vsel %vm1934, %v1713, 0
  %v2125 = vsel %vm1934, %v1714, 0
  %v2128 = vsel %vm1934, %v1715, 0
  %v2131 = vsel %vm1934, %v1716, 0
  %v2134 = vsel %vm1934, %v1717, 0
  %v2137 = vsel %vm1934, %v1718, 0
  %v2140 = vsel %vm1934, %v1719, 0
  %v2143 = vsel %vm1934, %v1720, 0
  %v2146 = vsel %vm1934, %v1721, 0
  %v2149 = vsel %vm1934, %v1722, 0
  %v2152 = vsel %vm1934, %v1723, 0
  %v2155 = vsel %vm1934, %v1724, 0
  %v2158 = vsel %vm1934, %v1725, 0
  %v2161 = vsel %vm1934, %v1726, 0
  %v2164 = vsel %vm1934, %v1727, 0
  %v2167 = vsel %vm1934, %v1728, 0
  %v2170 = vsel %vm1934, %v1729, 0
  %v2173 = vsel %vm1934, %v1730, 0
  %v2176 = vsel %vm1934, %v1731, 0
  %v2179 = vsel %vm1934, %v1732, 0
  %v2182 = vsel %vm1934, %v1733, 0
  %v2185 = vsel %vm1934, %v1734, 0
  %v2188 = vsel %vm1934, %v1735, 0
  %v2191 = vsel %vm1934, %v1736, 0
  %v2194 = vsel %vm1934, %v1737, 0
  %v2197 = vsel %vm1934, %v1738, 0
  %v2200 = vsel %vm1934, %v1739, 0
  %v2203 = vsel %vm1934, %v1740, 0
  %v2206 = vsel %vm1934, %v1741, 0
  %v2209 = vsel %vm1934, %v1742, 0
  %v2212 = vsel %vm1934, %v1743, 0
  %v2215 = vsel %vm1934, %v1744, 0
  %v2218 = vsel %vm1934, %v1745, 0
  %v2221 = vsel %vm1934, %v1746, 0
  %v2224 = vsel %vm1934, %v1747, 0
  %v2227 = vsel %vm1934, %v1748, 0
  %v2230 = vsel %vm1934, %v1749, 0
  %v2233 = vsel %vm1934, %v1750, 0
  %v2236 = vsel %vm1934, %v1751, 0
  %v2239 = vsel %vm1934, %v1752, 0
  %v2242 = vsel %vm1934, %v1753, 0
  %v2245 = vsel %vm1934, %v1754, 0
  %v2248 = vsel %vm1934, %v1755, 0
  %v2251 = vsel %vm1934, %v1756, 0
  %v2254 = vsel %vm1934, %v1757, 0
  %v2257 = vsel %vm1934, %v1758, 0
  %v2260 = vsel %vm1934, %v1759, 0
  %v2263 = vsel %vm1934, %v1760, 0
  %v2266 = vsel %vm1934, %v1761, 0
  %v2269 = vsel %vm1934, %v1762, 0
  %v2272 = vsel %vm1934, %v1763, 0
  %v2275 = vsel %vm1934, %v1764, 0
  %v2278 = vsel %vm1934, %v1765, 0
  %v2281 = vsel %vm1934, %v1766, 0
  %v2284 = vsel %vm1934, %v1767, 0
  %v2287 = vsel %vm1934, %v1768, 0
  %v2290 = vsel %vm1934, %v1769, 0
  %v2293 = vsel %vm1934, %v1770, 0
  %v2296 = vsel %vm1934, %v1771, 0
  %v2299 = vsel %vm1934, %v1772, 0
  %v2302 = vsel %vm1934, %v1773, 0
  %v2305 = vsel %vm1934, %v1774, 0
  %v2308 = vsel %vm1934, %v1775, 0
  %v2311 = vsel %vm1934, %v1776, 0
  %v2314 = vsel %vm1934, %v1777, 0
  %v2317 = vsel %vm1934, %v1778, 0
  %v2320 = vsel %vm1934, %v1779, 0
  %v2323 = vsel %vm1934, %v1780, 0
  %v2326 = vsel %vm1934, %v1781, 0
  %v2329 = vsel %vm1934, %v1782, 0
  %v2332 = vsel %vm1934, %v1783, 0
  %v2335 = vsel %vm1934, %v1784, 0
  %v2338 = vsel %vm1934, %v1785, 0
  %v2341 = vsel %vm1934, %v1786, 0
  %v2344 = vsel %vm1934, %v1787, 0
  %v2347 = vsel %vm1934, %v1788, 0
  %v2350 = vsel %vm1934, %v1789, 0
  %v2353 = vsel %vm1934, %v1790, 0
  %v2356 = vsel %vm1934, %v1791, 0
  %v2359 = vsel %vm1934, %v1792, 0
  %v2362 = vsel %vm1934, %v1793, 0
  %v2365 = vsel %vm1934, %v1794, 0
  %v2368 = vsel %vm1934, %v1795, 0
  %v2371 = vsel %vm1934, %v1796, 0
  %v2374 = vsel %vm1934, %v1797, 0
  %v2377 = vsel %vm1934, %v1798, 0
  %v2380 = vsel %vm1934, %v1799, 0
  %v2383 = vsel %vm1934, %v1800, 0
  %v2386 = vsel %vm1934, %v1801, 0
  %v2389 = vsel %vm1934, %v1802, 0
  %v2392 = vsel %vm1934, %v1803, 0
  %v2395 = vsel %vm1934, %v1804, 0
  %v2398 = vsel %vm1934, %v1805, 0
  %v2401 = vsel %vm1934, %v1806, 0
  %v2404 = vsel %vm1934, %v1807, 0
  %v2407 = vsel %vm1934, %v1808, 0
  %v2410 = vsel %vm1934, %v1809, 0
  %v2413 = vsel %vm1934, %v1810, 0
  %v2416 = vsel %vm1934, %v1811, 0
  %v2419 = vsel %vm1934, %v1812, 0
  %v2422 = vsel %vm1934, %v1813, 0
  %v2425 = vsel %vm1934, %v1814, 0
  %v2428 = vsel %vm1934, %v1815, 0
  %v2431 = vsel %vm1934, %v1816, 0
  %v2434 = vsel %vm1934, %v1817, 0
  %v2437 = vsel %vm1934, %v1818, 0
  %v2440 = vsel %vm1934, %v1819, 0
  %v2443 = vsel %vm1934, %v1820, 0
  %v2446 = vsel %vm1934, %v1821, 0
  %v2449 = vsel %vm1934, %v1822, 0
  %v2452 = vsel %vm1934, %v1823, 0
  %v2455 = vsel %vm1934, %v1824, 0
  %v2458 = vsel %vm1934, %v1825, 0
  %v2461 = vsel %vm1934, %v1826, 0
  %v2464 = vsel %vm1934, %v1827, 0
  %v2467 = vsel %vm1934, %v1828, 0
  %v2470 = vsel %vm1934, %v1829, 0
  %v2473 = vsel %vm1934, %v1830, 0
  %v2476 = vsel %vm1934, %v1831, 0
  %v2479 = vsel %vm1934, %v1832, 0
  %v2482 = vsel %vm1934, %v1833, 0
  %v2485 = vsel %vm1934, %v1834, 0
  %v2488 = vsel %vm1934, %v1835, 0
  %v2491 = vsel %vm1934, %v1836, 0
  %v2494 = vsel %vm1934, %v1837, 0
  %v2497 = vsel %vm1934, %v1838, 0
  %v2500 = vsel %vm1934, %v1839, 0
  %v2503 = vsel %vm1934, %v1840, 0
  %v2506 = vsel %vm1934, %v1841, 0
  %v2509 = vsel %vm1934, %v1842, 0
  %v2512 = vsel %vm1934, %v1843, 0
  %v2515 = vsel %vm1934, %v1844, 0
  %v2518 = vsel %vm1934, %v1845, 0
  %v2521 = vsel %vm1934, %v1846, 0
  %v2524 = vsel %vm1934, %v1847, 0
  %v2527 = vsel %vm1934, %v1848, 0
  %v2530 = vsel %vm1934, %v1849, 0
  %v2533 = vsel %vm1934, %v1850, 0
  %v2536 = vsel %vm1934, %v1851, 0
  %v2539 = vsel %vm1934, %v1852, 0
  %v2542 = vsel %vm1934, %v1853, 0
  %v2545 = vsel %vm1934, %v1854, 0
  %v2548 = vsel %vm1934, %v1855, 0
  %v2551 = vsel %vm1934, %v1856, 0
  %v2554 = vsel %vm1934, %v1857, 0
  %v2557 = vsel %vm1934, %v1858, 0
  %v2560 = vsel %vm1934, %v1859, 0
  %v2563 = vsel %vm1934, %v1860, 0
  %v2566 = vsel %vm1934, %v1861, 0
  %v2569 = vsel %vm1934, %v1862, 0
  %v2572 = vsel %vm1934, %v1863, 0
  %v2575 = vsel %vm1934, %v1864, 0
  %v2578 = vsel %vm1934, %v1865, 0
  %v2581 = vsel %vm1934, %v1866, 0
  %v2584 = vsel %vm1934, %v1867, 0
  %v2587 = vsel %vm1934, %v1868, 0
  %v2590 = vsel %vm1934, %v1869, 0
  %v2593 = vsel %vm1934, %v1870, 0
  %v2596 = vsel %vm1934, %v1871, 0
  %v2599 = vsel %vm1934, %v1872, 0
  %v2602 = vsel %vm1934, %v1873, 0
  %v2605 = vsel %vm1934, %v1874, 0
  %v2608 = vsel %vm1934, %v1875, 0
  %v2611 = vsel %vm1934, %v1876, 0
  %v2614 = vsel %vm1934, %v1877, 0
  %v2617 = vsel %vm1934, %v1878, 0
  %v2620 = vsel %vm1934, %v1879, 0
  %v2623 = vsel %vm1934, %v1880, 0
  %v2626 = vsel %vm1934, %v1881, 0
  %v2629 = vsel %vm1934, %v1882, 0
  %v2632 = vsel %vm1934, %v1883, 0
  %v2635 = vsel %vm1934, %v1884, 0
  %v2638 = vsel %vm1934, %v1885, 0
  %v2641 = vsel %vm1934, %v1886, 0
  %v2644 = vsel %vm1934, %v1887, 0
  %v2647 = vsel %vm1934, %v1888, 0
  %v2650 = vsel %vm1934, %v1889, 0
  %v2653 = vsel %vm1934, %v1890, 0
  %v2656 = vsel %vm1934, %v1891, 0
  %v2659 = vsel %vm1934, %v1892, 0
  %v2662 = vsel %vm1934, %v1893, 0
  %v2665 = vsel %vm1934, %v1894, 0
  %v2668 = vsel %vm1934, %v1895, 0
  %v2671 = vsel %vm1934, %v1896, 0
  %v2674 = vsel %vm1934, %v1897, 0
  %v2677 = vsel %vm1934, %v1898, 0
  %v2680 = vsel %vm1934, %v1899, 0
  %v2683 = vsel %vm1934, %v1900, 0
  %v2686 = vsel %vm1934, %v1901, 0
  %v2689 = vsel %vm1934, %v1902, 0
  %v2692 = vsel %vm1934, %v1903, 0
  %v2695 = vsel %vm1934, %v1904, 0
  %v2698 = vsel %vm1934, %v1905, 0
  %v2701 = vsel %vm1934, %v1906, 0
  %v2704 = vsel %vm1934, %v1907, 0
  %v2707 = vsel %vm1934, %v1908, 0
  %v2710 = vsel %vm1934, %v1909, 0
  %v2713 = vsel %vm1934, %v1910, 0
  %v2716 = vsel %vm1934, %v1911, 0
  %v2719 = vsel %vm1934, %v1912, 0
  %v2722 = vsel %vm1934, %v1913, 0
  %v2725 = vsel %vm1934, %v1914, 0
  %v2728 = vsel %vm1934, %v1915, 0
  %v2731 = vsel %vm1934, %v1916, 0
  %v2734 = vsel %vm1934, %v1917, 0
  %v2737 = vsel %vm1934, %v1918, 0
  %v2740 = vsel %vm1934, %v1919, 0
  %v2743 = vsel %vm1934, %v1920, 0
  %v2746 = vsel %vm1934, %v1921, 0
  %v2749 = vsel %vm1934, %v1922, 0
  %vm2751 = vcmask 1043456
  %vm2752 = vcmask 1044480
  %v2753 = vsel %vm2751, 4294967295, 65535
  %v2754 = vsel %vm2752, %v2753, 0
  %v2756 = vand.u32 %v1932, %v2754
  %2758 = vmatprep.subr.bf16.mxu0 0
  %2759 = vmatpush1.bf16.msra.mxu0 %v1931
  %2760 = vmatprep.subr.bf16.mxu0 0
  %2761 = vmatpush1.bf16.msra.mxu0 %v2756
  %2762 = vmatprep.subr.bf16.mxu0 0
  %2763 = vmatpush1.bf16.msra.mxu0 0
  %2764 = vmatprep.subr.bf16.mxu0 0
  %2765 = vmatpush1.bf16.msra.mxu0 0
  %2766 = vmatprep.subr.bf16.mxu0 0
  %2767 = vmatpush1.bf16.msra.mxu0 0
  %2768 = vmatprep.subr.bf16.mxu0 0
  %2769 = vmatpush1.bf16.msra.mxu0 0
  %2770 = vmatprep.subr.bf16.mxu0 0
  %2771 = vmatpush1.bf16.msra.mxu0 0
  %2772 = vmatprep.subr.bf16.mxu0 0
  %2773 = vmatpush1.bf16.msra.mxu0 0
  %2774 = vmatprep.subr.bf16.mxu0 0
  %2775 = vmatpush1.bf16.msra.mxu0 0
  %2776 = vmatprep.subr.bf16.mxu0 0
  %2777 = vmatpush1.bf16.msra.mxu0 0
  %2778 = vmatprep.subr.bf16.mxu0 0
  %2779 = vmatpush1.bf16.msra.mxu0 0
  %2780 = vmatprep.subr.bf16.mxu0 0
  %2781 = vmatpush1.bf16.msra.mxu0 0
  %2782 = vmatprep.subr.bf16.mxu0 0
  %2783 = vmatpush1.bf16.msra.mxu0 0
  %2784 = vmatprep.subr.bf16.mxu0 0
  %2785 = vmatpush1.bf16.msra.mxu0 0
  %2786 = vmatprep.subr.bf16.mxu0 0
  %2787 = vmatpush1.bf16.msra.mxu0 0
  %2788 = vmatprep.subr.bf16.mxu0 0
  %2789 = vmatpush1.bf16.msra.mxu0 0
  %2790 = vmatprep.mubr.bf16.mxu0 0
  %2791 = vmatmul.mubr.bf16.gmra.mrb[0].mxu0 %v1936
  %v2792 = vpop.f32.mrb[0].mxu0
  %v2793 = vadd.f32 0.0, %v2792
  %v2794 = vpop.f32.mrb[0].mxu0
  %v2795 = vpop.f32.mrb[0].mxu0
  %v2796 = vadd.f32 0.0, %v2795
  %v2797 = vpop.f32.mrb[0].mxu0
  %2798 = vmatprep.mubr.bf16.mxu0 0
  %2799 = vmatmul.mubr.bf16.gmra.mrb[0].mxu0 %v1939
  %v2800 = vpop.f32.mrb[0].mxu0
  %v2801 = vadd.f32 0.0, %v2800
  %v2802 = vpop.f32.mrb[0].mxu0
  %v2803 = vpop.f32.mrb[0].mxu0
  %v2804 = vadd.f32 0.0, %v2803
  %v2805 = vpop.f32.mrb[0].mxu0
  %2806 = vmatprep.mubr.bf16.mxu0 0
  %2807 = vmatmul.mubr.bf16.gmra.mrb[0].mxu0 %v1942
  %v2808 = vpop.f32.mrb[0].mxu0
  %v2809 = vadd.f32 0.0, %v2808
  %v2810 = vpop.f32.mrb[0].mxu0
  %v2811 = vpop.f32.mrb[0].mxu0
  %v2812 = vadd.f32 0.0, %v2811
  %v2813 = vpop.f32.mrb[0].mxu0
  %2814 = vmatprep.mubr.bf16.mxu0 0
  %2815 = vmatmul.mubr.bf16.gmra.mrb[0].mxu0 %v1945
  %v2816 = vpop.f32.mrb[0].mxu0
  %v2817 = vadd.f32 0.0, %v2816
  %v2818 = vpop.f32.mrb[0].mxu0
  %v2819 = vpop.f32.mrb[0].mxu0
  %v2820 = vadd.f32 0.0, %v2819
  %v2821 = vpop.f32.mrb[0].mxu0
  %2822 = vmatprep.mubr.bf16.mxu0 0
  %2823 = vmatmul.mubr.bf16.gmra.mrb[0].mxu0 %v1948
  %v2824 = vpop.f32.mrb[0].mxu0
  %v2825 = vadd.f32 0.0, %v2824
  %v2826 = vpop.f32.mrb[0].mxu0
  %v2827 = vpop.f32.mrb[0].mxu0
  %v2828 = vadd.f32 0.0, %v2827
  %v2829 = vpop.f32.mrb[0].mxu0
  %2830 = vmatprep.mubr.bf16.mxu0 0
  %2831 = vmatmul.mubr.bf16.gmra.mrb[0].mxu0 %v1951
  %v2832 = vpop.f32.mrb[0].mxu0
  %v2833 = vadd.f32 0.0, %v2832
  %v2834 = vpop.f32.mrb[0].mxu0
  %v2835 = vpop.f32.mrb[0].mxu0
  %v2836 = vadd.f32 0.0, %v2835
  %v2837 = vpop.f32.mrb[0].mxu0
  %2838 = vmatprep.mubr.bf16.mxu0 0
  %2839 = vmatmul.mubr.bf16.gmra.mrb[0].mxu0 %v1954
  %v2840 = vpop.f32.mrb[0].mxu0
  %v2841 = vadd.f32 0.0, %v2840
  %v2842 = vpop.f32.mrb[0].mxu0
  %v2843 = vpop.f32.mrb[0].mxu0
  %v2844 = vadd.f32 0.0, %v2843
  %v2845 = vpop.f32.mrb[0].mxu0
  %2846 = vmatprep.mubr.bf16.mxu0 0
  %2847 = vmatmul.mubr.bf16.gmra.mrb[0].mxu0 %v1957
  %v2848 = vpop.f32.mrb[0].mxu0
  %v2849 = vadd.f32 0.0, %v2848
  %v2850 = vpop.f32.mrb[0].mxu0
  %v2851 = vpop.f32.mrb[0].mxu0
  %v2852 = vadd.f32 0.0, %v2851
  %v2853 = vpop.f32.mrb[0].mxu0
  %2854 = vmatprep.mubr.bf16.mxu0 0
  %2855 = vmatmul.mubr.bf16.gmra.mrb[0].mxu0 %v1960
  %v2856 = vpop.f32.mrb[0].mxu0
  %v2857 = vadd.f32 0.0, %v2856
  %v2858 = vpop.f32.mrb[0].mxu0
  %v2859 = vpop.f32.mrb[0].mxu0
  %v2860 = vadd.f32 0.0, %v2859
  %v2861 = vpop.f32.mrb[0].mxu0
  %2862 = vmatprep.mubr.bf16.mxu0 0
  %2863 = vmatmul.mubr.bf16.gmra.mrb[0].mxu0 %v1963
  %v2864 = vpop.f32.mrb[0].mxu0
  %v2865 = vadd.f32 0.0, %v2864
  %v2866 = vpop.f32.mrb[0].mxu0
  %v2867 = vpop.f32.mrb[0].mxu0
  %v2868 = vadd.f32 0.0, %v2867
  %v2869 = vpop.f32.mrb[0].mxu0
  %2870 = vmatprep.mubr.bf16.mxu0 0
  %2871 = vmatmul.mubr.bf16.gmra.mrb[0].mxu0 %v1966
  %v2872 = vpop.f32.mrb[0].mxu0
  %v2873 = vadd.f32 0.0, %v2872
  %v2874 = vpop.f32.mrb[0].mxu0
  %v2875 = vpop.f32.mrb[0].mxu0
  %v2876 = vadd.f32 0.0, %v2875
  %v2877 = vpop.f32.mrb[0].mxu0
  %2878 = vmatprep.mubr.bf16.mxu0 0
  %2879 = vmatmul.mubr.bf16.gmra.mrb[0].mxu0 %v1969
  %v2880 = vpop.f32.mrb[0].mxu0
  %v2881 = vadd.f32 0.0, %v2880
  %v2882 = vpop.f32.mrb[0].mxu0
  %v2883 = vpop.f32.mrb[0].mxu0
  %v2884 = vadd.f32 0.0, %v2883
  %v2885 = vpop.f32.mrb[0].mxu0
  %2886 = vmatprep.mubr.bf16.mxu0 0
  %2887 = vmatmul.mubr.bf16.gmra.mrb[0].mxu0 %v1972
  %v2888 = vpop.f32.mrb[0].mxu0
  %v2889 = vadd.f32 0.0, %v2888
  %v2890 = vpop.f32.mrb[0].mxu0
  %v2891 = vpop.f32.mrb[0].mxu0
  %v2892 = vadd.f32 0.0, %v2891
  %v2893 = vpop.f32.mrb[0].mxu0
  %2894 = vmatprep.mubr.bf16.mxu0 0
  %2895 = vmatmul.mubr.bf16.gmra.mrb[0].mxu0 %v1975
  %v2896 = vpop.f32.mrb[0].mxu0
  %v2897 = vadd.f32 0.0, %v2896
  %v2898 = vpop.f32.mrb[0].mxu0
  %v2899 = vpop.f32.mrb[0].mxu0
  %v2900 = vadd.f32 0.0, %v2899
  %v2901 = vpop.f32.mrb[0].mxu0
  %2902 = vmatprep.mubr.bf16.mxu0 0
  %2903 = vmatmul.mubr.bf16.gmra.mrb[0].mxu0 %v1978
  %v2904 = vpop.f32.mrb[0].mxu0
  %v2905 = vadd.f32 0.0, %v2904
  %v2906 = vpop.f32.mrb[0].mxu0
  %v2907 = vpop.f32.mrb[0].mxu0
  %v2908 = vadd.f32 0.0, %v2907
  %v2909 = vpop.f32.mrb[0].mxu0
  %2910 = vmatprep.mubr.bf16.mxu0 0
  %2911 = vmatmul.mubr.bf16.gmra.mrb[0].mxu0 %v1981
  %v2912 = vpop.f32.mrb[0].mxu0
  %v2913 = vadd.f32 0.0, %v2912
  %v2914 = vpop.f32.mrb[0].mxu0
  %v2915 = vpop.f32.mrb[0].mxu0
  %v2916 = vadd.f32 0.0, %v2915
  %v2917 = vpop.f32.mrb[0].mxu0
  %2918 = vmatprep.mubr.bf16.mxu0 0
  %2919 = vmatmul.mubr.bf16.gmra.mrb[0].mxu0 %v1984
  %v2920 = vpop.f32.mrb[0].mxu0
  %v2921 = vadd.f32 0.0, %v2920
  %v2922 = vpop.f32.mrb[0].mxu0
  %v2923 = vpop.f32.mrb[0].mxu0
  %v2924 = vadd.f32 0.0, %v2923
  %v2925 = vpop.f32.mrb[0].mxu0
  %2926 = vmatprep.mubr.bf16.mxu0 0
  %2927 = vmatmul.mubr.bf16.gmra.mrb[0].mxu0 %v1987
  %v2928 = vpop.f32.mrb[0].mxu0
  %v2929 = vadd.f32 0.0, %v2928
  %v2930 = vpop.f32.mrb[0].mxu0
  %v2931 = vpop.f32.mrb[0].mxu0
  %v2932 = vadd.f32 0.0, %v2931
  %v2933 = vpop.f32.mrb[0].mxu0
  %2934 = vmatprep.mubr.bf16.mxu0 0
  %2935 = vmatmul.mubr.bf16.gmra.mrb[0].mxu0 %v1990
  %v2936 = vpop.f32.mrb[0].mxu0
  %v2937 = vadd.f32 0.0, %v2936
  %v2938 = vpop.f32.mrb[0].mxu0
  %v2939 = vpop.f32.mrb[0].mxu0
  %v2940 = vadd.f32 0.0, %v2939
  %v2941 = vpop.f32.mrb[0].mxu0
  %2942 = vmatprep.mubr.bf16.mxu0 0
  %2943 = vmatmul.mubr.bf16.gmra.mrb[0].mxu0 %v1993
  %v2944 = vpop.f32.mrb[0].mxu0
  %v2945 = vadd.f32 0.0, %v2944
  %v2946 = vpop.f32.mrb[0].mxu0
  %v2947 = vpop.f32.mrb[0].mxu0
  %v2948 = vadd.f32 0.0, %v2947
  %v2949 = vpop.f32.mrb[0].mxu0
  %2950 = vmatprep.mubr.bf16.mxu0 0
  %2951 = vmatmul.mubr.bf16.gmra.mrb[0].mxu0 %v1996
  %v2952 = vpop.f32.mrb[0].mxu0
  %v2953 = vadd.f32 0.0, %v2952
  %v2954 = vpop.f32.mrb[0].mxu0
  %v2955 = vpop.f32.mrb[0].mxu0
  %v2956 = vadd.f32 0.0, %v2955
  %v2957 = vpop.f32.mrb[0].mxu0
  %2958 = vmatprep.mubr.bf16.mxu0 0
  %2959 = vmatmul.mubr.bf16.gmra.mrb[0].mxu0 %v1999
  %v2960 = vpop.f32.mrb[0].mxu0
  %v2961 = vadd.f32 0.0, %v2960
  %v2962 = vpop.f32.mrb[0].mxu0
  %v2963 = vpop.f32.mrb[0].mxu0
  %v2964 = vadd.f32 0.0, %v2963
  %v2965 = vpop.f32.mrb[0].mxu0
  %2966 = vmatprep.mubr.bf16.mxu0 0
  %2967 = vmatmul.mubr.bf16.gmra.mrb[0].mxu0 %v2002
  %v2968 = vpop.f32.mrb[0].mxu0
  %v2969 = vadd.f32 0.0, %v2968
  %v2970 = vpop.f32.mrb[0].mxu0
  %v2971 = vpop.f32.mrb[0].mxu0
  %v2972 = vadd.f32 0.0, %v2971
  %v2973 = vpop.f32.mrb[0].mxu0
  %2974 = vmatprep.mubr.bf16.mxu0 0
  %2975 = vmatmul.mubr.bf16.gmra.mrb[0].mxu0 %v2005
  %v2976 = vpop.f32.mrb[0].mxu0
  %v2977 = vadd.f32 0.0, %v2976
  %v2978 = vpop.f32.mrb[0].mxu0
  %v2979 = vpop.f32.mrb[0].mxu0
  %v2980 = vadd.f32 0.0, %v2979
  %v2981 = vpop.f32.mrb[0].mxu0
  %2982 = vmatprep.mubr.bf16.mxu0 0
  %2983 = vmatmul.mubr.bf16.gmra.mrb[0].mxu0 %v2008
  %v2984 = vpop.f32.mrb[0].mxu0
  %v2985 = vadd.f32 0.0, %v2984
  %v2986 = vpop.f32.mrb[0].mxu0
  %v2987 = vpop.f32.mrb[0].mxu0
  %v2988 = vadd.f32 0.0, %v2987
  %v2989 = vpop.f32.mrb[0].mxu0
  %2990 = vmatprep.mubr.bf16.mxu0 0
  %2991 = vmatmul.mubr.bf16.gmra.mrb[0].mxu0 %v2011
  %v2992 = vpop.f32.mrb[0].mxu0
  %v2993 = vadd.f32 0.0, %v2992
  %v2994 = vpop.f32.mrb[0].mxu0
  %v2995 = vpop.f32.mrb[0].mxu0
  %v2996 = vadd.f32 0.0, %v2995
  %v2997 = vpop.f32.mrb[0].mxu0
  %2998 = vmatprep.mubr.bf16.mxu0 0
  %2999 = vmatmul.mubr.bf16.gmra.mrb[0].mxu0 %v2014
  %v3000 = vpop.f32.mrb[0].mxu0
  %v3001 = vadd.f32 0.0, %v3000
  %v3002 = vpop.f32.mrb[0].mxu0
  %v3003 = vpop.f32.mrb[0].mxu0
  %v3004 = vadd.f32 0.0, %v3003
  %v3005 = vpop.f32.mrb[0].mxu0
  %3006 = vmatprep.mubr.bf16.mxu0 0
  %3007 = vmatmul.mubr.bf16.gmra.mrb[0].mxu0 %v2017
  %v3008 = vpop.f32.mrb[0].mxu0
  %v3009 = vadd.f32 0.0, %v3008
  %v3010 = vpop.f32.mrb[0].mxu0
  %v3011 = vpop.f32.mrb[0].mxu0
  %v3012 = vadd.f32 0.0, %v3011
  %v3013 = vpop.f32.mrb[0].mxu0
  %3014 = vmatprep.mubr.bf16.mxu0 0
  %3015 = vmatmul.mubr.bf16.gmra.mrb[0].mxu0 %v2020
  %v3016 = vpop.f32.mrb[0].mxu0
  %v3017 = vadd.f32 0.0, %v3016
  %v3018 = vpop.f32.mrb[0].mxu0
  %v3019 = vpop.f32.mrb[0].mxu0
  %v3020 = vadd.f32 0.0, %v3019
  %v3021 = vpop.f32.mrb[0].mxu0
  %3022 = vmatprep.mubr.bf16.mxu0 0
  %3023 = vmatmul.mubr.bf16.gmra.mrb[0].mxu0 %v2023
  %v3024 = vpop.f32.mrb[0].mxu0
  %v3025 = vadd.f32 0.0, %v3024
  %v3026 = vpop.f32.mrb[0].mxu0
  %v3027 = vpop.f32.mrb[0].mxu0
  %v3028 = vadd.f32 0.0, %v3027
  %v3029 = vpop.f32.mrb[0].mxu0
  %3030 = vmatprep.mubr.bf16.mxu0 0
  %3031 = vmatmul.mubr.bf16.gmra.mrb[0].mxu0 %v2026
  %v3032 = vpop.f32.mrb[0].mxu0
  %v3033 = vadd.f32 0.0, %v3032
  %v3034 = vpop.f32.mrb[0].mxu0
  %v3035 = vpop.f32.mrb[0].mxu0
  %v3036 = vadd.f32 0.0, %v3035
  %v3037 = vpop.f32.mrb[0].mxu0
  %3038 = vmatprep.mubr.bf16.mxu0 0
  %3039 = vmatmul.mubr.bf16.gmra.mrb[0].mxu0 %v2029
  %v3040 = vpop.f32.mrb[0].mxu0
  %v3041 = vadd.f32 0.0, %v3040
  %v3042 = vpop.f32.mrb[0].mxu0
  %v3043 = vpop.f32.mrb[0].mxu0
  %v3044 = vadd.f32 0.0, %v3043
  %v3045 = vpop.f32.mrb[0].mxu0
  %3046 = vmatprep.mubr.bf16.mxu0 0
  %3047 = vmatmul.mubr.bf16.gmra.mrb[0].mxu0 %v2032
  %v3048 = vpop.f32.mrb[0].mxu0
  %v3049 = vadd.f32 0.0, %v3048
  %v3050 = vpop.f32.mrb[0].mxu0
  %v3051 = vpop.f32.mrb[0].mxu0
  %v3052 = vadd.f32 0.0, %v3051
  %v3053 = vpop.f32.mrb[0].mxu0
  %3054 = vmatprep.mubr.bf16.mxu0 0
  %3055 = vmatmul.mubr.bf16.gmra.mrb[0].mxu0 %v2035
  %v3056 = vpop.f32.mrb[0].mxu0
  %v3057 = vadd.f32 0.0, %v3056
  %v3058 = vpop.f32.mrb[0].mxu0
  %v3059 = vpop.f32.mrb[0].mxu0
  %v3060 = vadd.f32 0.0, %v3059
  %v3061 = vpop.f32.mrb[0].mxu0
  %3062 = vmatprep.mubr.bf16.mxu0 0
  %3063 = vmatmul.mubr.bf16.gmra.mrb[0].mxu0 %v2038
  %v3064 = vpop.f32.mrb[0].mxu0
  %v3065 = vadd.f32 0.0, %v3064
  %v3066 = vpop.f32.mrb[0].mxu0
  %v3067 = vpop.f32.mrb[0].mxu0
  %v3068 = vadd.f32 0.0, %v3067
  %v3069 = vpop.f32.mrb[0].mxu0
  %3070 = vmatprep.mubr.bf16.mxu0 0
  %3071 = vmatmul.mubr.bf16.gmra.mrb[0].mxu0 %v2041
  %v3072 = vpop.f32.mrb[0].mxu0
  %v3073 = vadd.f32 0.0, %v3072
  %v3074 = vpop.f32.mrb[0].mxu0
  %v3075 = vpop.f32.mrb[0].mxu0
  %v3076 = vadd.f32 0.0, %v3075
  %v3077 = vpop.f32.mrb[0].mxu0
  %3078 = vmatprep.mubr.bf16.mxu0 0
  %3079 = vmatmul.mubr.bf16.gmra.mrb[0].mxu0 %v2044
  %v3080 = vpop.f32.mrb[0].mxu0
  %v3081 = vadd.f32 0.0, %v3080
  %v3082 = vpop.f32.mrb[0].mxu0
  %v3083 = vpop.f32.mrb[0].mxu0
  %v3084 = vadd.f32 0.0, %v3083
  %v3085 = vpop.f32.mrb[0].mxu0
  %3086 = vmatprep.mubr.bf16.mxu0 0
  %3087 = vmatmul.mubr.bf16.gmra.mrb[0].mxu0 %v2047
  %v3088 = vpop.f32.mrb[0].mxu0
  %v3089 = vadd.f32 0.0, %v3088
  %v3090 = vpop.f32.mrb[0].mxu0
  %v3091 = vpop.f32.mrb[0].mxu0
  %v3092 = vadd.f32 0.0, %v3091
  %v3093 = vpop.f32.mrb[0].mxu0
  %3094 = vmatprep.mubr.bf16.mxu0 0
  %3095 = vmatmul.mubr.bf16.gmra.mrb[0].mxu0 %v2050
  %v3096 = vpop.f32.mrb[0].mxu0
  %v3097 = vadd.f32 0.0, %v3096
  %v3098 = vpop.f32.mrb[0].mxu0
  %v3099 = vpop.f32.mrb[0].mxu0
  %v3100 = vadd.f32 0.0, %v3099
  %v3101 = vpop.f32.mrb[0].mxu0
  %3102 = vmatprep.mubr.bf16.mxu0 0
  %3103 = vmatmul.mubr.bf16.gmra.mrb[0].mxu0 %v2053
  %v3104 = vpop.f32.mrb[0].mxu0
  %v3105 = vadd.f32 0.0, %v3104
  %v3106 = vpop.f32.mrb[0].mxu0
  %v3107 = vpop.f32.mrb[0].mxu0
  %v3108 = vadd.f32 0.0, %v3107
  %v3109 = vpop.f32.mrb[0].mxu0
  %3110 = vmatprep.mubr.bf16.mxu0 0
  %3111 = vmatmul.mubr.bf16.gmra.mrb[0].mxu0 %v2056
  %v3112 = vpop.f32.mrb[0].mxu0
  %v3113 = vadd.f32 0.0, %v3112
  %v3114 = vpop.f32.mrb[0].mxu0
  %v3115 = vpop.f32.mrb[0].mxu0
  %v3116 = vadd.f32 0.0, %v3115
  %v3117 = vpop.f32.mrb[0].mxu0
  %3118 = vmatprep.mubr.bf16.mxu0 0
  %3119 = vmatmul.mubr.bf16.gmra.mrb[0].mxu0 %v2059
  %v3120 = vpop.f32.mrb[0].mxu0
  %v3121 = vadd.f32 0.0, %v3120
  %v3122 = vpop.f32.mrb[0].mxu0
  %v3123 = vpop.f32.mrb[0].mxu0
  %v3124 = vadd.f32 0.0, %v3123
  %v3125 = vpop.f32.mrb[0].mxu0
  %3126 = vmatprep.mubr.bf16.mxu0 0
  %3127 = vmatmul.mubr.bf16.gmra.mrb[0].mxu0 %v2062
  %v3128 = vpop.f32.mrb[0].mxu0
  %v3129 = vadd.f32 0.0, %v3128
  %v3130 = vpop.f32.mrb[0].mxu0
  %v3131 = vpop.f32.mrb[0].mxu0
  %v3132 = vadd.f32 0.0, %v3131
  %v3133 = vpop.f32.mrb[0].mxu0
  %3134 = vmatprep.mubr.bf16.mxu0 0
  %3135 = vmatmul.mubr.bf16.gmra.mrb[0].mxu0 %v2065
  %v3136 = vpop.f32.mrb[0].mxu0
  %v3137 = vadd.f32 0.0, %v3136
  %v3138 = vpop.f32.mrb[0].mxu0
  %v3139 = vpop.f32.mrb[0].mxu0
  %v3140 = vadd.f32 0.0, %v3139
  %v3141 = vpop.f32.mrb[0].mxu0
  %3142 = vmatprep.mubr.bf16.mxu0 0
  %3143 = vmatmul.mubr.bf16.gmra.mrb[0].mxu0 %v2068
  %v3144 = vpop.f32.mrb[0].mxu0
  %v3145 = vadd.f32 0.0, %v3144
  %v3146 = vpop.f32.mrb[0].mxu0
  %v3147 = vpop.f32.mrb[0].mxu0
  %v3148 = vadd.f32 0.0, %v3147
  %v3149 = vpop.f32.mrb[0].mxu0
  %3150 = vmatprep.mubr.bf16.mxu0 0
  %3151 = vmatmul.mubr.bf16.gmra.mrb[0].mxu0 %v2071
  %v3152 = vpop.f32.mrb[0].mxu0
  %v3153 = vadd.f32 0.0, %v3152
  %v3154 = vpop.f32.mrb[0].mxu0
  %v3155 = vpop.f32.mrb[0].mxu0
  %v3156 = vadd.f32 0.0, %v3155
  %v3157 = vpop.f32.mrb[0].mxu0
  %3158 = vmatprep.mubr.bf16.mxu0 0
  %3159 = vmatmul.mubr.bf16.gmra.mrb[0].mxu0 %v2074
  %v3160 = vpop.f32.mrb[0].mxu0
  %v3161 = vadd.f32 0.0, %v3160
  %v3162 = vpop.f32.mrb[0].mxu0
  %v3163 = vpop.f32.mrb[0].mxu0
  %v3164 = vadd.f32 0.0, %v3163
  %v3165 = vpop.f32.mrb[0].mxu0
  %3166 = vmatprep.mubr.bf16.mxu0 0
  %3167 = vmatmul.mubr.bf16.gmra.mrb[0].mxu0 %v2077
  %v3168 = vpop.f32.mrb[0].mxu0
  %v3169 = vadd.f32 0.0, %v3168
  %v3170 = vpop.f32.mrb[0].mxu0
  %v3171 = vpop.f32.mrb[0].mxu0
  %v3172 = vadd.f32 0.0, %v3171
  %v3173 = vpop.f32.mrb[0].mxu0
  %3174 = vmatprep.mubr.bf16.mxu0 0
  %3175 = vmatmul.mubr.bf16.gmra.mrb[0].mxu0 %v2080
  %v3176 = vpop.f32.mrb[0].mxu0
  %v3177 = vadd.f32 0.0, %v3176
  %v3178 = vpop.f32.mrb[0].mxu0
  %v3179 = vpop.f32.mrb[0].mxu0
  %v3180 = vadd.f32 0.0, %v3179
  %v3181 = vpop.f32.mrb[0].mxu0
  %3182 = vmatprep.mubr.bf16.mxu0 0
  %3183 = vmatmul.mubr.bf16.gmra.mrb[0].mxu0 %v2083
  %v3184 = vpop.f32.mrb[0].mxu0
  %v3185 = vadd.f32 0.0, %v3184
  %v3186 = vpop.f32.mrb[0].mxu0
  %v3187 = vpop.f32.mrb[0].mxu0
  %v3188 = vadd.f32 0.0, %v3187
  %v3189 = vpop.f32.mrb[0].mxu0
  %3190 = vmatprep.mubr.bf16.mxu0 0
  %3191 = vmatmul.mubr.bf16.gmra.mrb[0].mxu0 %v2086
  %v3192 = vpop.f32.mrb[0].mxu0
  %v3193 = vadd.f32 0.0, %v3192
  %v3194 = vpop.f32.mrb[0].mxu0
  %v3195 = vpop.f32.mrb[0].mxu0
  %v3196 = vadd.f32 0.0, %v3195
  %v3197 = vpop.f32.mrb[0].mxu0
  %3198 = vmatprep.mubr.bf16.mxu0 0
  %3199 = vmatmul.mubr.bf16.gmra.mrb[0].mxu0 %v2089
  %v3200 = vpop.f32.mrb[0].mxu0
  %v3201 = vadd.f32 0.0, %v3200
  %v3202 = vpop.f32.mrb[0].mxu0
  %v3203 = vpop.f32.mrb[0].mxu0
  %v3204 = vadd.f32 0.0, %v3203
  %v3205 = vpop.f32.mrb[0].mxu0
  %3206 = vmatprep.mubr.bf16.mxu0 0
  %3207 = vmatmul.mubr.bf16.gmra.mrb[0].mxu0 %v2092
  %v3208 = vpop.f32.mrb[0].mxu0
  %v3209 = vadd.f32 0.0, %v3208
  %v3210 = vpop.f32.mrb[0].mxu0
  %v3211 = vpop.f32.mrb[0].mxu0
  %v3212 = vadd.f32 0.0, %v3211
  %v3213 = vpop.f32.mrb[0].mxu0
  %3214 = vmatprep.mubr.bf16.mxu0 0
  %3215 = vmatmul.mubr.bf16.gmra.mrb[0].mxu0 %v2095
  %v3216 = vpop.f32.mrb[0].mxu0
  %v3217 = vadd.f32 0.0, %v3216
  %v3218 = vpop.f32.mrb[0].mxu0
  %v3219 = vpop.f32.mrb[0].mxu0
  %v3220 = vadd.f32 0.0, %v3219
  %v3221 = vpop.f32.mrb[0].mxu0
  %3222 = vmatprep.mubr.bf16.mxu0 0
  %3223 = vmatmul.mubr.bf16.gmra.mrb[0].mxu0 %v2098
  %v3224 = vpop.f32.mrb[0].mxu0
  %v3225 = vadd.f32 0.0, %v3224
  %v3226 = vpop.f32.mrb[0].mxu0
  %v3227 = vpop.f32.mrb[0].mxu0
  %v3228 = vadd.f32 0.0, %v3227
  %v3229 = vpop.f32.mrb[0].mxu0
  %3230 = vmatprep.mubr.bf16.mxu0 0
  %3231 = vmatmul.mubr.bf16.gmra.mrb[0].mxu0 %v2101
  %v3232 = vpop.f32.mrb[0].mxu0
  %v3233 = vadd.f32 0.0, %v3232
  %v3234 = vpop.f32.mrb[0].mxu0
  %v3235 = vpop.f32.mrb[0].mxu0
  %v3236 = vadd.f32 0.0, %v3235
  %v3237 = vpop.f32.mrb[0].mxu0
  %3238 = vmatprep.mubr.bf16.mxu0 0
  %3239 = vmatmul.mubr.bf16.gmra.mrb[0].mxu0 %v2104
  %v3240 = vpop.f32.mrb[0].mxu0
  %v3241 = vadd.f32 0.0, %v3240
  %v3242 = vpop.f32.mrb[0].mxu0
  %v3243 = vpop.f32.mrb[0].mxu0
  %v3244 = vadd.f32 0.0, %v3243
  %v3245 = vpop.f32.mrb[0].mxu0
  %3246 = vmatprep.mubr.bf16.mxu0 0
  %3247 = vmatmul.mubr.bf16.gmra.mrb[0].mxu0 %v2107
  %v3248 = vpop.f32.mrb[0].mxu0
  %v3249 = vadd.f32 0.0, %v3248
  %v3250 = vpop.f32.mrb[0].mxu0
  %v3251 = vpop.f32.mrb[0].mxu0
  %v3252 = vadd.f32 0.0, %v3251
  %v3253 = vpop.f32.mrb[0].mxu0
  %3254 = vmatprep.mubr.bf16.mxu0 0
  %3255 = vmatmul.mubr.bf16.gmra.mrb[0].mxu0 %v2110
  %v3256 = vpop.f32.mrb[0].mxu0
  %v3257 = vadd.f32 0.0, %v3256
  %v3258 = vpop.f32.mrb[0].mxu0
  %v3259 = vpop.f32.mrb[0].mxu0
  %v3260 = vadd.f32 0.0, %v3259
  %v3261 = vpop.f32.mrb[0].mxu0
  %3262 = vmatprep.mubr.bf16.mxu0 0
  %3263 = vmatmul.mubr.bf16.gmra.mrb[0].mxu0 %v2113
  %v3264 = vpop.f32.mrb[0].mxu0
  %v3265 = vadd.f32 0.0, %v3264
  %v3266 = vpop.f32.mrb[0].mxu0
  %v3267 = vpop.f32.mrb[0].mxu0
  %v3268 = vadd.f32 0.0, %v3267
  %v3269 = vpop.f32.mrb[0].mxu0
  %3270 = vmatprep.mubr.bf16.mxu0 0
  %3271 = vmatmul.mubr.bf16.gmra.mrb[0].mxu0 %v2116
  %v3272 = vpop.f32.mrb[0].mxu0
  %v3273 = vadd.f32 0.0, %v3272
  %v3274 = vpop.f32.mrb[0].mxu0
  %v3275 = vpop.f32.mrb[0].mxu0
  %v3276 = vadd.f32 0.0, %v3275
  %v3277 = vpop.f32.mrb[0].mxu0
  %3278 = vmatprep.mubr.bf16.mxu0 0
  %3279 = vmatmul.mubr.bf16.gmra.mrb[0].mxu0 %v2119
  %v3280 = vpop.f32.mrb[0].mxu0
  %v3281 = vadd.f32 0.0, %v3280
  %v3282 = vpop.f32.mrb[0].mxu0
  %v3283 = vpop.f32.mrb[0].mxu0
  %v3284 = vadd.f32 0.0, %v3283
  %v3285 = vpop.f32.mrb[0].mxu0
  %3286 = vmatprep.mubr.bf16.mxu0 0
  %3287 = vmatmul.mubr.bf16.gmra.mrb[0].mxu0 %v2122
  %v3288 = vpop.f32.mrb[0].mxu0
  %v3289 = vadd.f32 0.0, %v3288
  %v3290 = vpop.f32.mrb[0].mxu0
  %v3291 = vpop.f32.mrb[0].mxu0
  %v3292 = vadd.f32 0.0, %v3291
  %v3293 = vpop.f32.mrb[0].mxu0
  %3294 = vmatprep.mubr.bf16.mxu0 0
  %3295 = vmatmul.mubr.bf16.gmra.mrb[0].mxu0 %v2125
  %v3296 = vpop.f32.mrb[0].mxu0
  %v3297 = vadd.f32 0.0, %v3296
  %v3298 = vpop.f32.mrb[0].mxu0
  %v3299 = vpop.f32.mrb[0].mxu0
  %v3300 = vadd.f32 0.0, %v3299
  %v3301 = vpop.f32.mrb[0].mxu0
  %3302 = vmatprep.mubr.bf16.mxu0 0
  %3303 = vmatmul.mubr.bf16.gmra.mrb[0].mxu0 %v2128
  %v3304 = vpop.f32.mrb[0].mxu0
  %v3305 = vadd.f32 0.0, %v3304
  %v3306 = vpop.f32.mrb[0].mxu0
  %v3307 = vpop.f32.mrb[0].mxu0
  %v3308 = vadd.f32 0.0, %v3307
  %v3309 = vpop.f32.mrb[0].mxu0
  %3310 = vmatprep.mubr.bf16.mxu0 0
  %3311 = vmatmul.mubr.bf16.gmra.mrb[0].mxu0 %v2131
  %v3312 = vpop.f32.mrb[0].mxu0
  %v3313 = vadd.f32 0.0, %v3312
  %v3314 = vpop.f32.mrb[0].mxu0
  %v3315 = vpop.f32.mrb[0].mxu0
  %v3316 = vadd.f32 0.0, %v3315
  %v3317 = vpop.f32.mrb[0].mxu0
  %3318 = vmatprep.mubr.bf16.mxu0 0
  %3319 = vmatmul.mubr.bf16.gmra.mrb[0].mxu0 %v2134
  %v3320 = vpop.f32.mrb[0].mxu0
  %v3321 = vadd.f32 0.0, %v3320
  %v3322 = vpop.f32.mrb[0].mxu0
  %v3323 = vpop.f32.mrb[0].mxu0
  %v3324 = vadd.f32 0.0, %v3323
  %v3325 = vpop.f32.mrb[0].mxu0
  %3326 = vmatprep.mubr.bf16.mxu0 0
  %3327 = vmatmul.mubr.bf16.gmra.mrb[0].mxu0 %v2137
  %v3328 = vpop.f32.mrb[0].mxu0
  %v3329 = vadd.f32 0.0, %v3328
  %v3330 = vpop.f32.mrb[0].mxu0
  %v3331 = vpop.f32.mrb[0].mxu0
  %v3332 = vadd.f32 0.0, %v3331
  %v3333 = vpop.f32.mrb[0].mxu0
  %3334 = vmatprep.mubr.bf16.mxu0 0
  %3335 = vmatmul.mubr.bf16.gmra.mrb[0].mxu0 %v2140
  %v3336 = vpop.f32.mrb[0].mxu0
  %v3337 = vadd.f32 0.0, %v3336
  %v3338 = vpop.f32.mrb[0].mxu0
  %v3339 = vpop.f32.mrb[0].mxu0
  %v3340 = vadd.f32 0.0, %v3339
  %v3341 = vpop.f32.mrb[0].mxu0
  %3342 = vmatprep.mubr.bf16.mxu0 0
  %3343 = vmatmul.mubr.bf16.gmra.mrb[0].mxu0 %v2143
  %v3344 = vpop.f32.mrb[0].mxu0
  %v3345 = vadd.f32 0.0, %v3344
  %v3346 = vpop.f32.mrb[0].mxu0
  %v3347 = vpop.f32.mrb[0].mxu0
  %v3348 = vadd.f32 0.0, %v3347
  %v3349 = vpop.f32.mrb[0].mxu0
  %3350 = vmatprep.mubr.bf16.mxu0 0
  %3351 = vmatmul.mubr.bf16.gmra.mrb[0].mxu0 %v2146
  %v3352 = vpop.f32.mrb[0].mxu0
  %v3353 = vadd.f32 0.0, %v3352
  %v3354 = vpop.f32.mrb[0].mxu0
  %v3355 = vpop.f32.mrb[0].mxu0
  %v3356 = vadd.f32 0.0, %v3355
  %v3357 = vpop.f32.mrb[0].mxu0
  %3358 = vmatprep.mubr.bf16.mxu0 0
  %3359 = vmatmul.mubr.bf16.gmra.mrb[0].mxu0 %v2149
  %v3360 = vpop.f32.mrb[0].mxu0
  %v3361 = vadd.f32 0.0, %v3360
  %v3362 = vpop.f32.mrb[0].mxu0
  %v3363 = vpop.f32.mrb[0].mxu0
  %v3364 = vadd.f32 0.0, %v3363
  %v3365 = vpop.f32.mrb[0].mxu0
  %3366 = vmatprep.mubr.bf16.mxu0 0
  %3367 = vmatmul.mubr.bf16.gmra.mrb[0].mxu0 %v2152
  %v3368 = vpop.f32.mrb[0].mxu0
  %v3369 = vadd.f32 0.0, %v3368
  %v3370 = vpop.f32.mrb[0].mxu0
  %v3371 = vpop.f32.mrb[0].mxu0
  %v3372 = vadd.f32 0.0, %v3371
  %v3373 = vpop.f32.mrb[0].mxu0
  %3374 = vmatprep.mubr.bf16.mxu0 0
  %3375 = vmatmul.mubr.bf16.gmra.mrb[0].mxu0 %v2155
  %v3376 = vpop.f32.mrb[0].mxu0
  %v3377 = vadd.f32 0.0, %v3376
  %v3378 = vpop.f32.mrb[0].mxu0
  %v3379 = vpop.f32.mrb[0].mxu0
  %v3380 = vadd.f32 0.0, %v3379
  %v3381 = vpop.f32.mrb[0].mxu0
  %3382 = vmatprep.mubr.bf16.mxu0 0
  %3383 = vmatmul.mubr.bf16.gmra.mrb[0].mxu0 %v2158
  %v3384 = vpop.f32.mrb[0].mxu0
  %v3385 = vadd.f32 0.0, %v3384
  %v3386 = vpop.f32.mrb[0].mxu0
  %v3387 = vpop.f32.mrb[0].mxu0
  %v3388 = vadd.f32 0.0, %v3387
  %v3389 = vpop.f32.mrb[0].mxu0
  %3390 = vmatprep.mubr.bf16.mxu0 0
  %3391 = vmatmul.mubr.bf16.gmra.mrb[0].mxu0 %v2161
  %v3392 = vpop.f32.mrb[0].mxu0
  %v3393 = vadd.f32 0.0, %v3392
  %v3394 = vpop.f32.mrb[0].mxu0
  %v3395 = vpop.f32.mrb[0].mxu0
  %v3396 = vadd.f32 0.0, %v3395
  %v3397 = vpop.f32.mrb[0].mxu0
  %3398 = vmatprep.mubr.bf16.mxu0 0
  %3399 = vmatmul.mubr.bf16.gmra.mrb[0].mxu0 %v2164
  %v3400 = vpop.f32.mrb[0].mxu0
  %v3401 = vadd.f32 0.0, %v3400
  %v3402 = vpop.f32.mrb[0].mxu0
  %v3403 = vpop.f32.mrb[0].mxu0
  %v3404 = vadd.f32 0.0, %v3403
  %v3405 = vpop.f32.mrb[0].mxu0
  %3406 = vmatprep.mubr.bf16.mxu0 0
  %3407 = vmatmul.mubr.bf16.gmra.mrb[0].mxu0 %v2167
  %v3408 = vpop.f32.mrb[0].mxu0
  %v3409 = vadd.f32 0.0, %v3408
  %v3410 = vpop.f32.mrb[0].mxu0
  %v3411 = vpop.f32.mrb[0].mxu0
  %v3412 = vadd.f32 0.0, %v3411
  %v3413 = vpop.f32.mrb[0].mxu0
  %3414 = vmatprep.mubr.bf16.mxu0 0
  %3415 = vmatmul.mubr.bf16.gmra.mrb[0].mxu0 %v2170
  %v3416 = vpop.f32.mrb[0].mxu0
  %v3417 = vadd.f32 0.0, %v3416
  %v3418 = vpop.f32.mrb[0].mxu0
  %v3419 = vpop.f32.mrb[0].mxu0
  %v3420 = vadd.f32 0.0, %v3419
  %v3421 = vpop.f32.mrb[0].mxu0
  %3422 = vmatprep.mubr.bf16.mxu0 0
  %3423 = vmatmul.mubr.bf16.gmra.mrb[0].mxu0 %v2173
  %v3424 = vpop.f32.mrb[0].mxu0
  %v3425 = vadd.f32 0.0, %v3424
  %v3426 = vpop.f32.mrb[0].mxu0
  %v3427 = vpop.f32.mrb[0].mxu0
  %v3428 = vadd.f32 0.0, %v3427
  %v3429 = vpop.f32.mrb[0].mxu0
  %3430 = vmatprep.mubr.bf16.mxu0 0
  %3431 = vmatmul.mubr.bf16.gmra.mrb[0].mxu0 %v2176
  %v3432 = vpop.f32.mrb[0].mxu0
  %v3433 = vadd.f32 0.0, %v3432
  %v3434 = vpop.f32.mrb[0].mxu0
  %v3435 = vpop.f32.mrb[0].mxu0
  %v3436 = vadd.f32 0.0, %v3435
  %v3437 = vpop.f32.mrb[0].mxu0
  %3438 = vmatprep.mubr.bf16.mxu0 0
  %3439 = vmatmul.mubr.bf16.gmra.mrb[0].mxu0 %v2179
  %v3440 = vpop.f32.mrb[0].mxu0
  %v3441 = vadd.f32 0.0, %v3440
  %v3442 = vpop.f32.mrb[0].mxu0
  %v3443 = vpop.f32.mrb[0].mxu0
  %v3444 = vadd.f32 0.0, %v3443
  %v3445 = vpop.f32.mrb[0].mxu0
  %3446 = vmatprep.mubr.bf16.mxu0 0
  %3447 = vmatmul.mubr.bf16.gmra.mrb[0].mxu0 %v2182
  %v3448 = vpop.f32.mrb[0].mxu0
  %v3449 = vadd.f32 0.0, %v3448
  %v3450 = vpop.f32.mrb[0].mxu0
  %v3451 = vpop.f32.mrb[0].mxu0
  %v3452 = vadd.f32 0.0, %v3451
  %v3453 = vpop.f32.mrb[0].mxu0
  %3454 = vmatprep.mubr.bf16.mxu0 0
  %3455 = vmatmul.mubr.bf16.gmra.mrb[0].mxu0 %v2185
  %v3456 = vpop.f32.mrb[0].mxu0
  %v3457 = vadd.f32 0.0, %v3456
  %v3458 = vpop.f32.mrb[0].mxu0
  %v3459 = vpop.f32.mrb[0].mxu0
  %v3460 = vadd.f32 0.0, %v3459
  %v3461 = vpop.f32.mrb[0].mxu0
  %3462 = vmatprep.mubr.bf16.mxu0 0
  %3463 = vmatmul.mubr.bf16.gmra.mrb[0].mxu0 %v2188
  %v3464 = vpop.f32.mrb[0].mxu0
  %v3465 = vadd.f32 0.0, %v3464
  %v3466 = vpop.f32.mrb[0].mxu0
  %v3467 = vpop.f32.mrb[0].mxu0
  %v3468 = vadd.f32 0.0, %v3467
  %v3469 = vpop.f32.mrb[0].mxu0
  %3470 = vmatprep.mubr.bf16.mxu0 0
  %3471 = vmatmul.mubr.bf16.gmra.mrb[0].mxu0 %v2191
  %v3472 = vpop.f32.mrb[0].mxu0
  %v3473 = vadd.f32 0.0, %v3472
  %v3474 = vpop.f32.mrb[0].mxu0
  %v3475 = vpop.f32.mrb[0].mxu0
  %v3476 = vadd.f32 0.0, %v3475
  %v3477 = vpop.f32.mrb[0].mxu0
  %3478 = vmatprep.mubr.bf16.mxu0 0
  %3479 = vmatmul.mubr.bf16.gmra.mrb[0].mxu0 %v2194
  %v3480 = vpop.f32.mrb[0].mxu0
  %v3481 = vadd.f32 0.0, %v3480
  %v3482 = vpop.f32.mrb[0].mxu0
  %v3483 = vpop.f32.mrb[0].mxu0
  %v3484 = vadd.f32 0.0, %v3483
  %v3485 = vpop.f32.mrb[0].mxu0
  %3486 = vmatprep.mubr.bf16.mxu0 0
  %3487 = vmatmul.mubr.bf16.gmra.mrb[0].mxu0 %v2197
  %v3488 = vpop.f32.mrb[0].mxu0
  %v3489 = vadd.f32 0.0, %v3488
  %v3490 = vpop.f32.mrb[0].mxu0
  %v3491 = vpop.f32.mrb[0].mxu0
  %v3492 = vadd.f32 0.0, %v3491
  %v3493 = vpop.f32.mrb[0].mxu0
  %3494 = vmatprep.mubr.bf16.mxu0 0
  %3495 = vmatmul.mubr.bf16.gmra.mrb[0].mxu0 %v2200
  %v3496 = vpop.f32.mrb[0].mxu0
  %v3497 = vadd.f32 0.0, %v3496
  %v3498 = vpop.f32.mrb[0].mxu0
  %v3499 = vpop.f32.mrb[0].mxu0
  %v3500 = vadd.f32 0.0, %v3499
  %v3501 = vpop.f32.mrb[0].mxu0
  %3502 = vmatprep.mubr.bf16.mxu0 0
  %3503 = vmatmul.mubr.bf16.gmra.mrb[0].mxu0 %v2203
  %v3504 = vpop.f32.mrb[0].mxu0
  %v3505 = vadd.f32 0.0, %v3504
  %v3506 = vpop.f32.mrb[0].mxu0
  %v3507 = vpop.f32.mrb[0].mxu0
  %v3508 = vadd.f32 0.0, %v3507
  %v3509 = vpop.f32.mrb[0].mxu0
  %3510 = vmatprep.mubr.bf16.mxu0 0
  %3511 = vmatmul.mubr.bf16.gmra.mrb[0].mxu0 %v2206
  %v3512 = vpop.f32.mrb[0].mxu0
  %v3513 = vadd.f32 0.0, %v3512
  %v3514 = vpop.f32.mrb[0].mxu0
  %v3515 = vpop.f32.mrb[0].mxu0
  %v3516 = vadd.f32 0.0, %v3515
  %v3517 = vpop.f32.mrb[0].mxu0
  %3518 = vmatprep.mubr.bf16.mxu0 0
  %3519 = vmatmul.mubr.bf16.gmra.mrb[0].mxu0 %v2209
  %v3520 = vpop.f32.mrb[0].mxu0
  %v3521 = vadd.f32 0.0, %v3520
  %v3522 = vpop.f32.mrb[0].mxu0
  %v3523 = vpop.f32.mrb[0].mxu0
  %v3524 = vadd.f32 0.0, %v3523
  %v3525 = vpop.f32.mrb[0].mxu0
  %3526 = vmatprep.mubr.bf16.mxu0 0
  %3527 = vmatmul.mubr.bf16.gmra.mrb[0].mxu0 %v2212
  %v3528 = vpop.f32.mrb[0].mxu0
  %v3529 = vadd.f32 0.0, %v3528
  %v3530 = vpop.f32.mrb[0].mxu0
  %v3531 = vpop.f32.mrb[0].mxu0
  %v3532 = vadd.f32 0.0, %v3531
  %v3533 = vpop.f32.mrb[0].mxu0
  %3534 = vmatprep.mubr.bf16.mxu0 0
  %3535 = vmatmul.mubr.bf16.gmra.mrb[0].mxu0 %v2215
  %v3536 = vpop.f32.mrb[0].mxu0
  %v3537 = vadd.f32 0.0, %v3536
  %v3538 = vpop.f32.mrb[0].mxu0
  %v3539 = vpop.f32.mrb[0].mxu0
  %v3540 = vadd.f32 0.0, %v3539
  %v3541 = vpop.f32.mrb[0].mxu0
  %3542 = vmatprep.mubr.bf16.mxu0 0
  %3543 = vmatmul.mubr.bf16.gmra.mrb[0].mxu0 %v2218
  %v3544 = vpop.f32.mrb[0].mxu0
  %v3545 = vadd.f32 0.0, %v3544
  %v3546 = vpop.f32.mrb[0].mxu0
  %v3547 = vpop.f32.mrb[0].mxu0
  %v3548 = vadd.f32 0.0, %v3547
  %v3549 = vpop.f32.mrb[0].mxu0
  %3550 = vmatprep.mubr.bf16.mxu0 0
  %3551 = vmatmul.mubr.bf16.gmra.mrb[0].mxu0 %v2221
  %v3552 = vpop.f32.mrb[0].mxu0
  %v3553 = vadd.f32 0.0, %v3552
  %v3554 = vpop.f32.mrb[0].mxu0
  %v3555 = vpop.f32.mrb[0].mxu0
  %v3556 = vadd.f32 0.0, %v3555
  %v3557 = vpop.f32.mrb[0].mxu0
  %3558 = vmatprep.mubr.bf16.mxu0 0
  %3559 = vmatmul.mubr.bf16.gmra.mrb[0].mxu0 %v2224
  %v3560 = vpop.f32.mrb[0].mxu0
  %v3561 = vadd.f32 0.0, %v3560
  %v3562 = vpop.f32.mrb[0].mxu0
  %v3563 = vpop.f32.mrb[0].mxu0
  %v3564 = vadd.f32 0.0, %v3563
  %v3565 = vpop.f32.mrb[0].mxu0
  %3566 = vmatprep.mubr.bf16.mxu0 0
  %3567 = vmatmul.mubr.bf16.gmra.mrb[0].mxu0 %v2227
  %v3568 = vpop.f32.mrb[0].mxu0
  %v3569 = vadd.f32 0.0, %v3568
  %v3570 = vpop.f32.mrb[0].mxu0
  %v3571 = vpop.f32.mrb[0].mxu0
  %v3572 = vadd.f32 0.0, %v3571
  %v3573 = vpop.f32.mrb[0].mxu0
  %3574 = vmatprep.mubr.bf16.mxu0 0
  %3575 = vmatmul.mubr.bf16.gmra.mrb[0].mxu0 %v2230
  %v3576 = vpop.f32.mrb[0].mxu0
  %v3577 = vadd.f32 0.0, %v3576
  %v3578 = vpop.f32.mrb[0].mxu0
  %v3579 = vpop.f32.mrb[0].mxu0
  %v3580 = vadd.f32 0.0, %v3579
  %v3581 = vpop.f32.mrb[0].mxu0
  %3582 = vmatprep.mubr.bf16.mxu0 0
  %3583 = vmatmul.mubr.bf16.gmra.mrb[0].mxu0 %v2233
  %v3584 = vpop.f32.mrb[0].mxu0
  %v3585 = vadd.f32 0.0, %v3584
  %v3586 = vpop.f32.mrb[0].mxu0
  %v3587 = vpop.f32.mrb[0].mxu0
  %v3588 = vadd.f32 0.0, %v3587
  %v3589 = vpop.f32.mrb[0].mxu0
  %3590 = vmatprep.mubr.bf16.mxu0 0
  %3591 = vmatmul.mubr.bf16.gmra.mrb[0].mxu0 %v2236
  %v3592 = vpop.f32.mrb[0].mxu0
  %v3593 = vadd.f32 0.0, %v3592
  %v3594 = vpop.f32.mrb[0].mxu0
  %v3595 = vpop.f32.mrb[0].mxu0
  %v3596 = vadd.f32 0.0, %v3595
  %v3597 = vpop.f32.mrb[0].mxu0
  %3598 = vmatprep.mubr.bf16.mxu0 0
  %3599 = vmatmul.mubr.bf16.gmra.mrb[0].mxu0 %v2239
  %v3600 = vpop.f32.mrb[0].mxu0
  %v3601 = vadd.f32 0.0, %v3600
  %v3602 = vpop.f32.mrb[0].mxu0
  %v3603 = vpop.f32.mrb[0].mxu0
  %v3604 = vadd.f32 0.0, %v3603
  %v3605 = vpop.f32.mrb[0].mxu0
  %3606 = vmatprep.mubr.bf16.mxu0 0
  %3607 = vmatmul.mubr.bf16.gmra.mrb[0].mxu0 %v2242
  %v3608 = vpop.f32.mrb[0].mxu0
  %v3609 = vadd.f32 0.0, %v3608
  %v3610 = vpop.f32.mrb[0].mxu0
  %v3611 = vpop.f32.mrb[0].mxu0
  %v3612 = vadd.f32 0.0, %v3611
  %v3613 = vpop.f32.mrb[0].mxu0
  %3614 = vmatprep.mubr.bf16.mxu0 0
  %3615 = vmatmul.mubr.bf16.gmra.mrb[0].mxu0 %v2245
  %v3616 = vpop.f32.mrb[0].mxu0
  %v3617 = vadd.f32 0.0, %v3616
  %v3618 = vpop.f32.mrb[0].mxu0
  %v3619 = vpop.f32.mrb[0].mxu0
  %v3620 = vadd.f32 0.0, %v3619
  %v3621 = vpop.f32.mrb[0].mxu0
  %3622 = vmatprep.mubr.bf16.mxu0 0
  %3623 = vmatmul.mubr.bf16.gmra.mrb[0].mxu0 %v2248
  %v3624 = vpop.f32.mrb[0].mxu0
  %v3625 = vadd.f32 0.0, %v3624
  %v3626 = vpop.f32.mrb[0].mxu0
  %v3627 = vpop.f32.mrb[0].mxu0
  %v3628 = vadd.f32 0.0, %v3627
  %v3629 = vpop.f32.mrb[0].mxu0
  %3630 = vmatprep.mubr.bf16.mxu0 0
  %3631 = vmatmul.mubr.bf16.gmra.mrb[0].mxu0 %v2251
  %v3632 = vpop.f32.mrb[0].mxu0
  %v3633 = vadd.f32 0.0, %v3632
  %v3634 = vpop.f32.mrb[0].mxu0
  %v3635 = vpop.f32.mrb[0].mxu0
  %v3636 = vadd.f32 0.0, %v3635
  %v3637 = vpop.f32.mrb[0].mxu0
  %3638 = vmatprep.mubr.bf16.mxu0 0
  %3639 = vmatmul.mubr.bf16.gmra.mrb[0].mxu0 %v2254
  %v3640 = vpop.f32.mrb[0].mxu0
  %v3641 = vadd.f32 0.0, %v3640
  %v3642 = vpop.f32.mrb[0].mxu0
  %v3643 = vpop.f32.mrb[0].mxu0
  %v3644 = vadd.f32 0.0, %v3643
  %v3645 = vpop.f32.mrb[0].mxu0
  %3646 = vmatprep.mubr.bf16.mxu0 0
  %3647 = vmatmul.mubr.bf16.gmra.mrb[0].mxu0 %v2257
  %v3648 = vpop.f32.mrb[0].mxu0
  %v3649 = vadd.f32 0.0, %v3648
  %v3650 = vpop.f32.mrb[0].mxu0
  %v3651 = vpop.f32.mrb[0].mxu0
  %v3652 = vadd.f32 0.0, %v3651
  %v3653 = vpop.f32.mrb[0].mxu0
  %3654 = vmatprep.mubr.bf16.mxu0 0
  %3655 = vmatmul.mubr.bf16.gmra.mrb[0].mxu0 %v2260
  %v3656 = vpop.f32.mrb[0].mxu0
  %v3657 = vadd.f32 0.0, %v3656
  %v3658 = vpop.f32.mrb[0].mxu0
  %v3659 = vpop.f32.mrb[0].mxu0
  %v3660 = vadd.f32 0.0, %v3659
  %v3661 = vpop.f32.mrb[0].mxu0
  %3662 = vmatprep.mubr.bf16.mxu0 0
  %3663 = vmatmul.mubr.bf16.gmra.mrb[0].mxu0 %v2263
  %v3664 = vpop.f32.mrb[0].mxu0
  %v3665 = vadd.f32 0.0, %v3664
  %v3666 = vpop.f32.mrb[0].mxu0
  %v3667 = vpop.f32.mrb[0].mxu0
  %v3668 = vadd.f32 0.0, %v3667
  %v3669 = vpop.f32.mrb[0].mxu0
  %3670 = vmatprep.mubr.bf16.mxu0 0
  %3671 = vmatmul.mubr.bf16.gmra.mrb[0].mxu0 %v2266
  %v3672 = vpop.f32.mrb[0].mxu0
  %v3673 = vadd.f32 0.0, %v3672
  %v3674 = vpop.f32.mrb[0].mxu0
  %v3675 = vpop.f32.mrb[0].mxu0
  %v3676 = vadd.f32 0.0, %v3675
  %v3677 = vpop.f32.mrb[0].mxu0
  %3678 = vmatprep.mubr.bf16.mxu0 0
  %3679 = vmatmul.mubr.bf16.gmra.mrb[0].mxu0 %v2269
  %v3680 = vpop.f32.mrb[0].mxu0
  %v3681 = vadd.f32 0.0, %v3680
  %v3682 = vpop.f32.mrb[0].mxu0
  %v3683 = vpop.f32.mrb[0].mxu0
  %v3684 = vadd.f32 0.0, %v3683
  %v3685 = vpop.f32.mrb[0].mxu0
  %3686 = vmatprep.mubr.bf16.mxu0 0
  %3687 = vmatmul.mubr.bf16.gmra.mrb[0].mxu0 %v2272
  %v3688 = vpop.f32.mrb[0].mxu0
  %v3689 = vadd.f32 0.0, %v3688
  %v3690 = vpop.f32.mrb[0].mxu0
  %v3691 = vpop.f32.mrb[0].mxu0
  %v3692 = vadd.f32 0.0, %v3691
  %v3693 = vpop.f32.mrb[0].mxu0
  %3694 = vmatprep.mubr.bf16.mxu0 0
  %3695 = vmatmul.mubr.bf16.gmra.mrb[0].mxu0 %v2275
  %v3696 = vpop.f32.mrb[0].mxu0
  %v3697 = vadd.f32 0.0, %v3696
  %v3698 = vpop.f32.mrb[0].mxu0
  %v3699 = vpop.f32.mrb[0].mxu0
  %v3700 = vadd.f32 0.0, %v3699
  %v3701 = vpop.f32.mrb[0].mxu0
  %3702 = vmatprep.mubr.bf16.mxu0 0
  %3703 = vmatmul.mubr.bf16.gmra.mrb[0].mxu0 %v2278
  %v3704 = vpop.f32.mrb[0].mxu0
  %v3705 = vadd.f32 0.0, %v3704
  %v3706 = vpop.f32.mrb[0].mxu0
  %v3707 = vpop.f32.mrb[0].mxu0
  %v3708 = vadd.f32 0.0, %v3707
  %v3709 = vpop.f32.mrb[0].mxu0
  %3710 = vmatprep.mubr.bf16.mxu0 0
  %3711 = vmatmul.mubr.bf16.gmra.mrb[0].mxu0 %v2281
  %v3712 = vpop.f32.mrb[0].mxu0
  %v3713 = vadd.f32 0.0, %v3712
  %v3714 = vpop.f32.mrb[0].mxu0
  %v3715 = vpop.f32.mrb[0].mxu0
  %v3716 = vadd.f32 0.0, %v3715
  %v3717 = vpop.f32.mrb[0].mxu0
  %3718 = vmatprep.mubr.bf16.mxu0 0
  %3719 = vmatmul.mubr.bf16.gmra.mrb[0].mxu0 %v2284
  %v3720 = vpop.f32.mrb[0].mxu0
  %v3721 = vadd.f32 0.0, %v3720
  %v3722 = vpop.f32.mrb[0].mxu0
  %v3723 = vpop.f32.mrb[0].mxu0
  %v3724 = vadd.f32 0.0, %v3723
  %v3725 = vpop.f32.mrb[0].mxu0
  %3726 = vmatprep.mubr.bf16.mxu0 0
  %3727 = vmatmul.mubr.bf16.gmra.mrb[0].mxu0 %v2287
  %v3728 = vpop.f32.mrb[0].mxu0
  %v3729 = vadd.f32 0.0, %v3728
  %v3730 = vpop.f32.mrb[0].mxu0
  %v3731 = vpop.f32.mrb[0].mxu0
  %v3732 = vadd.f32 0.0, %v3731
  %v3733 = vpop.f32.mrb[0].mxu0
  %3734 = vmatprep.mubr.bf16.mxu0 0
  %3735 = vmatmul.mubr.bf16.gmra.mrb[0].mxu0 %v2290
  %v3736 = vpop.f32.mrb[0].mxu0
  %v3737 = vadd.f32 0.0, %v3736
  %v3738 = vpop.f32.mrb[0].mxu0
  %v3739 = vpop.f32.mrb[0].mxu0
  %v3740 = vadd.f32 0.0, %v3739
  %v3741 = vpop.f32.mrb[0].mxu0
  %3742 = vmatprep.mubr.bf16.mxu0 0
  %3743 = vmatmul.mubr.bf16.gmra.mrb[0].mxu0 %v2293
  %v3744 = vpop.f32.mrb[0].mxu0
  %v3745 = vadd.f32 0.0, %v3744
  %v3746 = vpop.f32.mrb[0].mxu0
  %v3747 = vpop.f32.mrb[0].mxu0
  %v3748 = vadd.f32 0.0, %v3747
  %v3749 = vpop.f32.mrb[0].mxu0
  %3750 = vmatprep.mubr.bf16.mxu0 0
  %3751 = vmatmul.mubr.bf16.gmra.mrb[0].mxu0 %v2296
  %v3752 = vpop.f32.mrb[0].mxu0
  %v3753 = vadd.f32 0.0, %v3752
  %v3754 = vpop.f32.mrb[0].mxu0
  %v3755 = vpop.f32.mrb[0].mxu0
  %v3756 = vadd.f32 0.0, %v3755
  %v3757 = vpop.f32.mrb[0].mxu0
  %3758 = vmatprep.mubr.bf16.mxu0 0
  %3759 = vmatmul.mubr.bf16.gmra.mrb[0].mxu0 %v2299
  %v3760 = vpop.f32.mrb[0].mxu0
  %v3761 = vadd.f32 0.0, %v3760
  %v3762 = vpop.f32.mrb[0].mxu0
  %v3763 = vpop.f32.mrb[0].mxu0
  %v3764 = vadd.f32 0.0, %v3763
  %v3765 = vpop.f32.mrb[0].mxu0
  %3766 = vmatprep.mubr.bf16.mxu0 0
  %3767 = vmatmul.mubr.bf16.gmra.mrb[0].mxu0 %v2302
  %v3768 = vpop.f32.mrb[0].mxu0
  %v3769 = vadd.f32 0.0, %v3768
  %v3770 = vpop.f32.mrb[0].mxu0
  %v3771 = vpop.f32.mrb[0].mxu0
  %v3772 = vadd.f32 0.0, %v3771
  %v3773 = vpop.f32.mrb[0].mxu0
  %3774 = vmatprep.mubr.bf16.mxu0 0
  %3775 = vmatmul.mubr.bf16.gmra.mrb[0].mxu0 %v2305
  %v3776 = vpop.f32.mrb[0].mxu0
  %v3777 = vadd.f32 0.0, %v3776
  %v3778 = vpop.f32.mrb[0].mxu0
  %v3779 = vpop.f32.mrb[0].mxu0
  %v3780 = vadd.f32 0.0, %v3779
  %v3781 = vpop.f32.mrb[0].mxu0
  %3782 = vmatprep.mubr.bf16.mxu0 0
  %3783 = vmatmul.mubr.bf16.gmra.mrb[0].mxu0 %v2308
  %v3784 = vpop.f32.mrb[0].mxu0
  %v3785 = vadd.f32 0.0, %v3784
  %v3786 = vpop.f32.mrb[0].mxu0
  %v3787 = vpop.f32.mrb[0].mxu0
  %v3788 = vadd.f32 0.0, %v3787
  %v3789 = vpop.f32.mrb[0].mxu0
  %3790 = vmatprep.mubr.bf16.mxu0 0
  %3791 = vmatmul.mubr.bf16.gmra.mrb[0].mxu0 %v2311
  %v3792 = vpop.f32.mrb[0].mxu0
  %v3793 = vadd.f32 0.0, %v3792
  %v3794 = vpop.f32.mrb[0].mxu0
  %v3795 = vpop.f32.mrb[0].mxu0
  %v3796 = vadd.f32 0.0, %v3795
  %v3797 = vpop.f32.mrb[0].mxu0
  %3798 = vmatprep.mubr.bf16.mxu0 0
  %3799 = vmatmul.mubr.bf16.gmra.mrb[0].mxu0 %v2314
  %v3800 = vpop.f32.mrb[0].mxu0
  %v3801 = vadd.f32 0.0, %v3800
  %v3802 = vpop.f32.mrb[0].mxu0
  %v3803 = vpop.f32.mrb[0].mxu0
  %v3804 = vadd.f32 0.0, %v3803
  %v3805 = vpop.f32.mrb[0].mxu0
  %3806 = vmatprep.mubr.bf16.mxu0 0
  %3807 = vmatmul.mubr.bf16.gmra.mrb[0].mxu0 %v2317
  %v3808 = vpop.f32.mrb[0].mxu0
  %v3809 = vadd.f32 0.0, %v3808
  %v3810 = vpop.f32.mrb[0].mxu0
  %v3811 = vpop.f32.mrb[0].mxu0
  %v3812 = vadd.f32 0.0, %v3811
  %v3813 = vpop.f32.mrb[0].mxu0
  %3814 = vmatprep.mubr.bf16.mxu0 0
  %3815 = vmatmul.mubr.bf16.gmra.mrb[0].mxu0 %v2320
  %v3816 = vpop.f32.mrb[0].mxu0
  %v3817 = vadd.f32 0.0, %v3816
  %v3818 = vpop.f32.mrb[0].mxu0
  %v3819 = vpop.f32.mrb[0].mxu0
  %v3820 = vadd.f32 0.0, %v3819
  %v3821 = vpop.f32.mrb[0].mxu0
  %3822 = vmatprep.mubr.bf16.mxu0 0
  %3823 = vmatmul.mubr.bf16.gmra.mrb[0].mxu0 %v2323
  %v3824 = vpop.f32.mrb[0].mxu0
  %v3825 = vadd.f32 0.0, %v3824
  %v3826 = vpop.f32.mrb[0].mxu0
  %v3827 = vpop.f32.mrb[0].mxu0
  %v3828 = vadd.f32 0.0, %v3827
  %v3829 = vpop.f32.mrb[0].mxu0
  %3830 = vmatprep.mubr.bf16.mxu0 0
  %3831 = vmatmul.mubr.bf16.gmra.mrb[0].mxu0 %v2326
  %v3832 = vpop.f32.mrb[0].mxu0
  %v3833 = vadd.f32 0.0, %v3832
  %v3834 = vpop.f32.mrb[0].mxu0
  %v3835 = vpop.f32.mrb[0].mxu0
  %v3836 = vadd.f32 0.0, %v3835
  %v3837 = vpop.f32.mrb[0].mxu0
  %3838 = vmatprep.mubr.bf16.mxu0 0
  %3839 = vmatmul.mubr.bf16.gmra.mrb[0].mxu0 %v2329
  %v3840 = vpop.f32.mrb[0].mxu0
  %v3841 = vadd.f32 0.0, %v3840
  %v3842 = vpop.f32.mrb[0].mxu0
  %v3843 = vpop.f32.mrb[0].mxu0
  %v3844 = vadd.f32 0.0, %v3843
  %v3845 = vpop.f32.mrb[0].mxu0
  %3846 = vmatprep.mubr.bf16.mxu0 0
  %3847 = vmatmul.mubr.bf16.gmra.mrb[0].mxu0 %v2332
  %v3848 = vpop.f32.mrb[0].mxu0
  %v3849 = vadd.f32 0.0, %v3848
  %v3850 = vpop.f32.mrb[0].mxu0
  %v3851 = vpop.f32.mrb[0].mxu0
  %v3852 = vadd.f32 0.0, %v3851
  %v3853 = vpop.f32.mrb[0].mxu0
  %3854 = vmatprep.mubr.bf16.mxu0 0
  %3855 = vmatmul.mubr.bf16.gmra.mrb[0].mxu0 %v2335
  %v3856 = vpop.f32.mrb[0].mxu0
  %v3857 = vadd.f32 0.0, %v3856
  %v3858 = vpop.f32.mrb[0].mxu0
  %v3859 = vpop.f32.mrb[0].mxu0
  %v3860 = vadd.f32 0.0, %v3859
  %v3861 = vpop.f32.mrb[0].mxu0
  %3862 = vmatprep.mubr.bf16.mxu0 0
  %3863 = vmatmul.mubr.bf16.gmra.mrb[0].mxu0 %v2338
  %v3864 = vpop.f32.mrb[0].mxu0
  %v3865 = vadd.f32 0.0, %v3864
  %v3866 = vpop.f32.mrb[0].mxu0
  %v3867 = vpop.f32.mrb[0].mxu0
  %v3868 = vadd.f32 0.0, %v3867
  %v3869 = vpop.f32.mrb[0].mxu0
  %3870 = vmatprep.mubr.bf16.mxu0 0
  %3871 = vmatmul.mubr.bf16.gmra.mrb[0].mxu0 %v2341
  %v3872 = vpop.f32.mrb[0].mxu0
  %v3873 = vadd.f32 0.0, %v3872
  %v3874 = vpop.f32.mrb[0].mxu0
  %v3875 = vpop.f32.mrb[0].mxu0
  %v3876 = vadd.f32 0.0, %v3875
  %v3877 = vpop.f32.mrb[0].mxu0
  %3878 = vmatprep.mubr.bf16.mxu0 0
  %3879 = vmatmul.mubr.bf16.gmra.mrb[0].mxu0 %v2344
  %v3880 = vpop.f32.mrb[0].mxu0
  %v3881 = vadd.f32 0.0, %v3880
  %v3882 = vpop.f32.mrb[0].mxu0
  %v3883 = vpop.f32.mrb[0].mxu0
  %v3884 = vadd.f32 0.0, %v3883
  %v3885 = vpop.f32.mrb[0].mxu0
  %3886 = vmatprep.mubr.bf16.mxu0 0
  %3887 = vmatmul.mubr.bf16.gmra.mrb[0].mxu0 %v2347
  %v3888 = vpop.f32.mrb[0].mxu0
  %v3889 = vadd.f32 0.0, %v3888
  %v3890 = vpop.f32.mrb[0].mxu0
  %v3891 = vpop.f32.mrb[0].mxu0
  %v3892 = vadd.f32 0.0, %v3891
  %v3893 = vpop.f32.mrb[0].mxu0
  %3894 = vmatprep.mubr.bf16.mxu0 0
  %3895 = vmatmul.mubr.bf16.gmra.mrb[0].mxu0 %v2350
  %v3896 = vpop.f32.mrb[0].mxu0
  %v3897 = vadd.f32 0.0, %v3896
  %v3898 = vpop.f32.mrb[0].mxu0
  %v3899 = vpop.f32.mrb[0].mxu0
  %v3900 = vadd.f32 0.0, %v3899
  %v3901 = vpop.f32.mrb[0].mxu0
  %3902 = vmatprep.mubr.bf16.mxu0 0
  %3903 = vmatmul.mubr.bf16.gmra.mrb[0].mxu0 %v2353
  %v3904 = vpop.f32.mrb[0].mxu0
  %v3905 = vadd.f32 0.0, %v3904
  %v3906 = vpop.f32.mrb[0].mxu0
  %v3907 = vpop.f32.mrb[0].mxu0
  %v3908 = vadd.f32 0.0, %v3907
  %v3909 = vpop.f32.mrb[0].mxu0
  %3910 = vmatprep.mubr.bf16.mxu0 0
  %3911 = vmatmul.mubr.bf16.gmra.mrb[0].mxu0 %v2356
  %v3912 = vpop.f32.mrb[0].mxu0
  %v3913 = vadd.f32 0.0, %v3912
  %v3914 = vpop.f32.mrb[0].mxu0
  %v3915 = vpop.f32.mrb[0].mxu0
  %v3916 = vadd.f32 0.0, %v3915
  %v3917 = vpop.f32.mrb[0].mxu0
  %3918 = vmatprep.mubr.bf16.mxu0 0
  %3919 = vmatmul.mubr.bf16.gmra.mrb[0].mxu0 %v2359
  %v3920 = vpop.f32.mrb[0].mxu0
  %v3921 = vadd.f32 0.0, %v3920
  %v3922 = vpop.f32.mrb[0].mxu0
  %v3923 = vpop.f32.mrb[0].mxu0
  %v3924 = vadd.f32 0.0, %v3923
  %v3925 = vpop.f32.mrb[0].mxu0
  %3926 = vmatprep.mubr.bf16.mxu0 0
  %3927 = vmatmul.mubr.bf16.gmra.mrb[0].mxu0 %v2362
  %v3928 = vpop.f32.mrb[0].mxu0
  %v3929 = vadd.f32 0.0, %v3928
  %v3930 = vpop.f32.mrb[0].mxu0
  %v3931 = vpop.f32.mrb[0].mxu0
  %v3932 = vadd.f32 0.0, %v3931
  %v3933 = vpop.f32.mrb[0].mxu0
  %3934 = vmatprep.mubr.bf16.mxu0 0
  %3935 = vmatmul.mubr.bf16.gmra.mrb[0].mxu0 %v2365
  %v3936 = vpop.f32.mrb[0].mxu0
  %v3937 = vadd.f32 0.0, %v3936
  %v3938 = vpop.f32.mrb[0].mxu0
  %v3939 = vpop.f32.mrb[0].mxu0
  %v3940 = vadd.f32 0.0, %v3939
  %v3941 = vpop.f32.mrb[0].mxu0
  %3942 = vmatprep.mubr.bf16.mxu0 0
  %3943 = vmatmul.mubr.bf16.gmra.mrb[0].mxu0 %v2368
  %v3944 = vpop.f32.mrb[0].mxu0
  %v3945 = vadd.f32 0.0, %v3944
  %v3946 = vpop.f32.mrb[0].mxu0
  %v3947 = vpop.f32.mrb[0].mxu0
  %v3948 = vadd.f32 0.0, %v3947
  %v3949 = vpop.f32.mrb[0].mxu0
  %3950 = vmatprep.mubr.bf16.mxu0 0
  %3951 = vmatmul.mubr.bf16.gmra.mrb[0].mxu0 %v2371
  %v3952 = vpop.f32.mrb[0].mxu0
  %v3953 = vadd.f32 0.0, %v3952
  %v3954 = vpop.f32.mrb[0].mxu0
  %v3955 = vpop.f32.mrb[0].mxu0
  %v3956 = vadd.f32 0.0, %v3955
  %v3957 = vpop.f32.mrb[0].mxu0
  %3958 = vmatprep.mubr.bf16.mxu0 0
  %3959 = vmatmul.mubr.bf16.gmra.mrb[0].mxu0 %v2374
  %v3960 = vpop.f32.mrb[0].mxu0
  %v3961 = vadd.f32 0.0, %v3960
  %v3962 = vpop.f32.mrb[0].mxu0
  %v3963 = vpop.f32.mrb[0].mxu0
  %v3964 = vadd.f32 0.0, %v3963
  %v3965 = vpop.f32.mrb[0].mxu0
  %3966 = vmatprep.mubr.bf16.mxu0 0
  %3967 = vmatmul.mubr.bf16.gmra.mrb[0].mxu0 %v2377
  %v3968 = vpop.f32.mrb[0].mxu0
  %v3969 = vadd.f32 0.0, %v3968
  %v3970 = vpop.f32.mrb[0].mxu0
  %v3971 = vpop.f32.mrb[0].mxu0
  %v3972 = vadd.f32 0.0, %v3971
  %v3973 = vpop.f32.mrb[0].mxu0
  %3974 = vmatprep.mubr.bf16.mxu0 0
  %3975 = vmatmul.mubr.bf16.gmra.mrb[0].mxu0 %v2380
  %v3976 = vpop.f32.mrb[0].mxu0
  %v3977 = vadd.f32 0.0, %v3976
  %v3978 = vpop.f32.mrb[0].mxu0
  %v3979 = vpop.f32.mrb[0].mxu0
  %v3980 = vadd.f32 0.0, %v3979
  %v3981 = vpop.f32.mrb[0].mxu0
  %3982 = vmatprep.mubr.bf16.mxu0 0
  %3983 = vmatmul.mubr.bf16.gmra.mrb[0].mxu0 %v2383
  %v3984 = vpop.f32.mrb[0].mxu0
  %v3985 = vadd.f32 0.0, %v3984
  %v3986 = vpop.f32.mrb[0].mxu0
  %v3987 = vpop.f32.mrb[0].mxu0
  %v3988 = vadd.f32 0.0, %v3987
  %v3989 = vpop.f32.mrb[0].mxu0
  %3990 = vmatprep.mubr.bf16.mxu0 0
  %3991 = vmatmul.mubr.bf16.gmra.mrb[0].mxu0 %v2386
  %v3992 = vpop.f32.mrb[0].mxu0
  %v3993 = vadd.f32 0.0, %v3992
  %v3994 = vpop.f32.mrb[0].mxu0
  %v3995 = vpop.f32.mrb[0].mxu0
  %v3996 = vadd.f32 0.0, %v3995
  %v3997 = vpop.f32.mrb[0].mxu0
  %3998 = vmatprep.mubr.bf16.mxu0 0
  %3999 = vmatmul.mubr.bf16.gmra.mrb[0].mxu0 %v2389
  %v4000 = vpop.f32.mrb[0].mxu0
  %v4001 = vadd.f32 0.0, %v4000
  %v4002 = vpop.f32.mrb[0].mxu0
  %v4003 = vpop.f32.mrb[0].mxu0
  %v4004 = vadd.f32 0.0, %v4003
  %v4005 = vpop.f32.mrb[0].mxu0
  %4006 = vmatprep.mubr.bf16.mxu0 0
  %4007 = vmatmul.mubr.bf16.gmra.mrb[0].mxu0 %v2392
  %v4008 = vpop.f32.mrb[0].mxu0
  %v4009 = vadd.f32 0.0, %v4008
  %v4010 = vpop.f32.mrb[0].mxu0
  %v4011 = vpop.f32.mrb[0].mxu0
  %v4012 = vadd.f32 0.0, %v4011
  %v4013 = vpop.f32.mrb[0].mxu0
  %4014 = vmatprep.mubr.bf16.mxu0 0
  %4015 = vmatmul.mubr.bf16.gmra.mrb[0].mxu0 %v2395
  %v4016 = vpop.f32.mrb[0].mxu0
  %v4017 = vadd.f32 0.0, %v4016
  %v4018 = vpop.f32.mrb[0].mxu0
  %v4019 = vpop.f32.mrb[0].mxu0
  %v4020 = vadd.f32 0.0, %v4019
  %v4021 = vpop.f32.mrb[0].mxu0
  %4022 = vmatprep.mubr.bf16.mxu0 0
  %4023 = vmatmul.mubr.bf16.gmra.mrb[0].mxu0 %v2398
  %v4024 = vpop.f32.mrb[0].mxu0
  %v4025 = vadd.f32 0.0, %v4024
  %v4026 = vpop.f32.mrb[0].mxu0
  %v4027 = vpop.f32.mrb[0].mxu0
  %v4028 = vadd.f32 0.0, %v4027
  %v4029 = vpop.f32.mrb[0].mxu0
  %4030 = vmatprep.mubr.bf16.mxu0 0
  %4031 = vmatmul.mubr.bf16.gmra.mrb[0].mxu0 %v2401
  %v4032 = vpop.f32.mrb[0].mxu0
  %v4033 = vadd.f32 0.0, %v4032
  %v4034 = vpop.f32.mrb[0].mxu0
  %v4035 = vpop.f32.mrb[0].mxu0
  %v4036 = vadd.f32 0.0, %v4035
  %v4037 = vpop.f32.mrb[0].mxu0
  %4038 = vmatprep.mubr.bf16.mxu0 0
  %4039 = vmatmul.mubr.bf16.gmra.mrb[0].mxu0 %v2404
  %v4040 = vpop.f32.mrb[0].mxu0
  %v4041 = vadd.f32 0.0, %v4040
  %v4042 = vpop.f32.mrb[0].mxu0
  %v4043 = vpop.f32.mrb[0].mxu0
  %v4044 = vadd.f32 0.0, %v4043
  %v4045 = vpop.f32.mrb[0].mxu0
  %4046 = vmatprep.mubr.bf16.mxu0 0
  %4047 = vmatmul.mubr.bf16.gmra.mrb[0].mxu0 %v2407
  %v4048 = vpop.f32.mrb[0].mxu0
  %v4049 = vadd.f32 0.0, %v4048
  %v4050 = vpop.f32.mrb[0].mxu0
  %v4051 = vpop.f32.mrb[0].mxu0
  %v4052 = vadd.f32 0.0, %v4051
  %v4053 = vpop.f32.mrb[0].mxu0
  %4054 = vmatprep.mubr.bf16.mxu0 0
  %4055 = vmatmul.mubr.bf16.gmra.mrb[0].mxu0 %v2410
  %v4056 = vpop.f32.mrb[0].mxu0
  %v4057 = vadd.f32 0.0, %v4056
  %v4058 = vpop.f32.mrb[0].mxu0
  %v4059 = vpop.f32.mrb[0].mxu0
  %v4060 = vadd.f32 0.0, %v4059
  %v4061 = vpop.f32.mrb[0].mxu0
  %4062 = vmatprep.mubr.bf16.mxu0 0
  %4063 = vmatmul.mubr.bf16.gmra.mrb[0].mxu0 %v2413
  %v4064 = vpop.f32.mrb[0].mxu0
  %v4065 = vadd.f32 0.0, %v4064
  %v4066 = vpop.f32.mrb[0].mxu0
  %v4067 = vpop.f32.mrb[0].mxu0
  %v4068 = vadd.f32 0.0, %v4067
  %v4069 = vpop.f32.mrb[0].mxu0
  %4070 = vmatprep.mubr.bf16.mxu0 0
  %4071 = vmatmul.mubr.bf16.gmra.mrb[0].mxu0 %v2416
  %v4072 = vpop.f32.mrb[0].mxu0
  %v4073 = vadd.f32 0.0, %v4072
  %v4074 = vpop.f32.mrb[0].mxu0
  %v4075 = vpop.f32.mrb[0].mxu0
  %v4076 = vadd.f32 0.0, %v4075
  %v4077 = vpop.f32.mrb[0].mxu0
  %4078 = vmatprep.mubr.bf16.mxu0 0
  %4079 = vmatmul.mubr.bf16.gmra.mrb[0].mxu0 %v2419
  %v4080 = vpop.f32.mrb[0].mxu0
  %v4081 = vadd.f32 0.0, %v4080
  %v4082 = vpop.f32.mrb[0].mxu0
  %v4083 = vpop.f32.mrb[0].mxu0
  %v4084 = vadd.f32 0.0, %v4083
  %v4085 = vpop.f32.mrb[0].mxu0
  %4086 = vmatprep.mubr.bf16.mxu0 0
  %4087 = vmatmul.mubr.bf16.gmra.mrb[0].mxu0 %v2422
  %v4088 = vpop.f32.mrb[0].mxu0
  %v4089 = vadd.f32 0.0, %v4088
  %v4090 = vpop.f32.mrb[0].mxu0
  %v4091 = vpop.f32.mrb[0].mxu0
  %v4092 = vadd.f32 0.0, %v4091
  %v4093 = vpop.f32.mrb[0].mxu0
  %4094 = vmatprep.mubr.bf16.mxu0 0
  %4095 = vmatmul.mubr.bf16.gmra.mrb[0].mxu0 %v2425
  %v4096 = vpop.f32.mrb[0].mxu0
  %v4097 = vadd.f32 0.0, %v4096
  %v4098 = vpop.f32.mrb[0].mxu0
  %v4099 = vpop.f32.mrb[0].mxu0
  %v4100 = vadd.f32 0.0, %v4099
  %v4101 = vpop.f32.mrb[0].mxu0
  %4102 = vmatprep.mubr.bf16.mxu0 0
  %4103 = vmatmul.mubr.bf16.gmra.mrb[0].mxu0 %v2428
  %v4104 = vpop.f32.mrb[0].mxu0
  %v4105 = vadd.f32 0.0, %v4104
  %v4106 = vpop.f32.mrb[0].mxu0
  %v4107 = vpop.f32.mrb[0].mxu0
  %v4108 = vadd.f32 0.0, %v4107
  %v4109 = vpop.f32.mrb[0].mxu0
  %4110 = vmatprep.mubr.bf16.mxu0 0
  %4111 = vmatmul.mubr.bf16.gmra.mrb[0].mxu0 %v2431
  %v4112 = vpop.f32.mrb[0].mxu0
  %v4113 = vadd.f32 0.0, %v4112
  %v4114 = vpop.f32.mrb[0].mxu0
  %v4115 = vpop.f32.mrb[0].mxu0
  %v4116 = vadd.f32 0.0, %v4115
  %v4117 = vpop.f32.mrb[0].mxu0
  %4118 = vmatprep.mubr.bf16.mxu0 0
  %4119 = vmatmul.mubr.bf16.gmra.mrb[0].mxu0 %v2434
  %v4120 = vpop.f32.mrb[0].mxu0
  %v4121 = vadd.f32 0.0, %v4120
  %v4122 = vpop.f32.mrb[0].mxu0
  %v4123 = vpop.f32.mrb[0].mxu0
  %v4124 = vadd.f32 0.0, %v4123
  %v4125 = vpop.f32.mrb[0].mxu0
  %4126 = vmatprep.mubr.bf16.mxu0 0
  %4127 = vmatmul.mubr.bf16.gmra.mrb[0].mxu0 %v2437
  %v4128 = vpop.f32.mrb[0].mxu0
  %v4129 = vadd.f32 0.0, %v4128
  %v4130 = vpop.f32.mrb[0].mxu0
  %v4131 = vpop.f32.mrb[0].mxu0
  %v4132 = vadd.f32 0.0, %v4131
  %v4133 = vpop.f32.mrb[0].mxu0
  %4134 = vmatprep.mubr.bf16.mxu0 0
  %4135 = vmatmul.mubr.bf16.gmra.mrb[0].mxu0 %v2440
  %v4136 = vpop.f32.mrb[0].mxu0
  %v4137 = vadd.f32 0.0, %v4136
  %v4138 = vpop.f32.mrb[0].mxu0
  %v4139 = vpop.f32.mrb[0].mxu0
  %v4140 = vadd.f32 0.0, %v4139
  %v4141 = vpop.f32.mrb[0].mxu0
  %4142 = vmatprep.mubr.bf16.mxu0 0
  %4143 = vmatmul.mubr.bf16.gmra.mrb[0].mxu0 %v2443
  %v4144 = vpop.f32.mrb[0].mxu0
  %v4145 = vadd.f32 0.0, %v4144
  %v4146 = vpop.f32.mrb[0].mxu0
  %v4147 = vpop.f32.mrb[0].mxu0
  %v4148 = vadd.f32 0.0, %v4147
  %v4149 = vpop.f32.mrb[0].mxu0
  %4150 = vmatprep.mubr.bf16.mxu0 0
  %4151 = vmatmul.mubr.bf16.gmra.mrb[0].mxu0 %v2446
  %v4152 = vpop.f32.mrb[0].mxu0
  %v4153 = vadd.f32 0.0, %v4152
  %v4154 = vpop.f32.mrb[0].mxu0
  %v4155 = vpop.f32.mrb[0].mxu0
  %v4156 = vadd.f32 0.0, %v4155
  %v4157 = vpop.f32.mrb[0].mxu0
  %4158 = vmatprep.mubr.bf16.mxu0 0
  %4159 = vmatmul.mubr.bf16.gmra.mrb[0].mxu0 %v2449
  %v4160 = vpop.f32.mrb[0].mxu0
  %v4161 = vadd.f32 0.0, %v4160
  %v4162 = vpop.f32.mrb[0].mxu0
  %v4163 = vpop.f32.mrb[0].mxu0
  %v4164 = vadd.f32 0.0, %v4163
  %v4165 = vpop.f32.mrb[0].mxu0
  %4166 = vmatprep.mubr.bf16.mxu0 0
  %4167 = vmatmul.mubr.bf16.gmra.mrb[0].mxu0 %v2452
  %v4168 = vpop.f32.mrb[0].mxu0
  %v4169 = vadd.f32 0.0, %v4168
  %v4170 = vpop.f32.mrb[0].mxu0
  %v4171 = vpop.f32.mrb[0].mxu0
  %v4172 = vadd.f32 0.0, %v4171
  %v4173 = vpop.f32.mrb[0].mxu0
  %4174 = vmatprep.mubr.bf16.mxu0 0
  %4175 = vmatmul.mubr.bf16.gmra.mrb[0].mxu0 %v2455
  %v4176 = vpop.f32.mrb[0].mxu0
  %v4177 = vadd.f32 0.0, %v4176
  %v4178 = vpop.f32.mrb[0].mxu0
  %v4179 = vpop.f32.mrb[0].mxu0
  %v4180 = vadd.f32 0.0, %v4179
  %v4181 = vpop.f32.mrb[0].mxu0
  %4182 = vmatprep.mubr.bf16.mxu0 0
  %4183 = vmatmul.mubr.bf16.gmra.mrb[0].mxu0 %v2458
  %v4184 = vpop.f32.mrb[0].mxu0
  %v4185 = vadd.f32 0.0, %v4184
  %v4186 = vpop.f32.mrb[0].mxu0
  %v4187 = vpop.f32.mrb[0].mxu0
  %v4188 = vadd.f32 0.0, %v4187
  %v4189 = vpop.f32.mrb[0].mxu0
  %4190 = vmatprep.mubr.bf16.mxu0 0
  %4191 = vmatmul.mubr.bf16.gmra.mrb[0].mxu0 %v2461
  %v4192 = vpop.f32.mrb[0].mxu0
  %v4193 = vadd.f32 0.0, %v4192
  %v4194 = vpop.f32.mrb[0].mxu0
  %v4195 = vpop.f32.mrb[0].mxu0
  %v4196 = vadd.f32 0.0, %v4195
  %v4197 = vpop.f32.mrb[0].mxu0
  %4198 = vmatprep.mubr.bf16.mxu0 0
  %4199 = vmatmul.mubr.bf16.gmra.mrb[0].mxu0 %v2464
  %v4200 = vpop.f32.mrb[0].mxu0
  %v4201 = vadd.f32 0.0, %v4200
  %v4202 = vpop.f32.mrb[0].mxu0
  %v4203 = vpop.f32.mrb[0].mxu0
  %v4204 = vadd.f32 0.0, %v4203
  %v4205 = vpop.f32.mrb[0].mxu0
  %4206 = vmatprep.mubr.bf16.mxu0 0
  %4207 = vmatmul.mubr.bf16.gmra.mrb[0].mxu0 %v2467
  %v4208 = vpop.f32.mrb[0].mxu0
  %v4209 = vadd.f32 0.0, %v4208
  %v4210 = vpop.f32.mrb[0].mxu0
  %v4211 = vpop.f32.mrb[0].mxu0
  %v4212 = vadd.f32 0.0, %v4211
  %v4213 = vpop.f32.mrb[0].mxu0
  %4214 = vmatprep.mubr.bf16.mxu0 0
  %4215 = vmatmul.mubr.bf16.gmra.mrb[0].mxu0 %v2470
  %v4216 = vpop.f32.mrb[0].mxu0
  %v4217 = vadd.f32 0.0, %v4216
  %v4218 = vpop.f32.mrb[0].mxu0
  %v4219 = vpop.f32.mrb[0].mxu0
  %v4220 = vadd.f32 0.0, %v4219
  %v4221 = vpop.f32.mrb[0].mxu0
  %4222 = vmatprep.mubr.bf16.mxu0 0
  %4223 = vmatmul.mubr.bf16.gmra.mrb[0].mxu0 %v2473
  %v4224 = vpop.f32.mrb[0].mxu0
  %v4225 = vadd.f32 0.0, %v4224
  %v4226 = vpop.f32.mrb[0].mxu0
  %v4227 = vpop.f32.mrb[0].mxu0
  %v4228 = vadd.f32 0.0, %v4227
  %v4229 = vpop.f32.mrb[0].mxu0
  %4230 = vmatprep.mubr.bf16.mxu0 0
  %4231 = vmatmul.mubr.bf16.gmra.mrb[0].mxu0 %v2476
  %v4232 = vpop.f32.mrb[0].mxu0
  %v4233 = vadd.f32 0.0, %v4232
  %v4234 = vpop.f32.mrb[0].mxu0
  %v4235 = vpop.f32.mrb[0].mxu0
  %v4236 = vadd.f32 0.0, %v4235
  %v4237 = vpop.f32.mrb[0].mxu0
  %4238 = vmatprep.mubr.bf16.mxu0 0
  %4239 = vmatmul.mubr.bf16.gmra.mrb[0].mxu0 %v2479
  %v4240 = vpop.f32.mrb[0].mxu0
  %v4241 = vadd.f32 0.0, %v4240
  %v4242 = vpop.f32.mrb[0].mxu0
  %v4243 = vpop.f32.mrb[0].mxu0
  %v4244 = vadd.f32 0.0, %v4243
  %v4245 = vpop.f32.mrb[0].mxu0
  %4246 = vmatprep.mubr.bf16.mxu0 0
  %4247 = vmatmul.mubr.bf16.gmra.mrb[0].mxu0 %v2482
  %v4248 = vpop.f32.mrb[0].mxu0
  %v4249 = vadd.f32 0.0, %v4248
  %v4250 = vpop.f32.mrb[0].mxu0
  %v4251 = vpop.f32.mrb[0].mxu0
  %v4252 = vadd.f32 0.0, %v4251
  %v4253 = vpop.f32.mrb[0].mxu0
  %4254 = vmatprep.mubr.bf16.mxu0 0
  %4255 = vmatmul.mubr.bf16.gmra.mrb[0].mxu0 %v2485
  %v4256 = vpop.f32.mrb[0].mxu0
  %v4257 = vadd.f32 0.0, %v4256
  %v4258 = vpop.f32.mrb[0].mxu0
  %v4259 = vpop.f32.mrb[0].mxu0
  %v4260 = vadd.f32 0.0, %v4259
  %v4261 = vpop.f32.mrb[0].mxu0
  %4262 = vmatprep.mubr.bf16.mxu0 0
  %4263 = vmatmul.mubr.bf16.gmra.mrb[0].mxu0 %v2488
  %v4264 = vpop.f32.mrb[0].mxu0
  %v4265 = vadd.f32 0.0, %v4264
  %v4266 = vpop.f32.mrb[0].mxu0
  %v4267 = vpop.f32.mrb[0].mxu0
  %v4268 = vadd.f32 0.0, %v4267
  %v4269 = vpop.f32.mrb[0].mxu0
  %4270 = vmatprep.mubr.bf16.mxu0 0
  %4271 = vmatmul.mubr.bf16.gmra.mrb[0].mxu0 %v2491
  %v4272 = vpop.f32.mrb[0].mxu0
  %v4273 = vadd.f32 0.0, %v4272
  %v4274 = vpop.f32.mrb[0].mxu0
  %v4275 = vpop.f32.mrb[0].mxu0
  %v4276 = vadd.f32 0.0, %v4275
  %v4277 = vpop.f32.mrb[0].mxu0
  %4278 = vmatprep.mubr.bf16.mxu0 0
  %4279 = vmatmul.mubr.bf16.gmra.mrb[0].mxu0 %v2494
  %v4280 = vpop.f32.mrb[0].mxu0
  %v4281 = vadd.f32 0.0, %v4280
  %v4282 = vpop.f32.mrb[0].mxu0
  %v4283 = vpop.f32.mrb[0].mxu0
  %v4284 = vadd.f32 0.0, %v4283
  %v4285 = vpop.f32.mrb[0].mxu0
  %4286 = vmatprep.mubr.bf16.mxu0 0
  %4287 = vmatmul.mubr.bf16.gmra.mrb[0].mxu0 %v2497
  %v4288 = vpop.f32.mrb[0].mxu0
  %v4289 = vadd.f32 0.0, %v4288
  %v4290 = vpop.f32.mrb[0].mxu0
  %v4291 = vpop.f32.mrb[0].mxu0
  %v4292 = vadd.f32 0.0, %v4291
  %v4293 = vpop.f32.mrb[0].mxu0
  %4294 = vmatprep.mubr.bf16.mxu0 0
  %4295 = vmatmul.mubr.bf16.gmra.mrb[0].mxu0 %v2500
  %v4296 = vpop.f32.mrb[0].mxu0
  %v4297 = vadd.f32 0.0, %v4296
  %v4298 = vpop.f32.mrb[0].mxu0
  %v4299 = vpop.f32.mrb[0].mxu0
  %v4300 = vadd.f32 0.0, %v4299
  %v4301 = vpop.f32.mrb[0].mxu0
  %4302 = vmatprep.mubr.bf16.mxu0 0
  %4303 = vmatmul.mubr.bf16.gmra.mrb[0].mxu0 %v2503
  %v4304 = vpop.f32.mrb[0].mxu0
  %v4305 = vadd.f32 0.0, %v4304
  %v4306 = vpop.f32.mrb[0].mxu0
  %v4307 = vpop.f32.mrb[0].mxu0
  %v4308 = vadd.f32 0.0, %v4307
  %v4309 = vpop.f32.mrb[0].mxu0
  %4310 = vmatprep.mubr.bf16.mxu0 0
  %4311 = vmatmul.mubr.bf16.gmra.mrb[0].mxu0 %v2506
  %v4312 = vpop.f32.mrb[0].mxu0
  %v4313 = vadd.f32 0.0, %v4312
  %v4314 = vpop.f32.mrb[0].mxu0
  %v4315 = vpop.f32.mrb[0].mxu0
  %v4316 = vadd.f32 0.0, %v4315
  %v4317 = vpop.f32.mrb[0].mxu0
  %4318 = vmatprep.mubr.bf16.mxu0 0
  %4319 = vmatmul.mubr.bf16.gmra.mrb[0].mxu0 %v2509
  %v4320 = vpop.f32.mrb[0].mxu0
  %v4321 = vadd.f32 0.0, %v4320
  %v4322 = vpop.f32.mrb[0].mxu0
  %v4323 = vpop.f32.mrb[0].mxu0
  %v4324 = vadd.f32 0.0, %v4323
  %v4325 = vpop.f32.mrb[0].mxu0
  %4326 = vmatprep.mubr.bf16.mxu0 0
  %4327 = vmatmul.mubr.bf16.gmra.mrb[0].mxu0 %v2512
  %v4328 = vpop.f32.mrb[0].mxu0
  %v4329 = vadd.f32 0.0, %v4328
  %v4330 = vpop.f32.mrb[0].mxu0
  %v4331 = vpop.f32.mrb[0].mxu0
  %v4332 = vadd.f32 0.0, %v4331
  %v4333 = vpop.f32.mrb[0].mxu0
  %4334 = vmatprep.mubr.bf16.mxu0 0
  %4335 = vmatmul.mubr.bf16.gmra.mrb[0].mxu0 %v2515
  %v4336 = vpop.f32.mrb[0].mxu0
  %v4337 = vadd.f32 0.0, %v4336
  %v4338 = vpop.f32.mrb[0].mxu0
  %v4339 = vpop.f32.mrb[0].mxu0
  %v4340 = vadd.f32 0.0, %v4339
  %v4341 = vpop.f32.mrb[0].mxu0
  %4342 = vmatprep.mubr.bf16.mxu0 0
  %4343 = vmatmul.mubr.bf16.gmra.mrb[0].mxu0 %v2518
  %v4344 = vpop.f32.mrb[0].mxu0
  %v4345 = vadd.f32 0.0, %v4344
  %v4346 = vpop.f32.mrb[0].mxu0
  %v4347 = vpop.f32.mrb[0].mxu0
  %v4348 = vadd.f32 0.0, %v4347
  %v4349 = vpop.f32.mrb[0].mxu0
  %4350 = vmatprep.mubr.bf16.mxu0 0
  %4351 = vmatmul.mubr.bf16.gmra.mrb[0].mxu0 %v2521
  %v4352 = vpop.f32.mrb[0].mxu0
  %v4353 = vadd.f32 0.0, %v4352
  %v4354 = vpop.f32.mrb[0].mxu0
  %v4355 = vpop.f32.mrb[0].mxu0
  %v4356 = vadd.f32 0.0, %v4355
  %v4357 = vpop.f32.mrb[0].mxu0
  %4358 = vmatprep.mubr.bf16.mxu0 0
  %4359 = vmatmul.mubr.bf16.gmra.mrb[0].mxu0 %v2524
  %v4360 = vpop.f32.mrb[0].mxu0
  %v4361 = vadd.f32 0.0, %v4360
  %v4362 = vpop.f32.mrb[0].mxu0
  %v4363 = vpop.f32.mrb[0].mxu0
  %v4364 = vadd.f32 0.0, %v4363
  %v4365 = vpop.f32.mrb[0].mxu0
  %4366 = vmatprep.mubr.bf16.mxu0 0
  %4367 = vmatmul.mubr.bf16.gmra.mrb[0].mxu0 %v2527
  %v4368 = vpop.f32.mrb[0].mxu0
  %v4369 = vadd.f32 0.0, %v4368
  %v4370 = vpop.f32.mrb[0].mxu0
  %v4371 = vpop.f32.mrb[0].mxu0
  %v4372 = vadd.f32 0.0, %v4371
  %v4373 = vpop.f32.mrb[0].mxu0
  %4374 = vmatprep.mubr.bf16.mxu0 0
  %4375 = vmatmul.mubr.bf16.gmra.mrb[0].mxu0 %v2530
  %v4376 = vpop.f32.mrb[0].mxu0
  %v4377 = vadd.f32 0.0, %v4376
  %v4378 = vpop.f32.mrb[0].mxu0
  %v4379 = vpop.f32.mrb[0].mxu0
  %v4380 = vadd.f32 0.0, %v4379
  %v4381 = vpop.f32.mrb[0].mxu0
  %4382 = vmatprep.mubr.bf16.mxu0 0
  %4383 = vmatmul.mubr.bf16.gmra.mrb[0].mxu0 %v2533
  %v4384 = vpop.f32.mrb[0].mxu0
  %v4385 = vadd.f32 0.0, %v4384
  %v4386 = vpop.f32.mrb[0].mxu0
  %v4387 = vpop.f32.mrb[0].mxu0
  %v4388 = vadd.f32 0.0, %v4387
  %v4389 = vpop.f32.mrb[0].mxu0
  %4390 = vmatprep.mubr.bf16.mxu0 0
  %4391 = vmatmul.mubr.bf16.gmra.mrb[0].mxu0 %v2536
  %v4392 = vpop.f32.mrb[0].mxu0
  %v4393 = vadd.f32 0.0, %v4392
  %v4394 = vpop.f32.mrb[0].mxu0
  %v4395 = vpop.f32.mrb[0].mxu0
  %v4396 = vadd.f32 0.0, %v4395
  %v4397 = vpop.f32.mrb[0].mxu0
  %4398 = vmatprep.mubr.bf16.mxu0 0
  %4399 = vmatmul.mubr.bf16.gmra.mrb[0].mxu0 %v2539
  %v4400 = vpop.f32.mrb[0].mxu0
  %v4401 = vadd.f32 0.0, %v4400
  %v4402 = vpop.f32.mrb[0].mxu0
  %v4403 = vpop.f32.mrb[0].mxu0
  %v4404 = vadd.f32 0.0, %v4403
  %v4405 = vpop.f32.mrb[0].mxu0
  %4406 = vmatprep.mubr.bf16.mxu0 0
  %4407 = vmatmul.mubr.bf16.gmra.mrb[0].mxu0 %v2542
  %v4408 = vpop.f32.mrb[0].mxu0
  %v4409 = vadd.f32 0.0, %v4408
  %v4410 = vpop.f32.mrb[0].mxu0
  %v4411 = vpop.f32.mrb[0].mxu0
  %v4412 = vadd.f32 0.0, %v4411
  %v4413 = vpop.f32.mrb[0].mxu0
  %4414 = vmatprep.mubr.bf16.mxu0 0
  %4415 = vmatmul.mubr.bf16.gmra.mrb[0].mxu0 %v2545
  %v4416 = vpop.f32.mrb[0].mxu0
  %v4417 = vadd.f32 0.0, %v4416
  %v4418 = vpop.f32.mrb[0].mxu0
  %v4419 = vpop.f32.mrb[0].mxu0
  %v4420 = vadd.f32 0.0, %v4419
  %v4421 = vpop.f32.mrb[0].mxu0
  %4422 = vmatprep.mubr.bf16.mxu0 0
  %4423 = vmatmul.mubr.bf16.gmra.mrb[0].mxu0 %v2548
  %v4424 = vpop.f32.mrb[0].mxu0
  %v4425 = vadd.f32 0.0, %v4424
  %v4426 = vpop.f32.mrb[0].mxu0
  %v4427 = vpop.f32.mrb[0].mxu0
  %v4428 = vadd.f32 0.0, %v4427
  %v4429 = vpop.f32.mrb[0].mxu0
  %4430 = vmatprep.mubr.bf16.mxu0 0
  %4431 = vmatmul.mubr.bf16.gmra.mrb[0].mxu0 %v2551
  %v4432 = vpop.f32.mrb[0].mxu0
  %v4433 = vadd.f32 0.0, %v4432
  %v4434 = vpop.f32.mrb[0].mxu0
  %v4435 = vpop.f32.mrb[0].mxu0
  %v4436 = vadd.f32 0.0, %v4435
  %v4437 = vpop.f32.mrb[0].mxu0
  %4438 = vmatprep.mubr.bf16.mxu0 0
  %4439 = vmatmul.mubr.bf16.gmra.mrb[0].mxu0 %v2554
  %v4440 = vpop.f32.mrb[0].mxu0
  %v4441 = vadd.f32 0.0, %v4440
  %v4442 = vpop.f32.mrb[0].mxu0
  %v4443 = vpop.f32.mrb[0].mxu0
  %v4444 = vadd.f32 0.0, %v4443
  %v4445 = vpop.f32.mrb[0].mxu0
  %4446 = vmatprep.mubr.bf16.mxu0 0
  %4447 = vmatmul.mubr.bf16.gmra.mrb[0].mxu0 %v2557
  %v4448 = vpop.f32.mrb[0].mxu0
  %v4449 = vadd.f32 0.0, %v4448
  %v4450 = vpop.f32.mrb[0].mxu0
  %v4451 = vpop.f32.mrb[0].mxu0
  %v4452 = vadd.f32 0.0, %v4451
  %v4453 = vpop.f32.mrb[0].mxu0
  %4454 = vmatprep.mubr.bf16.mxu0 0
  %4455 = vmatmul.mubr.bf16.gmra.mrb[0].mxu0 %v2560
  %v4456 = vpop.f32.mrb[0].mxu0
  %v4457 = vadd.f32 0.0, %v4456
  %v4458 = vpop.f32.mrb[0].mxu0
  %v4459 = vpop.f32.mrb[0].mxu0
  %v4460 = vadd.f32 0.0, %v4459
  %v4461 = vpop.f32.mrb[0].mxu0
  %4462 = vmatprep.mubr.bf16.mxu0 0
  %4463 = vmatmul.mubr.bf16.gmra.mrb[0].mxu0 %v2563
  %v4464 = vpop.f32.mrb[0].mxu0
  %v4465 = vadd.f32 0.0, %v4464
  %v4466 = vpop.f32.mrb[0].mxu0
  %v4467 = vpop.f32.mrb[0].mxu0
  %v4468 = vadd.f32 0.0, %v4467
  %v4469 = vpop.f32.mrb[0].mxu0
  %4470 = vmatprep.mubr.bf16.mxu0 0
  %4471 = vmatmul.mubr.bf16.gmra.mrb[0].mxu0 %v2566
  %v4472 = vpop.f32.mrb[0].mxu0
  %v4473 = vadd.f32 0.0, %v4472
  %v4474 = vpop.f32.mrb[0].mxu0
  %v4475 = vpop.f32.mrb[0].mxu0
  %v4476 = vadd.f32 0.0, %v4475
  %v4477 = vpop.f32.mrb[0].mxu0
  %4478 = vmatprep.mubr.bf16.mxu0 0
  %4479 = vmatmul.mubr.bf16.gmra.mrb[0].mxu0 %v2569
  %v4480 = vpop.f32.mrb[0].mxu0
  %v4481 = vadd.f32 0.0, %v4480
  %v4482 = vpop.f32.mrb[0].mxu0
  %v4483 = vpop.f32.mrb[0].mxu0
  %v4484 = vadd.f32 0.0, %v4483
  %v4485 = vpop.f32.mrb[0].mxu0
  %4486 = vmatprep.mubr.bf16.mxu0 0
  %4487 = vmatmul.mubr.bf16.gmra.mrb[0].mxu0 %v2572
  %v4488 = vpop.f32.mrb[0].mxu0
  %v4489 = vadd.f32 0.0, %v4488
  %v4490 = vpop.f32.mrb[0].mxu0
  %v4491 = vpop.f32.mrb[0].mxu0
  %v4492 = vadd.f32 0.0, %v4491
  %v4493 = vpop.f32.mrb[0].mxu0
  %4494 = vmatprep.mubr.bf16.mxu0 0
  %4495 = vmatmul.mubr.bf16.gmra.mrb[0].mxu0 %v2575
  %v4496 = vpop.f32.mrb[0].mxu0
  %v4497 = vadd.f32 0.0, %v4496
  %v4498 = vpop.f32.mrb[0].mxu0
  %v4499 = vpop.f32.mrb[0].mxu0
  %v4500 = vadd.f32 0.0, %v4499
  %v4501 = vpop.f32.mrb[0].mxu0
  %4502 = vmatprep.mubr.bf16.mxu0 0
  %4503 = vmatmul.mubr.bf16.gmra.mrb[0].mxu0 %v2578
  %v4504 = vpop.f32.mrb[0].mxu0
  %v4505 = vadd.f32 0.0, %v4504
  %v4506 = vpop.f32.mrb[0].mxu0
  %v4507 = vpop.f32.mrb[0].mxu0
  %v4508 = vadd.f32 0.0, %v4507
  %v4509 = vpop.f32.mrb[0].mxu0
  %4510 = vmatprep.mubr.bf16.mxu0 0
  %4511 = vmatmul.mubr.bf16.gmra.mrb[0].mxu0 %v2581
  %v4512 = vpop.f32.mrb[0].mxu0
  %v4513 = vadd.f32 0.0, %v4512
  %v4514 = vpop.f32.mrb[0].mxu0
  %v4515 = vpop.f32.mrb[0].mxu0
  %v4516 = vadd.f32 0.0, %v4515
  %v4517 = vpop.f32.mrb[0].mxu0
  %4518 = vmatprep.mubr.bf16.mxu0 0
  %4519 = vmatmul.mubr.bf16.gmra.mrb[0].mxu0 %v2584
  %v4520 = vpop.f32.mrb[0].mxu0
  %v4521 = vadd.f32 0.0, %v4520
  %v4522 = vpop.f32.mrb[0].mxu0
  %v4523 = vpop.f32.mrb[0].mxu0
  %v4524 = vadd.f32 0.0, %v4523
  %v4525 = vpop.f32.mrb[0].mxu0
  %4526 = vmatprep.mubr.bf16.mxu0 0
  %4527 = vmatmul.mubr.bf16.gmra.mrb[0].mxu0 %v2587
  %v4528 = vpop.f32.mrb[0].mxu0
  %v4529 = vadd.f32 0.0, %v4528
  %v4530 = vpop.f32.mrb[0].mxu0
  %v4531 = vpop.f32.mrb[0].mxu0
  %v4532 = vadd.f32 0.0, %v4531
  %v4533 = vpop.f32.mrb[0].mxu0
  %4534 = vmatprep.mubr.bf16.mxu0 0
  %4535 = vmatmul.mubr.bf16.gmra.mrb[0].mxu0 %v2590
  %v4536 = vpop.f32.mrb[0].mxu0
  %v4537 = vadd.f32 0.0, %v4536
  %v4538 = vpop.f32.mrb[0].mxu0
  %v4539 = vpop.f32.mrb[0].mxu0
  %v4540 = vadd.f32 0.0, %v4539
  %v4541 = vpop.f32.mrb[0].mxu0
  %4542 = vmatprep.mubr.bf16.mxu0 0
  %4543 = vmatmul.mubr.bf16.gmra.mrb[0].mxu0 %v2593
  %v4544 = vpop.f32.mrb[0].mxu0
  %v4545 = vadd.f32 0.0, %v4544
  %v4546 = vpop.f32.mrb[0].mxu0
  %v4547 = vpop.f32.mrb[0].mxu0
  %v4548 = vadd.f32 0.0, %v4547
  %v4549 = vpop.f32.mrb[0].mxu0
  %4550 = vmatprep.mubr.bf16.mxu0 0
  %4551 = vmatmul.mubr.bf16.gmra.mrb[0].mxu0 %v2596
  %v4552 = vpop.f32.mrb[0].mxu0
  %v4553 = vadd.f32 0.0, %v4552
  %v4554 = vpop.f32.mrb[0].mxu0
  %v4555 = vpop.f32.mrb[0].mxu0
  %v4556 = vadd.f32 0.0, %v4555
  %v4557 = vpop.f32.mrb[0].mxu0
  %4558 = vmatprep.mubr.bf16.mxu0 0
  %4559 = vmatmul.mubr.bf16.gmra.mrb[0].mxu0 %v2599
  %v4560 = vpop.f32.mrb[0].mxu0
  %v4561 = vadd.f32 0.0, %v4560
  %v4562 = vpop.f32.mrb[0].mxu0
  %v4563 = vpop.f32.mrb[0].mxu0
  %v4564 = vadd.f32 0.0, %v4563
  %v4565 = vpop.f32.mrb[0].mxu0
  %4566 = vmatprep.mubr.bf16.mxu0 0
  %4567 = vmatmul.mubr.bf16.gmra.mrb[0].mxu0 %v2602
  %v4568 = vpop.f32.mrb[0].mxu0
  %v4569 = vadd.f32 0.0, %v4568
  %v4570 = vpop.f32.mrb[0].mxu0
  %v4571 = vpop.f32.mrb[0].mxu0
  %v4572 = vadd.f32 0.0, %v4571
  %v4573 = vpop.f32.mrb[0].mxu0
  %4574 = vmatprep.mubr.bf16.mxu0 0
  %4575 = vmatmul.mubr.bf16.gmra.mrb[0].mxu0 %v2605
  %v4576 = vpop.f32.mrb[0].mxu0
  %v4577 = vadd.f32 0.0, %v4576
  %v4578 = vpop.f32.mrb[0].mxu0
  %v4579 = vpop.f32.mrb[0].mxu0
  %v4580 = vadd.f32 0.0, %v4579
  %v4581 = vpop.f32.mrb[0].mxu0
  %4582 = vmatprep.mubr.bf16.mxu0 0
  %4583 = vmatmul.mubr.bf16.gmra.mrb[0].mxu0 %v2608
  %v4584 = vpop.f32.mrb[0].mxu0
  %v4585 = vadd.f32 0.0, %v4584
  %v4586 = vpop.f32.mrb[0].mxu0
  %v4587 = vpop.f32.mrb[0].mxu0
  %v4588 = vadd.f32 0.0, %v4587
  %v4589 = vpop.f32.mrb[0].mxu0
  %4590 = vmatprep.mubr.bf16.mxu0 0
  %4591 = vmatmul.mubr.bf16.gmra.mrb[0].mxu0 %v2611
  %v4592 = vpop.f32.mrb[0].mxu0
  %v4593 = vadd.f32 0.0, %v4592
  %v4594 = vpop.f32.mrb[0].mxu0
  %v4595 = vpop.f32.mrb[0].mxu0
  %v4596 = vadd.f32 0.0, %v4595
  %v4597 = vpop.f32.mrb[0].mxu0
  %4598 = vmatprep.mubr.bf16.mxu0 0
  %4599 = vmatmul.mubr.bf16.gmra.mrb[0].mxu0 %v2614
  %v4600 = vpop.f32.mrb[0].mxu0
  %v4601 = vadd.f32 0.0, %v4600
  %v4602 = vpop.f32.mrb[0].mxu0
  %v4603 = vpop.f32.mrb[0].mxu0
  %v4604 = vadd.f32 0.0, %v4603
  %v4605 = vpop.f32.mrb[0].mxu0
  %4606 = vmatprep.mubr.bf16.mxu0 0
  %4607 = vmatmul.mubr.bf16.gmra.mrb[0].mxu0 %v2617
  %v4608 = vpop.f32.mrb[0].mxu0
  %v4609 = vadd.f32 0.0, %v4608
  %v4610 = vpop.f32.mrb[0].mxu0
  %v4611 = vpop.f32.mrb[0].mxu0
  %v4612 = vadd.f32 0.0, %v4611
  %v4613 = vpop.f32.mrb[0].mxu0
  %4614 = vmatprep.mubr.bf16.mxu0 0
  %4615 = vmatmul.mubr.bf16.gmra.mrb[0].mxu0 %v2620
  %v4616 = vpop.f32.mrb[0].mxu0
  %v4617 = vadd.f32 0.0, %v4616
  %v4618 = vpop.f32.mrb[0].mxu0
  %v4619 = vpop.f32.mrb[0].mxu0
  %v4620 = vadd.f32 0.0, %v4619
  %v4621 = vpop.f32.mrb[0].mxu0
  %4622 = vmatprep.mubr.bf16.mxu0 0
  %4623 = vmatmul.mubr.bf16.gmra.mrb[0].mxu0 %v2623
  %v4624 = vpop.f32.mrb[0].mxu0
  %v4625 = vadd.f32 0.0, %v4624
  %v4626 = vpop.f32.mrb[0].mxu0
  %v4627 = vpop.f32.mrb[0].mxu0
  %v4628 = vadd.f32 0.0, %v4627
  %v4629 = vpop.f32.mrb[0].mxu0
  %4630 = vmatprep.mubr.bf16.mxu0 0
  %4631 = vmatmul.mubr.bf16.gmra.mrb[0].mxu0 %v2626
  %v4632 = vpop.f32.mrb[0].mxu0
  %v4633 = vadd.f32 0.0, %v4632
  %v4634 = vpop.f32.mrb[0].mxu0
  %v4635 = vpop.f32.mrb[0].mxu0
  %v4636 = vadd.f32 0.0, %v4635
  %v4637 = vpop.f32.mrb[0].mxu0
  %4638 = vmatprep.mubr.bf16.mxu0 0
  %4639 = vmatmul.mubr.bf16.gmra.mrb[0].mxu0 %v2629
  %v4640 = vpop.f32.mrb[0].mxu0
  %v4641 = vadd.f32 0.0, %v4640
  %v4642 = vpop.f32.mrb[0].mxu0
  %v4643 = vpop.f32.mrb[0].mxu0
  %v4644 = vadd.f32 0.0, %v4643
  %v4645 = vpop.f32.mrb[0].mxu0
  %4646 = vmatprep.mubr.bf16.mxu0 0
  %4647 = vmatmul.mubr.bf16.gmra.mrb[0].mxu0 %v2632
  %v4648 = vpop.f32.mrb[0].mxu0
  %v4649 = vadd.f32 0.0, %v4648
  %v4650 = vpop.f32.mrb[0].mxu0
  %v4651 = vpop.f32.mrb[0].mxu0
  %v4652 = vadd.f32 0.0, %v4651
  %v4653 = vpop.f32.mrb[0].mxu0
  %4654 = vmatprep.mubr.bf16.mxu0 0
  %4655 = vmatmul.mubr.bf16.gmra.mrb[0].mxu0 %v2635
  %v4656 = vpop.f32.mrb[0].mxu0
  %v4657 = vadd.f32 0.0, %v4656
  %v4658 = vpop.f32.mrb[0].mxu0
  %v4659 = vpop.f32.mrb[0].mxu0
  %v4660 = vadd.f32 0.0, %v4659
  %v4661 = vpop.f32.mrb[0].mxu0
  %4662 = vmatprep.mubr.bf16.mxu0 0
  %4663 = vmatmul.mubr.bf16.gmra.mrb[0].mxu0 %v2638
  %v4664 = vpop.f32.mrb[0].mxu0
  %v4665 = vadd.f32 0.0, %v4664
  %v4666 = vpop.f32.mrb[0].mxu0
  %v4667 = vpop.f32.mrb[0].mxu0
  %v4668 = vadd.f32 0.0, %v4667
  %v4669 = vpop.f32.mrb[0].mxu0
  %4670 = vmatprep.mubr.bf16.mxu0 0
  %4671 = vmatmul.mubr.bf16.gmra.mrb[0].mxu0 %v2641
  %v4672 = vpop.f32.mrb[0].mxu0
  %v4673 = vadd.f32 0.0, %v4672
  %v4674 = vpop.f32.mrb[0].mxu0
  %v4675 = vpop.f32.mrb[0].mxu0
  %v4676 = vadd.f32 0.0, %v4675
  %v4677 = vpop.f32.mrb[0].mxu0
  %4678 = vmatprep.mubr.bf16.mxu0 0
  %4679 = vmatmul.mubr.bf16.gmra.mrb[0].mxu0 %v2644
  %v4680 = vpop.f32.mrb[0].mxu0
  %v4681 = vadd.f32 0.0, %v4680
  %v4682 = vpop.f32.mrb[0].mxu0
  %v4683 = vpop.f32.mrb[0].mxu0
  %v4684 = vadd.f32 0.0, %v4683
  %v4685 = vpop.f32.mrb[0].mxu0
  %4686 = vmatprep.mubr.bf16.mxu0 0
  %4687 = vmatmul.mubr.bf16.gmra.mrb[0].mxu0 %v2647
  %v4688 = vpop.f32.mrb[0].mxu0
  %v4689 = vadd.f32 0.0, %v4688
  %v4690 = vpop.f32.mrb[0].mxu0
  %v4691 = vpop.f32.mrb[0].mxu0
  %v4692 = vadd.f32 0.0, %v4691
  %v4693 = vpop.f32.mrb[0].mxu0
  %4694 = vmatprep.mubr.bf16.mxu0 0
  %4695 = vmatmul.mubr.bf16.gmra.mrb[0].mxu0 %v2650
  %v4696 = vpop.f32.mrb[0].mxu0
  %v4697 = vadd.f32 0.0, %v4696
  %v4698 = vpop.f32.mrb[0].mxu0
  %v4699 = vpop.f32.mrb[0].mxu0
  %v4700 = vadd.f32 0.0, %v4699
  %v4701 = vpop.f32.mrb[0].mxu0
  %4702 = vmatprep.mubr.bf16.mxu0 0
  %4703 = vmatmul.mubr.bf16.gmra.mrb[0].mxu0 %v2653
  %v4704 = vpop.f32.mrb[0].mxu0
  %v4705 = vadd.f32 0.0, %v4704
  %v4706 = vpop.f32.mrb[0].mxu0
  %v4707 = vpop.f32.mrb[0].mxu0
  %v4708 = vadd.f32 0.0, %v4707
  %v4709 = vpop.f32.mrb[0].mxu0
  %4710 = vmatprep.mubr.bf16.mxu0 0
  %4711 = vmatmul.mubr.bf16.gmra.mrb[0].mxu0 %v2656
  %v4712 = vpop.f32.mrb[0].mxu0
  %v4713 = vadd.f32 0.0, %v4712
  %v4714 = vpop.f32.mrb[0].mxu0
  %v4715 = vpop.f32.mrb[0].mxu0
  %v4716 = vadd.f32 0.0, %v4715
  %v4717 = vpop.f32.mrb[0].mxu0
  %4718 = vmatprep.mubr.bf16.mxu0 0
  %4719 = vmatmul.mubr.bf16.gmra.mrb[0].mxu0 %v2659
  %v4720 = vpop.f32.mrb[0].mxu0
  %v4721 = vadd.f32 0.0, %v4720
  %v4722 = vpop.f32.mrb[0].mxu0
  %v4723 = vpop.f32.mrb[0].mxu0
  %v4724 = vadd.f32 0.0, %v4723
  %v4725 = vpop.f32.mrb[0].mxu0
  %4726 = vmatprep.mubr.bf16.mxu0 0
  %4727 = vmatmul.mubr.bf16.gmra.mrb[0].mxu0 %v2662
  %v4728 = vpop.f32.mrb[0].mxu0
  %v4729 = vadd.f32 0.0, %v4728
  %v4730 = vpop.f32.mrb[0].mxu0
  %v4731 = vpop.f32.mrb[0].mxu0
  %v4732 = vadd.f32 0.0, %v4731
  %v4733 = vpop.f32.mrb[0].mxu0
  %4734 = vmatprep.mubr.bf16.mxu0 0
  %4735 = vmatmul.mubr.bf16.gmra.mrb[0].mxu0 %v2665
  %v4736 = vpop.f32.mrb[0].mxu0
  %v4737 = vadd.f32 0.0, %v4736
  %v4738 = vpop.f32.mrb[0].mxu0
  %v4739 = vpop.f32.mrb[0].mxu0
  %v4740 = vadd.f32 0.0, %v4739
  %v4741 = vpop.f32.mrb[0].mxu0
  %4742 = vmatprep.mubr.bf16.mxu0 0
  %4743 = vmatmul.mubr.bf16.gmra.mrb[0].mxu0 %v2668
  %v4744 = vpop.f32.mrb[0].mxu0
  %v4745 = vadd.f32 0.0, %v4744
  %v4746 = vpop.f32.mrb[0].mxu0
  %v4747 = vpop.f32.mrb[0].mxu0
  %v4748 = vadd.f32 0.0, %v4747
  %v4749 = vpop.f32.mrb[0].mxu0
  %4750 = vmatprep.mubr.bf16.mxu0 0
  %4751 = vmatmul.mubr.bf16.gmra.mrb[0].mxu0 %v2671
  %v4752 = vpop.f32.mrb[0].mxu0
  %v4753 = vadd.f32 0.0, %v4752
  %v4754 = vpop.f32.mrb[0].mxu0
  %v4755 = vpop.f32.mrb[0].mxu0
  %v4756 = vadd.f32 0.0, %v4755
  %v4757 = vpop.f32.mrb[0].mxu0
  %4758 = vmatprep.mubr.bf16.mxu0 0
  %4759 = vmatmul.mubr.bf16.gmra.mrb[0].mxu0 %v2674
  %v4760 = vpop.f32.mrb[0].mxu0
  %v4761 = vadd.f32 0.0, %v4760
  %v4762 = vpop.f32.mrb[0].mxu0
  %v4763 = vpop.f32.mrb[0].mxu0
  %v4764 = vadd.f32 0.0, %v4763
  %v4765 = vpop.f32.mrb[0].mxu0
  %4766 = vmatprep.mubr.bf16.mxu0 0
  %4767 = vmatmul.mubr.bf16.gmra.mrb[0].mxu0 %v2677
  %v4768 = vpop.f32.mrb[0].mxu0
  %v4769 = vadd.f32 0.0, %v4768
  %v4770 = vpop.f32.mrb[0].mxu0
  %v4771 = vpop.f32.mrb[0].mxu0
  %v4772 = vadd.f32 0.0, %v4771
  %v4773 = vpop.f32.mrb[0].mxu0
  %4774 = vmatprep.mubr.bf16.mxu0 0
  %4775 = vmatmul.mubr.bf16.gmra.mrb[0].mxu0 %v2680
  %v4776 = vpop.f32.mrb[0].mxu0
  %v4777 = vadd.f32 0.0, %v4776
  %v4778 = vpop.f32.mrb[0].mxu0
  %v4779 = vpop.f32.mrb[0].mxu0
  %v4780 = vadd.f32 0.0, %v4779
  %v4781 = vpop.f32.mrb[0].mxu0
  %4782 = vmatprep.mubr.bf16.mxu0 0
  %4783 = vmatmul.mubr.bf16.gmra.mrb[0].mxu0 %v2683
  %v4784 = vpop.f32.mrb[0].mxu0
  %v4785 = vadd.f32 0.0, %v4784
  %v4786 = vpop.f32.mrb[0].mxu0
  %v4787 = vpop.f32.mrb[0].mxu0
  %v4788 = vadd.f32 0.0, %v4787
  %v4789 = vpop.f32.mrb[0].mxu0
  %4790 = vmatprep.mubr.bf16.mxu0 0
  %4791 = vmatmul.mubr.bf16.gmra.mrb[0].mxu0 %v2686
  %v4792 = vpop.f32.mrb[0].mxu0
  %v4793 = vadd.f32 0.0, %v4792
  %v4794 = vpop.f32.mrb[0].mxu0
  %v4795 = vpop.f32.mrb[0].mxu0
  %v4796 = vadd.f32 0.0, %v4795
  %v4797 = vpop.f32.mrb[0].mxu0
  %4798 = vmatprep.mubr.bf16.mxu0 0
  %4799 = vmatmul.mubr.bf16.gmra.mrb[0].mxu0 %v2689
  %v4800 = vpop.f32.mrb[0].mxu0
  %v4801 = vadd.f32 0.0, %v4800
  %v4802 = vpop.f32.mrb[0].mxu0
  %v4803 = vpop.f32.mrb[0].mxu0
  %v4804 = vadd.f32 0.0, %v4803
  %v4805 = vpop.f32.mrb[0].mxu0
  %4806 = vmatprep.mubr.bf16.mxu0 0
  %4807 = vmatmul.mubr.bf16.gmra.mrb[0].mxu0 %v2692
  %v4808 = vpop.f32.mrb[0].mxu0
  %v4809 = vadd.f32 0.0, %v4808
  %v4810 = vpop.f32.mrb[0].mxu0
  %v4811 = vpop.f32.mrb[0].mxu0
  %v4812 = vadd.f32 0.0, %v4811
  %v4813 = vpop.f32.mrb[0].mxu0
  %4814 = vmatprep.mubr.bf16.mxu0 0
  %4815 = vmatmul.mubr.bf16.gmra.mrb[0].mxu0 %v2695
  %v4816 = vpop.f32.mrb[0].mxu0
  %v4817 = vadd.f32 0.0, %v4816
  %v4818 = vpop.f32.mrb[0].mxu0
  %v4819 = vpop.f32.mrb[0].mxu0
  %v4820 = vadd.f32 0.0, %v4819
  %v4821 = vpop.f32.mrb[0].mxu0
  %4822 = vmatprep.mubr.bf16.mxu0 0
  %4823 = vmatmul.mubr.bf16.gmra.mrb[0].mxu0 %v2698
  %v4824 = vpop.f32.mrb[0].mxu0
  %v4825 = vadd.f32 0.0, %v4824
  %v4826 = vpop.f32.mrb[0].mxu0
  %v4827 = vpop.f32.mrb[0].mxu0
  %v4828 = vadd.f32 0.0, %v4827
  %v4829 = vpop.f32.mrb[0].mxu0
  %4830 = vmatprep.mubr.bf16.mxu0 0
  %4831 = vmatmul.mubr.bf16.gmra.mrb[0].mxu0 %v2701
  %v4832 = vpop.f32.mrb[0].mxu0
  %v4833 = vadd.f32 0.0, %v4832
  %v4834 = vpop.f32.mrb[0].mxu0
  %v4835 = vpop.f32.mrb[0].mxu0
  %v4836 = vadd.f32 0.0, %v4835
  %v4837 = vpop.f32.mrb[0].mxu0
  %4838 = vmatprep.mubr.bf16.mxu0 0
  %4839 = vmatmul.mubr.bf16.gmra.mrb[0].mxu0 %v2704
  %v4840 = vpop.f32.mrb[0].mxu0
  %v4841 = vadd.f32 0.0, %v4840
  %v4842 = vpop.f32.mrb[0].mxu0
  %v4843 = vpop.f32.mrb[0].mxu0
  %v4844 = vadd.f32 0.0, %v4843
  %v4845 = vpop.f32.mrb[0].mxu0
  %4846 = vmatprep.mubr.bf16.mxu0 0
  %4847 = vmatmul.mubr.bf16.gmra.mrb[0].mxu0 %v2707
  %v4848 = vpop.f32.mrb[0].mxu0
  %v4849 = vadd.f32 0.0, %v4848
  %v4850 = vpop.f32.mrb[0].mxu0
  %v4851 = vpop.f32.mrb[0].mxu0
  %v4852 = vadd.f32 0.0, %v4851
  %v4853 = vpop.f32.mrb[0].mxu0
  %4854 = vmatprep.mubr.bf16.mxu0 0
  %4855 = vmatmul.mubr.bf16.gmra.mrb[0].mxu0 %v2710
  %v4856 = vpop.f32.mrb[0].mxu0
  %v4857 = vadd.f32 0.0, %v4856
  %v4858 = vpop.f32.mrb[0].mxu0
  %v4859 = vpop.f32.mrb[0].mxu0
  %v4860 = vadd.f32 0.0, %v4859
  %v4861 = vpop.f32.mrb[0].mxu0
  %4862 = vmatprep.mubr.bf16.mxu0 0
  %4863 = vmatmul.mubr.bf16.gmra.mrb[0].mxu0 %v2713
  %v4864 = vpop.f32.mrb[0].mxu0
  %v4865 = vadd.f32 0.0, %v4864
  %v4866 = vpop.f32.mrb[0].mxu0
  %v4867 = vpop.f32.mrb[0].mxu0
  %v4868 = vadd.f32 0.0, %v4867
  %v4869 = vpop.f32.mrb[0].mxu0
  %4870 = vmatprep.mubr.bf16.mxu0 0
  %4871 = vmatmul.mubr.bf16.gmra.mrb[0].mxu0 %v2716
  %v4872 = vpop.f32.mrb[0].mxu0
  %v4873 = vadd.f32 0.0, %v4872
  %v4874 = vpop.f32.mrb[0].mxu0
  %v4875 = vpop.f32.mrb[0].mxu0
  %v4876 = vadd.f32 0.0, %v4875
  %v4877 = vpop.f32.mrb[0].mxu0
  %4878 = vmatprep.mubr.bf16.mxu0 0
  %4879 = vmatmul.mubr.bf16.gmra.mrb[0].mxu0 %v2719
  %v4880 = vpop.f32.mrb[0].mxu0
  %v4881 = vadd.f32 0.0, %v4880
  %v4882 = vpop.f32.mrb[0].mxu0
  %v4883 = vpop.f32.mrb[0].mxu0
  %v4884 = vadd.f32 0.0, %v4883
  %v4885 = vpop.f32.mrb[0].mxu0
  %4886 = vmatprep.mubr.bf16.mxu0 0
  %4887 = vmatmul.mubr.bf16.gmra.mrb[0].mxu0 %v2722
  %v4888 = vpop.f32.mrb[0].mxu0
  %v4889 = vadd.f32 0.0, %v4888
  %v4890 = vpop.f32.mrb[0].mxu0
  %v4891 = vpop.f32.mrb[0].mxu0
  %v4892 = vadd.f32 0.0, %v4891
  %v4893 = vpop.f32.mrb[0].mxu0
  %4894 = vmatprep.mubr.bf16.mxu0 0
  %4895 = vmatmul.mubr.bf16.gmra.mrb[0].mxu0 %v2725
  %v4896 = vpop.f32.mrb[0].mxu0
  %v4897 = vadd.f32 0.0, %v4896
  %v4898 = vpop.f32.mrb[0].mxu0
  %v4899 = vpop.f32.mrb[0].mxu0
  %v4900 = vadd.f32 0.0, %v4899
  %v4901 = vpop.f32.mrb[0].mxu0
  %4902 = vmatprep.mubr.bf16.mxu0 0
  %4903 = vmatmul.mubr.bf16.gmra.mrb[0].mxu0 %v2728
  %v4904 = vpop.f32.mrb[0].mxu0
  %v4905 = vadd.f32 0.0, %v4904
  %v4906 = vpop.f32.mrb[0].mxu0
  %v4907 = vpop.f32.mrb[0].mxu0
  %v4908 = vadd.f32 0.0, %v4907
  %v4909 = vpop.f32.mrb[0].mxu0
  %4910 = vmatprep.mubr.bf16.mxu0 0
  %4911 = vmatmul.mubr.bf16.gmra.mrb[0].mxu0 %v2731
  %v4912 = vpop.f32.mrb[0].mxu0
  %v4913 = vadd.f32 0.0, %v4912
  %v4914 = vpop.f32.mrb[0].mxu0
  %v4915 = vpop.f32.mrb[0].mxu0
  %v4916 = vadd.f32 0.0, %v4915
  %v4917 = vpop.f32.mrb[0].mxu0
  %4918 = vmatprep.mubr.bf16.mxu0 0
  %4919 = vmatmul.mubr.bf16.gmra.mrb[0].mxu0 %v2734
  %v4920 = vpop.f32.mrb[0].mxu0
  %v4921 = vadd.f32 0.0, %v4920
  %v4922 = vpop.f32.mrb[0].mxu0
  %v4923 = vpop.f32.mrb[0].mxu0
  %v4924 = vadd.f32 0.0, %v4923
  %v4925 = vpop.f32.mrb[0].mxu0
  %4926 = vmatprep.mubr.bf16.mxu0 0
  %4927 = vmatmul.mubr.bf16.gmra.mrb[0].mxu0 %v2737
  %v4928 = vpop.f32.mrb[0].mxu0
  %v4929 = vadd.f32 0.0, %v4928
  %v4930 = vpop.f32.mrb[0].mxu0
  %v4931 = vpop.f32.mrb[0].mxu0
  %v4932 = vadd.f32 0.0, %v4931
  %v4933 = vpop.f32.mrb[0].mxu0
  %4934 = vmatprep.mubr.bf16.mxu0 0
  %4935 = vmatmul.mubr.bf16.gmra.mrb[0].mxu0 %v2740
  %v4936 = vpop.f32.mrb[0].mxu0
  %v4937 = vadd.f32 0.0, %v4936
  %v4938 = vpop.f32.mrb[0].mxu0
  %v4939 = vpop.f32.mrb[0].mxu0
  %v4940 = vadd.f32 0.0, %v4939
  %v4941 = vpop.f32.mrb[0].mxu0
  %4942 = vmatprep.mubr.bf16.mxu0 0
  %4943 = vmatmul.mubr.bf16.gmra.mrb[0].mxu0 %v2743
  %v4944 = vpop.f32.mrb[0].mxu0
  %v4945 = vadd.f32 0.0, %v4944
  %v4946 = vpop.f32.mrb[0].mxu0
  %v4947 = vpop.f32.mrb[0].mxu0
  %v4948 = vadd.f32 0.0, %v4947
  %v4949 = vpop.f32.mrb[0].mxu0
  %4950 = vmatprep.mubr.bf16.mxu0 0
  %4951 = vmatmul.mubr.bf16.gmra.mrb[0].mxu0 %v2746
  %v4952 = vpop.f32.mrb[0].mxu0
  %v4953 = vadd.f32 0.0, %v4952
  %v4954 = vpop.f32.mrb[0].mxu0
  %v4955 = vpop.f32.mrb[0].mxu0
  %v4956 = vadd.f32 0.0, %v4955
  %v4957 = vpop.f32.mrb[0].mxu0
  %4958 = vmatprep.mubr.bf16.mxu0 0
  %4959 = vmatmul.mubr.bf16.gmra.mrb[0].mxu0 %v2749
  %v4960 = vpop.f32.mrb[0].mxu0
  %v4961 = vadd.f32 0.0, %v4960
  %v4962 = vpop.f32.mrb[0].mxu0
  %v4963 = vpop.f32.mrb[0].mxu0
  %v4964 = vadd.f32 0.0, %v4963
  %v4965 = vpop.f32.mrb[0].mxu0
  %4966 = vdwg.mxu0
  %vm4967 = vcmask 261120
  %v4968 = vsel %vm4967, %v2793, -inf
  %v4969 = vsel %vm4967, %v3337, -inf
  %v4970 = vmax.f32 %v4968, %v4969
  %v4971 = vsel %vm4967, %v3881, -inf
  %v4972 = vmax.f32 %v4970, %v4971
  %v4973 = vsel %vm4967, %v4425, -inf
  %v4974 = vmax.f32 %v4972, %v4973
  %v4975 = vsel %vm4967, %v2796, -inf
  %v4976 = vsel %vm4967, %v3340, -inf
  %v4977 = vmax.f32 %v4975, %v4976
  %v4978 = vsel %vm4967, %v3884, -inf
  %v4979 = vmax.f32 %v4977, %v4978
  %v4980 = vsel %vm4967, %v4428, -inf
  %v4981 = vmax.f32 %v4979, %v4980
  %v4982 = vsel %vm4967, %v2801, -inf
  %v4983 = vsel %vm4967, %v3345, -inf
  %v4984 = vmax.f32 %v4982, %v4983
  %v4985 = vsel %vm4967, %v3889, -inf
  %v4986 = vmax.f32 %v4984, %v4985
  %v4987 = vsel %vm4967, %v4433, -inf
  %v4988 = vmax.f32 %v4986, %v4987
  %v4989 = vsel %vm4967, %v2804, -inf
  %v4990 = vsel %vm4967, %v3348, -inf
  %v4991 = vmax.f32 %v4989, %v4990
  %v4992 = vsel %vm4967, %v3892, -inf
  %v4993 = vmax.f32 %v4991, %v4992
  %v4994 = vsel %vm4967, %v4436, -inf
  %v4995 = vmax.f32 %v4993, %v4994
  %v4996 = vsel %vm4967, %v2809, -inf
  %v4997 = vsel %vm4967, %v3353, -inf
  %v4998 = vmax.f32 %v4996, %v4997
  %v4999 = vsel %vm4967, %v3897, -inf
  %v5000 = vmax.f32 %v4998, %v4999
  %v5001 = vsel %vm4967, %v4441, -inf
  %v5002 = vmax.f32 %v5000, %v5001
  %v5003 = vsel %vm4967, %v2812, -inf
  %v5004 = vsel %vm4967, %v3356, -inf
  %v5005 = vmax.f32 %v5003, %v5004
  %v5006 = vsel %vm4967, %v3900, -inf
  %v5007 = vmax.f32 %v5005, %v5006
  %v5008 = vsel %vm4967, %v4444, -inf
  %v5009 = vmax.f32 %v5007, %v5008
  %v5010 = vsel %vm4967, %v2817, -inf
  %v5011 = vsel %vm4967, %v3361, -inf
  %v5012 = vmax.f32 %v5010, %v5011
  %v5013 = vsel %vm4967, %v3905, -inf
  %v5014 = vmax.f32 %v5012, %v5013
  %v5015 = vsel %vm4967, %v4449, -inf
  %v5016 = vmax.f32 %v5014, %v5015
  %v5017 = vsel %vm4967, %v2820, -inf
  %v5018 = vsel %vm4967, %v3364, -inf
  %v5019 = vmax.f32 %v5017, %v5018
  %v5020 = vsel %vm4967, %v3908, -inf
  %v5021 = vmax.f32 %v5019, %v5020
  %v5022 = vsel %vm4967, %v4452, -inf
  %v5023 = vmax.f32 %v5021, %v5022
  %v5024 = vsel %vm4967, %v2825, -inf
  %v5025 = vsel %vm4967, %v3369, -inf
  %v5026 = vmax.f32 %v5024, %v5025
  %v5027 = vsel %vm4967, %v3913, -inf
  %v5028 = vmax.f32 %v5026, %v5027
  %v5029 = vsel %vm4967, %v4457, -inf
  %v5030 = vmax.f32 %v5028, %v5029
  %v5031 = vsel %vm4967, %v2828, -inf
  %v5032 = vsel %vm4967, %v3372, -inf
  %v5033 = vmax.f32 %v5031, %v5032
  %v5034 = vsel %vm4967, %v3916, -inf
  %v5035 = vmax.f32 %v5033, %v5034
  %v5036 = vsel %vm4967, %v4460, -inf
  %v5037 = vmax.f32 %v5035, %v5036
  %v5038 = vsel %vm4967, %v2833, -inf
  %v5039 = vsel %vm4967, %v3377, -inf
  %v5040 = vmax.f32 %v5038, %v5039
  %v5041 = vsel %vm4967, %v3921, -inf
  %v5042 = vmax.f32 %v5040, %v5041
  %v5043 = vsel %vm4967, %v4465, -inf
  %v5044 = vmax.f32 %v5042, %v5043
  %v5045 = vsel %vm4967, %v2836, -inf
  %v5046 = vsel %vm4967, %v3380, -inf
  %v5047 = vmax.f32 %v5045, %v5046
  %v5048 = vsel %vm4967, %v3924, -inf
  %v5049 = vmax.f32 %v5047, %v5048
  %v5050 = vsel %vm4967, %v4468, -inf
  %v5051 = vmax.f32 %v5049, %v5050
  %v5052 = vsel %vm4967, %v2841, -inf
  %v5053 = vsel %vm4967, %v3385, -inf
  %v5054 = vmax.f32 %v5052, %v5053
  %v5055 = vsel %vm4967, %v3929, -inf
  %v5056 = vmax.f32 %v5054, %v5055
  %v5057 = vsel %vm4967, %v4473, -inf
  %v5058 = vmax.f32 %v5056, %v5057
  %v5059 = vsel %vm4967, %v2844, -inf
  %v5060 = vsel %vm4967, %v3388, -inf
  %v5061 = vmax.f32 %v5059, %v5060
  %v5062 = vsel %vm4967, %v3932, -inf
  %v5063 = vmax.f32 %v5061, %v5062
  %v5064 = vsel %vm4967, %v4476, -inf
  %v5065 = vmax.f32 %v5063, %v5064
  %v5066 = vsel %vm4967, %v2849, -inf
  %v5067 = vsel %vm4967, %v3393, -inf
  %v5068 = vmax.f32 %v5066, %v5067
  %v5069 = vsel %vm4967, %v3937, -inf
  %v5070 = vmax.f32 %v5068, %v5069
  %v5071 = vsel %vm4967, %v4481, -inf
  %v5072 = vmax.f32 %v5070, %v5071
  %v5073 = vsel %vm4967, %v2852, -inf
  %v5074 = vsel %vm4967, %v3396, -inf
  %v5075 = vmax.f32 %v5073, %v5074
  %v5076 = vsel %vm4967, %v3940, -inf
  %v5077 = vmax.f32 %v5075, %v5076
  %v5078 = vsel %vm4967, %v4484, -inf
  %v5079 = vmax.f32 %v5077, %v5078
  %v5080 = vsel %vm4967, %v2857, -inf
  %v5081 = vsel %vm4967, %v3401, -inf
  %v5082 = vmax.f32 %v5080, %v5081
  %v5083 = vsel %vm4967, %v3945, -inf
  %v5084 = vmax.f32 %v5082, %v5083
  %v5085 = vsel %vm4967, %v4489, -inf
  %v5086 = vmax.f32 %v5084, %v5085
  %v5087 = vsel %vm4967, %v2860, -inf
  %v5088 = vsel %vm4967, %v3404, -inf
  %v5089 = vmax.f32 %v5087, %v5088
  %v5090 = vsel %vm4967, %v3948, -inf
  %v5091 = vmax.f32 %v5089, %v5090
  %v5092 = vsel %vm4967, %v4492, -inf
  %v5093 = vmax.f32 %v5091, %v5092
  %v5094 = vsel %vm4967, %v2865, -inf
  %v5095 = vsel %vm4967, %v3409, -inf
  %v5096 = vmax.f32 %v5094, %v5095
  %v5097 = vsel %vm4967, %v3953, -inf
  %v5098 = vmax.f32 %v5096, %v5097
  %v5099 = vsel %vm4967, %v4497, -inf
  %v5100 = vmax.f32 %v5098, %v5099
  %v5101 = vsel %vm4967, %v2868, -inf
  %v5102 = vsel %vm4967, %v3412, -inf
  %v5103 = vmax.f32 %v5101, %v5102
  %v5104 = vsel %vm4967, %v3956, -inf
  %v5105 = vmax.f32 %v5103, %v5104
  %v5106 = vsel %vm4967, %v4500, -inf
  %v5107 = vmax.f32 %v5105, %v5106
  %v5108 = vsel %vm4967, %v2873, -inf
  %v5109 = vsel %vm4967, %v3417, -inf
  %v5110 = vmax.f32 %v5108, %v5109
  %v5111 = vsel %vm4967, %v3961, -inf
  %v5112 = vmax.f32 %v5110, %v5111
  %v5113 = vsel %vm4967, %v4505, -inf
  %v5114 = vmax.f32 %v5112, %v5113
  %v5115 = vsel %vm4967, %v2876, -inf
  %v5116 = vsel %vm4967, %v3420, -inf
  %v5117 = vmax.f32 %v5115, %v5116
  %v5118 = vsel %vm4967, %v3964, -inf
  %v5119 = vmax.f32 %v5117, %v5118
  %v5120 = vsel %vm4967, %v4508, -inf
  %v5121 = vmax.f32 %v5119, %v5120
  %v5122 = vsel %vm4967, %v2881, -inf
  %v5123 = vsel %vm4967, %v3425, -inf
  %v5124 = vmax.f32 %v5122, %v5123
  %v5125 = vsel %vm4967, %v3969, -inf
  %v5126 = vmax.f32 %v5124, %v5125
  %v5127 = vsel %vm4967, %v4513, -inf
  %v5128 = vmax.f32 %v5126, %v5127
  %v5129 = vsel %vm4967, %v2884, -inf
  %v5130 = vsel %vm4967, %v3428, -inf
  %v5131 = vmax.f32 %v5129, %v5130
  %v5132 = vsel %vm4967, %v3972, -inf
  %v5133 = vmax.f32 %v5131, %v5132
  %v5134 = vsel %vm4967, %v4516, -inf
  %v5135 = vmax.f32 %v5133, %v5134
  %v5136 = vsel %vm4967, %v2889, -inf
  %v5137 = vsel %vm4967, %v3433, -inf
  %v5138 = vmax.f32 %v5136, %v5137
  %v5139 = vsel %vm4967, %v3977, -inf
  %v5140 = vmax.f32 %v5138, %v5139
  %v5141 = vsel %vm4967, %v4521, -inf
  %v5142 = vmax.f32 %v5140, %v5141
  %v5143 = vsel %vm4967, %v2892, -inf
  %v5144 = vsel %vm4967, %v3436, -inf
  %v5145 = vmax.f32 %v5143, %v5144
  %v5146 = vsel %vm4967, %v3980, -inf
  %v5147 = vmax.f32 %v5145, %v5146
  %v5148 = vsel %vm4967, %v4524, -inf
  %v5149 = vmax.f32 %v5147, %v5148
  %v5150 = vsel %vm4967, %v2897, -inf
  %v5151 = vsel %vm4967, %v3441, -inf
  %v5152 = vmax.f32 %v5150, %v5151
  %v5153 = vsel %vm4967, %v3985, -inf
  %v5154 = vmax.f32 %v5152, %v5153
  %v5155 = vsel %vm4967, %v4529, -inf
  %v5156 = vmax.f32 %v5154, %v5155
  %v5157 = vsel %vm4967, %v2900, -inf
  %v5158 = vsel %vm4967, %v3444, -inf
  %v5159 = vmax.f32 %v5157, %v5158
  %v5160 = vsel %vm4967, %v3988, -inf
  %v5161 = vmax.f32 %v5159, %v5160
  %v5162 = vsel %vm4967, %v4532, -inf
  %v5163 = vmax.f32 %v5161, %v5162
  %v5164 = vsel %vm4967, %v2905, -inf
  %v5165 = vsel %vm4967, %v3449, -inf
  %v5166 = vmax.f32 %v5164, %v5165
  %v5167 = vsel %vm4967, %v3993, -inf
  %v5168 = vmax.f32 %v5166, %v5167
  %v5169 = vsel %vm4967, %v4537, -inf
  %v5170 = vmax.f32 %v5168, %v5169
  %v5171 = vsel %vm4967, %v2908, -inf
  %v5172 = vsel %vm4967, %v3452, -inf
  %v5173 = vmax.f32 %v5171, %v5172
  %v5174 = vsel %vm4967, %v3996, -inf
  %v5175 = vmax.f32 %v5173, %v5174
  %v5176 = vsel %vm4967, %v4540, -inf
  %v5177 = vmax.f32 %v5175, %v5176
  %v5178 = vsel %vm4967, %v2913, -inf
  %v5179 = vsel %vm4967, %v3457, -inf
  %v5180 = vmax.f32 %v5178, %v5179
  %v5181 = vsel %vm4967, %v4001, -inf
  %v5182 = vmax.f32 %v5180, %v5181
  %v5183 = vsel %vm4967, %v4545, -inf
  %v5184 = vmax.f32 %v5182, %v5183
  %v5185 = vsel %vm4967, %v2916, -inf
  %v5186 = vsel %vm4967, %v3460, -inf
  %v5187 = vmax.f32 %v5185, %v5186
  %v5188 = vsel %vm4967, %v4004, -inf
  %v5189 = vmax.f32 %v5187, %v5188
  %v5190 = vsel %vm4967, %v4548, -inf
  %v5191 = vmax.f32 %v5189, %v5190
  %v5192 = vsel %vm4967, %v2921, -inf
  %v5193 = vsel %vm4967, %v3465, -inf
  %v5194 = vmax.f32 %v5192, %v5193
  %v5195 = vsel %vm4967, %v4009, -inf
  %v5196 = vmax.f32 %v5194, %v5195
  %v5197 = vsel %vm4967, %v4553, -inf
  %v5198 = vmax.f32 %v5196, %v5197
  %v5199 = vsel %vm4967, %v2924, -inf
  %v5200 = vsel %vm4967, %v3468, -inf
  %v5201 = vmax.f32 %v5199, %v5200
  %v5202 = vsel %vm4967, %v4012, -inf
  %v5203 = vmax.f32 %v5201, %v5202
  %v5204 = vsel %vm4967, %v4556, -inf
  %v5205 = vmax.f32 %v5203, %v5204
  %v5206 = vsel %vm4967, %v2929, -inf
  %v5207 = vsel %vm4967, %v3473, -inf
  %v5208 = vmax.f32 %v5206, %v5207
  %v5209 = vsel %vm4967, %v4017, -inf
  %v5210 = vmax.f32 %v5208, %v5209
  %v5211 = vsel %vm4967, %v4561, -inf
  %v5212 = vmax.f32 %v5210, %v5211
  %v5213 = vsel %vm4967, %v2932, -inf
  %v5214 = vsel %vm4967, %v3476, -inf
  %v5215 = vmax.f32 %v5213, %v5214
  %v5216 = vsel %vm4967, %v4020, -inf
  %v5217 = vmax.f32 %v5215, %v5216
  %v5218 = vsel %vm4967, %v4564, -inf
  %v5219 = vmax.f32 %v5217, %v5218
  %v5220 = vsel %vm4967, %v2937, -inf
  %v5221 = vsel %vm4967, %v3481, -inf
  %v5222 = vmax.f32 %v5220, %v5221
  %v5223 = vsel %vm4967, %v4025, -inf
  %v5224 = vmax.f32 %v5222, %v5223
  %v5225 = vsel %vm4967, %v4569, -inf
  %v5226 = vmax.f32 %v5224, %v5225
  %v5227 = vsel %vm4967, %v2940, -inf
  %v5228 = vsel %vm4967, %v3484, -inf
  %v5229 = vmax.f32 %v5227, %v5228
  %v5230 = vsel %vm4967, %v4028, -inf
  %v5231 = vmax.f32 %v5229, %v5230
  %v5232 = vsel %vm4967, %v4572, -inf
  %v5233 = vmax.f32 %v5231, %v5232
  %v5234 = vsel %vm4967, %v2945, -inf
  %v5235 = vsel %vm4967, %v3489, -inf
  %v5236 = vmax.f32 %v5234, %v5235
  %v5237 = vsel %vm4967, %v4033, -inf
  %v5238 = vmax.f32 %v5236, %v5237
  %v5239 = vsel %vm4967, %v4577, -inf
  %v5240 = vmax.f32 %v5238, %v5239
  %v5241 = vsel %vm4967, %v2948, -inf
  %v5242 = vsel %vm4967, %v3492, -inf
  %v5243 = vmax.f32 %v5241, %v5242
  %v5244 = vsel %vm4967, %v4036, -inf
  %v5245 = vmax.f32 %v5243, %v5244
  %v5246 = vsel %vm4967, %v4580, -inf
  %v5247 = vmax.f32 %v5245, %v5246
  %v5248 = vsel %vm4967, %v2953, -inf
  %v5249 = vsel %vm4967, %v3497, -inf
  %v5250 = vmax.f32 %v5248, %v5249
  %v5251 = vsel %vm4967, %v4041, -inf
  %v5252 = vmax.f32 %v5250, %v5251
  %v5253 = vsel %vm4967, %v4585, -inf
  %v5254 = vmax.f32 %v5252, %v5253
  %v5255 = vsel %vm4967, %v2956, -inf
  %v5256 = vsel %vm4967, %v3500, -inf
  %v5257 = vmax.f32 %v5255, %v5256
  %v5258 = vsel %vm4967, %v4044, -inf
  %v5259 = vmax.f32 %v5257, %v5258
  %v5260 = vsel %vm4967, %v4588, -inf
  %v5261 = vmax.f32 %v5259, %v5260
  %v5262 = vsel %vm4967, %v2961, -inf
  %v5263 = vsel %vm4967, %v3505, -inf
  %v5264 = vmax.f32 %v5262, %v5263
  %v5265 = vsel %vm4967, %v4049, -inf
  %v5266 = vmax.f32 %v5264, %v5265
  %v5267 = vsel %vm4967, %v4593, -inf
  %v5268 = vmax.f32 %v5266, %v5267
  %v5269 = vsel %vm4967, %v2964, -inf
  %v5270 = vsel %vm4967, %v3508, -inf
  %v5271 = vmax.f32 %v5269, %v5270
  %v5272 = vsel %vm4967, %v4052, -inf
  %v5273 = vmax.f32 %v5271, %v5272
  %v5274 = vsel %vm4967, %v4596, -inf
  %v5275 = vmax.f32 %v5273, %v5274
  %v5276 = vsel %vm4967, %v2969, -inf
  %v5277 = vsel %vm4967, %v3513, -inf
  %v5278 = vmax.f32 %v5276, %v5277
  %v5279 = vsel %vm4967, %v4057, -inf
  %v5280 = vmax.f32 %v5278, %v5279
  %v5281 = vsel %vm4967, %v4601, -inf
  %v5282 = vmax.f32 %v5280, %v5281
  %v5283 = vsel %vm4967, %v2972, -inf
  %v5284 = vsel %vm4967, %v3516, -inf
  %v5285 = vmax.f32 %v5283, %v5284
  %v5286 = vsel %vm4967, %v4060, -inf
  %v5287 = vmax.f32 %v5285, %v5286
  %v5288 = vsel %vm4967, %v4604, -inf
  %v5289 = vmax.f32 %v5287, %v5288
  %v5290 = vsel %vm4967, %v2977, -inf
  %v5291 = vsel %vm4967, %v3521, -inf
  %v5292 = vmax.f32 %v5290, %v5291
  %v5293 = vsel %vm4967, %v4065, -inf
  %v5294 = vmax.f32 %v5292, %v5293
  %v5295 = vsel %vm4967, %v4609, -inf
  %v5296 = vmax.f32 %v5294, %v5295
  %v5297 = vsel %vm4967, %v2980, -inf
  %v5298 = vsel %vm4967, %v3524, -inf
  %v5299 = vmax.f32 %v5297, %v5298
  %v5300 = vsel %vm4967, %v4068, -inf
  %v5301 = vmax.f32 %v5299, %v5300
  %v5302 = vsel %vm4967, %v4612, -inf
  %v5303 = vmax.f32 %v5301, %v5302
  %v5304 = vsel %vm4967, %v2985, -inf
  %v5305 = vsel %vm4967, %v3529, -inf
  %v5306 = vmax.f32 %v5304, %v5305
  %v5307 = vsel %vm4967, %v4073, -inf
  %v5308 = vmax.f32 %v5306, %v5307
  %v5309 = vsel %vm4967, %v4617, -inf
  %v5310 = vmax.f32 %v5308, %v5309
  %v5311 = vsel %vm4967, %v2988, -inf
  %v5312 = vsel %vm4967, %v3532, -inf
  %v5313 = vmax.f32 %v5311, %v5312
  %v5314 = vsel %vm4967, %v4076, -inf
  %v5315 = vmax.f32 %v5313, %v5314
  %v5316 = vsel %vm4967, %v4620, -inf
  %v5317 = vmax.f32 %v5315, %v5316
  %v5318 = vsel %vm4967, %v2993, -inf
  %v5319 = vsel %vm4967, %v3537, -inf
  %v5320 = vmax.f32 %v5318, %v5319
  %v5321 = vsel %vm4967, %v4081, -inf
  %v5322 = vmax.f32 %v5320, %v5321
  %v5323 = vsel %vm4967, %v4625, -inf
  %v5324 = vmax.f32 %v5322, %v5323
  %v5325 = vsel %vm4967, %v2996, -inf
  %v5326 = vsel %vm4967, %v3540, -inf
  %v5327 = vmax.f32 %v5325, %v5326
  %v5328 = vsel %vm4967, %v4084, -inf
  %v5329 = vmax.f32 %v5327, %v5328
  %v5330 = vsel %vm4967, %v4628, -inf
  %v5331 = vmax.f32 %v5329, %v5330
  %v5332 = vsel %vm4967, %v3001, -inf
  %v5333 = vsel %vm4967, %v3545, -inf
  %v5334 = vmax.f32 %v5332, %v5333
  %v5335 = vsel %vm4967, %v4089, -inf
  %v5336 = vmax.f32 %v5334, %v5335
  %v5337 = vsel %vm4967, %v4633, -inf
  %v5338 = vmax.f32 %v5336, %v5337
  %v5339 = vsel %vm4967, %v3004, -inf
  %v5340 = vsel %vm4967, %v3548, -inf
  %v5341 = vmax.f32 %v5339, %v5340
  %v5342 = vsel %vm4967, %v4092, -inf
  %v5343 = vmax.f32 %v5341, %v5342
  %v5344 = vsel %vm4967, %v4636, -inf
  %v5345 = vmax.f32 %v5343, %v5344
  %v5346 = vsel %vm4967, %v3009, -inf
  %v5347 = vsel %vm4967, %v3553, -inf
  %v5348 = vmax.f32 %v5346, %v5347
  %v5349 = vsel %vm4967, %v4097, -inf
  %v5350 = vmax.f32 %v5348, %v5349
  %v5351 = vsel %vm4967, %v4641, -inf
  %v5352 = vmax.f32 %v5350, %v5351
  %v5353 = vsel %vm4967, %v3012, -inf
  %v5354 = vsel %vm4967, %v3556, -inf
  %v5355 = vmax.f32 %v5353, %v5354
  %v5356 = vsel %vm4967, %v4100, -inf
  %v5357 = vmax.f32 %v5355, %v5356
  %v5358 = vsel %vm4967, %v4644, -inf
  %v5359 = vmax.f32 %v5357, %v5358
  %v5360 = vsel %vm4967, %v3017, -inf
  %v5361 = vsel %vm4967, %v3561, -inf
  %v5362 = vmax.f32 %v5360, %v5361
  %v5363 = vsel %vm4967, %v4105, -inf
  %v5364 = vmax.f32 %v5362, %v5363
  %v5365 = vsel %vm4967, %v4649, -inf
  %v5366 = vmax.f32 %v5364, %v5365
  %v5367 = vsel %vm4967, %v3020, -inf
  %v5368 = vsel %vm4967, %v3564, -inf
  %v5369 = vmax.f32 %v5367, %v5368
  %v5370 = vsel %vm4967, %v4108, -inf
  %v5371 = vmax.f32 %v5369, %v5370
  %v5372 = vsel %vm4967, %v4652, -inf
  %v5373 = vmax.f32 %v5371, %v5372
  %v5374 = vsel %vm4967, %v3025, -inf
  %v5375 = vsel %vm4967, %v3569, -inf
  %v5376 = vmax.f32 %v5374, %v5375
  %v5377 = vsel %vm4967, %v4113, -inf
  %v5378 = vmax.f32 %v5376, %v5377
  %v5379 = vsel %vm4967, %v4657, -inf
  %v5380 = vmax.f32 %v5378, %v5379
  %v5381 = vsel %vm4967, %v3028, -inf
  %v5382 = vsel %vm4967, %v3572, -inf
  %v5383 = vmax.f32 %v5381, %v5382
  %v5384 = vsel %vm4967, %v4116, -inf
  %v5385 = vmax.f32 %v5383, %v5384
  %v5386 = vsel %vm4967, %v4660, -inf
  %v5387 = vmax.f32 %v5385, %v5386
  %v5388 = vsel %vm4967, %v3033, -inf
  %v5389 = vsel %vm4967, %v3577, -inf
  %v5390 = vmax.f32 %v5388, %v5389
  %v5391 = vsel %vm4967, %v4121, -inf
  %v5392 = vmax.f32 %v5390, %v5391
  %v5393 = vsel %vm4967, %v4665, -inf
  %v5394 = vmax.f32 %v5392, %v5393
  %v5395 = vsel %vm4967, %v3036, -inf
  %v5396 = vsel %vm4967, %v3580, -inf
  %v5397 = vmax.f32 %v5395, %v5396
  %v5398 = vsel %vm4967, %v4124, -inf
  %v5399 = vmax.f32 %v5397, %v5398
  %v5400 = vsel %vm4967, %v4668, -inf
  %v5401 = vmax.f32 %v5399, %v5400
  %v5402 = vsel %vm4967, %v3041, -inf
  %v5403 = vsel %vm4967, %v3585, -inf
  %v5404 = vmax.f32 %v5402, %v5403
  %v5405 = vsel %vm4967, %v4129, -inf
  %v5406 = vmax.f32 %v5404, %v5405
  %v5407 = vsel %vm4967, %v4673, -inf
  %v5408 = vmax.f32 %v5406, %v5407
  %v5409 = vsel %vm4967, %v3044, -inf
  %v5410 = vsel %vm4967, %v3588, -inf
  %v5411 = vmax.f32 %v5409, %v5410
  %v5412 = vsel %vm4967, %v4132, -inf
  %v5413 = vmax.f32 %v5411, %v5412
  %v5414 = vsel %vm4967, %v4676, -inf
  %v5415 = vmax.f32 %v5413, %v5414
  %v5416 = vsel %vm4967, %v3049, -inf
  %v5417 = vsel %vm4967, %v3593, -inf
  %v5418 = vmax.f32 %v5416, %v5417
  %v5419 = vsel %vm4967, %v4137, -inf
  %v5420 = vmax.f32 %v5418, %v5419
  %v5421 = vsel %vm4967, %v4681, -inf
  %v5422 = vmax.f32 %v5420, %v5421
  %v5423 = vsel %vm4967, %v3052, -inf
  %v5424 = vsel %vm4967, %v3596, -inf
  %v5425 = vmax.f32 %v5423, %v5424
  %v5426 = vsel %vm4967, %v4140, -inf
  %v5427 = vmax.f32 %v5425, %v5426
  %v5428 = vsel %vm4967, %v4684, -inf
  %v5429 = vmax.f32 %v5427, %v5428
  %v5430 = vsel %vm4967, %v3057, -inf
  %v5431 = vsel %vm4967, %v3601, -inf
  %v5432 = vmax.f32 %v5430, %v5431
  %v5433 = vsel %vm4967, %v4145, -inf
  %v5434 = vmax.f32 %v5432, %v5433
  %v5435 = vsel %vm4967, %v4689, -inf
  %v5436 = vmax.f32 %v5434, %v5435
  %v5437 = vsel %vm4967, %v3060, -inf
  %v5438 = vsel %vm4967, %v3604, -inf
  %v5439 = vmax.f32 %v5437, %v5438
  %v5440 = vsel %vm4967, %v4148, -inf
  %v5441 = vmax.f32 %v5439, %v5440
  %v5442 = vsel %vm4967, %v4692, -inf
  %v5443 = vmax.f32 %v5441, %v5442
  %v5444 = vsel %vm4967, %v3065, -inf
  %v5445 = vsel %vm4967, %v3609, -inf
  %v5446 = vmax.f32 %v5444, %v5445
  %v5447 = vsel %vm4967, %v4153, -inf
  %v5448 = vmax.f32 %v5446, %v5447
  %v5449 = vsel %vm4967, %v4697, -inf
  %v5450 = vmax.f32 %v5448, %v5449
  %v5451 = vsel %vm4967, %v3068, -inf
  %v5452 = vsel %vm4967, %v3612, -inf
  %v5453 = vmax.f32 %v5451, %v5452
  %v5454 = vsel %vm4967, %v4156, -inf
  %v5455 = vmax.f32 %v5453, %v5454
  %v5456 = vsel %vm4967, %v4700, -inf
  %v5457 = vmax.f32 %v5455, %v5456
  %v5458 = vsel %vm4967, %v3073, -inf
  %v5459 = vsel %vm4967, %v3617, -inf
  %v5460 = vmax.f32 %v5458, %v5459
  %v5461 = vsel %vm4967, %v4161, -inf
  %v5462 = vmax.f32 %v5460, %v5461
  %v5463 = vsel %vm4967, %v4705, -inf
  %v5464 = vmax.f32 %v5462, %v5463
  %v5465 = vsel %vm4967, %v3076, -inf
  %v5466 = vsel %vm4967, %v3620, -inf
  %v5467 = vmax.f32 %v5465, %v5466
  %v5468 = vsel %vm4967, %v4164, -inf
  %v5469 = vmax.f32 %v5467, %v5468
  %v5470 = vsel %vm4967, %v4708, -inf
  %v5471 = vmax.f32 %v5469, %v5470
  %v5472 = vsel %vm4967, %v3081, -inf
  %v5473 = vsel %vm4967, %v3625, -inf
  %v5474 = vmax.f32 %v5472, %v5473
  %v5475 = vsel %vm4967, %v4169, -inf
  %v5476 = vmax.f32 %v5474, %v5475
  %v5477 = vsel %vm4967, %v4713, -inf
  %v5478 = vmax.f32 %v5476, %v5477
  %v5479 = vsel %vm4967, %v3084, -inf
  %v5480 = vsel %vm4967, %v3628, -inf
  %v5481 = vmax.f32 %v5479, %v5480
  %v5482 = vsel %vm4967, %v4172, -inf
  %v5483 = vmax.f32 %v5481, %v5482
  %v5484 = vsel %vm4967, %v4716, -inf
  %v5485 = vmax.f32 %v5483, %v5484
  %v5486 = vsel %vm4967, %v3089, -inf
  %v5487 = vsel %vm4967, %v3633, -inf
  %v5488 = vmax.f32 %v5486, %v5487
  %v5489 = vsel %vm4967, %v4177, -inf
  %v5490 = vmax.f32 %v5488, %v5489
  %v5491 = vsel %vm4967, %v4721, -inf
  %v5492 = vmax.f32 %v5490, %v5491
  %v5493 = vsel %vm4967, %v3092, -inf
  %v5494 = vsel %vm4967, %v3636, -inf
  %v5495 = vmax.f32 %v5493, %v5494
  %v5496 = vsel %vm4967, %v4180, -inf
  %v5497 = vmax.f32 %v5495, %v5496
  %v5498 = vsel %vm4967, %v4724, -inf
  %v5499 = vmax.f32 %v5497, %v5498
  %v5500 = vsel %vm4967, %v3097, -inf
  %v5501 = vsel %vm4967, %v3641, -inf
  %v5502 = vmax.f32 %v5500, %v5501
  %v5503 = vsel %vm4967, %v4185, -inf
  %v5504 = vmax.f32 %v5502, %v5503
  %v5505 = vsel %vm4967, %v4729, -inf
  %v5506 = vmax.f32 %v5504, %v5505
  %v5507 = vsel %vm4967, %v3100, -inf
  %v5508 = vsel %vm4967, %v3644, -inf
  %v5509 = vmax.f32 %v5507, %v5508
  %v5510 = vsel %vm4967, %v4188, -inf
  %v5511 = vmax.f32 %v5509, %v5510
  %v5512 = vsel %vm4967, %v4732, -inf
  %v5513 = vmax.f32 %v5511, %v5512
  %v5514 = vsel %vm4967, %v3105, -inf
  %v5515 = vsel %vm4967, %v3649, -inf
  %v5516 = vmax.f32 %v5514, %v5515
  %v5517 = vsel %vm4967, %v4193, -inf
  %v5518 = vmax.f32 %v5516, %v5517
  %v5519 = vsel %vm4967, %v4737, -inf
  %v5520 = vmax.f32 %v5518, %v5519
  %v5521 = vsel %vm4967, %v3108, -inf
  %v5522 = vsel %vm4967, %v3652, -inf
  %v5523 = vmax.f32 %v5521, %v5522
  %v5524 = vsel %vm4967, %v4196, -inf
  %v5525 = vmax.f32 %v5523, %v5524
  %v5526 = vsel %vm4967, %v4740, -inf
  %v5527 = vmax.f32 %v5525, %v5526
  %v5528 = vsel %vm4967, %v3113, -inf
  %v5529 = vsel %vm4967, %v3657, -inf
  %v5530 = vmax.f32 %v5528, %v5529
  %v5531 = vsel %vm4967, %v4201, -inf
  %v5532 = vmax.f32 %v5530, %v5531
  %v5533 = vsel %vm4967, %v4745, -inf
  %v5534 = vmax.f32 %v5532, %v5533
  %v5535 = vsel %vm4967, %v3116, -inf
  %v5536 = vsel %vm4967, %v3660, -inf
  %v5537 = vmax.f32 %v5535, %v5536
  %v5538 = vsel %vm4967, %v4204, -inf
  %v5539 = vmax.f32 %v5537, %v5538
  %v5540 = vsel %vm4967, %v4748, -inf
  %v5541 = vmax.f32 %v5539, %v5540
  %v5542 = vsel %vm4967, %v3121, -inf
  %v5543 = vsel %vm4967, %v3665, -inf
  %v5544 = vmax.f32 %v5542, %v5543
  %v5545 = vsel %vm4967, %v4209, -inf
  %v5546 = vmax.f32 %v5544, %v5545
  %v5547 = vsel %vm4967, %v4753, -inf
  %v5548 = vmax.f32 %v5546, %v5547
  %v5549 = vsel %vm4967, %v3124, -inf
  %v5550 = vsel %vm4967, %v3668, -inf
  %v5551 = vmax.f32 %v5549, %v5550
  %v5552 = vsel %vm4967, %v4212, -inf
  %v5553 = vmax.f32 %v5551, %v5552
  %v5554 = vsel %vm4967, %v4756, -inf
  %v5555 = vmax.f32 %v5553, %v5554
  %v5556 = vsel %vm4967, %v3129, -inf
  %v5557 = vsel %vm4967, %v3673, -inf
  %v5558 = vmax.f32 %v5556, %v5557
  %v5559 = vsel %vm4967, %v4217, -inf
  %v5560 = vmax.f32 %v5558, %v5559
  %v5561 = vsel %vm4967, %v4761, -inf
  %v5562 = vmax.f32 %v5560, %v5561
  %v5563 = vsel %vm4967, %v3132, -inf
  %v5564 = vsel %vm4967, %v3676, -inf
  %v5565 = vmax.f32 %v5563, %v5564
  %v5566 = vsel %vm4967, %v4220, -inf
  %v5567 = vmax.f32 %v5565, %v5566
  %v5568 = vsel %vm4967, %v4764, -inf
  %v5569 = vmax.f32 %v5567, %v5568
  %v5570 = vsel %vm4967, %v3137, -inf
  %v5571 = vsel %vm4967, %v3681, -inf
  %v5572 = vmax.f32 %v5570, %v5571
  %v5573 = vsel %vm4967, %v4225, -inf
  %v5574 = vmax.f32 %v5572, %v5573
  %v5575 = vsel %vm4967, %v4769, -inf
  %v5576 = vmax.f32 %v5574, %v5575
  %v5577 = vsel %vm4967, %v3140, -inf
  %v5578 = vsel %vm4967, %v3684, -inf
  %v5579 = vmax.f32 %v5577, %v5578
  %v5580 = vsel %vm4967, %v4228, -inf
  %v5581 = vmax.f32 %v5579, %v5580
  %v5582 = vsel %vm4967, %v4772, -inf
  %v5583 = vmax.f32 %v5581, %v5582
  %v5584 = vsel %vm4967, %v3145, -inf
  %v5585 = vsel %vm4967, %v3689, -inf
  %v5586 = vmax.f32 %v5584, %v5585
  %v5587 = vsel %vm4967, %v4233, -inf
  %v5588 = vmax.f32 %v5586, %v5587
  %v5589 = vsel %vm4967, %v4777, -inf
  %v5590 = vmax.f32 %v5588, %v5589
  %v5591 = vsel %vm4967, %v3148, -inf
  %v5592 = vsel %vm4967, %v3692, -inf
  %v5593 = vmax.f32 %v5591, %v5592
  %v5594 = vsel %vm4967, %v4236, -inf
  %v5595 = vmax.f32 %v5593, %v5594
  %v5596 = vsel %vm4967, %v4780, -inf
  %v5597 = vmax.f32 %v5595, %v5596
  %v5598 = vsel %vm4967, %v3153, -inf
  %v5599 = vsel %vm4967, %v3697, -inf
  %v5600 = vmax.f32 %v5598, %v5599
  %v5601 = vsel %vm4967, %v4241, -inf
  %v5602 = vmax.f32 %v5600, %v5601
  %v5603 = vsel %vm4967, %v4785, -inf
  %v5604 = vmax.f32 %v5602, %v5603
  %v5605 = vsel %vm4967, %v3156, -inf
  %v5606 = vsel %vm4967, %v3700, -inf
  %v5607 = vmax.f32 %v5605, %v5606
  %v5608 = vsel %vm4967, %v4244, -inf
  %v5609 = vmax.f32 %v5607, %v5608
  %v5610 = vsel %vm4967, %v4788, -inf
  %v5611 = vmax.f32 %v5609, %v5610
  %v5612 = vsel %vm4967, %v3161, -inf
  %v5613 = vsel %vm4967, %v3705, -inf
  %v5614 = vmax.f32 %v5612, %v5613
  %v5615 = vsel %vm4967, %v4249, -inf
  %v5616 = vmax.f32 %v5614, %v5615
  %v5617 = vsel %vm4967, %v4793, -inf
  %v5618 = vmax.f32 %v5616, %v5617
  %v5619 = vsel %vm4967, %v3164, -inf
  %v5620 = vsel %vm4967, %v3708, -inf
  %v5621 = vmax.f32 %v5619, %v5620
  %v5622 = vsel %vm4967, %v4252, -inf
  %v5623 = vmax.f32 %v5621, %v5622
  %v5624 = vsel %vm4967, %v4796, -inf
  %v5625 = vmax.f32 %v5623, %v5624
  %v5626 = vsel %vm4967, %v3169, -inf
  %v5627 = vsel %vm4967, %v3713, -inf
  %v5628 = vmax.f32 %v5626, %v5627
  %v5629 = vsel %vm4967, %v4257, -inf
  %v5630 = vmax.f32 %v5628, %v5629
  %v5631 = vsel %vm4967, %v4801, -inf
  %v5632 = vmax.f32 %v5630, %v5631
  %v5633 = vsel %vm4967, %v3172, -inf
  %v5634 = vsel %vm4967, %v3716, -inf
  %v5635 = vmax.f32 %v5633, %v5634
  %v5636 = vsel %vm4967, %v4260, -inf
  %v5637 = vmax.f32 %v5635, %v5636
  %v5638 = vsel %vm4967, %v4804, -inf
  %v5639 = vmax.f32 %v5637, %v5638
  %v5640 = vsel %vm4967, %v3177, -inf
  %v5641 = vsel %vm4967, %v3721, -inf
  %v5642 = vmax.f32 %v5640, %v5641
  %v5643 = vsel %vm4967, %v4265, -inf
  %v5644 = vmax.f32 %v5642, %v5643
  %v5645 = vsel %vm4967, %v4809, -inf
  %v5646 = vmax.f32 %v5644, %v5645
  %v5647 = vsel %vm4967, %v3180, -inf
  %v5648 = vsel %vm4967, %v3724, -inf
  %v5649 = vmax.f32 %v5647, %v5648
  %v5650 = vsel %vm4967, %v4268, -inf
  %v5651 = vmax.f32 %v5649, %v5650
  %v5652 = vsel %vm4967, %v4812, -inf
  %v5653 = vmax.f32 %v5651, %v5652
  %v5654 = vsel %vm4967, %v3185, -inf
  %v5655 = vsel %vm4967, %v3729, -inf
  %v5656 = vmax.f32 %v5654, %v5655
  %v5657 = vsel %vm4967, %v4273, -inf
  %v5658 = vmax.f32 %v5656, %v5657
  %v5659 = vsel %vm4967, %v4817, -inf
  %v5660 = vmax.f32 %v5658, %v5659
  %v5661 = vsel %vm4967, %v3188, -inf
  %v5662 = vsel %vm4967, %v3732, -inf
  %v5663 = vmax.f32 %v5661, %v5662
  %v5664 = vsel %vm4967, %v4276, -inf
  %v5665 = vmax.f32 %v5663, %v5664
  %v5666 = vsel %vm4967, %v4820, -inf
  %v5667 = vmax.f32 %v5665, %v5666
  %v5668 = vsel %vm4967, %v3193, -inf
  %v5669 = vsel %vm4967, %v3737, -inf
  %v5670 = vmax.f32 %v5668, %v5669
  %v5671 = vsel %vm4967, %v4281, -inf
  %v5672 = vmax.f32 %v5670, %v5671
  %v5673 = vsel %vm4967, %v4825, -inf
  %v5674 = vmax.f32 %v5672, %v5673
  %v5675 = vsel %vm4967, %v3196, -inf
  %v5676 = vsel %vm4967, %v3740, -inf
  %v5677 = vmax.f32 %v5675, %v5676
  %v5678 = vsel %vm4967, %v4284, -inf
  %v5679 = vmax.f32 %v5677, %v5678
  %v5680 = vsel %vm4967, %v4828, -inf
  %v5681 = vmax.f32 %v5679, %v5680
  %v5682 = vsel %vm4967, %v3201, -inf
  %v5683 = vsel %vm4967, %v3745, -inf
  %v5684 = vmax.f32 %v5682, %v5683
  %v5685 = vsel %vm4967, %v4289, -inf
  %v5686 = vmax.f32 %v5684, %v5685
  %v5687 = vsel %vm4967, %v4833, -inf
  %v5688 = vmax.f32 %v5686, %v5687
  %v5689 = vsel %vm4967, %v3204, -inf
  %v5690 = vsel %vm4967, %v3748, -inf
  %v5691 = vmax.f32 %v5689, %v5690
  %v5692 = vsel %vm4967, %v4292, -inf
  %v5693 = vmax.f32 %v5691, %v5692
  %v5694 = vsel %vm4967, %v4836, -inf
  %v5695 = vmax.f32 %v5693, %v5694
  %v5696 = vsel %vm4967, %v3209, -inf
  %v5697 = vsel %vm4967, %v3753, -inf
  %v5698 = vmax.f32 %v5696, %v5697
  %v5699 = vsel %vm4967, %v4297, -inf
  %v5700 = vmax.f32 %v5698, %v5699
  %v5701 = vsel %vm4967, %v4841, -inf
  %v5702 = vmax.f32 %v5700, %v5701
  %v5703 = vsel %vm4967, %v3212, -inf
  %v5704 = vsel %vm4967, %v3756, -inf
  %v5705 = vmax.f32 %v5703, %v5704
  %v5706 = vsel %vm4967, %v4300, -inf
  %v5707 = vmax.f32 %v5705, %v5706
  %v5708 = vsel %vm4967, %v4844, -inf
  %v5709 = vmax.f32 %v5707, %v5708
  %v5710 = vsel %vm4967, %v3217, -inf
  %v5711 = vsel %vm4967, %v3761, -inf
  %v5712 = vmax.f32 %v5710, %v5711
  %v5713 = vsel %vm4967, %v4305, -inf
  %v5714 = vmax.f32 %v5712, %v5713
  %v5715 = vsel %vm4967, %v4849, -inf
  %v5716 = vmax.f32 %v5714, %v5715
  %v5717 = vsel %vm4967, %v3220, -inf
  %v5718 = vsel %vm4967, %v3764, -inf
  %v5719 = vmax.f32 %v5717, %v5718
  %v5720 = vsel %vm4967, %v4308, -inf
  %v5721 = vmax.f32 %v5719, %v5720
  %v5722 = vsel %vm4967, %v4852, -inf
  %v5723 = vmax.f32 %v5721, %v5722
  %v5724 = vsel %vm4967, %v3225, -inf
  %v5725 = vsel %vm4967, %v3769, -inf
  %v5726 = vmax.f32 %v5724, %v5725
  %v5727 = vsel %vm4967, %v4313, -inf
  %v5728 = vmax.f32 %v5726, %v5727
  %v5729 = vsel %vm4967, %v4857, -inf
  %v5730 = vmax.f32 %v5728, %v5729
  %v5731 = vsel %vm4967, %v3228, -inf
  %v5732 = vsel %vm4967, %v3772, -inf
  %v5733 = vmax.f32 %v5731, %v5732
  %v5734 = vsel %vm4967, %v4316, -inf
  %v5735 = vmax.f32 %v5733, %v5734
  %v5736 = vsel %vm4967, %v4860, -inf
  %v5737 = vmax.f32 %v5735, %v5736
  %v5738 = vsel %vm4967, %v3233, -inf
  %v5739 = vsel %vm4967, %v3777, -inf
  %v5740 = vmax.f32 %v5738, %v5739
  %v5741 = vsel %vm4967, %v4321, -inf
  %v5742 = vmax.f32 %v5740, %v5741
  %v5743 = vsel %vm4967, %v4865, -inf
  %v5744 = vmax.f32 %v5742, %v5743
  %v5745 = vsel %vm4967, %v3236, -inf
  %v5746 = vsel %vm4967, %v3780, -inf
  %v5747 = vmax.f32 %v5745, %v5746
  %v5748 = vsel %vm4967, %v4324, -inf
  %v5749 = vmax.f32 %v5747, %v5748
  %v5750 = vsel %vm4967, %v4868, -inf
  %v5751 = vmax.f32 %v5749, %v5750
  %v5752 = vsel %vm4967, %v3241, -inf
  %v5753 = vsel %vm4967, %v3785, -inf
  %v5754 = vmax.f32 %v5752, %v5753
  %v5755 = vsel %vm4967, %v4329, -inf
  %v5756 = vmax.f32 %v5754, %v5755
  %v5757 = vsel %vm4967, %v4873, -inf
  %v5758 = vmax.f32 %v5756, %v5757
  %v5759 = vsel %vm4967, %v3244, -inf
  %v5760 = vsel %vm4967, %v3788, -inf
  %v5761 = vmax.f32 %v5759, %v5760
  %v5762 = vsel %vm4967, %v4332, -inf
  %v5763 = vmax.f32 %v5761, %v5762
  %v5764 = vsel %vm4967, %v4876, -inf
  %v5765 = vmax.f32 %v5763, %v5764
  %v5766 = vsel %vm4967, %v3249, -inf
  %v5767 = vsel %vm4967, %v3793, -inf
  %v5768 = vmax.f32 %v5766, %v5767
  %v5769 = vsel %vm4967, %v4337, -inf
  %v5770 = vmax.f32 %v5768, %v5769
  %v5771 = vsel %vm4967, %v4881, -inf
  %v5772 = vmax.f32 %v5770, %v5771
  %v5773 = vsel %vm4967, %v3252, -inf
  %v5774 = vsel %vm4967, %v3796, -inf
  %v5775 = vmax.f32 %v5773, %v5774
  %v5776 = vsel %vm4967, %v4340, -inf
  %v5777 = vmax.f32 %v5775, %v5776
  %v5778 = vsel %vm4967, %v4884, -inf
  %v5779 = vmax.f32 %v5777, %v5778
  %v5780 = vsel %vm4967, %v3257, -inf
  %v5781 = vsel %vm4967, %v3801, -inf
  %v5782 = vmax.f32 %v5780, %v5781
  %v5783 = vsel %vm4967, %v4345, -inf
  %v5784 = vmax.f32 %v5782, %v5783
  %v5785 = vsel %vm4967, %v4889, -inf
  %v5786 = vmax.f32 %v5784, %v5785
  %v5787 = vsel %vm4967, %v3260, -inf
  %v5788 = vsel %vm4967, %v3804, -inf
  %v5789 = vmax.f32 %v5787, %v5788
  %v5790 = vsel %vm4967, %v4348, -inf
  %v5791 = vmax.f32 %v5789, %v5790
  %v5792 = vsel %vm4967, %v4892, -inf
  %v5793 = vmax.f32 %v5791, %v5792
  %v5794 = vsel %vm4967, %v3265, -inf
  %v5795 = vsel %vm4967, %v3809, -inf
  %v5796 = vmax.f32 %v5794, %v5795
  %v5797 = vsel %vm4967, %v4353, -inf
  %v5798 = vmax.f32 %v5796, %v5797
  %v5799 = vsel %vm4967, %v4897, -inf
  %v5800 = vmax.f32 %v5798, %v5799
  %v5801 = vsel %vm4967, %v3268, -inf
  %v5802 = vsel %vm4967, %v3812, -inf
  %v5803 = vmax.f32 %v5801, %v5802
  %v5804 = vsel %vm4967, %v4356, -inf
  %v5805 = vmax.f32 %v5803, %v5804
  %v5806 = vsel %vm4967, %v4900, -inf
  %v5807 = vmax.f32 %v5805, %v5806
  %v5808 = vsel %vm4967, %v3273, -inf
  %v5809 = vsel %vm4967, %v3817, -inf
  %v5810 = vmax.f32 %v5808, %v5809
  %v5811 = vsel %vm4967, %v4361, -inf
  %v5812 = vmax.f32 %v5810, %v5811
  %v5813 = vsel %vm4967, %v4905, -inf
  %v5814 = vmax.f32 %v5812, %v5813
  %v5815 = vsel %vm4967, %v3276, -inf
  %v5816 = vsel %vm4967, %v3820, -inf
  %v5817 = vmax.f32 %v5815, %v5816
  %v5818 = vsel %vm4967, %v4364, -inf
  %v5819 = vmax.f32 %v5817, %v5818
  %v5820 = vsel %vm4967, %v4908, -inf
  %v5821 = vmax.f32 %v5819, %v5820
  %v5822 = vsel %vm4967, %v3281, -inf
  %v5823 = vsel %vm4967, %v3825, -inf
  %v5824 = vmax.f32 %v5822, %v5823
  %v5825 = vsel %vm4967, %v4369, -inf
  %v5826 = vmax.f32 %v5824, %v5825
  %v5827 = vsel %vm4967, %v4913, -inf
  %v5828 = vmax.f32 %v5826, %v5827
  %v5829 = vsel %vm4967, %v3284, -inf
  %v5830 = vsel %vm4967, %v3828, -inf
  %v5831 = vmax.f32 %v5829, %v5830
  %v5832 = vsel %vm4967, %v4372, -inf
  %v5833 = vmax.f32 %v5831, %v5832
  %v5834 = vsel %vm4967, %v4916, -inf
  %v5835 = vmax.f32 %v5833, %v5834
  %v5836 = vsel %vm4967, %v3289, -inf
  %v5837 = vsel %vm4967, %v3833, -inf
  %v5838 = vmax.f32 %v5836, %v5837
  %v5839 = vsel %vm4967, %v4377, -inf
  %v5840 = vmax.f32 %v5838, %v5839
  %v5841 = vsel %vm4967, %v4921, -inf
  %v5842 = vmax.f32 %v5840, %v5841
  %v5843 = vsel %vm4967, %v3292, -inf
  %v5844 = vsel %vm4967, %v3836, -inf
  %v5845 = vmax.f32 %v5843, %v5844
  %v5846 = vsel %vm4967, %v4380, -inf
  %v5847 = vmax.f32 %v5845, %v5846
  %v5848 = vsel %vm4967, %v4924, -inf
  %v5849 = vmax.f32 %v5847, %v5848
  %v5850 = vsel %vm4967, %v3297, -inf
  %v5851 = vsel %vm4967, %v3841, -inf
  %v5852 = vmax.f32 %v5850, %v5851
  %v5853 = vsel %vm4967, %v4385, -inf
  %v5854 = vmax.f32 %v5852, %v5853
  %v5855 = vsel %vm4967, %v4929, -inf
  %v5856 = vmax.f32 %v5854, %v5855
  %v5857 = vsel %vm4967, %v3300, -inf
  %v5858 = vsel %vm4967, %v3844, -inf
  %v5859 = vmax.f32 %v5857, %v5858
  %v5860 = vsel %vm4967, %v4388, -inf
  %v5861 = vmax.f32 %v5859, %v5860
  %v5862 = vsel %vm4967, %v4932, -inf
  %v5863 = vmax.f32 %v5861, %v5862
  %v5864 = vsel %vm4967, %v3305, -inf
  %v5865 = vsel %vm4967, %v3849, -inf
  %v5866 = vmax.f32 %v5864, %v5865
  %v5867 = vsel %vm4967, %v4393, -inf
  %v5868 = vmax.f32 %v5866, %v5867
  %v5869 = vsel %vm4967, %v4937, -inf
  %v5870 = vmax.f32 %v5868, %v5869
  %v5871 = vsel %vm4967, %v3308, -inf
  %v5872 = vsel %vm4967, %v3852, -inf
  %v5873 = vmax.f32 %v5871, %v5872
  %v5874 = vsel %vm4967, %v4396, -inf
  %v5875 = vmax.f32 %v5873, %v5874
  %v5876 = vsel %vm4967, %v4940, -inf
  %v5877 = vmax.f32 %v5875, %v5876
  %v5878 = vsel %vm4967, %v3313, -inf
  %v5879 = vsel %vm4967, %v3857, -inf
  %v5880 = vmax.f32 %v5878, %v5879
  %v5881 = vsel %vm4967, %v4401, -inf
  %v5882 = vmax.f32 %v5880, %v5881
  %v5883 = vsel %vm4967, %v4945, -inf
  %v5884 = vmax.f32 %v5882, %v5883
  %v5885 = vsel %vm4967, %v3316, -inf
  %v5886 = vsel %vm4967, %v3860, -inf
  %v5887 = vmax.f32 %v5885, %v5886
  %v5888 = vsel %vm4967, %v4404, -inf
  %v5889 = vmax.f32 %v5887, %v5888
  %v5890 = vsel %vm4967, %v4948, -inf
  %v5891 = vmax.f32 %v5889, %v5890
  %v5892 = vsel %vm4967, %v3321, -inf
  %v5893 = vsel %vm4967, %v3865, -inf
  %v5894 = vmax.f32 %v5892, %v5893
  %v5895 = vsel %vm4967, %v4409, -inf
  %v5896 = vmax.f32 %v5894, %v5895
  %v5897 = vsel %vm4967, %v4953, -inf
  %v5898 = vmax.f32 %v5896, %v5897
  %v5899 = vsel %vm4967, %v3324, -inf
  %v5900 = vsel %vm4967, %v3868, -inf
  %v5901 = vmax.f32 %v5899, %v5900
  %v5902 = vsel %vm4967, %v4412, -inf
  %v5903 = vmax.f32 %v5901, %v5902
  %v5904 = vsel %vm4967, %v4956, -inf
  %v5905 = vmax.f32 %v5903, %v5904
  %v5906 = vsel %vm4967, %v3329, -inf
  %v5907 = vsel %vm4967, %v3873, -inf
  %v5908 = vmax.f32 %v5906, %v5907
  %v5909 = vsel %vm4967, %v4417, -inf
  %v5910 = vmax.f32 %v5908, %v5909
  %v5911 = vsel %vm4967, %v4961, -inf
  %v5912 = vmax.f32 %v5910, %v5911
  %v5913 = vsel %vm4967, %v3332, -inf
  %v5914 = vsel %vm4967, %v3876, -inf
  %v5915 = vmax.f32 %v5913, %v5914
  %v5916 = vsel %vm4967, %v4420, -inf
  %v5917 = vmax.f32 %v5915, %v5916
  %v5918 = vsel %vm4967, %v4964, -inf
  %v5919 = vmax.f32 %v5917, %v5918
  %v5920 = vld [vmem:[%s2] sm:$0x1]
  %v5922 = vlaneseq
  %v5923 = vshrl.u32 %v5922, 7
  %v5924 = vsub.s32 0, %v5923
  %v5925 = vrot.slane %v5920, %v5924
  %v5927 = vadd.f32 %v4974, %v5925
  %v5928 = vadd.f32 %v4981, %v5925
  %v5929 = vadd.f32 %v4988, %v5925
  %v5930 = vadd.f32 %v4995, %v5925
  %v5931 = vadd.f32 %v5002, %v5925
  %v5932 = vadd.f32 %v5009, %v5925
  %v5933 = vadd.f32 %v5016, %v5925
  %v5934 = vadd.f32 %v5023, %v5925
  %v5935 = vadd.f32 %v5030, %v5925
  %v5936 = vadd.f32 %v5037, %v5925
  %v5937 = vadd.f32 %v5044, %v5925
  %v5938 = vadd.f32 %v5051, %v5925
  %v5939 = vadd.f32 %v5058, %v5925
  %v5940 = vadd.f32 %v5065, %v5925
  %v5941 = vadd.f32 %v5072, %v5925
  %v5942 = vadd.f32 %v5079, %v5925
  %v5943 = vadd.f32 %v5086, %v5925
  %v5944 = vadd.f32 %v5093, %v5925
  %v5945 = vadd.f32 %v5100, %v5925
  %v5946 = vadd.f32 %v5107, %v5925
  %v5947 = vadd.f32 %v5114, %v5925
  %v5948 = vadd.f32 %v5121, %v5925
  %v5949 = vadd.f32 %v5128, %v5925
  %v5950 = vadd.f32 %v5135, %v5925
  %v5951 = vadd.f32 %v5142, %v5925
  %v5952 = vadd.f32 %v5149, %v5925
  %v5953 = vadd.f32 %v5156, %v5925
  %v5954 = vadd.f32 %v5163, %v5925
  %v5955 = vadd.f32 %v5170, %v5925
  %v5956 = vadd.f32 %v5177, %v5925
  %v5957 = vadd.f32 %v5184, %v5925
  %v5958 = vadd.f32 %v5191, %v5925
  %v5959 = vadd.f32 %v5198, %v5925
  %v5960 = vadd.f32 %v5205, %v5925
  %v5961 = vadd.f32 %v5212, %v5925
  %v5962 = vadd.f32 %v5219, %v5925
  %v5963 = vadd.f32 %v5226, %v5925
  %v5964 = vadd.f32 %v5233, %v5925
  %v5965 = vadd.f32 %v5240, %v5925
  %v5966 = vadd.f32 %v5247, %v5925
  %v5967 = vadd.f32 %v5254, %v5925
  %v5968 = vadd.f32 %v5261, %v5925
  %v5969 = vadd.f32 %v5268, %v5925
  %v5970 = vadd.f32 %v5275, %v5925
  %v5971 = vadd.f32 %v5282, %v5925
  %v5972 = vadd.f32 %v5289, %v5925
  %v5973 = vadd.f32 %v5296, %v5925
  %v5974 = vadd.f32 %v5303, %v5925
  %v5975 = vadd.f32 %v5310, %v5925
  %v5976 = vadd.f32 %v5317, %v5925
  %v5977 = vadd.f32 %v5324, %v5925
  %v5978 = vadd.f32 %v5331, %v5925
  %v5979 = vadd.f32 %v5338, %v5925
  %v5980 = vadd.f32 %v5345, %v5925
  %v5981 = vadd.f32 %v5352, %v5925
  %v5982 = vadd.f32 %v5359, %v5925
  %v5983 = vadd.f32 %v5366, %v5925
  %v5984 = vadd.f32 %v5373, %v5925
  %v5985 = vadd.f32 %v5380, %v5925
  %v5986 = vadd.f32 %v5387, %v5925
  %v5987 = vadd.f32 %v5394, %v5925
  %v5988 = vadd.f32 %v5401, %v5925
  %v5989 = vadd.f32 %v5408, %v5925
  %v5990 = vadd.f32 %v5415, %v5925
  %v5991 = vadd.f32 %v5422, %v5925
  %v5992 = vadd.f32 %v5429, %v5925
  %v5993 = vadd.f32 %v5436, %v5925
  %v5994 = vadd.f32 %v5443, %v5925
  %v5995 = vadd.f32 %v5450, %v5925
  %v5996 = vadd.f32 %v5457, %v5925
  %v5997 = vadd.f32 %v5464, %v5925
  %v5998 = vadd.f32 %v5471, %v5925
  %v5999 = vadd.f32 %v5478, %v5925
  %v6000 = vadd.f32 %v5485, %v5925
  %v6001 = vadd.f32 %v5492, %v5925
  %v6002 = vadd.f32 %v5499, %v5925
  %v6003 = vadd.f32 %v5506, %v5925
  %v6004 = vadd.f32 %v5513, %v5925
  %v6005 = vadd.f32 %v5520, %v5925
  %v6006 = vadd.f32 %v5527, %v5925
  %v6007 = vadd.f32 %v5534, %v5925
  %v6008 = vadd.f32 %v5541, %v5925
  %v6009 = vadd.f32 %v5548, %v5925
  %v6010 = vadd.f32 %v5555, %v5925
  %v6011 = vadd.f32 %v5562, %v5925
  %v6012 = vadd.f32 %v5569, %v5925
  %v6013 = vadd.f32 %v5576, %v5925
  %v6014 = vadd.f32 %v5583, %v5925
  %v6015 = vadd.f32 %v5590, %v5925
  %v6016 = vadd.f32 %v5597, %v5925
  %v6017 = vadd.f32 %v5604, %v5925
  %v6018 = vadd.f32 %v5611, %v5925
  %v6019 = vadd.f32 %v5618, %v5925
  %v6020 = vadd.f32 %v5625, %v5925
  %v6021 = vadd.f32 %v5632, %v5925
  %v6022 = vadd.f32 %v5639, %v5925
  %v6023 = vadd.f32 %v5646, %v5925
  %v6024 = vadd.f32 %v5653, %v5925
  %v6025 = vadd.f32 %v5660, %v5925
  %v6026 = vadd.f32 %v5667, %v5925
  %v6027 = vadd.f32 %v5674, %v5925
  %v6028 = vadd.f32 %v5681, %v5925
  %v6029 = vadd.f32 %v5688, %v5925
  %v6030 = vadd.f32 %v5695, %v5925
  %v6031 = vadd.f32 %v5702, %v5925
  %v6032 = vadd.f32 %v5709, %v5925
  %v6033 = vadd.f32 %v5716, %v5925
  %v6034 = vadd.f32 %v5723, %v5925
  %v6035 = vadd.f32 %v5730, %v5925
  %v6036 = vadd.f32 %v5737, %v5925
  %v6037 = vadd.f32 %v5744, %v5925
  %v6038 = vadd.f32 %v5751, %v5925
  %v6039 = vadd.f32 %v5758, %v5925
  %v6040 = vadd.f32 %v5765, %v5925
  %v6041 = vadd.f32 %v5772, %v5925
  %v6042 = vadd.f32 %v5779, %v5925
  %v6043 = vadd.f32 %v5786, %v5925
  %v6044 = vadd.f32 %v5793, %v5925
  %v6045 = vadd.f32 %v5800, %v5925
  %v6046 = vadd.f32 %v5807, %v5925
  %v6047 = vadd.f32 %v5814, %v5925
  %v6048 = vadd.f32 %v5821, %v5925
  %v6049 = vadd.f32 %v5828, %v5925
  %v6050 = vadd.f32 %v5835, %v5925
  %v6051 = vadd.f32 %v5842, %v5925
  %v6052 = vadd.f32 %v5849, %v5925
  %v6053 = vadd.f32 %v5856, %v5925
  %v6054 = vadd.f32 %v5863, %v5925
  %v6055 = vadd.f32 %v5870, %v5925
  %v6056 = vadd.f32 %v5877, %v5925
  %v6057 = vadd.f32 %v5884, %v5925
  %v6058 = vadd.f32 %v5891, %v5925
  %v6059 = vadd.f32 %v5898, %v5925
  %v6060 = vadd.f32 %v5905, %v5925
  %v6061 = vadd.f32 %v5912, %v5925
  %v6062 = vadd.f32 %v5919, %v5925
  %v6063 = vmax.f32 %v5927, 0.0
  %v6064 = vmax.f32 %v5928, 0.0
  %v6065 = vmax.f32 %v5929, 0.0
  %v6066 = vmax.f32 %v5930, 0.0
  %v6067 = vmax.f32 %v5931, 0.0
  %v6068 = vmax.f32 %v5932, 0.0
  %v6069 = vmax.f32 %v5933, 0.0
  %v6070 = vmax.f32 %v5934, 0.0
  %v6071 = vmax.f32 %v5935, 0.0
  %v6072 = vmax.f32 %v5936, 0.0
  %v6073 = vmax.f32 %v5937, 0.0
  %v6074 = vmax.f32 %v5938, 0.0
  %v6075 = vmax.f32 %v5939, 0.0
  %v6076 = vmax.f32 %v5940, 0.0
  %v6077 = vmax.f32 %v5941, 0.0
  %v6078 = vmax.f32 %v5942, 0.0
  %v6079 = vmax.f32 %v5943, 0.0
  %v6080 = vmax.f32 %v5944, 0.0
  %v6081 = vmax.f32 %v5945, 0.0
  %v6082 = vmax.f32 %v5946, 0.0
  %v6083 = vmax.f32 %v5947, 0.0
  %v6084 = vmax.f32 %v5948, 0.0
  %v6085 = vmax.f32 %v5949, 0.0
  %v6086 = vmax.f32 %v5950, 0.0
  %v6087 = vmax.f32 %v5951, 0.0
  %v6088 = vmax.f32 %v5952, 0.0
  %v6089 = vmax.f32 %v5953, 0.0
  %v6090 = vmax.f32 %v5954, 0.0
  %v6091 = vmax.f32 %v5955, 0.0
  %v6092 = vmax.f32 %v5956, 0.0
  %v6093 = vmax.f32 %v5957, 0.0
  %v6094 = vmax.f32 %v5958, 0.0
  %v6095 = vmax.f32 %v5959, 0.0
  %v6096 = vmax.f32 %v5960, 0.0
  %v6097 = vmax.f32 %v5961, 0.0
  %v6098 = vmax.f32 %v5962, 0.0
  %v6099 = vmax.f32 %v5963, 0.0
  %v6100 = vmax.f32 %v5964, 0.0
  %v6101 = vmax.f32 %v5965, 0.0
  %v6102 = vmax.f32 %v5966, 0.0
  %v6103 = vmax.f32 %v5967, 0.0
  %v6104 = vmax.f32 %v5968, 0.0
  %v6105 = vmax.f32 %v5969, 0.0
  %v6106 = vmax.f32 %v5970, 0.0
  %v6107 = vmax.f32 %v5971, 0.0
  %v6108 = vmax.f32 %v5972, 0.0
  %v6109 = vmax.f32 %v5973, 0.0
  %v6110 = vmax.f32 %v5974, 0.0
  %v6111 = vmax.f32 %v5975, 0.0
  %v6112 = vmax.f32 %v5976, 0.0
  %v6113 = vmax.f32 %v5977, 0.0
  %v6114 = vmax.f32 %v5978, 0.0
  %v6115 = vmax.f32 %v5979, 0.0
  %v6116 = vmax.f32 %v5980, 0.0
  %v6117 = vmax.f32 %v5981, 0.0
  %v6118 = vmax.f32 %v5982, 0.0
  %v6119 = vmax.f32 %v5983, 0.0
  %v6120 = vmax.f32 %v5984, 0.0
  %v6121 = vmax.f32 %v5985, 0.0
  %v6122 = vmax.f32 %v5986, 0.0
  %v6123 = vmax.f32 %v5987, 0.0
  %v6124 = vmax.f32 %v5988, 0.0
  %v6125 = vmax.f32 %v5989, 0.0
  %v6126 = vmax.f32 %v5990, 0.0
  %v6127 = vmax.f32 %v5991, 0.0
  %v6128 = vmax.f32 %v5992, 0.0
  %v6129 = vmax.f32 %v5993, 0.0
  %v6130 = vmax.f32 %v5994, 0.0
  %v6131 = vmax.f32 %v5995, 0.0
  %v6132 = vmax.f32 %v5996, 0.0
  %v6133 = vmax.f32 %v5997, 0.0
  %v6134 = vmax.f32 %v5998, 0.0
  %v6135 = vmax.f32 %v5999, 0.0
  %v6136 = vmax.f32 %v6000, 0.0
  %v6137 = vmax.f32 %v6001, 0.0
  %v6138 = vmax.f32 %v6002, 0.0
  %v6139 = vmax.f32 %v6003, 0.0
  %v6140 = vmax.f32 %v6004, 0.0
  %v6141 = vmax.f32 %v6005, 0.0
  %v6142 = vmax.f32 %v6006, 0.0
  %v6143 = vmax.f32 %v6007, 0.0
  %v6144 = vmax.f32 %v6008, 0.0
  %v6145 = vmax.f32 %v6009, 0.0
  %v6146 = vmax.f32 %v6010, 0.0
  %v6147 = vmax.f32 %v6011, 0.0
  %v6148 = vmax.f32 %v6012, 0.0
  %v6149 = vmax.f32 %v6013, 0.0
  %v6150 = vmax.f32 %v6014, 0.0
  %v6151 = vmax.f32 %v6015, 0.0
  %v6152 = vmax.f32 %v6016, 0.0
  %v6153 = vmax.f32 %v6017, 0.0
  %v6154 = vmax.f32 %v6018, 0.0
  %v6155 = vmax.f32 %v6019, 0.0
  %v6156 = vmax.f32 %v6020, 0.0
  %v6157 = vmax.f32 %v6021, 0.0
  %v6158 = vmax.f32 %v6022, 0.0
  %v6159 = vmax.f32 %v6023, 0.0
  %v6160 = vmax.f32 %v6024, 0.0
  %v6161 = vmax.f32 %v6025, 0.0
  %v6162 = vmax.f32 %v6026, 0.0
  %v6163 = vmax.f32 %v6027, 0.0
  %v6164 = vmax.f32 %v6028, 0.0
  %v6165 = vmax.f32 %v6029, 0.0
  %v6166 = vmax.f32 %v6030, 0.0
  %v6167 = vmax.f32 %v6031, 0.0
  %v6168 = vmax.f32 %v6032, 0.0
  %v6169 = vmax.f32 %v6033, 0.0
  %v6170 = vmax.f32 %v6034, 0.0
  %v6171 = vmax.f32 %v6035, 0.0
  %v6172 = vmax.f32 %v6036, 0.0
  %v6173 = vmax.f32 %v6037, 0.0
  %v6174 = vmax.f32 %v6038, 0.0
  %v6175 = vmax.f32 %v6039, 0.0
  %v6176 = vmax.f32 %v6040, 0.0
  %v6177 = vmax.f32 %v6041, 0.0
  %v6178 = vmax.f32 %v6042, 0.0
  %v6179 = vmax.f32 %v6043, 0.0
  %v6180 = vmax.f32 %v6044, 0.0
  %v6181 = vmax.f32 %v6045, 0.0
  %v6182 = vmax.f32 %v6046, 0.0
  %v6183 = vmax.f32 %v6047, 0.0
  %v6184 = vmax.f32 %v6048, 0.0
  %v6185 = vmax.f32 %v6049, 0.0
  %v6186 = vmax.f32 %v6050, 0.0
  %v6187 = vmax.f32 %v6051, 0.0
  %v6188 = vmax.f32 %v6052, 0.0
  %v6189 = vmax.f32 %v6053, 0.0
  %v6190 = vmax.f32 %v6054, 0.0
  %v6191 = vmax.f32 %v6055, 0.0
  %v6192 = vmax.f32 %v6056, 0.0
  %v6193 = vmax.f32 %v6057, 0.0
  %v6194 = vmax.f32 %v6058, 0.0
  %v6195 = vmax.f32 %v6059, 0.0
  %v6196 = vmax.f32 %v6060, 0.0
  %v6197 = vmax.f32 %v6061, 0.0
  %v6198 = vmax.f32 %v6062, 0.0
  %v6199 = vpack.c.bf16 %v6064, %v6063
  %v6200 = vpack.c.bf16 %v6066, %v6065
  %v6201 = vpack.c.bf16 %v6068, %v6067
  %v6202 = vpack.c.bf16 %v6070, %v6069
  %v6203 = vpack.c.bf16 %v6072, %v6071
  %v6204 = vpack.c.bf16 %v6074, %v6073
  %v6205 = vpack.c.bf16 %v6076, %v6075
  %v6206 = vpack.c.bf16 %v6078, %v6077
  %v6207 = vpack.c.bf16 %v6080, %v6079
  %v6208 = vpack.c.bf16 %v6082, %v6081
  %v6209 = vpack.c.bf16 %v6084, %v6083
  %v6210 = vpack.c.bf16 %v6086, %v6085
  %v6211 = vpack.c.bf16 %v6088, %v6087
  %v6212 = vpack.c.bf16 %v6090, %v6089
  %v6213 = vpack.c.bf16 %v6092, %v6091
  %v6214 = vpack.c.bf16 %v6094, %v6093
  %v6215 = vpack.c.bf16 %v6096, %v6095
  %v6216 = vpack.c.bf16 %v6098, %v6097
  %v6217 = vpack.c.bf16 %v6100, %v6099
  %v6218 = vpack.c.bf16 %v6102, %v6101
  %v6219 = vpack.c.bf16 %v6104, %v6103
  %v6220 = vpack.c.bf16 %v6106, %v6105
  %v6221 = vpack.c.bf16 %v6108, %v6107
  %v6222 = vpack.c.bf16 %v6110, %v6109
  %v6223 = vpack.c.bf16 %v6112, %v6111
  %v6224 = vpack.c.bf16 %v6114, %v6113
  %v6225 = vpack.c.bf16 %v6116, %v6115
  %v6226 = vpack.c.bf16 %v6118, %v6117
  %v6227 = vpack.c.bf16 %v6120, %v6119
  %v6228 = vpack.c.bf16 %v6122, %v6121
  %v6229 = vpack.c.bf16 %v6124, %v6123
  %v6230 = vpack.c.bf16 %v6126, %v6125
  %v6231 = vpack.c.bf16 %v6128, %v6127
  %v6232 = vpack.c.bf16 %v6130, %v6129
  %v6233 = vpack.c.bf16 %v6132, %v6131
  %v6234 = vpack.c.bf16 %v6134, %v6133
  %v6235 = vpack.c.bf16 %v6136, %v6135
  %v6236 = vpack.c.bf16 %v6138, %v6137
  %v6237 = vpack.c.bf16 %v6140, %v6139
  %v6238 = vpack.c.bf16 %v6142, %v6141
  %v6239 = vpack.c.bf16 %v6144, %v6143
  %v6240 = vpack.c.bf16 %v6146, %v6145
  %v6241 = vpack.c.bf16 %v6148, %v6147
  %v6242 = vpack.c.bf16 %v6150, %v6149
  %v6243 = vpack.c.bf16 %v6152, %v6151
  %v6244 = vpack.c.bf16 %v6154, %v6153
  %v6245 = vpack.c.bf16 %v6156, %v6155
  %v6246 = vpack.c.bf16 %v6158, %v6157
  %v6247 = vpack.c.bf16 %v6160, %v6159
  %v6248 = vpack.c.bf16 %v6162, %v6161
  %v6249 = vpack.c.bf16 %v6164, %v6163
  %v6250 = vpack.c.bf16 %v6166, %v6165
  %v6251 = vpack.c.bf16 %v6168, %v6167
  %v6252 = vpack.c.bf16 %v6170, %v6169
  %v6253 = vpack.c.bf16 %v6172, %v6171
  %v6254 = vpack.c.bf16 %v6174, %v6173
  %v6255 = vpack.c.bf16 %v6176, %v6175
  %v6256 = vpack.c.bf16 %v6178, %v6177
  %v6257 = vpack.c.bf16 %v6180, %v6179
  %v6258 = vpack.c.bf16 %v6182, %v6181
  %v6259 = vpack.c.bf16 %v6184, %v6183
  %v6260 = vpack.c.bf16 %v6186, %v6185
  %v6261 = vpack.c.bf16 %v6188, %v6187
  %v6262 = vpack.c.bf16 %v6190, %v6189
  %v6263 = vpack.c.bf16 %v6192, %v6191
  %v6264 = vpack.c.bf16 %v6194, %v6193
  %v6265 = vpack.c.bf16 %v6196, %v6195
  %v6266 = vpack.c.bf16 %v6198, %v6197
  %v6335 = vunpack.c.l.b16 %v6199
  %v6336 = vunpack.c.h.b16 %v6199
  %v6337 = vunpack.c.l.b16 %v6200
  %v6338 = vunpack.c.h.b16 %v6200
  %v6339 = vunpack.c.l.b16 %v6201
  %v6340 = vunpack.c.h.b16 %v6201
  %v6341 = vunpack.c.l.b16 %v6202
  %v6342 = vunpack.c.h.b16 %v6202
  %v6343 = vunpack.c.l.b16 %v6203
  %v6344 = vunpack.c.h.b16 %v6203
  %v6345 = vunpack.c.l.b16 %v6204
  %v6346 = vunpack.c.h.b16 %v6204
  %v6347 = vunpack.c.l.b16 %v6205
  %v6348 = vunpack.c.h.b16 %v6205
  %v6349 = vunpack.c.l.b16 %v6206
  %v6350 = vunpack.c.h.b16 %v6206
  %v6351 = vunpack.c.l.b16 %v6207
  %v6352 = vunpack.c.h.b16 %v6207
  %v6353 = vunpack.c.l.b16 %v6208
  %v6354 = vunpack.c.h.b16 %v6208
  %v6355 = vunpack.c.l.b16 %v6209
  %v6356 = vunpack.c.h.b16 %v6209
  %v6357 = vunpack.c.l.b16 %v6210
  %v6358 = vunpack.c.h.b16 %v6210
  %v6359 = vunpack.c.l.b16 %v6211
  %v6360 = vunpack.c.h.b16 %v6211
  %v6361 = vunpack.c.l.b16 %v6212
  %v6362 = vunpack.c.h.b16 %v6212
  %v6363 = vunpack.c.l.b16 %v6213
  %v6364 = vunpack.c.h.b16 %v6213
  %v6365 = vunpack.c.l.b16 %v6214
  %v6366 = vunpack.c.h.b16 %v6214
  %v6367 = vunpack.c.l.b16 %v6215
  %v6368 = vunpack.c.h.b16 %v6215
  %v6369 = vunpack.c.l.b16 %v6216
  %v6370 = vunpack.c.h.b16 %v6216
  %v6371 = vunpack.c.l.b16 %v6217
  %v6372 = vunpack.c.h.b16 %v6217
  %v6373 = vunpack.c.l.b16 %v6218
  %v6374 = vunpack.c.h.b16 %v6218
  %v6375 = vunpack.c.l.b16 %v6219
  %v6376 = vunpack.c.h.b16 %v6219
  %v6377 = vunpack.c.l.b16 %v6220
  %v6378 = vunpack.c.h.b16 %v6220
  %v6379 = vunpack.c.l.b16 %v6221
  %v6380 = vunpack.c.h.b16 %v6221
  %v6381 = vunpack.c.l.b16 %v6222
  %v6382 = vunpack.c.h.b16 %v6222
  %v6383 = vunpack.c.l.b16 %v6223
  %v6384 = vunpack.c.h.b16 %v6223
  %v6385 = vunpack.c.l.b16 %v6224
  %v6386 = vunpack.c.h.b16 %v6224
  %v6387 = vunpack.c.l.b16 %v6225
  %v6388 = vunpack.c.h.b16 %v6225
  %v6389 = vunpack.c.l.b16 %v6226
  %v6390 = vunpack.c.h.b16 %v6226
  %v6391 = vunpack.c.l.b16 %v6227
  %v6392 = vunpack.c.h.b16 %v6227
  %v6393 = vunpack.c.l.b16 %v6228
  %v6394 = vunpack.c.h.b16 %v6228
  %v6395 = vunpack.c.l.b16 %v6229
  %v6396 = vunpack.c.h.b16 %v6229
  %v6397 = vunpack.c.l.b16 %v6230
  %v6398 = vunpack.c.h.b16 %v6230
  %v6399 = vunpack.c.l.b16 %v6231
  %v6400 = vunpack.c.h.b16 %v6231
  %v6401 = vunpack.c.l.b16 %v6232
  %v6402 = vunpack.c.h.b16 %v6232
  %v6403 = vunpack.c.l.b16 %v6233
  %v6404 = vunpack.c.h.b16 %v6233
  %v6405 = vunpack.c.l.b16 %v6234
  %v6406 = vunpack.c.h.b16 %v6234
  %v6407 = vunpack.c.l.b16 %v6235
  %v6408 = vunpack.c.h.b16 %v6235
  %v6409 = vunpack.c.l.b16 %v6236
  %v6410 = vunpack.c.h.b16 %v6236
  %v6411 = vunpack.c.l.b16 %v6237
  %v6412 = vunpack.c.h.b16 %v6237
  %v6413 = vunpack.c.l.b16 %v6238
  %v6414 = vunpack.c.h.b16 %v6238
  %v6415 = vunpack.c.l.b16 %v6239
  %v6416 = vunpack.c.h.b16 %v6239
  %v6417 = vunpack.c.l.b16 %v6240
  %v6418 = vunpack.c.h.b16 %v6240
  %v6419 = vunpack.c.l.b16 %v6241
  %v6420 = vunpack.c.h.b16 %v6241
  %v6421 = vunpack.c.l.b16 %v6242
  %v6422 = vunpack.c.h.b16 %v6242
  %v6423 = vunpack.c.l.b16 %v6243
  %v6424 = vunpack.c.h.b16 %v6243
  %v6425 = vunpack.c.l.b16 %v6244
  %v6426 = vunpack.c.h.b16 %v6244
  %v6427 = vunpack.c.l.b16 %v6245
  %v6428 = vunpack.c.h.b16 %v6245
  %v6429 = vunpack.c.l.b16 %v6246
  %v6430 = vunpack.c.h.b16 %v6246
  %v6431 = vunpack.c.l.b16 %v6247
  %v6432 = vunpack.c.h.b16 %v6247
  %v6433 = vunpack.c.l.b16 %v6248
  %v6434 = vunpack.c.h.b16 %v6248
  %v6435 = vunpack.c.l.b16 %v6249
  %v6436 = vunpack.c.h.b16 %v6249
  %v6437 = vunpack.c.l.b16 %v6250
  %v6438 = vunpack.c.h.b16 %v6250
  %v6439 = vunpack.c.l.b16 %v6251
  %v6440 = vunpack.c.h.b16 %v6251
  %v6441 = vunpack.c.l.b16 %v6252
  %v6442 = vunpack.c.h.b16 %v6252
  %v6443 = vunpack.c.l.b16 %v6253
  %v6444 = vunpack.c.h.b16 %v6253
  %v6445 = vunpack.c.l.b16 %v6254
  %v6446 = vunpack.c.h.b16 %v6254
  %v6447 = vunpack.c.l.b16 %v6255
  %v6448 = vunpack.c.h.b16 %v6255
  %v6449 = vunpack.c.l.b16 %v6256
  %v6450 = vunpack.c.h.b16 %v6256
  %v6451 = vunpack.c.l.b16 %v6257
  %v6452 = vunpack.c.h.b16 %v6257
  %v6453 = vunpack.c.l.b16 %v6258
  %v6454 = vunpack.c.h.b16 %v6258
  %v6455 = vunpack.c.l.b16 %v6259
  %v6456 = vunpack.c.h.b16 %v6259
  %v6457 = vunpack.c.l.b16 %v6260
  %v6458 = vunpack.c.h.b16 %v6260
  %v6459 = vunpack.c.l.b16 %v6261
  %v6460 = vunpack.c.h.b16 %v6261
  %v6461 = vunpack.c.l.b16 %v6262
  %v6462 = vunpack.c.h.b16 %v6262
  %v6463 = vunpack.c.l.b16 %v6263
  %v6464 = vunpack.c.h.b16 %v6263
  %v6465 = vunpack.c.l.b16 %v6264
  %v6466 = vunpack.c.h.b16 %v6264
  %v6467 = vunpack.c.l.b16 %v6265
  %v6468 = vunpack.c.h.b16 %v6265
  %v6469 = vunpack.c.l.b16 %v6266
  %v6470 = vunpack.c.h.b16 %v6266
  %v6471 = vpack.c.b16 %v6335, %v6335
  %v6472 = vpack.c.b16 %v6336, %v6336
  %v6473 = vpack.c.b16 %v6337, %v6337
  %v6474 = vpack.c.b16 %v6338, %v6338
  %v6475 = vpack.c.b16 %v6339, %v6339
  %v6476 = vpack.c.b16 %v6340, %v6340
  %v6477 = vpack.c.b16 %v6341, %v6341
  %v6478 = vpack.c.b16 %v6342, %v6342
  %v6479 = vpack.c.b16 %v6343, %v6343
  %v6480 = vpack.c.b16 %v6344, %v6344
  %v6481 = vpack.c.b16 %v6345, %v6345
  %v6482 = vpack.c.b16 %v6346, %v6346
  %v6483 = vpack.c.b16 %v6347, %v6347
  %v6484 = vpack.c.b16 %v6348, %v6348
  %v6485 = vpack.c.b16 %v6349, %v6349
  %v6486 = vpack.c.b16 %v6350, %v6350
  %v6487 = vpack.c.b16 %v6351, %v6351
  %v6488 = vpack.c.b16 %v6352, %v6352
  %v6489 = vpack.c.b16 %v6353, %v6353
  %v6490 = vpack.c.b16 %v6354, %v6354
  %v6491 = vpack.c.b16 %v6355, %v6355
  %v6492 = vpack.c.b16 %v6356, %v6356
  %v6493 = vpack.c.b16 %v6357, %v6357
  %v6494 = vpack.c.b16 %v6358, %v6358
  %v6495 = vpack.c.b16 %v6359, %v6359
  %v6496 = vpack.c.b16 %v6360, %v6360
  %v6497 = vpack.c.b16 %v6361, %v6361
  %v6498 = vpack.c.b16 %v6362, %v6362
  %v6499 = vpack.c.b16 %v6363, %v6363
  %v6500 = vpack.c.b16 %v6364, %v6364
  %v6501 = vpack.c.b16 %v6365, %v6365
  %v6502 = vpack.c.b16 %v6366, %v6366
  %v6503 = vpack.c.b16 %v6367, %v6367
  %v6504 = vpack.c.b16 %v6368, %v6368
  %v6505 = vpack.c.b16 %v6369, %v6369
  %v6506 = vpack.c.b16 %v6370, %v6370
  %v6507 = vpack.c.b16 %v6371, %v6371
  %v6508 = vpack.c.b16 %v6372, %v6372
  %v6509 = vpack.c.b16 %v6373, %v6373
  %v6510 = vpack.c.b16 %v6374, %v6374
  %v6511 = vpack.c.b16 %v6375, %v6375
  %v6512 = vpack.c.b16 %v6376, %v6376
  %v6513 = vpack.c.b16 %v6377, %v6377
  %v6514 = vpack.c.b16 %v6378, %v6378
  %v6515 = vpack.c.b16 %v6379, %v6379
  %v6516 = vpack.c.b16 %v6380, %v6380
  %v6517 = vpack.c.b16 %v6381, %v6381
  %v6518 = vpack.c.b16 %v6382, %v6382
  %v6519 = vpack.c.b16 %v6383, %v6383
  %v6520 = vpack.c.b16 %v6384, %v6384
  %v6521 = vpack.c.b16 %v6385, %v6385
  %v6522 = vpack.c.b16 %v6386, %v6386
  %v6523 = vpack.c.b16 %v6387, %v6387
  %v6524 = vpack.c.b16 %v6388, %v6388
  %v6525 = vpack.c.b16 %v6389, %v6389
  %v6526 = vpack.c.b16 %v6390, %v6390
  %v6527 = vpack.c.b16 %v6391, %v6391
  %v6528 = vpack.c.b16 %v6392, %v6392
  %v6529 = vpack.c.b16 %v6393, %v6393
  %v6530 = vpack.c.b16 %v6394, %v6394
  %v6531 = vpack.c.b16 %v6395, %v6395
  %v6532 = vpack.c.b16 %v6396, %v6396
  %v6533 = vpack.c.b16 %v6397, %v6397
  %v6534 = vpack.c.b16 %v6398, %v6398
  %v6535 = vpack.c.b16 %v6399, %v6399
  %v6536 = vpack.c.b16 %v6400, %v6400
  %v6537 = vpack.c.b16 %v6401, %v6401
  %v6538 = vpack.c.b16 %v6402, %v6402
  %v6539 = vpack.c.b16 %v6403, %v6403
  %v6540 = vpack.c.b16 %v6404, %v6404
  %v6541 = vpack.c.b16 %v6405, %v6405
  %v6542 = vpack.c.b16 %v6406, %v6406
  %v6543 = vpack.c.b16 %v6407, %v6407
  %v6544 = vpack.c.b16 %v6408, %v6408
  %v6545 = vpack.c.b16 %v6409, %v6409
  %v6546 = vpack.c.b16 %v6410, %v6410
  %v6547 = vpack.c.b16 %v6411, %v6411
  %v6548 = vpack.c.b16 %v6412, %v6412
  %v6549 = vpack.c.b16 %v6413, %v6413
  %v6550 = vpack.c.b16 %v6414, %v6414
  %v6551 = vpack.c.b16 %v6415, %v6415
  %v6552 = vpack.c.b16 %v6416, %v6416
  %v6553 = vpack.c.b16 %v6417, %v6417
  %v6554 = vpack.c.b16 %v6418, %v6418
  %v6555 = vpack.c.b16 %v6419, %v6419
  %v6556 = vpack.c.b16 %v6420, %v6420
  %v6557 = vpack.c.b16 %v6421, %v6421
  %v6558 = vpack.c.b16 %v6422, %v6422
  %v6559 = vpack.c.b16 %v6423, %v6423
  %v6560 = vpack.c.b16 %v6424, %v6424
  %v6561 = vpack.c.b16 %v6425, %v6425
  %v6562 = vpack.c.b16 %v6426, %v6426
  %v6563 = vpack.c.b16 %v6427, %v6427
  %v6564 = vpack.c.b16 %v6428, %v6428
  %v6565 = vpack.c.b16 %v6429, %v6429
  %v6566 = vpack.c.b16 %v6430, %v6430
  %v6567 = vpack.c.b16 %v6431, %v6431
  %v6568 = vpack.c.b16 %v6432, %v6432
  %v6569 = vpack.c.b16 %v6433, %v6433
  %v6570 = vpack.c.b16 %v6434, %v6434
  %v6571 = vpack.c.b16 %v6435, %v6435
  %v6572 = vpack.c.b16 %v6436, %v6436
  %v6573 = vpack.c.b16 %v6437, %v6437
  %v6574 = vpack.c.b16 %v6438, %v6438
  %v6575 = vpack.c.b16 %v6439, %v6439
  %v6576 = vpack.c.b16 %v6440, %v6440
  %v6577 = vpack.c.b16 %v6441, %v6441
  %v6578 = vpack.c.b16 %v6442, %v6442
  %v6579 = vpack.c.b16 %v6443, %v6443
  %v6580 = vpack.c.b16 %v6444, %v6444
  %v6581 = vpack.c.b16 %v6445, %v6445
  %v6582 = vpack.c.b16 %v6446, %v6446
  %v6583 = vpack.c.b16 %v6447, %v6447
  %v6584 = vpack.c.b16 %v6448, %v6448
  %v6585 = vpack.c.b16 %v6449, %v6449
  %v6586 = vpack.c.b16 %v6450, %v6450
  %v6587 = vpack.c.b16 %v6451, %v6451
  %v6588 = vpack.c.b16 %v6452, %v6452
  %v6589 = vpack.c.b16 %v6453, %v6453
  %v6590 = vpack.c.b16 %v6454, %v6454
  %v6591 = vpack.c.b16 %v6455, %v6455
  %v6592 = vpack.c.b16 %v6456, %v6456
  %v6593 = vpack.c.b16 %v6457, %v6457
  %v6594 = vpack.c.b16 %v6458, %v6458
  %v6595 = vpack.c.b16 %v6459, %v6459
  %v6596 = vpack.c.b16 %v6460, %v6460
  %v6597 = vpack.c.b16 %v6461, %v6461
  %v6598 = vpack.c.b16 %v6462, %v6462
  %v6599 = vpack.c.b16 %v6463, %v6463
  %v6600 = vpack.c.b16 %v6464, %v6464
  %v6601 = vpack.c.b16 %v6465, %v6465
  %v6602 = vpack.c.b16 %v6466, %v6466
  %v6603 = vpack.c.b16 %v6467, %v6467
  %v6604 = vpack.c.b16 %v6468, %v6468
  %v6605 = vpack.c.b16 %v6469, %v6469
  %v6606 = vpack.c.b16 %v6470, %v6470
  %vm6743 = vcmask 257024
  %6744 = vst.msk [vmem:[%s3] sm:$0xf] %vm6743, %v6471
  %6745 = vst.msk [vmem:[%s3 + $0x4] sm:$0xf] %vm6743, %v6472
  %6746 = vst.msk [vmem:[%s3 + $0x8] sm:$0xf] %vm6743, %v6473
  %6747 = vst.msk [vmem:[%s3 + $0xc] sm:$0xf] %vm6743, %v6474
  %6748 = vst.msk [vmem:[%s3 + $0x10] sm:$0xf] %vm6743, %v6475
  %6749 = vst.msk [vmem:[%s3 + $0x14] sm:$0xf] %vm6743, %v6476
  %6750 = vst.msk [vmem:[%s3 + $0x18] sm:$0xf] %vm6743, %v6477
  %6751 = vst.msk [vmem:[%s3 + $0x1c] sm:$0xf] %vm6743, %v6478
  %6752 = vst.msk [vmem:[%s3 + $0x20] sm:$0xf] %vm6743, %v6479
  %6753 = vst.msk [vmem:[%s3 + $0x24] sm:$0xf] %vm6743, %v6480
  %6754 = vst.msk [vmem:[%s3 + $0x28] sm:$0xf] %vm6743, %v6481
  %6755 = vst.msk [vmem:[%s3 + $0x2c] sm:$0xf] %vm6743, %v6482
  %6756 = vst.msk [vmem:[%s3 + $0x30] sm:$0xf] %vm6743, %v6483
  %6757 = vst.msk [vmem:[%s3 + $0x34] sm:$0xf] %vm6743, %v6484
  %6758 = vst.msk [vmem:[%s3 + $0x38] sm:$0xf] %vm6743, %v6485
  %6759 = vst.msk [vmem:[%s3 + $0x3c] sm:$0xf] %vm6743, %v6486
  %6760 = vst.msk [vmem:[%s3 + $0x40] sm:$0xf] %vm6743, %v6487
  %6761 = vst.msk [vmem:[%s3 + $0x44] sm:$0xf] %vm6743, %v6488
  %6762 = vst.msk [vmem:[%s3 + $0x48] sm:$0xf] %vm6743, %v6489
  %6763 = vst.msk [vmem:[%s3 + $0x4c] sm:$0xf] %vm6743, %v6490
  %6764 = vst.msk [vmem:[%s3 + $0x50] sm:$0xf] %vm6743, %v6491
  %6765 = vst.msk [vmem:[%s3 + $0x54] sm:$0xf] %vm6743, %v6492
  %6766 = vst.msk [vmem:[%s3 + $0x58] sm:$0xf] %vm6743, %v6493
  %6767 = vst.msk [vmem:[%s3 + $0x5c] sm:$0xf] %vm6743, %v6494
  %6768 = vst.msk [vmem:[%s3 + $0x60] sm:$0xf] %vm6743, %v6495
  %6769 = vst.msk [vmem:[%s3 + $0x64] sm:$0xf] %vm6743, %v6496
  %6770 = vst.msk [vmem:[%s3 + $0x68] sm:$0xf] %vm6743, %v6497
  %6771 = vst.msk [vmem:[%s3 + $0x6c] sm:$0xf] %vm6743, %v6498
  %6772 = vst.msk [vmem:[%s3 + $0x70] sm:$0xf] %vm6743, %v6499
  %6773 = vst.msk [vmem:[%s3 + $0x74] sm:$0xf] %vm6743, %v6500
  %6774 = vst.msk [vmem:[%s3 + $0x78] sm:$0xf] %vm6743, %v6501
  %6775 = vst.msk [vmem:[%s3 + $0x7c] sm:$0xf] %vm6743, %v6502
  %6776 = vst.msk [vmem:[%s3 + $0x80] sm:$0xf] %vm6743, %v6503
  %6777 = vst.msk [vmem:[%s3 + $0x84] sm:$0xf] %vm6743, %v6504
  %6778 = vst.msk [vmem:[%s3 + $0x88] sm:$0xf] %vm6743, %v6505
  %6779 = vst.msk [vmem:[%s3 + $0x8c] sm:$0xf] %vm6743, %v6506
  %6780 = vst.msk [vmem:[%s3 + $0x90] sm:$0xf] %vm6743, %v6507
  %6781 = vst.msk [vmem:[%s3 + $0x94] sm:$0xf] %vm6743, %v6508
  %6782 = vst.msk [vmem:[%s3 + $0x98] sm:$0xf] %vm6743, %v6509
  %6783 = vst.msk [vmem:[%s3 + $0x9c] sm:$0xf] %vm6743, %v6510
  %6784 = vst.msk [vmem:[%s3 + $0xa0] sm:$0xf] %vm6743, %v6511
  %6785 = vst.msk [vmem:[%s3 + $0xa4] sm:$0xf] %vm6743, %v6512
  %6786 = vst.msk [vmem:[%s3 + $0xa8] sm:$0xf] %vm6743, %v6513
  %6787 = vst.msk [vmem:[%s3 + $0xac] sm:$0xf] %vm6743, %v6514
  %6788 = vst.msk [vmem:[%s3 + $0xb0] sm:$0xf] %vm6743, %v6515
  %6789 = vst.msk [vmem:[%s3 + $0xb4] sm:$0xf] %vm6743, %v6516
  %6790 = vst.msk [vmem:[%s3 + $0xb8] sm:$0xf] %vm6743, %v6517
  %6791 = vst.msk [vmem:[%s3 + $0xbc] sm:$0xf] %vm6743, %v6518
  %6792 = vst.msk [vmem:[%s3 + $0xc0] sm:$0xf] %vm6743, %v6519
  %6793 = vst.msk [vmem:[%s3 + $0xc4] sm:$0xf] %vm6743, %v6520
  %6794 = vst.msk [vmem:[%s3 + $0xc8] sm:$0xf] %vm6743, %v6521
  %6795 = vst.msk [vmem:[%s3 + $0xcc] sm:$0xf] %vm6743, %v6522
  %6796 = vst.msk [vmem:[%s3 + $0xd0] sm:$0xf] %vm6743, %v6523
  %6797 = vst.msk [vmem:[%s3 + $0xd4] sm:$0xf] %vm6743, %v6524
  %6798 = vst.msk [vmem:[%s3 + $0xd8] sm:$0xf] %vm6743, %v6525
  %6799 = vst.msk [vmem:[%s3 + $0xdc] sm:$0xf] %vm6743, %v6526
  %6800 = vst.msk [vmem:[%s3 + $0xe0] sm:$0xf] %vm6743, %v6527
  %6801 = vst.msk [vmem:[%s3 + $0xe4] sm:$0xf] %vm6743, %v6528
  %6802 = vst.msk [vmem:[%s3 + $0xe8] sm:$0xf] %vm6743, %v6529
  %6803 = vst.msk [vmem:[%s3 + $0xec] sm:$0xf] %vm6743, %v6530
  %6804 = vst.msk [vmem:[%s3 + $0xf0] sm:$0xf] %vm6743, %v6531
  %6805 = vst.msk [vmem:[%s3 + $0xf4] sm:$0xf] %vm6743, %v6532
  %6806 = vst.msk [vmem:[%s3 + $0xf8] sm:$0xf] %vm6743, %v6533
  %6807 = vst.msk [vmem:[%s3 + $0xfc] sm:$0xf] %vm6743, %v6534
  %6808 = vst.msk [vmem:[%s3 + $0x100] sm:$0xf] %vm6743, %v6535
  %6809 = vst.msk [vmem:[%s3 + $0x104] sm:$0xf] %vm6743, %v6536
  %6810 = vst.msk [vmem:[%s3 + $0x108] sm:$0xf] %vm6743, %v6537
  %6811 = vst.msk [vmem:[%s3 + $0x10c] sm:$0xf] %vm6743, %v6538
  %6812 = vst.msk [vmem:[%s3 + $0x110] sm:$0xf] %vm6743, %v6539
  %6813 = vst.msk [vmem:[%s3 + $0x114] sm:$0xf] %vm6743, %v6540
  %6814 = vst.msk [vmem:[%s3 + $0x118] sm:$0xf] %vm6743, %v6541
  %6815 = vst.msk [vmem:[%s3 + $0x11c] sm:$0xf] %vm6743, %v6542
  %6816 = vst.msk [vmem:[%s3 + $0x120] sm:$0xf] %vm6743, %v6543
  %6817 = vst.msk [vmem:[%s3 + $0x124] sm:$0xf] %vm6743, %v6544
  %6818 = vst.msk [vmem:[%s3 + $0x128] sm:$0xf] %vm6743, %v6545
  %6819 = vst.msk [vmem:[%s3 + $0x12c] sm:$0xf] %vm6743, %v6546
  %6820 = vst.msk [vmem:[%s3 + $0x130] sm:$0xf] %vm6743, %v6547
  %6821 = vst.msk [vmem:[%s3 + $0x134] sm:$0xf] %vm6743, %v6548
  %6822 = vst.msk [vmem:[%s3 + $0x138] sm:$0xf] %vm6743, %v6549
  %6823 = vst.msk [vmem:[%s3 + $0x13c] sm:$0xf] %vm6743, %v6550
  %6824 = vst.msk [vmem:[%s3 + $0x140] sm:$0xf] %vm6743, %v6551
  %6825 = vst.msk [vmem:[%s3 + $0x144] sm:$0xf] %vm6743, %v6552
  %6826 = vst.msk [vmem:[%s3 + $0x148] sm:$0xf] %vm6743, %v6553
  %6827 = vst.msk [vmem:[%s3 + $0x14c] sm:$0xf] %vm6743, %v6554
  %6828 = vst.msk [vmem:[%s3 + $0x150] sm:$0xf] %vm6743, %v6555
  %6829 = vst.msk [vmem:[%s3 + $0x154] sm:$0xf] %vm6743, %v6556
  %6830 = vst.msk [vmem:[%s3 + $0x158] sm:$0xf] %vm6743, %v6557
  %6831 = vst.msk [vmem:[%s3 + $0x15c] sm:$0xf] %vm6743, %v6558
  %6832 = vst.msk [vmem:[%s3 + $0x160] sm:$0xf] %vm6743, %v6559
  %6833 = vst.msk [vmem:[%s3 + $0x164] sm:$0xf] %vm6743, %v6560
  %6834 = vst.msk [vmem:[%s3 + $0x168] sm:$0xf] %vm6743, %v6561
  %6835 = vst.msk [vmem:[%s3 + $0x16c] sm:$0xf] %vm6743, %v6562
  %6836 = vst.msk [vmem:[%s3 + $0x170] sm:$0xf] %vm6743, %v6563
  %6837 = vst.msk [vmem:[%s3 + $0x174] sm:$0xf] %vm6743, %v6564
  %6838 = vst.msk [vmem:[%s3 + $0x178] sm:$0xf] %vm6743, %v6565
  %6839 = vst.msk [vmem:[%s3 + $0x17c] sm:$0xf] %vm6743, %v6566
  %6840 = vst.msk [vmem:[%s3 + $0x180] sm:$0xf] %vm6743, %v6567
  %6841 = vst.msk [vmem:[%s3 + $0x184] sm:$0xf] %vm6743, %v6568
  %6842 = vst.msk [vmem:[%s3 + $0x188] sm:$0xf] %vm6743, %v6569
  %6843 = vst.msk [vmem:[%s3 + $0x18c] sm:$0xf] %vm6743, %v6570
  %6844 = vst.msk [vmem:[%s3 + $0x190] sm:$0xf] %vm6743, %v6571
  %6845 = vst.msk [vmem:[%s3 + $0x194] sm:$0xf] %vm6743, %v6572
  %6846 = vst.msk [vmem:[%s3 + $0x198] sm:$0xf] %vm6743, %v6573
  %6847 = vst.msk [vmem:[%s3 + $0x19c] sm:$0xf] %vm6743, %v6574
  %6848 = vst.msk [vmem:[%s3 + $0x1a0] sm:$0xf] %vm6743, %v6575
  %6849 = vst.msk [vmem:[%s3 + $0x1a4] sm:$0xf] %vm6743, %v6576
  %6850 = vst.msk [vmem:[%s3 + $0x1a8] sm:$0xf] %vm6743, %v6577
  %6851 = vst.msk [vmem:[%s3 + $0x1ac] sm:$0xf] %vm6743, %v6578
  %6852 = vst.msk [vmem:[%s3 + $0x1b0] sm:$0xf] %vm6743, %v6579
  %6853 = vst.msk [vmem:[%s3 + $0x1b4] sm:$0xf] %vm6743, %v6580
  %6854 = vst.msk [vmem:[%s3 + $0x1b8] sm:$0xf] %vm6743, %v6581
  %6855 = vst.msk [vmem:[%s3 + $0x1bc] sm:$0xf] %vm6743, %v6582
  %6856 = vst.msk [vmem:[%s3 + $0x1c0] sm:$0xf] %vm6743, %v6583
  %6857 = vst.msk [vmem:[%s3 + $0x1c4] sm:$0xf] %vm6743, %v6584
  %6858 = vst.msk [vmem:[%s3 + $0x1c8] sm:$0xf] %vm6743, %v6585
  %6859 = vst.msk [vmem:[%s3 + $0x1cc] sm:$0xf] %vm6743, %v6586
  %6860 = vst.msk [vmem:[%s3 + $0x1d0] sm:$0xf] %vm6743, %v6587
  %6861 = vst.msk [vmem:[%s3 + $0x1d4] sm:$0xf] %vm6743, %v6588
  %6862 = vst.msk [vmem:[%s3 + $0x1d8] sm:$0xf] %vm6743, %v6589
  %6863 = vst.msk [vmem:[%s3 + $0x1dc] sm:$0xf] %vm6743, %v6590
  %6864 = vst.msk [vmem:[%s3 + $0x1e0] sm:$0xf] %vm6743, %v6591
  %6865 = vst.msk [vmem:[%s3 + $0x1e4] sm:$0xf] %vm6743, %v6592
  %6866 = vst.msk [vmem:[%s3 + $0x1e8] sm:$0xf] %vm6743, %v6593
  %6867 = vst.msk [vmem:[%s3 + $0x1ec] sm:$0xf] %vm6743, %v6594
  %6868 = vst.msk [vmem:[%s3 + $0x1f0] sm:$0xf] %vm6743, %v6595
  %6869 = vst.msk [vmem:[%s3 + $0x1f4] sm:$0xf] %vm6743, %v6596
  %6870 = vst.msk [vmem:[%s3 + $0x1f8] sm:$0xf] %vm6743, %v6597
  %6871 = vst.msk [vmem:[%s3 + $0x1fc] sm:$0xf] %vm6743, %v6598
  %6872 = vst.msk [vmem:[%s3 + $0x200] sm:$0xf] %vm6743, %v6599
  %6873 = vst.msk [vmem:[%s3 + $0x204] sm:$0xf] %vm6743, %v6600
  %6874 = vst.msk [vmem:[%s3 + $0x208] sm:$0xf] %vm6743, %v6601
  %6875 = vst.msk [vmem:[%s3 + $0x20c] sm:$0xf] %vm6743, %v6602
  %6876 = vst.msk [vmem:[%s3 + $0x210] sm:$0xf] %vm6743, %v6603
  %6877 = vst.msk [vmem:[%s3 + $0x214] sm:$0xf] %vm6743, %v6604
  %6878 = vst.msk [vmem:[%s3 + $0x218] sm:$0xf] %vm6743, %v6605
  %6879 = vst.msk [vmem:[%s3 + $0x21c] sm:$0xf] %vm6743, %v6606
  // Predicated region
  $region14: #{net_forward.3} parent=0 // pred_check
    _
  $region15: #{net_forward.3} parent=0 // pred_check_branch
    %6881 = sbr.rel (0) target = $region17
  $region16: #{net_forward.3} parent=0 // pred_region
    _
  $region17: #{net_forward.3} parent=0 // pred_fallthru
    _
  // Predicated region
  $region18: #{net_forward.3} parent=0 // pred_check
    _
  $region19: #{net_forward.3} parent=0 // pred_check_branch
    %6883 = sbr.rel (0) target = $region21
  $region20: #{net_forward.3} parent=0 // pred_region
    _
  $region21: #{net_forward.3} parent=0 // pred_fallthru
    _

// kernel: net_forward.4
$region0: #{net_forward.4}
  #allocation0 [shape = 'u32[]', space=smem, size = 0x4, offset = 0x4, fixed_abs, tag = 'smem constant byte address 0x4 - core index']
  #allocation1 [shape = 'u32[144,128]{1,0:T(1,128)}', space=vmem, size = 0x12000, scoped, tag = 'internal scratch']
  %s0 = inlined_call_operand.vmem [shape: bf16[4,192,800], index: 0, kind: input, shape index: {}]
  %s1 = inlined_call_operand.vmem [shape: bf16[800,64], index: 1, kind: input, shape index: {}]
  %s2 = inlined_call_operand.vmem [shape: f32[1,64], index: 2, kind: input, shape index: {}]
  %s3 = inlined_call_operand.vmem [shape: bf16[192,64], index: 3, kind: output, shape index: {}]
  %s4 = sld [smem:[#allocation0]]
  $region22: #{net_forward.4} parent=0
    _
  %s6 = ssub.s32 1, %s4
  %s7 = scalar_select 0, %s6, %s4
  // Predicated region
  $region2: #{net_forward.4} parent=0 // pred_check
    _
  $region3: #{net_forward.4} parent=0 // pred_check_branch
    %9 = sbr.rel (0) target = $region5
  $region4: #{net_forward.4} parent=0 // pred_region
    _
  $region5: #{net_forward.4} parent=0 // pred_fallthru
    _
  // Predicated region
  $region6: #{net_forward.4} parent=0 // pred_check
    _
  $region7: #{net_forward.4} parent=0 // pred_check_branch
    %11 = sbr.rel (0) target = $region9
  $region8: #{net_forward.4} parent=0 // pred_region
    _
  $region9: #{net_forward.4} parent=0 // pred_fallthru
    _
  // Predicated region
  $region10: #{net_forward.4} parent=0 // pred_check
    _
  $region11: #{net_forward.4} parent=0 // pred_check_branch
    %13 = sbr.rel (0) target = $region13
  $region12: #{net_forward.4} parent=0 // pred_region
    _
  $region13: #{net_forward.4} parent=0 // pred_fallthru
    _
  %v15 = vld [vmem:[%s0] sm:$0xff]
  %v16 = vld [vmem:[%s0 + $0x8] sm:$0xff]
  %v17 = vld [vmem:[%s0 + $0x10] sm:$0xff]
  %v18 = vld [vmem:[%s0 + $0x18] sm:$0xf]
  %v19 = vld [vmem:[%s0 + $0x1c] sm:$0xff]
  %v20 = vld [vmem:[%s0 + $0x24] sm:$0xff]
  %v21 = vld [vmem:[%s0 + $0x2c] sm:$0xff]
  %v22 = vld [vmem:[%s0 + $0x34] sm:$0xf]
  %v23 = vld [vmem:[%s0 + $0x38] sm:$0xff]
  %v24 = vld [vmem:[%s0 + $0x40] sm:$0xff]
  %v25 = vld [vmem:[%s0 + $0x48] sm:$0xff]
  %v26 = vld [vmem:[%s0 + $0x50] sm:$0xf]
  %v27 = vld [vmem:[%s0 + $0x54] sm:$0xff]
  %v28 = vld [vmem:[%s0 + $0x5c] sm:$0xff]
  %v29 = vld [vmem:[%s0 + $0x64] sm:$0xff]
  %v30 = vld [vmem:[%s0 + $0x6c] sm:$0xf]
  %v31 = vld [vmem:[%s0 + $0x70] sm:$0xff]
  %v32 = vld [vmem:[%s0 + $0x78] sm:$0xff]
  %v33 = vld [vmem:[%s0 + $0x80] sm:$0xff]
  %v34 = vld [vmem:[%s0 + $0x88] sm:$0xf]
  %v35 = vld [vmem:[%s0 + $0x8c] sm:$0xff]
  %v36 = vld [vmem:[%s0 + $0x94] sm:$0xff]
  %v37 = vld [vmem:[%s0 + $0x9c] sm:$0xff]
  %v38 = vld [vmem:[%s0 + $0xa4] sm:$0xf]
  %v39 = vld [vmem:[%s0 + $0xa8] sm:$0xff]
  %v40 = vld [vmem:[%s0 + $0xb0] sm:$0xff]
  %v41 = vld [vmem:[%s0 + $0xb8] sm:$0xff]
  %v42 = vld [vmem:[%s0 + $0xc0] sm:$0xf]
  %v43 = vld [vmem:[%s0 + $0xc4] sm:$0xff]
  %v44 = vld [vmem:[%s0 + $0xcc] sm:$0xff]
  %v45 = vld [vmem:[%s0 + $0xd4] sm:$0xff]
  %v46 = vld [vmem:[%s0 + $0xdc] sm:$0xf]
  %v47 = vld [vmem:[%s0 + $0xe0] sm:$0xff]
  %v48 = vld [vmem:[%s0 + $0xe8] sm:$0xff]
  %v49 = vld [vmem:[%s0 + $0xf0] sm:$0xff]
  %v50 = vld [vmem:[%s0 + $0xf8] sm:$0xf]
  %v51 = vld [vmem:[%s0 + $0xfc] sm:$0xff]
  %v52 = vld [vmem:[%s0 + $0x104] sm:$0xff]
  %v53 = vld [vmem:[%s0 + $0x10c] sm:$0xff]
  %v54 = vld [vmem:[%s0 + $0x114] sm:$0xf]
  %v55 = vld [vmem:[%s0 + $0x118] sm:$0xff]
  %v56 = vld [vmem:[%s0 + $0x120] sm:$0xff]
  %v57 = vld [vmem:[%s0 + $0x128] sm:$0xff]
  %v58 = vld [vmem:[%s0 + $0x130] sm:$0xf]
  %v59 = vld [vmem:[%s0 + $0x134] sm:$0xff]
  %v60 = vld [vmem:[%s0 + $0x13c] sm:$0xff]
  %v61 = vld [vmem:[%s0 + $0x144] sm:$0xff]
  %v62 = vld [vmem:[%s0 + $0x14c] sm:$0xf]
  %v63 = vld [vmem:[%s0 + $0x150] sm:$0xff]
  %v64 = vld [vmem:[%s0 + $0x158] sm:$0xff]
  %v65 = vld [vmem:[%s0 + $0x160] sm:$0xff]
  %v66 = vld [vmem:[%s0 + $0x168] sm:$0xf]
  %v67 = vld [vmem:[%s0 + $0x16c] sm:$0xff]
  %v68 = vld [vmem:[%s0 + $0x174] sm:$0xff]
  %v69 = vld [vmem:[%s0 + $0x17c] sm:$0xff]
  %v70 = vld [vmem:[%s0 + $0x184] sm:$0xf]
  %v71 = vld [vmem:[%s0 + $0x188] sm:$0xff]
  %v72 = vld [vmem:[%s0 + $0x190] sm:$0xff]
  %v73 = vld [vmem:[%s0 + $0x198] sm:$0xff]
  %v74 = vld [vmem:[%s0 + $0x1a0] sm:$0xf]
  %v75 = vld [vmem:[%s0 + $0x1a4] sm:$0xff]
  %v76 = vld [vmem:[%s0 + $0x1ac] sm:$0xff]
  %v77 = vld [vmem:[%s0 + $0x1b4] sm:$0xff]
  %v78 = vld [vmem:[%s0 + $0x1bc] sm:$0xf]
  %v79 = vld [vmem:[%s0 + $0x1c0] sm:$0xff]
  %v80 = vld [vmem:[%s0 + $0x1c8] sm:$0xff]
  %v81 = vld [vmem:[%s0 + $0x1d0] sm:$0xff]
  %v82 = vld [vmem:[%s0 + $0x1d8] sm:$0xf]
  %v83 = vld [vmem:[%s0 + $0x1dc] sm:$0xff]
  %v84 = vld [vmem:[%s0 + $0x1e4] sm:$0xff]
  %v85 = vld [vmem:[%s0 + $0x1ec] sm:$0xff]
  %v86 = vld [vmem:[%s0 + $0x1f4] sm:$0xf]
  %v87 = vld [vmem:[%s0 + $0x1f8] sm:$0xff]
  %v88 = vld [vmem:[%s0 + $0x200] sm:$0xff]
  %v89 = vld [vmem:[%s0 + $0x208] sm:$0xff]
  %v90 = vld [vmem:[%s0 + $0x210] sm:$0xf]
  %v91 = vld [vmem:[%s0 + $0x214] sm:$0xff]
  %v92 = vld [vmem:[%s0 + $0x21c] sm:$0xff]
  %v93 = vld [vmem:[%s0 + $0x224] sm:$0xff]
  %v94 = vld [vmem:[%s0 + $0x22c] sm:$0xf]
  %v95 = vld [vmem:[%s0 + $0x230] sm:$0xff]
  %v96 = vld [vmem:[%s0 + $0x238] sm:$0xff]
  %v97 = vld [vmem:[%s0 + $0x240] sm:$0xff]
  %v98 = vld [vmem:[%s0 + $0x248] sm:$0xf]
  %v99 = vld [vmem:[%s0 + $0x24c] sm:$0xff]
  %v100 = vld [vmem:[%s0 + $0x254] sm:$0xff]
  %v101 = vld [vmem:[%s0 + $0x25c] sm:$0xff]
  %v102 = vld [vmem:[%s0 + $0x264] sm:$0xf]
  %v103 = vld [vmem:[%s0 + $0x268] sm:$0xff]
  %v104 = vld [vmem:[%s0 + $0x270] sm:$0xff]
  %v105 = vld [vmem:[%s0 + $0x278] sm:$0xff]
  %v106 = vld [vmem:[%s0 + $0x280] sm:$0xf]
  %v107 = vld [vmem:[%s0 + $0x284] sm:$0xff]
  %v108 = vld [vmem:[%s0 + $0x28c] sm:$0xff]
  %v109 = vld [vmem:[%s0 + $0x294] sm:$0xff]
  %v110 = vld [vmem:[%s0 + $0x29c] sm:$0xf]
  %v111 = vld [vmem:[%s0 + $0x2a0] sm:$0xff]
  %v112 = vld [vmem:[%s0 + $0x2a8] sm:$0xff]
  %v113 = vld [vmem:[%s0 + $0x2b0] sm:$0xff]
  %v114 = vld [vmem:[%s0 + $0x2b8] sm:$0xf]
  %v115 = vld [vmem:[%s0 + $0x2bc] sm:$0xff]
  %v116 = vld [vmem:[%s0 + $0x2c4] sm:$0xff]
  %v117 = vld [vmem:[%s0 + $0x2cc] sm:$0xff]
  %v118 = vld [vmem:[%s0 + $0x2d4] sm:$0xf]
  %v119 = vld [vmem:[%s0 + $0x2d8] sm:$0xff]
  %v120 = vld [vmem:[%s0 + $0x2e0] sm:$0xff]
  %v121 = vld [vmem:[%s0 + $0x2e8] sm:$0xff]
  %v122 = vld [vmem:[%s0 + $0x2f0] sm:$0xf]
  %v123 = vld [vmem:[%s0 + $0x2f4] sm:$0xff]
  %v124 = vld [vmem:[%s0 + $0x2fc] sm:$0xff]
  %v125 = vld [vmem:[%s0 + $0x304] sm:$0xff]
  %v126 = vld [vmem:[%s0 + $0x30c] sm:$0xf]
  %v127 = vld [vmem:[%s0 + $0x310] sm:$0xff]
  %v128 = vld [vmem:[%s0 + $0x318] sm:$0xff]
  %v129 = vld [vmem:[%s0 + $0x320] sm:$0xff]
  %v130 = vld [vmem:[%s0 + $0x328] sm:$0xf]
  %v131 = vld [vmem:[%s0 + $0x32c] sm:$0xff]
  %v132 = vld [vmem:[%s0 + $0x334] sm:$0xff]
  %v133 = vld [vmem:[%s0 + $0x33c] sm:$0xff]
  %v134 = vld [vmem:[%s0 + $0x344] sm:$0xf]
  %v135 = vld [vmem:[%s0 + $0x348] sm:$0xff]
  %v136 = vld [vmem:[%s0 + $0x350] sm:$0xff]
  %v137 = vld [vmem:[%s0 + $0x358] sm:$0xff]
  %v138 = vld [vmem:[%s0 + $0x360] sm:$0xf]
  %v139 = vld [vmem:[%s0 + $0x364] sm:$0xff]
  %v140 = vld [vmem:[%s0 + $0x36c] sm:$0xff]
  %v141 = vld [vmem:[%s0 + $0x374] sm:$0xff]
  %v142 = vld [vmem:[%s0 + $0x37c] sm:$0xf]
  %v143 = vld [vmem:[%s0 + $0x380] sm:$0xff]
  %v144 = vld [vmem:[%s0 + $0x388] sm:$0xff]
  %v145 = vld [vmem:[%s0 + $0x390] sm:$0xff]
  %v146 = vld [vmem:[%s0 + $0x398] sm:$0xf]
  %v147 = vld [vmem:[%s0 + $0x39c] sm:$0xff]
  %v148 = vld [vmem:[%s0 + $0x3a4] sm:$0xff]
  %v149 = vld [vmem:[%s0 + $0x3ac] sm:$0xff]
  %v150 = vld [vmem:[%s0 + $0x3b4] sm:$0xf]
  %v151 = vld [vmem:[%s0 + $0x3b8] sm:$0xff]
  %v152 = vld [vmem:[%s0 + $0x3c0] sm:$0xff]
  %v153 = vld [vmem:[%s0 + $0x3c8] sm:$0xff]
  %v154 = vld [vmem:[%s0 + $0x3d0] sm:$0xf]
  %v155 = vld [vmem:[%s0 + $0x3d4] sm:$0xff]
  %v156 = vld [vmem:[%s0 + $0x3dc] sm:$0xff]
  %v157 = vld [vmem:[%s0 + $0x3e4] sm:$0xff]
  %v158 = vld [vmem:[%s0 + $0x3ec] sm:$0xf]
  %v159 = vld [vmem:[%s0 + $0x3f0] sm:$0xff]
  %v160 = vld [vmem:[%s0 + $0x3f8] sm:$0xff]
  %v161 = vld [vmem:[%s0 + $0x400] sm:$0xff]
  %v162 = vld [vmem:[%s0 + $0x408] sm:$0xf]
  %v163 = vld [vmem:[%s0 + $0x40c] sm:$0xff]
  %v164 = vld [vmem:[%s0 + $0x414] sm:$0xff]
  %v165 = vld [vmem:[%s0 + $0x41c] sm:$0xff]
  %v166 = vld [vmem:[%s0 + $0x424] sm:$0xf]
  %v167 = vld [vmem:[%s0 + $0x428] sm:$0xff]
  %v168 = vld [vmem:[%s0 + $0x430] sm:$0xff]
  %v169 = vld [vmem:[%s0 + $0x438] sm:$0xff]
  %v170 = vld [vmem:[%s0 + $0x440] sm:$0xf]
  %v171 = vld [vmem:[%s0 + $0x444] sm:$0xff]
  %v172 = vld [vmem:[%s0 + $0x44c] sm:$0xff]
  %v173 = vld [vmem:[%s0 + $0x454] sm:$0xff]
  %v174 = vld [vmem:[%s0 + $0x45c] sm:$0xf]
  %v175 = vld [vmem:[%s0 + $0x460] sm:$0xff]
  %v176 = vld [vmem:[%s0 + $0x468] sm:$0xff]
  %v177 = vld [vmem:[%s0 + $0x470] sm:$0xff]
  %v178 = vld [vmem:[%s0 + $0x478] sm:$0xf]
  %v179 = vld [vmem:[%s0 + $0x47c] sm:$0xff]
  %v180 = vld [vmem:[%s0 + $0x484] sm:$0xff]
  %v181 = vld [vmem:[%s0 + $0x48c] sm:$0xff]
  %v182 = vld [vmem:[%s0 + $0x494] sm:$0xf]
  %v183 = vld [vmem:[%s0 + $0x498] sm:$0xff]
  %v184 = vld [vmem:[%s0 + $0x4a0] sm:$0xff]
  %v185 = vld [vmem:[%s0 + $0x4a8] sm:$0xff]
  %v186 = vld [vmem:[%s0 + $0x4b0] sm:$0xf]
  %v187 = vld [vmem:[%s0 + $0x4b4] sm:$0xff]
  %v188 = vld [vmem:[%s0 + $0x4bc] sm:$0xff]
  %v189 = vld [vmem:[%s0 + $0x4c4] sm:$0xff]
  %v190 = vld [vmem:[%s0 + $0x4cc] sm:$0xf]
  %v191 = vld [vmem:[%s0 + $0x4d0] sm:$0xff]
  %v192 = vld [vmem:[%s0 + $0x4d8] sm:$0xff]
  %v193 = vld [vmem:[%s0 + $0x4e0] sm:$0xff]
  %v194 = vld [vmem:[%s0 + $0x4e8] sm:$0xf]
  %v195 = vld [vmem:[%s0 + $0x4ec] sm:$0xff]
  %v196 = vld [vmem:[%s0 + $0x4f4] sm:$0xff]
  %v197 = vld [vmem:[%s0 + $0x4fc] sm:$0xff]
  %v198 = vld [vmem:[%s0 + $0x504] sm:$0xf]
  %v199 = vld [vmem:[%s0 + $0x508] sm:$0xff]
  %v200 = vld [vmem:[%s0 + $0x510] sm:$0xff]
  %v201 = vld [vmem:[%s0 + $0x518] sm:$0xff]
  %v202 = vld [vmem:[%s0 + $0x520] sm:$0xf]
  %v203 = vld [vmem:[%s0 + $0x524] sm:$0xff]
  %v204 = vld [vmem:[%s0 + $0x52c] sm:$0xff]
  %v205 = vld [vmem:[%s0 + $0x534] sm:$0xff]
  %v206 = vld [vmem:[%s0 + $0x53c] sm:$0xf]
  %v207 = vld [vmem:[%s0 + $0x540] sm:$0xff]
  %v208 = vld [vmem:[%s0 + $0x548] sm:$0xff]
  %v209 = vld [vmem:[%s0 + $0x550] sm:$0xff]
  %v210 = vld [vmem:[%s0 + $0x558] sm:$0xf]
  %v211 = vld [vmem:[%s0 + $0x55c] sm:$0xff]
  %v212 = vld [vmem:[%s0 + $0x564] sm:$0xff]
  %v213 = vld [vmem:[%s0 + $0x56c] sm:$0xff]
  %v214 = vld [vmem:[%s0 + $0x574] sm:$0xf]
  %v215 = vld [vmem:[%s0 + $0x578] sm:$0xff]
  %v216 = vld [vmem:[%s0 + $0x580] sm:$0xff]
  %v217 = vld [vmem:[%s0 + $0x588] sm:$0xff]
  %v218 = vld [vmem:[%s0 + $0x590] sm:$0xf]
  %v219 = vld [vmem:[%s0 + $0x594] sm:$0xff]
  %v220 = vld [vmem:[%s0 + $0x59c] sm:$0xff]
  %v221 = vld [vmem:[%s0 + $0x5a4] sm:$0xff]
  %v222 = vld [vmem:[%s0 + $0x5ac] sm:$0xf]
  %v223 = vld [vmem:[%s0 + $0x5b0] sm:$0xff]
  %v224 = vld [vmem:[%s0 + $0x5b8] sm:$0xff]
  %v225 = vld [vmem:[%s0 + $0x5c0] sm:$0xff]
  %v226 = vld [vmem:[%s0 + $0x5c8] sm:$0xf]
  %v227 = vld [vmem:[%s0 + $0x5cc] sm:$0xff]
  %v228 = vld [vmem:[%s0 + $0x5d4] sm:$0xff]
  %v229 = vld [vmem:[%s0 + $0x5dc] sm:$0xff]
  %v230 = vld [vmem:[%s0 + $0x5e4] sm:$0xf]
  %v231 = vld [vmem:[%s0 + $0x5e8] sm:$0xff]
  %v232 = vld [vmem:[%s0 + $0x5f0] sm:$0xff]
  %v233 = vld [vmem:[%s0 + $0x5f8] sm:$0xff]
  %v234 = vld [vmem:[%s0 + $0x600] sm:$0xf]
  %v235 = vld [vmem:[%s0 + $0x604] sm:$0xff]
  %v236 = vld [vmem:[%s0 + $0x60c] sm:$0xff]
  %v237 = vld [vmem:[%s0 + $0x614] sm:$0xff]
  %v238 = vld [vmem:[%s0 + $0x61c] sm:$0xf]
  %v239 = vld [vmem:[%s0 + $0x620] sm:$0xff]
  %v240 = vld [vmem:[%s0 + $0x628] sm:$0xff]
  %v241 = vld [vmem:[%s0 + $0x630] sm:$0xff]
  %v242 = vld [vmem:[%s0 + $0x638] sm:$0xf]
  %v243 = vld [vmem:[%s0 + $0x63c] sm:$0xff]
  %v244 = vld [vmem:[%s0 + $0x644] sm:$0xff]
  %v245 = vld [vmem:[%s0 + $0x64c] sm:$0xff]
  %v246 = vld [vmem:[%s0 + $0x654] sm:$0xf]
  %v247 = vld [vmem:[%s0 + $0x658] sm:$0xff]
  %v248 = vld [vmem:[%s0 + $0x660] sm:$0xff]
  %v249 = vld [vmem:[%s0 + $0x668] sm:$0xff]
  %v250 = vld [vmem:[%s0 + $0x670] sm:$0xf]
  %v251 = vld [vmem:[%s0 + $0x674] sm:$0xff]
  %v252 = vld [vmem:[%s0 + $0x67c] sm:$0xff]
  %v253 = vld [vmem:[%s0 + $0x684] sm:$0xff]
  %v254 = vld [vmem:[%s0 + $0x68c] sm:$0xf]
  %v255 = vld [vmem:[%s0 + $0x690] sm:$0xff]
  %v256 = vld [vmem:[%s0 + $0x698] sm:$0xff]
  %v257 = vld [vmem:[%s0 + $0x6a0] sm:$0xff]
  %v258 = vld [vmem:[%s0 + $0x6a8] sm:$0xf]
  %v259 = vld [vmem:[%s0 + $0x6ac] sm:$0xff]
  %v260 = vld [vmem:[%s0 + $0x6b4] sm:$0xff]
  %v261 = vld [vmem:[%s0 + $0x6bc] sm:$0xff]
  %v262 = vld [vmem:[%s0 + $0x6c4] sm:$0xf]
  %v263 = vld [vmem:[%s0 + $0x6c8] sm:$0xff]
  %v264 = vld [vmem:[%s0 + $0x6d0] sm:$0xff]
  %v265 = vld [vmem:[%s0 + $0x6d8] sm:$0xff]
  %v266 = vld [vmem:[%s0 + $0x6e0] sm:$0xf]
  %v267 = vld [vmem:[%s0 + $0x6e4] sm:$0xff]
  %v268 = vld [vmem:[%s0 + $0x6ec] sm:$0xff]
  %v269 = vld [vmem:[%s0 + $0x6f4] sm:$0xff]
  %v270 = vld [vmem:[%s0 + $0x6fc] sm:$0xf]
  %v271 = vld [vmem:[%s0 + $0x700] sm:$0xff]
  %v272 = vld [vmem:[%s0 + $0x708] sm:$0xff]
  %v273 = vld [vmem:[%s0 + $0x710] sm:$0xff]
  %v274 = vld [vmem:[%s0 + $0x718] sm:$0xf]
  %v275 = vld [vmem:[%s0 + $0x71c] sm:$0xff]
  %v276 = vld [vmem:[%s0 + $0x724] sm:$0xff]
  %v277 = vld [vmem:[%s0 + $0x72c] sm:$0xff]
  %v278 = vld [vmem:[%s0 + $0x734] sm:$0xf]
  %v279 = vld [vmem:[%s0 + $0x738] sm:$0xff]
  %v280 = vld [vmem:[%s0 + $0x740] sm:$0xff]
  %v281 = vld [vmem:[%s0 + $0x748] sm:$0xff]
  %v282 = vld [vmem:[%s0 + $0x750] sm:$0xf]
  %v283 = vld [vmem:[%s0 + $0x754] sm:$0xff]
  %v284 = vld [vmem:[%s0 + $0x75c] sm:$0xff]
  %v285 = vld [vmem:[%s0 + $0x764] sm:$0xff]
  %v286 = vld [vmem:[%s0 + $0x76c] sm:$0xf]
  %v287 = vld [vmem:[%s0 + $0x770] sm:$0xff]
  %v288 = vld [vmem:[%s0 + $0x778] sm:$0xff]
  %v289 = vld [vmem:[%s0 + $0x780] sm:$0xff]
  %v290 = vld [vmem:[%s0 + $0x788] sm:$0xf]
  %v291 = vld [vmem:[%s0 + $0x78c] sm:$0xff]
  %v292 = vld [vmem:[%s0 + $0x794] sm:$0xff]
  %v293 = vld [vmem:[%s0 + $0x79c] sm:$0xff]
  %v294 = vld [vmem:[%s0 + $0x7a4] sm:$0xf]
  %v295 = vld [vmem:[%s0 + $0x7a8] sm:$0xff]
  %v296 = vld [vmem:[%s0 + $0x7b0] sm:$0xff]
  %v297 = vld [vmem:[%s0 + $0x7b8] sm:$0xff]
  %v298 = vld [vmem:[%s0 + $0x7c0] sm:$0xf]
  %v299 = vld [vmem:[%s0 + $0x7c4] sm:$0xff]
  %v300 = vld [vmem:[%s0 + $0x7cc] sm:$0xff]
  %v301 = vld [vmem:[%s0 + $0x7d4] sm:$0xff]
  %v302 = vld [vmem:[%s0 + $0x7dc] sm:$0xf]
  %v303 = vld [vmem:[%s0 + $0x7e0] sm:$0xff]
  %v304 = vld [vmem:[%s0 + $0x7e8] sm:$0xff]
  %v305 = vld [vmem:[%s0 + $0x7f0] sm:$0xff]
  %v306 = vld [vmem:[%s0 + $0x7f8] sm:$0xf]
  %v307 = vld [vmem:[%s0 + $0x7fc] sm:$0xff]
  %v308 = vld [vmem:[%s0 + $0x804] sm:$0xff]
  %v309 = vld [vmem:[%s0 + $0x80c] sm:$0xff]
  %v310 = vld [vmem:[%s0 + $0x814] sm:$0xf]
  %v311 = vld [vmem:[%s0 + $0x818] sm:$0xff]
  %v312 = vld [vmem:[%s0 + $0x820] sm:$0xff]
  %v313 = vld [vmem:[%s0 + $0x828] sm:$0xff]
  %v314 = vld [vmem:[%s0 + $0x830] sm:$0xf]
  %v315 = vld [vmem:[%s0 + $0x834] sm:$0xff]
  %v316 = vld [vmem:[%s0 + $0x83c] sm:$0xff]
  %v317 = vld [vmem:[%s0 + $0x844] sm:$0xff]
  %v318 = vld [vmem:[%s0 + $0x84c] sm:$0xf]
  %v319 = vld [vmem:[%s0 + $0x850] sm:$0xff]
  %v320 = vld [vmem:[%s0 + $0x858] sm:$0xff]
  %v321 = vld [vmem:[%s0 + $0x860] sm:$0xff]
  %v322 = vld [vmem:[%s0 + $0x868] sm:$0xf]
  %v323 = vld [vmem:[%s0 + $0x86c] sm:$0xff]
  %v324 = vld [vmem:[%s0 + $0x874] sm:$0xff]
  %v325 = vld [vmem:[%s0 + $0x87c] sm:$0xff]
  %v326 = vld [vmem:[%s0 + $0x884] sm:$0xf]
  %v327 = vld [vmem:[%s0 + $0x888] sm:$0xff]
  %v328 = vld [vmem:[%s0 + $0x890] sm:$0xff]
  %v329 = vld [vmem:[%s0 + $0x898] sm:$0xff]
  %v330 = vld [vmem:[%s0 + $0x8a0] sm:$0xf]
  %v331 = vld [vmem:[%s0 + $0x8a4] sm:$0xff]
  %v332 = vld [vmem:[%s0 + $0x8ac] sm:$0xff]
  %v333 = vld [vmem:[%s0 + $0x8b4] sm:$0xff]
  %v334 = vld [vmem:[%s0 + $0x8bc] sm:$0xf]
  %v335 = vld [vmem:[%s0 + $0x8c0] sm:$0xff]
  %v336 = vld [vmem:[%s0 + $0x8c8] sm:$0xff]
  %v337 = vld [vmem:[%s0 + $0x8d0] sm:$0xff]
  %v338 = vld [vmem:[%s0 + $0x8d8] sm:$0xf]
  %v339 = vld [vmem:[%s0 + $0x8dc] sm:$0xff]
  %v340 = vld [vmem:[%s0 + $0x8e4] sm:$0xff]
  %v341 = vld [vmem:[%s0 + $0x8ec] sm:$0xff]
  %v342 = vld [vmem:[%s0 + $0x8f4] sm:$0xf]
  %v343 = vld [vmem:[%s0 + $0x8f8] sm:$0xff]
  %v344 = vld [vmem:[%s0 + $0x900] sm:$0xff]
  %v345 = vld [vmem:[%s0 + $0x908] sm:$0xff]
  %v346 = vld [vmem:[%s0 + $0x910] sm:$0xf]
  %v347 = vld [vmem:[%s0 + $0x914] sm:$0xff]
  %v348 = vld [vmem:[%s0 + $0x91c] sm:$0xff]
  %v349 = vld [vmem:[%s0 + $0x924] sm:$0xff]
  %v350 = vld [vmem:[%s0 + $0x92c] sm:$0xf]
  %v351 = vld [vmem:[%s0 + $0x930] sm:$0xff]
  %v352 = vld [vmem:[%s0 + $0x938] sm:$0xff]
  %v353 = vld [vmem:[%s0 + $0x940] sm:$0xff]
  %v354 = vld [vmem:[%s0 + $0x948] sm:$0xf]
  %v355 = vld [vmem:[%s0 + $0x94c] sm:$0xff]
  %v356 = vld [vmem:[%s0 + $0x954] sm:$0xff]
  %v357 = vld [vmem:[%s0 + $0x95c] sm:$0xff]
  %v358 = vld [vmem:[%s0 + $0x964] sm:$0xf]
  %v359 = vld [vmem:[%s0 + $0x968] sm:$0xff]
  %v360 = vld [vmem:[%s0 + $0x970] sm:$0xff]
  %v361 = vld [vmem:[%s0 + $0x978] sm:$0xff]
  %v362 = vld [vmem:[%s0 + $0x980] sm:$0xf]
  %v363 = vld [vmem:[%s0 + $0x984] sm:$0xff]
  %v364 = vld [vmem:[%s0 + $0x98c] sm:$0xff]
  %v365 = vld [vmem:[%s0 + $0x994] sm:$0xff]
  %v366 = vld [vmem:[%s0 + $0x99c] sm:$0xf]
  %v367 = vld [vmem:[%s0 + $0x9a0] sm:$0xff]
  %v368 = vld [vmem:[%s0 + $0x9a8] sm:$0xff]
  %v369 = vld [vmem:[%s0 + $0x9b0] sm:$0xff]
  %v370 = vld [vmem:[%s0 + $0x9b8] sm:$0xf]
  %v371 = vld [vmem:[%s0 + $0x9bc] sm:$0xff]
  %v372 = vld [vmem:[%s0 + $0x9c4] sm:$0xff]
  %v373 = vld [vmem:[%s0 + $0x9cc] sm:$0xff]
  %v374 = vld [vmem:[%s0 + $0x9d4] sm:$0xf]
  %v375 = vld [vmem:[%s0 + $0x9d8] sm:$0xff]
  %v376 = vld [vmem:[%s0 + $0x9e0] sm:$0xff]
  %v377 = vld [vmem:[%s0 + $0x9e8] sm:$0xff]
  %v378 = vld [vmem:[%s0 + $0x9f0] sm:$0xf]
  %v379 = vld [vmem:[%s0 + $0x9f4] sm:$0xff]
  %v380 = vld [vmem:[%s0 + $0x9fc] sm:$0xff]
  %v381 = vld [vmem:[%s0 + $0xa04] sm:$0xff]
  %v382 = vld [vmem:[%s0 + $0xa0c] sm:$0xf]
  %v383 = vld [vmem:[%s0 + $0xa10] sm:$0xff]
  %v384 = vld [vmem:[%s0 + $0xa18] sm:$0xff]
  %v385 = vld [vmem:[%s0 + $0xa20] sm:$0xff]
  %v386 = vld [vmem:[%s0 + $0xa28] sm:$0xf]
  %v387 = vld [vmem:[%s0 + $0xa2c] sm:$0xff]
  %v388 = vld [vmem:[%s0 + $0xa34] sm:$0xff]
  %v389 = vld [vmem:[%s0 + $0xa3c] sm:$0xff]
  %v390 = vld [vmem:[%s0 + $0xa44] sm:$0xf]
  %v391 = vld [vmem:[%s0 + $0xa48] sm:$0xff]
  %v392 = vld [vmem:[%s0 + $0xa50] sm:$0xff]
  %v393 = vld [vmem:[%s0 + $0xa58] sm:$0xff]
  %v394 = vld [vmem:[%s0 + $0xa60] sm:$0xf]
  %v395 = vld [vmem:[%s0 + $0xa64] sm:$0xff]
  %v396 = vld [vmem:[%s0 + $0xa6c] sm:$0xff]
  %v397 = vld [vmem:[%s0 + $0xa74] sm:$0xff]
  %v398 = vld [vmem:[%s0 + $0xa7c] sm:$0xf]
  %v399 = vld [vmem:[%s1] sm:$0xf]
  %v400 = vld [vmem:[%s1 + $0x4] sm:$0xf]
  %v401 = vld [vmem:[%s1 + $0x8] sm:$0xf]
  %v402 = vld [vmem:[%s1 + $0xc] sm:$0xf]
  %v403 = vld [vmem:[%s1 + $0x10] sm:$0xf]
  %v404 = vld [vmem:[%s1 + $0x14] sm:$0xf]
  %v405 = vld [vmem:[%s1 + $0x18] sm:$0xf]
  %v406 = vld [vmem:[%s1 + $0x1c] sm:$0xf]
  %v407 = vld [vmem:[%s1 + $0x20] sm:$0xf]
  %v408 = vld [vmem:[%s1 + $0x24] sm:$0xf]
  %v409 = vld [vmem:[%s1 + $0x28] sm:$0xf]
  %v410 = vld [vmem:[%s1 + $0x2c] sm:$0xf]
  %v411 = vld [vmem:[%s1 + $0x30] sm:$0xf]
  %v412 = vld [vmem:[%s1 + $0x34] sm:$0xf]
  %v413 = vld [vmem:[%s1 + $0x38] sm:$0xf]
  %v414 = vld [vmem:[%s1 + $0x3c] sm:$0xf]
  %v415 = vld [vmem:[%s1 + $0x40] sm:$0xf]
  %v416 = vld [vmem:[%s1 + $0x44] sm:$0xf]
  %v417 = vld [vmem:[%s1 + $0x48] sm:$0xf]
  %v418 = vld [vmem:[%s1 + $0x4c] sm:$0xf]
  %v419 = vld [vmem:[%s1 + $0x50] sm:$0xf]
  %v420 = vld [vmem:[%s1 + $0x54] sm:$0xf]
  %v421 = vld [vmem:[%s1 + $0x58] sm:$0xf]
  %v422 = vld [vmem:[%s1 + $0x5c] sm:$0xf]
  %v423 = vld [vmem:[%s1 + $0x60] sm:$0xf]
  %v424 = vld [vmem:[%s1 + $0x64] sm:$0xf]
  %v425 = vld [vmem:[%s1 + $0x68] sm:$0xf]
  %v426 = vld [vmem:[%s1 + $0x6c] sm:$0xf]
  %v427 = vld [vmem:[%s1 + $0x70] sm:$0xf]
  %v428 = vld [vmem:[%s1 + $0x74] sm:$0xf]
  %v429 = vld [vmem:[%s1 + $0x78] sm:$0xf]
  %v430 = vld [vmem:[%s1 + $0x7c] sm:$0xf]
  %v431 = vld [vmem:[%s1 + $0x80] sm:$0xf]
  %v432 = vld [vmem:[%s1 + $0x84] sm:$0xf]
  %v433 = vld [vmem:[%s1 + $0x88] sm:$0xf]
  %v434 = vld [vmem:[%s1 + $0x8c] sm:$0xf]
  %v435 = vld [vmem:[%s1 + $0x90] sm:$0xf]
  %v436 = vld [vmem:[%s1 + $0x94] sm:$0xf]
  %v437 = vld [vmem:[%s1 + $0x98] sm:$0xf]
  %v438 = vld [vmem:[%s1 + $0x9c] sm:$0xf]
  %v439 = vld [vmem:[%s1 + $0xa0] sm:$0xf]
  %v440 = vld [vmem:[%s1 + $0xa4] sm:$0xf]
  %v441 = vld [vmem:[%s1 + $0xa8] sm:$0xf]
  %v442 = vld [vmem:[%s1 + $0xac] sm:$0xf]
  %v443 = vld [vmem:[%s1 + $0xb0] sm:$0xf]
  %v444 = vld [vmem:[%s1 + $0xb4] sm:$0xf]
  %v445 = vld [vmem:[%s1 + $0xb8] sm:$0xf]
  %v446 = vld [vmem:[%s1 + $0xbc] sm:$0xf]
  %v447 = vld [vmem:[%s1 + $0xc0] sm:$0xf]
  %v448 = vld [vmem:[%s1 + $0xc4] sm:$0xf]
  %v449 = vld [vmem:[%s1 + $0xc8] sm:$0xf]
  %v450 = vld [vmem:[%s1 + $0xcc] sm:$0xf]
  %v451 = vld [vmem:[%s1 + $0xd0] sm:$0xf]
  %v452 = vld [vmem:[%s1 + $0xd4] sm:$0xf]
  %v453 = vld [vmem:[%s1 + $0xd8] sm:$0xf]
  %v454 = vld [vmem:[%s1 + $0xdc] sm:$0xf]
  %v455 = vld [vmem:[%s1 + $0xe0] sm:$0xf]
  %v456 = vld [vmem:[%s1 + $0xe4] sm:$0xf]
  %v457 = vld [vmem:[%s1 + $0xe8] sm:$0xf]
  %v458 = vld [vmem:[%s1 + $0xec] sm:$0xf]
  %v459 = vld [vmem:[%s1 + $0xf0] sm:$0xf]
  %v460 = vld [vmem:[%s1 + $0xf4] sm:$0xf]
  %v461 = vld [vmem:[%s1 + $0xf8] sm:$0xf]
  %v462 = vld [vmem:[%s1 + $0xfc] sm:$0xf]
  %v463 = vld [vmem:[%s1 + $0x100] sm:$0xf]
  %v464 = vld [vmem:[%s1 + $0x104] sm:$0xf]
  %v465 = vld [vmem:[%s1 + $0x108] sm:$0xf]
  %v466 = vld [vmem:[%s1 + $0x10c] sm:$0xf]
  %v467 = vld [vmem:[%s1 + $0x110] sm:$0xf]
  %v468 = vld [vmem:[%s1 + $0x114] sm:$0xf]
  %v469 = vld [vmem:[%s1 + $0x118] sm:$0xf]
  %v470 = vld [vmem:[%s1 + $0x11c] sm:$0xf]
  %v471 = vld [vmem:[%s1 + $0x120] sm:$0xf]
  %v472 = vld [vmem:[%s1 + $0x124] sm:$0xf]
  %v473 = vld [vmem:[%s1 + $0x128] sm:$0xf]
  %v474 = vld [vmem:[%s1 + $0x12c] sm:$0xf]
  %v475 = vld [vmem:[%s1 + $0x130] sm:$0xf]
  %v476 = vld [vmem:[%s1 + $0x134] sm:$0xf]
  %v477 = vld [vmem:[%s1 + $0x138] sm:$0xf]
  %v478 = vld [vmem:[%s1 + $0x13c] sm:$0xf]
  %v479 = vld [vmem:[%s1 + $0x140] sm:$0xf]
  %v480 = vld [vmem:[%s1 + $0x144] sm:$0xf]
  %v481 = vld [vmem:[%s1 + $0x148] sm:$0xf]
  %v482 = vld [vmem:[%s1 + $0x14c] sm:$0xf]
  %v483 = vld [vmem:[%s1 + $0x150] sm:$0xf]
  %v484 = vld [vmem:[%s1 + $0x154] sm:$0xf]
  %v485 = vld [vmem:[%s1 + $0x158] sm:$0xf]
  %v486 = vld [vmem:[%s1 + $0x15c] sm:$0xf]
  %v487 = vld [vmem:[%s1 + $0x160] sm:$0xf]
  %v488 = vld [vmem:[%s1 + $0x164] sm:$0xf]
  %v489 = vld [vmem:[%s1 + $0x168] sm:$0xf]
  %v490 = vld [vmem:[%s1 + $0x16c] sm:$0xf]
  %v491 = vld [vmem:[%s1 + $0x170] sm:$0xf]
  %v492 = vld [vmem:[%s1 + $0x174] sm:$0xf]
  %v493 = vld [vmem:[%s1 + $0x178] sm:$0xf]
  %v494 = vld [vmem:[%s1 + $0x17c] sm:$0xf]
  %v495 = vld [vmem:[%s1 + $0x180] sm:$0xf]
  %v496 = vld [vmem:[%s1 + $0x184] sm:$0xf]
  %v497 = vld [vmem:[%s1 + $0x188] sm:$0xf]
  %v498 = vld [vmem:[%s1 + $0x18c] sm:$0xf]
  %v883 = vunpack.c.l.b16 %v15
  %v884 = vunpack.c.h.b16 %v15
  %v885 = vunpack.c.l.b16 %v16
  %v886 = vunpack.c.h.b16 %v16
  %v887 = vunpack.c.l.b16 %v17
  %v888 = vunpack.c.h.b16 %v17
  %v889 = vunpack.c.l.b16 %v18
  %v890 = vunpack.c.l.b16 %v19
  %v891 = vunpack.c.h.b16 %v19
  %v892 = vunpack.c.l.b16 %v20
  %v893 = vunpack.c.h.b16 %v20
  %v894 = vunpack.c.l.b16 %v21
  %v895 = vunpack.c.h.b16 %v21
  %v896 = vunpack.c.l.b16 %v22
  %v897 = vunpack.c.l.b16 %v23
  %v898 = vunpack.c.h.b16 %v23
  %v899 = vunpack.c.l.b16 %v24
  %v900 = vunpack.c.h.b16 %v24
  %v901 = vunpack.c.l.b16 %v25
  %v902 = vunpack.c.h.b16 %v25
  %v903 = vunpack.c.l.b16 %v26
  %v904 = vunpack.c.l.b16 %v27
  %v905 = vunpack.c.h.b16 %v27
  %v906 = vunpack.c.l.b16 %v28
  %v907 = vunpack.c.h.b16 %v28
  %v908 = vunpack.c.l.b16 %v29
  %v909 = vunpack.c.h.b16 %v29
  %v910 = vunpack.c.l.b16 %v30
  %v911 = vunpack.c.l.b16 %v31
  %v912 = vunpack.c.h.b16 %v31
  %v913 = vunpack.c.l.b16 %v32
  %v914 = vunpack.c.h.b16 %v32
  %v915 = vunpack.c.l.b16 %v33
  %v916 = vunpack.c.h.b16 %v33
  %v917 = vunpack.c.l.b16 %v34
  %v918 = vunpack.c.l.b16 %v35
  %v919 = vunpack.c.h.b16 %v35
  %v920 = vunpack.c.l.b16 %v36
  %v921 = vunpack.c.h.b16 %v36
  %v922 = vunpack.c.l.b16 %v37
  %v923 = vunpack.c.h.b16 %v37
  %v924 = vunpack.c.l.b16 %v38
  %v925 = vunpack.c.l.b16 %v39
  %v926 = vunpack.c.h.b16 %v39
  %v927 = vunpack.c.l.b16 %v40
  %v928 = vunpack.c.h.b16 %v40
  %v929 = vunpack.c.l.b16 %v41
  %v930 = vunpack.c.h.b16 %v41
  %v931 = vunpack.c.l.b16 %v42
  %v932 = vunpack.c.l.b16 %v43
  %v933 = vunpack.c.h.b16 %v43
  %v934 = vunpack.c.l.b16 %v44
  %v935 = vunpack.c.h.b16 %v44
  %v936 = vunpack.c.l.b16 %v45
  %v937 = vunpack.c.h.b16 %v45
  %v938 = vunpack.c.l.b16 %v46
  %v939 = vunpack.c.l.b16 %v47
  %v940 = vunpack.c.h.b16 %v47
  %v941 = vunpack.c.l.b16 %v48
  %v942 = vunpack.c.h.b16 %v48
  %v943 = vunpack.c.l.b16 %v49
  %v944 = vunpack.c.h.b16 %v49
  %v945 = vunpack.c.l.b16 %v50
  %v946 = vunpack.c.l.b16 %v51
  %v947 = vunpack.c.h.b16 %v51
  %v948 = vunpack.c.l.b16 %v52
  %v949 = vunpack.c.h.b16 %v52
  %v950 = vunpack.c.l.b16 %v53
  %v951 = vunpack.c.h.b16 %v53
  %v952 = vunpack.c.l.b16 %v54
  %v953 = vunpack.c.l.b16 %v55
  %v954 = vunpack.c.h.b16 %v55
  %v955 = vunpack.c.l.b16 %v56
  %v956 = vunpack.c.h.b16 %v56
  %v957 = vunpack.c.l.b16 %v57
  %v958 = vunpack.c.h.b16 %v57
  %v959 = vunpack.c.l.b16 %v58
  %v960 = vunpack.c.l.b16 %v59
  %v961 = vunpack.c.h.b16 %v59
  %v962 = vunpack.c.l.b16 %v60
  %v963 = vunpack.c.h.b16 %v60
  %v964 = vunpack.c.l.b16 %v61
  %v965 = vunpack.c.h.b16 %v61
  %v966 = vunpack.c.l.b16 %v62
  %v967 = vunpack.c.l.b16 %v63
  %v968 = vunpack.c.h.b16 %v63
  %v969 = vunpack.c.l.b16 %v64
  %v970 = vunpack.c.h.b16 %v64
  %v971 = vunpack.c.l.b16 %v65
  %v972 = vunpack.c.h.b16 %v65
  %v973 = vunpack.c.l.b16 %v66
  %v974 = vunpack.c.l.b16 %v67
  %v975 = vunpack.c.h.b16 %v67
  %v976 = vunpack.c.l.b16 %v68
  %v977 = vunpack.c.h.b16 %v68
  %v978 = vunpack.c.l.b16 %v69
  %v979 = vunpack.c.h.b16 %v69
  %v980 = vunpack.c.l.b16 %v70
  %v981 = vunpack.c.l.b16 %v71
  %v982 = vunpack.c.h.b16 %v71
  %v983 = vunpack.c.l.b16 %v72
  %v984 = vunpack.c.h.b16 %v72
  %v985 = vunpack.c.l.b16 %v73
  %v986 = vunpack.c.h.b16 %v73
  %v987 = vunpack.c.l.b16 %v74
  %v988 = vunpack.c.l.b16 %v75
  %v989 = vunpack.c.h.b16 %v75
  %v990 = vunpack.c.l.b16 %v76
  %v991 = vunpack.c.h.b16 %v76
  %v992 = vunpack.c.l.b16 %v77
  %v993 = vunpack.c.h.b16 %v77
  %v994 = vunpack.c.l.b16 %v78
  %v995 = vunpack.c.l.b16 %v79
  %v996 = vunpack.c.h.b16 %v79
  %v997 = vunpack.c.l.b16 %v80
  %v998 = vunpack.c.h.b16 %v80
  %v999 = vunpack.c.l.b16 %v81
  %v1000 = vunpack.c.h.b16 %v81
  %v1001 = vunpack.c.l.b16 %v82
  %v1002 = vunpack.c.l.b16 %v83
  %v1003 = vunpack.c.h.b16 %v83
  %v1004 = vunpack.c.l.b16 %v84
  %v1005 = vunpack.c.h.b16 %v84
  %v1006 = vunpack.c.l.b16 %v85
  %v1007 = vunpack.c.h.b16 %v85
  %v1008 = vunpack.c.l.b16 %v86
  %v1009 = vunpack.c.l.b16 %v87
  %v1010 = vunpack.c.h.b16 %v87
  %v1011 = vunpack.c.l.b16 %v88
  %v1012 = vunpack.c.h.b16 %v88
  %v1013 = vunpack.c.l.b16 %v89
  %v1014 = vunpack.c.h.b16 %v89
  %v1015 = vunpack.c.l.b16 %v90
  %v1016 = vunpack.c.l.b16 %v91
  %v1017 = vunpack.c.h.b16 %v91
  %v1018 = vunpack.c.l.b16 %v92
  %v1019 = vunpack.c.h.b16 %v92
  %v1020 = vunpack.c.l.b16 %v93
  %v1021 = vunpack.c.h.b16 %v93
  %v1022 = vunpack.c.l.b16 %v94
  %v1023 = vunpack.c.l.b16 %v95
  %v1024 = vunpack.c.h.b16 %v95
  %v1025 = vunpack.c.l.b16 %v96
  %v1026 = vunpack.c.h.b16 %v96
  %v1027 = vunpack.c.l.b16 %v97
  %v1028 = vunpack.c.h.b16 %v97
  %v1029 = vunpack.c.l.b16 %v98
  %v1030 = vunpack.c.l.b16 %v99
  %v1031 = vunpack.c.h.b16 %v99
  %v1032 = vunpack.c.l.b16 %v100
  %v1033 = vunpack.c.h.b16 %v100
  %v1034 = vunpack.c.l.b16 %v101
  %v1035 = vunpack.c.h.b16 %v101
  %v1036 = vunpack.c.l.b16 %v102
  %v1037 = vunpack.c.l.b16 %v103
  %v1038 = vunpack.c.h.b16 %v103
  %v1039 = vunpack.c.l.b16 %v104
  %v1040 = vunpack.c.h.b16 %v104
  %v1041 = vunpack.c.l.b16 %v105
  %v1042 = vunpack.c.h.b16 %v105
  %v1043 = vunpack.c.l.b16 %v106
  %v1044 = vunpack.c.l.b16 %v107
  %v1045 = vunpack.c.h.b16 %v107
  %v1046 = vunpack.c.l.b16 %v108
  %v1047 = vunpack.c.h.b16 %v108
  %v1048 = vunpack.c.l.b16 %v109
  %v1049 = vunpack.c.h.b16 %v109
  %v1050 = vunpack.c.l.b16 %v110
  %v1051 = vunpack.c.l.b16 %v111
  %v1052 = vunpack.c.h.b16 %v111
  %v1053 = vunpack.c.l.b16 %v112
  %v1054 = vunpack.c.h.b16 %v112
  %v1055 = vunpack.c.l.b16 %v113
  %v1056 = vunpack.c.h.b16 %v113
  %v1057 = vunpack.c.l.b16 %v114
  %v1058 = vunpack.c.l.b16 %v115
  %v1059 = vunpack.c.h.b16 %v115
  %v1060 = vunpack.c.l.b16 %v116
  %v1061 = vunpack.c.h.b16 %v116
  %v1062 = vunpack.c.l.b16 %v117
  %v1063 = vunpack.c.h.b16 %v117
  %v1064 = vunpack.c.l.b16 %v118
  %v1065 = vunpack.c.l.b16 %v119
  %v1066 = vunpack.c.h.b16 %v119
  %v1067 = vunpack.c.l.b16 %v120
  %v1068 = vunpack.c.h.b16 %v120
  %v1069 = vunpack.c.l.b16 %v121
  %v1070 = vunpack.c.h.b16 %v121
  %v1071 = vunpack.c.l.b16 %v122
  %v1072 = vunpack.c.l.b16 %v123
  %v1073 = vunpack.c.h.b16 %v123
  %v1074 = vunpack.c.l.b16 %v124
  %v1075 = vunpack.c.h.b16 %v124
  %v1076 = vunpack.c.l.b16 %v125
  %v1077 = vunpack.c.h.b16 %v125
  %v1078 = vunpack.c.l.b16 %v126
  %v1079 = vunpack.c.l.b16 %v127
  %v1080 = vunpack.c.h.b16 %v127
  %v1081 = vunpack.c.l.b16 %v128
  %v1082 = vunpack.c.h.b16 %v128
  %v1083 = vunpack.c.l.b16 %v129
  %v1084 = vunpack.c.h.b16 %v129
  %v1085 = vunpack.c.l.b16 %v130
  %v1086 = vunpack.c.l.b16 %v131
  %v1087 = vunpack.c.h.b16 %v131
  %v1088 = vunpack.c.l.b16 %v132
  %v1089 = vunpack.c.h.b16 %v132
  %v1090 = vunpack.c.l.b16 %v133
  %v1091 = vunpack.c.h.b16 %v133
  %v1092 = vunpack.c.l.b16 %v134
  %v1093 = vunpack.c.l.b16 %v135
  %v1094 = vunpack.c.h.b16 %v135
  %v1095 = vunpack.c.l.b16 %v136
  %v1096 = vunpack.c.h.b16 %v136
  %v1097 = vunpack.c.l.b16 %v137
  %v1098 = vunpack.c.h.b16 %v137
  %v1099 = vunpack.c.l.b16 %v138
  %v1100 = vunpack.c.l.b16 %v139
  %v1101 = vunpack.c.h.b16 %v139
  %v1102 = vunpack.c.l.b16 %v140
  %v1103 = vunpack.c.h.b16 %v140
  %v1104 = vunpack.c.l.b16 %v141
  %v1105 = vunpack.c.h.b16 %v141
  %v1106 = vunpack.c.l.b16 %v142
  %v1107 = vunpack.c.l.b16 %v143
  %v1108 = vunpack.c.h.b16 %v143
  %v1109 = vunpack.c.l.b16 %v144
  %v1110 = vunpack.c.h.b16 %v144
  %v1111 = vunpack.c.l.b16 %v145
  %v1112 = vunpack.c.h.b16 %v145
  %v1113 = vunpack.c.l.b16 %v146
  %v1114 = vunpack.c.l.b16 %v147
  %v1115 = vunpack.c.h.b16 %v147
  %v1116 = vunpack.c.l.b16 %v148
  %v1117 = vunpack.c.h.b16 %v148
  %v1118 = vunpack.c.l.b16 %v149
  %v1119 = vunpack.c.h.b16 %v149
  %v1120 = vunpack.c.l.b16 %v150
  %v1121 = vunpack.c.l.b16 %v151
  %v1122 = vunpack.c.h.b16 %v151
  %v1123 = vunpack.c.l.b16 %v152
  %v1124 = vunpack.c.h.b16 %v152
  %v1125 = vunpack.c.l.b16 %v153
  %v1126 = vunpack.c.h.b16 %v153
  %v1127 = vunpack.c.l.b16 %v154
  %v1128 = vunpack.c.l.b16 %v155
  %v1129 = vunpack.c.h.b16 %v155
  %v1130 = vunpack.c.l.b16 %v156
  %v1131 = vunpack.c.h.b16 %v156
  %v1132 = vunpack.c.l.b16 %v157
  %v1133 = vunpack.c.h.b16 %v157
  %v1134 = vunpack.c.l.b16 %v158
  %v1135 = vunpack.c.l.b16 %v159
  %v1136 = vunpack.c.h.b16 %v159
  %v1137 = vunpack.c.l.b16 %v160
  %v1138 = vunpack.c.h.b16 %v160
  %v1139 = vunpack.c.l.b16 %v161
  %v1140 = vunpack.c.h.b16 %v161
  %v1141 = vunpack.c.l.b16 %v162
  %v1142 = vunpack.c.l.b16 %v163
  %v1143 = vunpack.c.h.b16 %v163
  %v1144 = vunpack.c.l.b16 %v164
  %v1145 = vunpack.c.h.b16 %v164
  %v1146 = vunpack.c.l.b16 %v165
  %v1147 = vunpack.c.h.b16 %v165
  %v1148 = vunpack.c.l.b16 %v166
  %v1149 = vunpack.c.l.b16 %v167
  %v1150 = vunpack.c.h.b16 %v167
  %v1151 = vunpack.c.l.b16 %v168
  %v1152 = vunpack.c.h.b16 %v168
  %v1153 = vunpack.c.l.b16 %v169
  %v1154 = vunpack.c.h.b16 %v169
  %v1155 = vunpack.c.l.b16 %v170
  %v1156 = vunpack.c.l.b16 %v171
  %v1157 = vunpack.c.h.b16 %v171
  %v1158 = vunpack.c.l.b16 %v172
  %v1159 = vunpack.c.h.b16 %v172
  %v1160 = vunpack.c.l.b16 %v173
  %v1161 = vunpack.c.h.b16 %v173
  %v1162 = vunpack.c.l.b16 %v174
  %v1163 = vunpack.c.l.b16 %v175
  %v1164 = vunpack.c.h.b16 %v175
  %v1165 = vunpack.c.l.b16 %v176
  %v1166 = vunpack.c.h.b16 %v176
  %v1167 = vunpack.c.l.b16 %v177
  %v1168 = vunpack.c.h.b16 %v177
  %v1169 = vunpack.c.l.b16 %v178
  %v1170 = vunpack.c.l.b16 %v179
  %v1171 = vunpack.c.h.b16 %v179
  %v1172 = vunpack.c.l.b16 %v180
  %v1173 = vunpack.c.h.b16 %v180
  %v1174 = vunpack.c.l.b16 %v181
  %v1175 = vunpack.c.h.b16 %v181
  %v1176 = vunpack.c.l.b16 %v182
  %v1177 = vunpack.c.l.b16 %v183
  %v1178 = vunpack.c.h.b16 %v183
  %v1179 = vunpack.c.l.b16 %v184
  %v1180 = vunpack.c.h.b16 %v184
  %v1181 = vunpack.c.l.b16 %v185
  %v1182 = vunpack.c.h.b16 %v185
  %v1183 = vunpack.c.l.b16 %v186
  %v1184 = vunpack.c.l.b16 %v187
  %v1185 = vunpack.c.h.b16 %v187
  %v1186 = vunpack.c.l.b16 %v188
  %v1187 = vunpack.c.h.b16 %v188
  %v1188 = vunpack.c.l.b16 %v189
  %v1189 = vunpack.c.h.b16 %v189
  %v1190 = vunpack.c.l.b16 %v190
  %v1191 = vunpack.c.l.b16 %v191
  %v1192 = vunpack.c.h.b16 %v191
  %v1193 = vunpack.c.l.b16 %v192
  %v1194 = vunpack.c.h.b16 %v192
  %v1195 = vunpack.c.l.b16 %v193
  %v1196 = vunpack.c.h.b16 %v193
  %v1197 = vunpack.c.l.b16 %v194
  %v1198 = vunpack.c.l.b16 %v195
  %v1199 = vunpack.c.h.b16 %v195
  %v1200 = vunpack.c.l.b16 %v196
  %v1201 = vunpack.c.h.b16 %v196
  %v1202 = vunpack.c.l.b16 %v197
  %v1203 = vunpack.c.h.b16 %v197
  %v1204 = vunpack.c.l.b16 %v198
  %v1205 = vunpack.c.l.b16 %v199
  %v1206 = vunpack.c.h.b16 %v199
  %v1207 = vunpack.c.l.b16 %v200
  %v1208 = vunpack.c.h.b16 %v200
  %v1209 = vunpack.c.l.b16 %v201
  %v1210 = vunpack.c.h.b16 %v201
  %v1211 = vunpack.c.l.b16 %v202
  %v1212 = vunpack.c.l.b16 %v203
  %v1213 = vunpack.c.h.b16 %v203
  %v1214 = vunpack.c.l.b16 %v204
  %v1215 = vunpack.c.h.b16 %v204
  %v1216 = vunpack.c.l.b16 %v205
  %v1217 = vunpack.c.h.b16 %v205
  %v1218 = vunpack.c.l.b16 %v206
  %v1219 = vunpack.c.l.b16 %v207
  %v1220 = vunpack.c.h.b16 %v207
  %v1221 = vunpack.c.l.b16 %v208
  %v1222 = vunpack.c.h.b16 %v208
  %v1223 = vunpack.c.l.b16 %v209
  %v1224 = vunpack.c.h.b16 %v209
  %v1225 = vunpack.c.l.b16 %v210
  %v1226 = vunpack.c.l.b16 %v211
  %v1227 = vunpack.c.h.b16 %v211
  %v1228 = vunpack.c.l.b16 %v212
  %v1229 = vunpack.c.h.b16 %v212
  %v1230 = vunpack.c.l.b16 %v213
  %v1231 = vunpack.c.h.b16 %v213
  %v1232 = vunpack.c.l.b16 %v214
  %v1233 = vunpack.c.l.b16 %v215
  %v1234 = vunpack.c.h.b16 %v215
  %v1235 = vunpack.c.l.b16 %v216
  %v1236 = vunpack.c.h.b16 %v216
  %v1237 = vunpack.c.l.b16 %v217
  %v1238 = vunpack.c.h.b16 %v217
  %v1239 = vunpack.c.l.b16 %v218
  %v1240 = vunpack.c.l.b16 %v219
  %v1241 = vunpack.c.h.b16 %v219
  %v1242 = vunpack.c.l.b16 %v220
  %v1243 = vunpack.c.h.b16 %v220
  %v1244 = vunpack.c.l.b16 %v221
  %v1245 = vunpack.c.h.b16 %v221
  %v1246 = vunpack.c.l.b16 %v222
  %v1247 = vunpack.c.l.b16 %v223
  %v1248 = vunpack.c.h.b16 %v223
  %v1249 = vunpack.c.l.b16 %v224
  %v1250 = vunpack.c.h.b16 %v224
  %v1251 = vunpack.c.l.b16 %v225
  %v1252 = vunpack.c.h.b16 %v225
  %v1253 = vunpack.c.l.b16 %v226
  %v1254 = vunpack.c.l.b16 %v227
  %v1255 = vunpack.c.h.b16 %v227
  %v1256 = vunpack.c.l.b16 %v228
  %v1257 = vunpack.c.h.b16 %v228
  %v1258 = vunpack.c.l.b16 %v229
  %v1259 = vunpack.c.h.b16 %v229
  %v1260 = vunpack.c.l.b16 %v230
  %v1261 = vunpack.c.l.b16 %v231
  %v1262 = vunpack.c.h.b16 %v231
  %v1263 = vunpack.c.l.b16 %v232
  %v1264 = vunpack.c.h.b16 %v232
  %v1265 = vunpack.c.l.b16 %v233
  %v1266 = vunpack.c.h.b16 %v233
  %v1267 = vunpack.c.l.b16 %v234
  %v1268 = vunpack.c.l.b16 %v235
  %v1269 = vunpack.c.h.b16 %v235
  %v1270 = vunpack.c.l.b16 %v236
  %v1271 = vunpack.c.h.b16 %v236
  %v1272 = vunpack.c.l.b16 %v237
  %v1273 = vunpack.c.h.b16 %v237
  %v1274 = vunpack.c.l.b16 %v238
  %v1275 = vunpack.c.l.b16 %v239
  %v1276 = vunpack.c.h.b16 %v239
  %v1277 = vunpack.c.l.b16 %v240
  %v1278 = vunpack.c.h.b16 %v240
  %v1279 = vunpack.c.l.b16 %v241
  %v1280 = vunpack.c.h.b16 %v241
  %v1281 = vunpack.c.l.b16 %v242
  %v1282 = vunpack.c.l.b16 %v243
  %v1283 = vunpack.c.h.b16 %v243
  %v1284 = vunpack.c.l.b16 %v244
  %v1285 = vunpack.c.h.b16 %v244
  %v1286 = vunpack.c.l.b16 %v245
  %v1287 = vunpack.c.h.b16 %v245
  %v1288 = vunpack.c.l.b16 %v246
  %v1289 = vunpack.c.l.b16 %v247
  %v1290 = vunpack.c.h.b16 %v247
  %v1291 = vunpack.c.l.b16 %v248
  %v1292 = vunpack.c.h.b16 %v248
  %v1293 = vunpack.c.l.b16 %v249
  %v1294 = vunpack.c.h.b16 %v249
  %v1295 = vunpack.c.l.b16 %v250
  %v1296 = vunpack.c.l.b16 %v251
  %v1297 = vunpack.c.h.b16 %v251
  %v1298 = vunpack.c.l.b16 %v252
  %v1299 = vunpack.c.h.b16 %v252
  %v1300 = vunpack.c.l.b16 %v253
  %v1301 = vunpack.c.h.b16 %v253
  %v1302 = vunpack.c.l.b16 %v254
  %v1303 = vunpack.c.l.b16 %v255
  %v1304 = vunpack.c.h.b16 %v255
  %v1305 = vunpack.c.l.b16 %v256
  %v1306 = vunpack.c.h.b16 %v256
  %v1307 = vunpack.c.l.b16 %v257
  %v1308 = vunpack.c.h.b16 %v257
  %v1309 = vunpack.c.l.b16 %v258
  %v1310 = vunpack.c.l.b16 %v259
  %v1311 = vunpack.c.h.b16 %v259
  %v1312 = vunpack.c.l.b16 %v260
  %v1313 = vunpack.c.h.b16 %v260
  %v1314 = vunpack.c.l.b16 %v261
  %v1315 = vunpack.c.h.b16 %v261
  %v1316 = vunpack.c.l.b16 %v262
  %v1317 = vunpack.c.l.b16 %v263
  %v1318 = vunpack.c.h.b16 %v263
  %v1319 = vunpack.c.l.b16 %v264
  %v1320 = vunpack.c.h.b16 %v264
  %v1321 = vunpack.c.l.b16 %v265
  %v1322 = vunpack.c.h.b16 %v265
  %v1323 = vunpack.c.l.b16 %v266
  %v1324 = vunpack.c.l.b16 %v267
  %v1325 = vunpack.c.h.b16 %v267
  %v1326 = vunpack.c.l.b16 %v268
  %v1327 = vunpack.c.h.b16 %v268
  %v1328 = vunpack.c.l.b16 %v269
  %v1329 = vunpack.c.h.b16 %v269
  %v1330 = vunpack.c.l.b16 %v270
  %v1331 = vunpack.c.l.b16 %v271
  %v1332 = vunpack.c.h.b16 %v271
  %v1333 = vunpack.c.l.b16 %v272
  %v1334 = vunpack.c.h.b16 %v272
  %v1335 = vunpack.c.l.b16 %v273
  %v1336 = vunpack.c.h.b16 %v273
  %v1337 = vunpack.c.l.b16 %v274
  %v1338 = vunpack.c.l.b16 %v275
  %v1339 = vunpack.c.h.b16 %v275
  %v1340 = vunpack.c.l.b16 %v276
  %v1341 = vunpack.c.h.b16 %v276
  %v1342 = vunpack.c.l.b16 %v277
  %v1343 = vunpack.c.h.b16 %v277
  %v1344 = vunpack.c.l.b16 %v278
  %v1345 = vunpack.c.l.b16 %v279
  %v1346 = vunpack.c.h.b16 %v279
  %v1347 = vunpack.c.l.b16 %v280
  %v1348 = vunpack.c.h.b16 %v280
  %v1349 = vunpack.c.l.b16 %v281
  %v1350 = vunpack.c.h.b16 %v281
  %v1351 = vunpack.c.l.b16 %v282
  %v1352 = vunpack.c.l.b16 %v283
  %v1353 = vunpack.c.h.b16 %v283
  %v1354 = vunpack.c.l.b16 %v284
  %v1355 = vunpack.c.h.b16 %v284
  %v1356 = vunpack.c.l.b16 %v285
  %v1357 = vunpack.c.h.b16 %v285
  %v1358 = vunpack.c.l.b16 %v286
  %v1359 = vunpack.c.l.b16 %v287
  %v1360 = vunpack.c.h.b16 %v287
  %v1361 = vunpack.c.l.b16 %v288
  %v1362 = vunpack.c.h.b16 %v288
  %v1363 = vunpack.c.l.b16 %v289
  %v1364 = vunpack.c.h.b16 %v289
  %v1365 = vunpack.c.l.b16 %v290
  %v1366 = vunpack.c.l.b16 %v291
  %v1367 = vunpack.c.h.b16 %v291
  %v1368 = vunpack.c.l.b16 %v292
  %v1369 = vunpack.c.h.b16 %v292
  %v1370 = vunpack.c.l.b16 %v293
  %v1371 = vunpack.c.h.b16 %v293
  %v1372 = vunpack.c.l.b16 %v294
  %v1373 = vunpack.c.l.b16 %v295
  %v1374 = vunpack.c.h.b16 %v295
  %v1375 = vunpack.c.l.b16 %v296
  %v1376 = vunpack.c.h.b16 %v296
  %v1377 = vunpack.c.l.b16 %v297
  %v1378 = vunpack.c.h.b16 %v297
  %v1379 = vunpack.c.l.b16 %v298
  %v1380 = vunpack.c.l.b16 %v299
  %v1381 = vunpack.c.h.b16 %v299
  %v1382 = vunpack.c.l.b16 %v300
  %v1383 = vunpack.c.h.b16 %v300
  %v1384 = vunpack.c.l.b16 %v301
  %v1385 = vunpack.c.h.b16 %v301
  %v1386 = vunpack.c.l.b16 %v302
  %v1387 = vunpack.c.l.b16 %v303
  %v1388 = vunpack.c.h.b16 %v303
  %v1389 = vunpack.c.l.b16 %v304
  %v1390 = vunpack.c.h.b16 %v304
  %v1391 = vunpack.c.l.b16 %v305
  %v1392 = vunpack.c.h.b16 %v305
  %v1393 = vunpack.c.l.b16 %v306
  %v1394 = vunpack.c.l.b16 %v307
  %v1395 = vunpack.c.h.b16 %v307
  %v1396 = vunpack.c.l.b16 %v308
  %v1397 = vunpack.c.h.b16 %v308
  %v1398 = vunpack.c.l.b16 %v309
  %v1399 = vunpack.c.h.b16 %v309
  %v1400 = vunpack.c.l.b16 %v310
  %v1401 = vunpack.c.l.b16 %v311
  %v1402 = vunpack.c.h.b16 %v311
  %v1403 = vunpack.c.l.b16 %v312
  %v1404 = vunpack.c.h.b16 %v312
  %v1405 = vunpack.c.l.b16 %v313
  %v1406 = vunpack.c.h.b16 %v313
  %v1407 = vunpack.c.l.b16 %v314
  %v1408 = vunpack.c.l.b16 %v315
  %v1409 = vunpack.c.h.b16 %v315
  %v1410 = vunpack.c.l.b16 %v316
  %v1411 = vunpack.c.h.b16 %v316
  %v1412 = vunpack.c.l.b16 %v317
  %v1413 = vunpack.c.h.b16 %v317
  %v1414 = vunpack.c.l.b16 %v318
  %v1415 = vunpack.c.l.b16 %v319
  %v1416 = vunpack.c.h.b16 %v319
  %v1417 = vunpack.c.l.b16 %v320
  %v1418 = vunpack.c.h.b16 %v320
  %v1419 = vunpack.c.l.b16 %v321
  %v1420 = vunpack.c.h.b16 %v321
  %v1421 = vunpack.c.l.b16 %v322
  %v1422 = vunpack.c.l.b16 %v323
  %v1423 = vunpack.c.h.b16 %v323
  %v1424 = vunpack.c.l.b16 %v324
  %v1425 = vunpack.c.h.b16 %v324
  %v1426 = vunpack.c.l.b16 %v325
  %v1427 = vunpack.c.h.b16 %v325
  %v1428 = vunpack.c.l.b16 %v326
  %v1429 = vunpack.c.l.b16 %v327
  %v1430 = vunpack.c.h.b16 %v327
  %v1431 = vunpack.c.l.b16 %v328
  %v1432 = vunpack.c.h.b16 %v328
  %v1433 = vunpack.c.l.b16 %v329
  %v1434 = vunpack.c.h.b16 %v329
  %v1435 = vunpack.c.l.b16 %v330
  %v1436 = vunpack.c.l.b16 %v331
  %v1437 = vunpack.c.h.b16 %v331
  %v1438 = vunpack.c.l.b16 %v332
  %v1439 = vunpack.c.h.b16 %v332
  %v1440 = vunpack.c.l.b16 %v333
  %v1441 = vunpack.c.h.b16 %v333
  %v1442 = vunpack.c.l.b16 %v334
  %v1443 = vunpack.c.l.b16 %v335
  %v1444 = vunpack.c.h.b16 %v335
  %v1445 = vunpack.c.l.b16 %v336
  %v1446 = vunpack.c.h.b16 %v336
  %v1447 = vunpack.c.l.b16 %v337
  %v1448 = vunpack.c.h.b16 %v337
  %v1449 = vunpack.c.l.b16 %v338
  %v1450 = vunpack.c.l.b16 %v339
  %v1451 = vunpack.c.h.b16 %v339
  %v1452 = vunpack.c.l.b16 %v340
  %v1453 = vunpack.c.h.b16 %v340
  %v1454 = vunpack.c.l.b16 %v341
  %v1455 = vunpack.c.h.b16 %v341
  %v1456 = vunpack.c.l.b16 %v342
  %v1457 = vunpack.c.l.b16 %v343
  %v1458 = vunpack.c.h.b16 %v343
  %v1459 = vunpack.c.l.b16 %v344
  %v1460 = vunpack.c.h.b16 %v344
  %v1461 = vunpack.c.l.b16 %v345
  %v1462 = vunpack.c.h.b16 %v345
  %v1463 = vunpack.c.l.b16 %v346
  %v1464 = vunpack.c.l.b16 %v347
  %v1465 = vunpack.c.h.b16 %v347
  %v1466 = vunpack.c.l.b16 %v348
  %v1467 = vunpack.c.h.b16 %v348
  %v1468 = vunpack.c.l.b16 %v349
  %v1469 = vunpack.c.h.b16 %v349
  %v1470 = vunpack.c.l.b16 %v350
  %v1471 = vunpack.c.l.b16 %v351
  %v1472 = vunpack.c.h.b16 %v351
  %v1473 = vunpack.c.l.b16 %v352
  %v1474 = vunpack.c.h.b16 %v352
  %v1475 = vunpack.c.l.b16 %v353
  %v1476 = vunpack.c.h.b16 %v353
  %v1477 = vunpack.c.l.b16 %v354
  %v1478 = vunpack.c.l.b16 %v355
  %v1479 = vunpack.c.h.b16 %v355
  %v1480 = vunpack.c.l.b16 %v356
  %v1481 = vunpack.c.h.b16 %v356
  %v1482 = vunpack.c.l.b16 %v357
  %v1483 = vunpack.c.h.b16 %v357
  %v1484 = vunpack.c.l.b16 %v358
  %v1485 = vunpack.c.l.b16 %v359
  %v1486 = vunpack.c.h.b16 %v359
  %v1487 = vunpack.c.l.b16 %v360
  %v1488 = vunpack.c.h.b16 %v360
  %v1489 = vunpack.c.l.b16 %v361
  %v1490 = vunpack.c.h.b16 %v361
  %v1491 = vunpack.c.l.b16 %v362
  %v1492 = vunpack.c.l.b16 %v363
  %v1493 = vunpack.c.h.b16 %v363
  %v1494 = vunpack.c.l.b16 %v364
  %v1495 = vunpack.c.h.b16 %v364
  %v1496 = vunpack.c.l.b16 %v365
  %v1497 = vunpack.c.h.b16 %v365
  %v1498 = vunpack.c.l.b16 %v366
  %v1499 = vunpack.c.l.b16 %v367
  %v1500 = vunpack.c.h.b16 %v367
  %v1501 = vunpack.c.l.b16 %v368
  %v1502 = vunpack.c.h.b16 %v368
  %v1503 = vunpack.c.l.b16 %v369
  %v1504 = vunpack.c.h.b16 %v369
  %v1505 = vunpack.c.l.b16 %v370
  %v1506 = vunpack.c.l.b16 %v371
  %v1507 = vunpack.c.h.b16 %v371
  %v1508 = vunpack.c.l.b16 %v372
  %v1509 = vunpack.c.h.b16 %v372
  %v1510 = vunpack.c.l.b16 %v373
  %v1511 = vunpack.c.h.b16 %v373
  %v1512 = vunpack.c.l.b16 %v374
  %v1513 = vunpack.c.l.b16 %v375
  %v1514 = vunpack.c.h.b16 %v375
  %v1515 = vunpack.c.l.b16 %v376
  %v1516 = vunpack.c.h.b16 %v376
  %v1517 = vunpack.c.l.b16 %v377
  %v1518 = vunpack.c.h.b16 %v377
  %v1519 = vunpack.c.l.b16 %v378
  %v1520 = vunpack.c.l.b16 %v379
  %v1521 = vunpack.c.h.b16 %v379
  %v1522 = vunpack.c.l.b16 %v380
  %v1523 = vunpack.c.h.b16 %v380
  %v1524 = vunpack.c.l.b16 %v381
  %v1525 = vunpack.c.h.b16 %v381
  %v1526 = vunpack.c.l.b16 %v382
  %v1527 = vunpack.c.l.b16 %v383
  %v1528 = vunpack.c.h.b16 %v383
  %v1529 = vunpack.c.l.b16 %v384
  %v1530 = vunpack.c.h.b16 %v384
  %v1531 = vunpack.c.l.b16 %v385
  %v1532 = vunpack.c.h.b16 %v385
  %v1533 = vunpack.c.l.b16 %v386
  %v1534 = vunpack.c.l.b16 %v387
  %v1535 = vunpack.c.h.b16 %v387
  %v1536 = vunpack.c.l.b16 %v388
  %v1537 = vunpack.c.h.b16 %v388
  %v1538 = vunpack.c.l.b16 %v389
  %v1539 = vunpack.c.h.b16 %v389
  %v1540 = vunpack.c.l.b16 %v390
  %v1541 = vunpack.c.l.b16 %v391
  %v1542 = vunpack.c.h.b16 %v391
  %v1543 = vunpack.c.l.b16 %v392
  %v1544 = vunpack.c.h.b16 %v392
  %v1545 = vunpack.c.l.b16 %v393
  %v1546 = vunpack.c.h.b16 %v393
  %v1547 = vunpack.c.l.b16 %v394
  %v1548 = vunpack.c.l.b16 %v395
  %v1549 = vunpack.c.h.b16 %v395
  %v1550 = vunpack.c.l.b16 %v396
  %v1551 = vunpack.c.h.b16 %v396
  %v1552 = vunpack.c.l.b16 %v397
  %v1553 = vunpack.c.h.b16 %v397
  %v1554 = vunpack.c.l.b16 %v398
  %v1555 = vpack.c.b16 %v890, %v883
  %v1556 = vpack.c.b16 %v891, %v884
  %v1557 = vpack.c.b16 %v892, %v885
  %v1558 = vpack.c.b16 %v893, %v886
  %v1559 = vpack.c.b16 %v894, %v887
  %v1560 = vpack.c.b16 %v895, %v888
  %v1561 = vpack.c.b16 %v896, %v889
  %v1562 = vpack.c.b16 %v904, %v897
  %v1563 = vpack.c.b16 %v905, %v898
  %v1564 = vpack.c.b16 %v906, %v899
  %v1565 = vpack.c.b16 %v907, %v900
  %v1566 = vpack.c.b16 %v908, %v901
  %v1567 = vpack.c.b16 %v909, %v902
  %v1568 = vpack.c.b16 %v910, %v903
  %v1569 = vpack.c.b16 %v918, %v911
  %v1570 = vpack.c.b16 %v919, %v912
  %v1571 = vpack.c.b16 %v920, %v913
  %v1572 = vpack.c.b16 %v921, %v914
  %v1573 = vpack.c.b16 %v922, %v915
  %v1574 = vpack.c.b16 %v923, %v916
  %v1575 = vpack.c.b16 %v924, %v917
  %v1576 = vpack.c.b16 %v932, %v925
  %v1577 = vpack.c.b16 %v933, %v926
  %v1578 = vpack.c.b16 %v934, %v927
  %v1579 = vpack.c.b16 %v935, %v928
  %v1580 = vpack.c.b16 %v936, %v929
  %v1581 = vpack.c.b16 %v937, %v930
  %v1582 = vpack.c.b16 %v938, %v931
  %v1583 = vpack.c.b16 %v946, %v939
  %v1584 = vpack.c.b16 %v947, %v940
  %v1585 = vpack.c.b16 %v948, %v941
  %v1586 = vpack.c.b16 %v949, %v942
  %v1587 = vpack.c.b16 %v950, %v943
  %v1588 = vpack.c.b16 %v951, %v944
  %v1589 = vpack.c.b16 %v952, %v945
  %v1590 = vpack.c.b16 %v960, %v953
  %v1591 = vpack.c.b16 %v961, %v954
  %v1592 = vpack.c.b16 %v962, %v955
  %v1593 = vpack.c.b16 %v963, %v956
  %v1594 = vpack.c.b16 %v964, %v957
  %v1595 = vpack.c.b16 %v965, %v958
  %v1596 = vpack.c.b16 %v966, %v959
  %v1597 = vpack.c.b16 %v974, %v967
  %v1598 = vpack.c.b16 %v975, %v968
  %v1599 = vpack.c.b16 %v976, %v969
  %v1600 = vpack.c.b16 %v977, %v970
  %v1601 = vpack.c.b16 %v978, %v971
  %v1602 = vpack.c.b16 %v979, %v972
  %v1603 = vpack.c.b16 %v980, %v973
  %v1604 = vpack.c.b16 %v988, %v981
  %v1605 = vpack.c.b16 %v989, %v982
  %v1606 = vpack.c.b16 %v990, %v983
  %v1607 = vpack.c.b16 %v991, %v984
  %v1608 = vpack.c.b16 %v992, %v985
  %v1609 = vpack.c.b16 %v993, %v986
  %v1610 = vpack.c.b16 %v994, %v987
  %v1611 = vpack.c.b16 %v1002, %v995
  %v1612 = vpack.c.b16 %v1003, %v996
  %v1613 = vpack.c.b16 %v1004, %v997
  %v1614 = vpack.c.b16 %v1005, %v998
  %v1615 = vpack.c.b16 %v1006, %v999
  %v1616 = vpack.c.b16 %v1007, %v1000
  %v1617 = vpack.c.b16 %v1008, %v1001
  %v1618 = vpack.c.b16 %v1016, %v1009
  %v1619 = vpack.c.b16 %v1017, %v1010
  %v1620 = vpack.c.b16 %v1018, %v1011
  %v1621 = vpack.c.b16 %v1019, %v1012
  %v1622 = vpack.c.b16 %v1020, %v1013
  %v1623 = vpack.c.b16 %v1021, %v1014
  %v1624 = vpack.c.b16 %v1022, %v1015
  %v1625 = vpack.c.b16 %v1030, %v1023
  %v1626 = vpack.c.b16 %v1031, %v1024
  %v1627 = vpack.c.b16 %v1032, %v1025
  %v1628 = vpack.c.b16 %v1033, %v1026
  %v1629 = vpack.c.b16 %v1034, %v1027
  %v1630 = vpack.c.b16 %v1035, %v1028
  %v1631 = vpack.c.b16 %v1036, %v1029
  %v1632 = vpack.c.b16 %v1044, %v1037
  %v1633 = vpack.c.b16 %v1045, %v1038
  %v1634 = vpack.c.b16 %v1046, %v1039
  %v1635 = vpack.c.b16 %v1047, %v1040
  %v1636 = vpack.c.b16 %v1048, %v1041
  %v1637 = vpack.c.b16 %v1049, %v1042
  %v1638 = vpack.c.b16 %v1050, %v1043
  %v1639 = vpack.c.b16 %v1058, %v1051
  %v1640 = vpack.c.b16 %v1059, %v1052
  %v1641 = vpack.c.b16 %v1060, %v1053
  %v1642 = vpack.c.b16 %v1061, %v1054
  %v1643 = vpack.c.b16 %v1062, %v1055
  %v1644 = vpack.c.b16 %v1063, %v1056
  %v1645 = vpack.c.b16 %v1064, %v1057
  %v1646 = vpack.c.b16 %v1072, %v1065
  %v1647 = vpack.c.b16 %v1073, %v1066
  %v1648 = vpack.c.b16 %v1074, %v1067
  %v1649 = vpack.c.b16 %v1075, %v1068
  %v1650 = vpack.c.b16 %v1076, %v1069
  %v1651 = vpack.c.b16 %v1077, %v1070
  %v1652 = vpack.c.b16 %v1078, %v1071
  %v1653 = vpack.c.b16 %v1086, %v1079
  %v1654 = vpack.c.b16 %v1087, %v1080
  %v1655 = vpack.c.b16 %v1088, %v1081
  %v1656 = vpack.c.b16 %v1089, %v1082
  %v1657 = vpack.c.b16 %v1090, %v1083
  %v1658 = vpack.c.b16 %v1091, %v1084
  %v1659 = vpack.c.b16 %v1092, %v1085
  %v1660 = vpack.c.b16 %v1100, %v1093
  %v1661 = vpack.c.b16 %v1101, %v1094
  %v1662 = vpack.c.b16 %v1102, %v1095
  %v1663 = vpack.c.b16 %v1103, %v1096
  %v1664 = vpack.c.b16 %v1104, %v1097
  %v1665 = vpack.c.b16 %v1105, %v1098
  %v1666 = vpack.c.b16 %v1106, %v1099
  %v1667 = vpack.c.b16 %v1114, %v1107
  %v1668 = vpack.c.b16 %v1115, %v1108
  %v1669 = vpack.c.b16 %v1116, %v1109
  %v1670 = vpack.c.b16 %v1117, %v1110
  %v1671 = vpack.c.b16 %v1118, %v1111
  %v1672 = vpack.c.b16 %v1119, %v1112
  %v1673 = vpack.c.b16 %v1120, %v1113
  %v1674 = vpack.c.b16 %v1128, %v1121
  %v1675 = vpack.c.b16 %v1129, %v1122
  %v1676 = vpack.c.b16 %v1130, %v1123
  %v1677 = vpack.c.b16 %v1131, %v1124
  %v1678 = vpack.c.b16 %v1132, %v1125
  %v1679 = vpack.c.b16 %v1133, %v1126
  %v1680 = vpack.c.b16 %v1134, %v1127
  %v1681 = vpack.c.b16 %v1142, %v1135
  %v1682 = vpack.c.b16 %v1143, %v1136
  %v1683 = vpack.c.b16 %v1144, %v1137
  %v1684 = vpack.c.b16 %v1145, %v1138
  %v1685 = vpack.c.b16 %v1146, %v1139
  %v1686 = vpack.c.b16 %v1147, %v1140
  %v1687 = vpack.c.b16 %v1148, %v1141
  %v1688 = vpack.c.b16 %v1156, %v1149
  %v1689 = vpack.c.b16 %v1157, %v1150
  %v1690 = vpack.c.b16 %v1158, %v1151
  %v1691 = vpack.c.b16 %v1159, %v1152
  %v1692 = vpack.c.b16 %v1160, %v1153
  %v1693 = vpack.c.b16 %v1161, %v1154
  %v1694 = vpack.c.b16 %v1162, %v1155
  %v1695 = vpack.c.b16 %v1170, %v1163
  %v1696 = vpack.c.b16 %v1171, %v1164
  %v1697 = vpack.c.b16 %v1172, %v1165
  %v1698 = vpack.c.b16 %v1173, %v1166
  %v1699 = vpack.c.b16 %v1174, %v1167
  %v1700 = vpack.c.b16 %v1175, %v1168
  %v1701 = vpack.c.b16 %v1176, %v1169
  %v1702 = vpack.c.b16 %v1184, %v1177
  %v1703 = vpack.c.b16 %v1185, %v1178
  %v1704 = vpack.c.b16 %v1186, %v1179
  %v1705 = vpack.c.b16 %v1187, %v1180
  %v1706 = vpack.c.b16 %v1188, %v1181
  %v1707 = vpack.c.b16 %v1189, %v1182
  %v1708 = vpack.c.b16 %v1190, %v1183
  %v1709 = vpack.c.b16 %v1198, %v1191
  %v1710 = vpack.c.b16 %v1199, %v1192
  %v1711 = vpack.c.b16 %v1200, %v1193
  %v1712 = vpack.c.b16 %v1201, %v1194
  %v1713 = vpack.c.b16 %v1202, %v1195
  %v1714 = vpack.c.b16 %v1203, %v1196
  %v1715 = vpack.c.b16 %v1204, %v1197
  %v1716 = vpack.c.b16 %v1212, %v1205
  %v1717 = vpack.c.b16 %v1213, %v1206
  %v1718 = vpack.c.b16 %v1214, %v1207
  %v1719 = vpack.c.b16 %v1215, %v1208
  %v1720 = vpack.c.b16 %v1216, %v1209
  %v1721 = vpack.c.b16 %v1217, %v1210
  %v1722 = vpack.c.b16 %v1218, %v1211
  %v1723 = vpack.c.b16 %v1226, %v1219
  %v1724 = vpack.c.b16 %v1227, %v1220
  %v1725 = vpack.c.b16 %v1228, %v1221
  %v1726 = vpack.c.b16 %v1229, %v1222
  %v1727 = vpack.c.b16 %v1230, %v1223
  %v1728 = vpack.c.b16 %v1231, %v1224
  %v1729 = vpack.c.b16 %v1232, %v1225
  %v1730 = vpack.c.b16 %v1240, %v1233
  %v1731 = vpack.c.b16 %v1241, %v1234
  %v1732 = vpack.c.b16 %v1242, %v1235
  %v1733 = vpack.c.b16 %v1243, %v1236
  %v1734 = vpack.c.b16 %v1244, %v1237
  %v1735 = vpack.c.b16 %v1245, %v1238
  %v1736 = vpack.c.b16 %v1246, %v1239
  %v1737 = vpack.c.b16 %v1254, %v1247
  %v1738 = vpack.c.b16 %v1255, %v1248
  %v1739 = vpack.c.b16 %v1256, %v1249
  %v1740 = vpack.c.b16 %v1257, %v1250
  %v1741 = vpack.c.b16 %v1258, %v1251
  %v1742 = vpack.c.b16 %v1259, %v1252
  %v1743 = vpack.c.b16 %v1260, %v1253
  %v1744 = vpack.c.b16 %v1268, %v1261
  %v1745 = vpack.c.b16 %v1269, %v1262
  %v1746 = vpack.c.b16 %v1270, %v1263
  %v1747 = vpack.c.b16 %v1271, %v1264
  %v1748 = vpack.c.b16 %v1272, %v1265
  %v1749 = vpack.c.b16 %v1273, %v1266
  %v1750 = vpack.c.b16 %v1274, %v1267
  %v1751 = vpack.c.b16 %v1282, %v1275
  %v1752 = vpack.c.b16 %v1283, %v1276
  %v1753 = vpack.c.b16 %v1284, %v1277
  %v1754 = vpack.c.b16 %v1285, %v1278
  %v1755 = vpack.c.b16 %v1286, %v1279
  %v1756 = vpack.c.b16 %v1287, %v1280
  %v1757 = vpack.c.b16 %v1288, %v1281
  %v1758 = vpack.c.b16 %v1296, %v1289
  %v1759 = vpack.c.b16 %v1297, %v1290
  %v1760 = vpack.c.b16 %v1298, %v1291
  %v1761 = vpack.c.b16 %v1299, %v1292
  %v1762 = vpack.c.b16 %v1300, %v1293
  %v1763 = vpack.c.b16 %v1301, %v1294
  %v1764 = vpack.c.b16 %v1302, %v1295
  %v1765 = vpack.c.b16 %v1310, %v1303
  %v1766 = vpack.c.b16 %v1311, %v1304
  %v1767 = vpack.c.b16 %v1312, %v1305
  %v1768 = vpack.c.b16 %v1313, %v1306
  %v1769 = vpack.c.b16 %v1314, %v1307
  %v1770 = vpack.c.b16 %v1315, %v1308
  %v1771 = vpack.c.b16 %v1316, %v1309
  %v1772 = vpack.c.b16 %v1324, %v1317
  %v1773 = vpack.c.b16 %v1325, %v1318
  %v1774 = vpack.c.b16 %v1326, %v1319
  %v1775 = vpack.c.b16 %v1327, %v1320
  %v1776 = vpack.c.b16 %v1328, %v1321
  %v1777 = vpack.c.b16 %v1329, %v1322
  %v1778 = vpack.c.b16 %v1330, %v1323
  %v1779 = vpack.c.b16 %v1338, %v1331
  %v1780 = vpack.c.b16 %v1339, %v1332
  %v1781 = vpack.c.b16 %v1340, %v1333
  %v1782 = vpack.c.b16 %v1341, %v1334
  %v1783 = vpack.c.b16 %v1342, %v1335
  %v1784 = vpack.c.b16 %v1343, %v1336
  %v1785 = vpack.c.b16 %v1344, %v1337
  %v1786 = vpack.c.b16 %v1352, %v1345
  %v1787 = vpack.c.b16 %v1353, %v1346
  %v1788 = vpack.c.b16 %v1354, %v1347
  %v1789 = vpack.c.b16 %v1355, %v1348
  %v1790 = vpack.c.b16 %v1356, %v1349
  %v1791 = vpack.c.b16 %v1357, %v1350
  %v1792 = vpack.c.b16 %v1358, %v1351
  %v1793 = vpack.c.b16 %v1366, %v1359
  %v1794 = vpack.c.b16 %v1367, %v1360
  %v1795 = vpack.c.b16 %v1368, %v1361
  %v1796 = vpack.c.b16 %v1369, %v1362
  %v1797 = vpack.c.b16 %v1370, %v1363
  %v1798 = vpack.c.b16 %v1371, %v1364
  %v1799 = vpack.c.b16 %v1372, %v1365
  %v1800 = vpack.c.b16 %v1380, %v1373
  %v1801 = vpack.c.b16 %v1381, %v1374
  %v1802 = vpack.c.b16 %v1382, %v1375
  %v1803 = vpack.c.b16 %v1383, %v1376
  %v1804 = vpack.c.b16 %v1384, %v1377
  %v1805 = vpack.c.b16 %v1385, %v1378
  %v1806 = vpack.c.b16 %v1386, %v1379
  %v1807 = vpack.c.b16 %v1394, %v1387
  %v1808 = vpack.c.b16 %v1395, %v1388
  %v1809 = vpack.c.b16 %v1396, %v1389
  %v1810 = vpack.c.b16 %v1397, %v1390
  %v1811 = vpack.c.b16 %v1398, %v1391
  %v1812 = vpack.c.b16 %v1399, %v1392
  %v1813 = vpack.c.b16 %v1400, %v1393
  %v1814 = vpack.c.b16 %v1408, %v1401
  %v1815 = vpack.c.b16 %v1409, %v1402
  %v1816 = vpack.c.b16 %v1410, %v1403
  %v1817 = vpack.c.b16 %v1411, %v1404
  %v1818 = vpack.c.b16 %v1412, %v1405
  %v1819 = vpack.c.b16 %v1413, %v1406
  %v1820 = vpack.c.b16 %v1414, %v1407
  %v1821 = vpack.c.b16 %v1422, %v1415
  %v1822 = vpack.c.b16 %v1423, %v1416
  %v1823 = vpack.c.b16 %v1424, %v1417
  %v1824 = vpack.c.b16 %v1425, %v1418
  %v1825 = vpack.c.b16 %v1426, %v1419
  %v1826 = vpack.c.b16 %v1427, %v1420
  %v1827 = vpack.c.b16 %v1428, %v1421
  %v1828 = vpack.c.b16 %v1436, %v1429
  %v1829 = vpack.c.b16 %v1437, %v1430
  %v1830 = vpack.c.b16 %v1438, %v1431
  %v1831 = vpack.c.b16 %v1439, %v1432
  %v1832 = vpack.c.b16 %v1440, %v1433
  %v1833 = vpack.c.b16 %v1441, %v1434
  %v1834 = vpack.c.b16 %v1442, %v1435
  %v1835 = vpack.c.b16 %v1450, %v1443
  %v1836 = vpack.c.b16 %v1451, %v1444
  %v1837 = vpack.c.b16 %v1452, %v1445
  %v1838 = vpack.c.b16 %v1453, %v1446
  %v1839 = vpack.c.b16 %v1454, %v1447
  %v1840 = vpack.c.b16 %v1455, %v1448
  %v1841 = vpack.c.b16 %v1456, %v1449
  %v1842 = vpack.c.b16 %v1464, %v1457
  %v1843 = vpack.c.b16 %v1465, %v1458
  %v1844 = vpack.c.b16 %v1466, %v1459
  %v1845 = vpack.c.b16 %v1467, %v1460
  %v1846 = vpack.c.b16 %v1468, %v1461
  %v1847 = vpack.c.b16 %v1469, %v1462
  %v1848 = vpack.c.b16 %v1470, %v1463
  %v1849 = vpack.c.b16 %v1478, %v1471
  %v1850 = vpack.c.b16 %v1479, %v1472
  %v1851 = vpack.c.b16 %v1480, %v1473
  %v1852 = vpack.c.b16 %v1481, %v1474
  %v1853 = vpack.c.b16 %v1482, %v1475
  %v1854 = vpack.c.b16 %v1483, %v1476
  %v1855 = vpack.c.b16 %v1484, %v1477
  %v1856 = vpack.c.b16 %v1492, %v1485
  %v1857 = vpack.c.b16 %v1493, %v1486
  %v1858 = vpack.c.b16 %v1494, %v1487
  %v1859 = vpack.c.b16 %v1495, %v1488
  %v1860 = vpack.c.b16 %v1496, %v1489
  %v1861 = vpack.c.b16 %v1497, %v1490
  %v1862 = vpack.c.b16 %v1498, %v1491
  %v1863 = vpack.c.b16 %v1506, %v1499
  %v1864 = vpack.c.b16 %v1507, %v1500
  %v1865 = vpack.c.b16 %v1508, %v1501
  %v1866 = vpack.c.b16 %v1509, %v1502
  %v1867 = vpack.c.b16 %v1510, %v1503
  %v1868 = vpack.c.b16 %v1511, %v1504
  %v1869 = vpack.c.b16 %v1512, %v1505
  %v1870 = vpack.c.b16 %v1520, %v1513
  %v1871 = vpack.c.b16 %v1521, %v1514
  %v1872 = vpack.c.b16 %v1522, %v1515
  %v1873 = vpack.c.b16 %v1523, %v1516
  %v1874 = vpack.c.b16 %v1524, %v1517
  %v1875 = vpack.c.b16 %v1525, %v1518
  %v1876 = vpack.c.b16 %v1526, %v1519
  %v1877 = vpack.c.b16 %v1534, %v1527
  %v1878 = vpack.c.b16 %v1535, %v1528
  %v1879 = vpack.c.b16 %v1536, %v1529
  %v1880 = vpack.c.b16 %v1537, %v1530
  %v1881 = vpack.c.b16 %v1538, %v1531
  %v1882 = vpack.c.b16 %v1539, %v1532
  %v1883 = vpack.c.b16 %v1540, %v1533
  %v1884 = vpack.c.b16 %v1548, %v1541
  %v1885 = vpack.c.b16 %v1549, %v1542
  %v1886 = vpack.c.b16 %v1550, %v1543
  %v1887 = vpack.c.b16 %v1551, %v1544
  %v1888 = vpack.c.b16 %v1552, %v1545
  %v1889 = vpack.c.b16 %v1553, %v1546
  %v1890 = vpack.c.b16 %v1554, %v1547
  %v2279 = vunpack.c.l.b16 %v399
  %v2280 = vunpack.c.l.b16 %v400
  %v2281 = vunpack.c.l.b16 %v401
  %v2282 = vunpack.c.l.b16 %v402
  %v2283 = vunpack.c.l.b16 %v403
  %v2284 = vunpack.c.l.b16 %v404
  %v2285 = vunpack.c.l.b16 %v405
  %v2286 = vunpack.c.l.b16 %v406
  %v2287 = vunpack.c.l.b16 %v407
  %v2288 = vunpack.c.l.b16 %v408
  %v2289 = vunpack.c.l.b16 %v409
  %v2290 = vunpack.c.l.b16 %v410
  %v2291 = vunpack.c.l.b16 %v411
  %v2292 = vunpack.c.l.b16 %v412
  %v2293 = vunpack.c.l.b16 %v413
  %v2294 = vunpack.c.l.b16 %v414
  %v2295 = vunpack.c.l.b16 %v415
  %v2296 = vunpack.c.l.b16 %v416
  %v2297 = vunpack.c.l.b16 %v417
  %v2298 = vunpack.c.l.b16 %v418
  %v2299 = vunpack.c.l.b16 %v419
  %v2300 = vunpack.c.l.b16 %v420
  %v2301 = vunpack.c.l.b16 %v421
  %v2302 = vunpack.c.l.b16 %v422
  %v2303 = vunpack.c.l.b16 %v423
  %v2304 = vunpack.c.l.b16 %v424
  %v2305 = vunpack.c.l.b16 %v425
  %v2306 = vunpack.c.l.b16 %v426
  %v2307 = vunpack.c.l.b16 %v427
  %v2308 = vunpack.c.l.b16 %v428
  %v2309 = vunpack.c.l.b16 %v429
  %v2310 = vunpack.c.l.b16 %v430
  %v2311 = vunpack.c.l.b16 %v431
  %v2312 = vunpack.c.l.b16 %v432
  %v2313 = vunpack.c.l.b16 %v433
  %v2314 = vunpack.c.l.b16 %v434
  %v2315 = vunpack.c.l.b16 %v435
  %v2316 = vunpack.c.l.b16 %v436
  %v2317 = vunpack.c.l.b16 %v437
  %v2318 = vunpack.c.l.b16 %v438
  %v2319 = vunpack.c.l.b16 %v439
  %v2320 = vunpack.c.l.b16 %v440
  %v2321 = vunpack.c.l.b16 %v441
  %v2322 = vunpack.c.l.b16 %v442
  %v2323 = vunpack.c.l.b16 %v443
  %v2324 = vunpack.c.l.b16 %v444
  %v2325 = vunpack.c.l.b16 %v445
  %v2326 = vunpack.c.l.b16 %v446
  %v2327 = vunpack.c.l.b16 %v447
  %v2328 = vunpack.c.l.b16 %v448
  %v2329 = vunpack.c.l.b16 %v449
  %v2330 = vunpack.c.l.b16 %v450
  %v2331 = vunpack.c.l.b16 %v451
  %v2332 = vunpack.c.l.b16 %v452
  %v2333 = vunpack.c.l.b16 %v453
  %v2334 = vunpack.c.l.b16 %v454
  %v2335 = vunpack.c.l.b16 %v455
  %v2336 = vunpack.c.l.b16 %v456
  %v2337 = vunpack.c.l.b16 %v457
  %v2338 = vunpack.c.l.b16 %v458
  %v2339 = vunpack.c.l.b16 %v459
  %v2340 = vunpack.c.l.b16 %v460
  %v2341 = vunpack.c.l.b16 %v461
  %v2342 = vunpack.c.l.b16 %v462
  %v2343 = vunpack.c.l.b16 %v463
  %v2344 = vunpack.c.l.b16 %v464
  %v2345 = vunpack.c.l.b16 %v465
  %v2346 = vunpack.c.l.b16 %v466
  %v2347 = vunpack.c.l.b16 %v467
  %v2348 = vunpack.c.l.b16 %v468
  %v2349 = vunpack.c.l.b16 %v469
  %v2350 = vunpack.c.l.b16 %v470
  %v2351 = vunpack.c.l.b16 %v471
  %v2352 = vunpack.c.l.b16 %v472
  %v2353 = vunpack.c.l.b16 %v473
  %v2354 = vunpack.c.l.b16 %v474
  %v2355 = vunpack.c.l.b16 %v475
  %v2356 = vunpack.c.l.b16 %v476
  %v2357 = vunpack.c.l.b16 %v477
  %v2358 = vunpack.c.l.b16 %v478
  %v2359 = vunpack.c.l.b16 %v479
  %v2360 = vunpack.c.l.b16 %v480
  %v2361 = vunpack.c.l.b16 %v481
  %v2362 = vunpack.c.l.b16 %v482
  %v2363 = vunpack.c.l.b16 %v483
  %v2364 = vunpack.c.l.b16 %v484
  %v2365 = vunpack.c.l.b16 %v485
  %v2366 = vunpack.c.l.b16 %v486
  %v2367 = vunpack.c.l.b16 %v487
  %v2368 = vunpack.c.l.b16 %v488
  %v2369 = vunpack.c.l.b16 %v489
  %v2370 = vunpack.c.l.b16 %v490
  %v2371 = vunpack.c.l.b16 %v491
  %v2372 = vunpack.c.l.b16 %v492
  %v2373 = vunpack.c.l.b16 %v493
  %v2374 = vunpack.c.l.b16 %v494
  %v2375 = vunpack.c.l.b16 %v495
  %v2376 = vunpack.c.l.b16 %v496
  %v2377 = vunpack.c.l.b16 %v497
  %v2378 = vunpack.c.l.b16 %v498
  %v2379 = vpack.c.b16 %v2280, %v2279
  %v2380 = vpack.c.b16 %v2282, %v2281
  %v2381 = vpack.c.b16 %v2284, %v2283
  %v2382 = vpack.c.b16 %v2286, %v2285
  %v2383 = vpack.c.b16 %v2288, %v2287
  %v2384 = vpack.c.b16 %v2290, %v2289
  %v2385 = vpack.c.b16 %v2292, %v2291
  %v2386 = vpack.c.b16 %v2294, %v2293
  %v2387 = vpack.c.b16 %v2296, %v2295
  %v2388 = vpack.c.b16 %v2298, %v2297
  %v2389 = vpack.c.b16 %v2300, %v2299
  %v2390 = vpack.c.b16 %v2302, %v2301
  %v2391 = vpack.c.b16 %v2304, %v2303
  %v2392 = vpack.c.b16 %v2306, %v2305
  %v2393 = vpack.c.b16 %v2308, %v2307
  %v2394 = vpack.c.b16 %v2310, %v2309
  %v2395 = vpack.c.b16 %v2312, %v2311
  %v2396 = vpack.c.b16 %v2314, %v2313
  %v2397 = vpack.c.b16 %v2316, %v2315
  %v2398 = vpack.c.b16 %v2318, %v2317
  %v2399 = vpack.c.b16 %v2320, %v2319
  %v2400 = vpack.c.b16 %v2322, %v2321
  %v2401 = vpack.c.b16 %v2324, %v2323
  %v2402 = vpack.c.b16 %v2326, %v2325
  %v2403 = vpack.c.b16 %v2328, %v2327
  %v2404 = vpack.c.b16 %v2330, %v2329
  %v2405 = vpack.c.b16 %v2332, %v2331
  %v2406 = vpack.c.b16 %v2334, %v2333
  %v2407 = vpack.c.b16 %v2336, %v2335
  %v2408 = vpack.c.b16 %v2338, %v2337
  %v2409 = vpack.c.b16 %v2340, %v2339
  %v2410 = vpack.c.b16 %v2342, %v2341
  %v2411 = vpack.c.b16 %v2344, %v2343
  %v2412 = vpack.c.b16 %v2346, %v2345
  %v2413 = vpack.c.b16 %v2348, %v2347
  %v2414 = vpack.c.b16 %v2350, %v2349
  %v2415 = vpack.c.b16 %v2352, %v2351
  %v2416 = vpack.c.b16 %v2354, %v2353
  %v2417 = vpack.c.b16 %v2356, %v2355
  %v2418 = vpack.c.b16 %v2358, %v2357
  %v2419 = vpack.c.b16 %v2360, %v2359
  %v2420 = vpack.c.b16 %v2362, %v2361
  %v2421 = vpack.c.b16 %v2364, %v2363
  %v2422 = vpack.c.b16 %v2366, %v2365
  %v2423 = vpack.c.b16 %v2368, %v2367
  %v2424 = vpack.c.b16 %v2370, %v2369
  %v2425 = vpack.c.b16 %v2372, %v2371
  %v2426 = vpack.c.b16 %v2374, %v2373
  %v2427 = vpack.c.b16 %v2376, %v2375
  %v2428 = vpack.c.b16 %v2378, %v2377
  %vm2479 = vcmask 261120
  %v2481 = vsel %vm2479, %v1561, 0
  %v2484 = vsel %vm2479, %v1568, 0
  %v2487 = vsel %vm2479, %v1575, 0
  %v2490 = vsel %vm2479, %v1582, 0
  %v2493 = vsel %vm2479, %v1589, 0
  %v2496 = vsel %vm2479, %v1596, 0
  %v2499 = vsel %vm2479, %v1603, 0
  %v2502 = vsel %vm2479, %v1610, 0
  %v2505 = vsel %vm2479, %v1617, 0
  %v2508 = vsel %vm2479, %v1624, 0
  %v2511 = vsel %vm2479, %v1631, 0
  %v2514 = vsel %vm2479, %v1638, 0
  %v2517 = vsel %vm2479, %v1645, 0
  %v2520 = vsel %vm2479, %v1652, 0
  %v2523 = vsel %vm2479, %v1659, 0
  %v2526 = vsel %vm2479, %v1666, 0
  %v2529 = vsel %vm2479, %v1673, 0
  %v2532 = vsel %vm2479, %v1680, 0
  %v2535 = vsel %vm2479, %v1687, 0
  %v2538 = vsel %vm2479, %v1694, 0
  %v2541 = vsel %vm2479, %v1701, 0
  %v2544 = vsel %vm2479, %v1708, 0
  %v2547 = vsel %vm2479, %v1715, 0
  %v2550 = vsel %vm2479, %v1722, 0
  %v2553 = vsel %vm2479, %v1729, 0
  %v2556 = vsel %vm2479, %v1736, 0
  %v2559 = vsel %vm2479, %v1743, 0
  %v2562 = vsel %vm2479, %v1750, 0
  %v2565 = vsel %vm2479, %v1757, 0
  %v2568 = vsel %vm2479, %v1764, 0
  %v2571 = vsel %vm2479, %v1771, 0
  %v2574 = vsel %vm2479, %v1778, 0
  %v2577 = vsel %vm2479, %v1785, 0
  %v2580 = vsel %vm2479, %v1792, 0
  %v2583 = vsel %vm2479, %v1799, 0
  %v2586 = vsel %vm2479, %v1806, 0
  %v2589 = vsel %vm2479, %v1813, 0
  %v2592 = vsel %vm2479, %v1820, 0
  %v2595 = vsel %vm2479, %v1827, 0
  %v2598 = vsel %vm2479, %v1834, 0
  %v2601 = vsel %vm2479, %v1841, 0
  %v2604 = vsel %vm2479, %v1848, 0
  %v2607 = vsel %vm2479, %v1855, 0
  %v2610 = vsel %vm2479, %v1862, 0
  %v2613 = vsel %vm2479, %v1869, 0
  %v2616 = vsel %vm2479, %v1876, 0
  %v2619 = vsel %vm2479, %v1883, 0
  %v2622 = vsel %vm2479, %v1890, 0
  %2624 = vmatprep.subr.bf16.mxu0 0
  %2625 = vmatpush1.bf16.msra.mxu0 %v2379
  %2626 = vmatprep.subr.bf16.mxu0 0
  %2627 = vmatpush1.bf16.msra.mxu0 %v2380
  %2628 = vmatprep.subr.bf16.mxu0 0
  %2629 = vmatpush1.bf16.msra.mxu0 %v2381
  %2630 = vmatprep.subr.bf16.mxu0 0
  %2631 = vmatpush1.bf16.msra.mxu0 %v2382
  %2632 = vmatprep.subr.bf16.mxu0 0
  %2633 = vmatpush1.bf16.msra.mxu0 %v2383
  %2634 = vmatprep.subr.bf16.mxu0 0
  %2635 = vmatpush1.bf16.msra.mxu0 %v2384
  %2636 = vmatprep.subr.bf16.mxu0 0
  %2637 = vmatpush1.bf16.msra.mxu0 %v2385
  %2638 = vmatprep.subr.bf16.mxu0 0
  %2639 = vmatpush1.bf16.msra.mxu0 %v2386
  %2640 = vmatprep.subr.bf16.mxu0 0
  %2641 = vmatpush1.bf16.msra.mxu0 %v2387
  %2642 = vmatprep.subr.bf16.mxu0 0
  %2643 = vmatpush1.bf16.msra.mxu0 %v2388
  %2644 = vmatprep.subr.bf16.mxu0 0
  %2645 = vmatpush1.bf16.msra.mxu0 %v2389
  %2646 = vmatprep.subr.bf16.mxu0 0
  %2647 = vmatpush1.bf16.msra.mxu0 %v2390
  %2648 = vmatprep.subr.bf16.mxu0 0
  %2649 = vmatpush1.bf16.msra.mxu0 %v2391
  %2650 = vmatprep.subr.bf16.mxu0 0
  %2651 = vmatpush1.bf16.msra.mxu0 %v2392
  %2652 = vmatprep.subr.bf16.mxu0 0
  %2653 = vmatpush1.bf16.msra.mxu0 %v2393
  %2654 = vmatprep.subr.bf16.mxu0 0
  %2655 = vmatpush1.bf16.msra.mxu0 %v2394
  %2656 = vmatprep.mubr.bf16.mxu0 %v1556
  %2657 = vmatmul.mubr.bf16.gmra.mrb[0].mxu0 %v1555
  %v2658 = vpop.f32.mrb[0].mxu0
  %v2659 = vadd.f32 0.0, %v2658
  %v2660 = vpop.f32.mrb[0].mxu0
  %v2661 = vpop.f32.mrb[0].mxu0
  %v2662 = vadd.f32 0.0, %v2661
  %v2663 = vpop.f32.mrb[0].mxu0
  %2664 = vmatprep.mubr.bf16.mxu0 %v1563
  %2665 = vmatmul.mubr.bf16.gmra.mrb[0].mxu0 %v1562
  %v2666 = vpop.f32.mrb[0].mxu0
  %v2667 = vadd.f32 0.0, %v2666
  %v2668 = vpop.f32.mrb[0].mxu0
  %v2669 = vpop.f32.mrb[0].mxu0
  %v2670 = vadd.f32 0.0, %v2669
  %v2671 = vpop.f32.mrb[0].mxu0
  %2672 = vmatprep.mubr.bf16.mxu0 %v1570
  %2673 = vmatmul.mubr.bf16.gmra.mrb[0].mxu0 %v1569
  %v2674 = vpop.f32.mrb[0].mxu0
  %v2675 = vadd.f32 0.0, %v2674
  %v2676 = vpop.f32.mrb[0].mxu0
  %v2677 = vpop.f32.mrb[0].mxu0
  %v2678 = vadd.f32 0.0, %v2677
  %v2679 = vpop.f32.mrb[0].mxu0
  %2680 = vmatprep.mubr.bf16.mxu0 %v1577
  %2681 = vmatmul.mubr.bf16.gmra.mrb[0].mxu0 %v1576
  %v2682 = vpop.f32.mrb[0].mxu0
  %v2683 = vadd.f32 0.0, %v2682
  %v2684 = vpop.f32.mrb[0].mxu0
  %v2685 = vpop.f32.mrb[0].mxu0
  %v2686 = vadd.f32 0.0, %v2685
  %v2687 = vpop.f32.mrb[0].mxu0
  %2688 = vmatprep.mubr.bf16.mxu0 %v1584
  %2689 = vmatmul.mubr.bf16.gmra.mrb[0].mxu0 %v1583
  %v2690 = vpop.f32.mrb[0].mxu0
  %v2691 = vadd.f32 0.0, %v2690
  %v2692 = vpop.f32.mrb[0].mxu0
  %v2693 = vpop.f32.mrb[0].mxu0
  %v2694 = vadd.f32 0.0, %v2693
  %v2695 = vpop.f32.mrb[0].mxu0
  %2696 = vmatprep.mubr.bf16.mxu0 %v1591
  %2697 = vmatmul.mubr.bf16.gmra.mrb[0].mxu0 %v1590
  %v2698 = vpop.f32.mrb[0].mxu0
  %v2699 = vadd.f32 0.0, %v2698
  %v2700 = vpop.f32.mrb[0].mxu0
  %v2701 = vpop.f32.mrb[0].mxu0
  %v2702 = vadd.f32 0.0, %v2701
  %v2703 = vpop.f32.mrb[0].mxu0
  %2704 = vmatprep.mubr.bf16.mxu0 %v1598
  %2705 = vmatmul.mubr.bf16.gmra.mrb[0].mxu0 %v1597
  %v2706 = vpop.f32.mrb[0].mxu0
  %v2707 = vadd.f32 0.0, %v2706
  %v2708 = vpop.f32.mrb[0].mxu0
  %v2709 = vpop.f32.mrb[0].mxu0
  %v2710 = vadd.f32 0.0, %v2709
  %v2711 = vpop.f32.mrb[0].mxu0
  %2712 = vmatprep.mubr.bf16.mxu0 %v1605
  %2713 = vmatmul.mubr.bf16.gmra.mrb[0].mxu0 %v1604
  %v2714 = vpop.f32.mrb[0].mxu0
  %v2715 = vadd.f32 0.0, %v2714
  %v2716 = vpop.f32.mrb[0].mxu0
  %v2717 = vpop.f32.mrb[0].mxu0
  %v2718 = vadd.f32 0.0, %v2717
  %v2719 = vpop.f32.mrb[0].mxu0
  %2720 = vmatprep.mubr.bf16.mxu0 %v1612
  %2721 = vmatmul.mubr.bf16.gmra.mrb[0].mxu0 %v1611
  %v2722 = vpop.f32.mrb[0].mxu0
  %v2723 = vadd.f32 0.0, %v2722
  %v2724 = vpop.f32.mrb[0].mxu0
  %v2725 = vpop.f32.mrb[0].mxu0
  %v2726 = vadd.f32 0.0, %v2725
  %v2727 = vpop.f32.mrb[0].mxu0
  %2728 = vmatprep.mubr.bf16.mxu0 %v1619
  %2729 = vmatmul.mubr.bf16.gmra.mrb[0].mxu0 %v1618
  %v2730 = vpop.f32.mrb[0].mxu0
  %v2731 = vadd.f32 0.0, %v2730
  %v2732 = vpop.f32.mrb[0].mxu0
  %v2733 = vpop.f32.mrb[0].mxu0
  %v2734 = vadd.f32 0.0, %v2733
  %v2735 = vpop.f32.mrb[0].mxu0
  %2736 = vmatprep.mubr.bf16.mxu0 %v1626
  %2737 = vmatmul.mubr.bf16.gmra.mrb[0].mxu0 %v1625
  %v2738 = vpop.f32.mrb[0].mxu0
  %v2739 = vadd.f32 0.0, %v2738
  %v2740 = vpop.f32.mrb[0].mxu0
  %v2741 = vpop.f32.mrb[0].mxu0
  %v2742 = vadd.f32 0.0, %v2741
  %v2743 = vpop.f32.mrb[0].mxu0
  %2744 = vmatprep.mubr.bf16.mxu0 %v1633
  %2745 = vmatmul.mubr.bf16.gmra.mrb[0].mxu0 %v1632
  %v2746 = vpop.f32.mrb[0].mxu0
  %v2747 = vadd.f32 0.0, %v2746
  %v2748 = vpop.f32.mrb[0].mxu0
  %v2749 = vpop.f32.mrb[0].mxu0
  %v2750 = vadd.f32 0.0, %v2749
  %v2751 = vpop.f32.mrb[0].mxu0
  %2752 = vmatprep.mubr.bf16.mxu0 %v1640
  %2753 = vmatmul.mubr.bf16.gmra.mrb[0].mxu0 %v1639
  %v2754 = vpop.f32.mrb[0].mxu0
  %v2755 = vadd.f32 0.0, %v2754
  %v2756 = vpop.f32.mrb[0].mxu0
  %v2757 = vpop.f32.mrb[0].mxu0
  %v2758 = vadd.f32 0.0, %v2757
  %v2759 = vpop.f32.mrb[0].mxu0
  %2760 = vmatprep.mubr.bf16.mxu0 %v1647
  %2761 = vmatmul.mubr.bf16.gmra.mrb[0].mxu0 %v1646
  %v2762 = vpop.f32.mrb[0].mxu0
  %v2763 = vadd.f32 0.0, %v2762
  %v2764 = vpop.f32.mrb[0].mxu0
  %v2765 = vpop.f32.mrb[0].mxu0
  %v2766 = vadd.f32 0.0, %v2765
  %v2767 = vpop.f32.mrb[0].mxu0
  %2768 = vmatprep.mubr.bf16.mxu0 %v1654
  %2769 = vmatmul.mubr.bf16.gmra.mrb[0].mxu0 %v1653
  %v2770 = vpop.f32.mrb[0].mxu0
  %v2771 = vadd.f32 0.0, %v2770
  %v2772 = vpop.f32.mrb[0].mxu0
  %v2773 = vpop.f32.mrb[0].mxu0
  %v2774 = vadd.f32 0.0, %v2773
  %v2775 = vpop.f32.mrb[0].mxu0
  %2776 = vmatprep.mubr.bf16.mxu0 %v1661
  %2777 = vmatmul.mubr.bf16.gmra.mrb[0].mxu0 %v1660
  %v2778 = vpop.f32.mrb[0].mxu0
  %v2779 = vadd.f32 0.0, %v2778
  %v2780 = vpop.f32.mrb[0].mxu0
  %v2781 = vpop.f32.mrb[0].mxu0
  %v2782 = vadd.f32 0.0, %v2781
  %v2783 = vpop.f32.mrb[0].mxu0
  %2784 = vmatprep.mubr.bf16.mxu0 %v1668
  %2785 = vmatmul.mubr.bf16.gmra.mrb[0].mxu0 %v1667
  %v2786 = vpop.f32.mrb[0].mxu0
  %v2787 = vadd.f32 0.0, %v2786
  %v2788 = vpop.f32.mrb[0].mxu0
  %v2789 = vpop.f32.mrb[0].mxu0
  %v2790 = vadd.f32 0.0, %v2789
  %v2791 = vpop.f32.mrb[0].mxu0
  %2792 = vmatprep.mubr.bf16.mxu0 %v1675
  %2793 = vmatmul.mubr.bf16.gmra.mrb[0].mxu0 %v1674
  %v2794 = vpop.f32.mrb[0].mxu0
  %v2795 = vadd.f32 0.0, %v2794
  %v2796 = vpop.f32.mrb[0].mxu0
  %v2797 = vpop.f32.mrb[0].mxu0
  %v2798 = vadd.f32 0.0, %v2797
  %v2799 = vpop.f32.mrb[0].mxu0
  %2800 = vmatprep.mubr.bf16.mxu0 %v1682
  %2801 = vmatmul.mubr.bf16.gmra.mrb[0].mxu0 %v1681
  %v2802 = vpop.f32.mrb[0].mxu0
  %v2803 = vadd.f32 0.0, %v2802
  %v2804 = vpop.f32.mrb[0].mxu0
  %v2805 = vpop.f32.mrb[0].mxu0
  %v2806 = vadd.f32 0.0, %v2805
  %v2807 = vpop.f32.mrb[0].mxu0
  %2808 = vmatprep.mubr.bf16.mxu0 %v1689
  %2809 = vmatmul.mubr.bf16.gmra.mrb[0].mxu0 %v1688
  %v2810 = vpop.f32.mrb[0].mxu0
  %v2811 = vadd.f32 0.0, %v2810
  %v2812 = vpop.f32.mrb[0].mxu0
  %v2813 = vpop.f32.mrb[0].mxu0
  %v2814 = vadd.f32 0.0, %v2813
  %v2815 = vpop.f32.mrb[0].mxu0
  %2816 = vmatprep.mubr.bf16.mxu0 %v1696
  %2817 = vmatmul.mubr.bf16.gmra.mrb[0].mxu0 %v1695
  %v2818 = vpop.f32.mrb[0].mxu0
  %v2819 = vadd.f32 0.0, %v2818
  %v2820 = vpop.f32.mrb[0].mxu0
  %v2821 = vpop.f32.mrb[0].mxu0
  %v2822 = vadd.f32 0.0, %v2821
  %v2823 = vpop.f32.mrb[0].mxu0
  %2824 = vmatprep.mubr.bf16.mxu0 %v1703
  %2825 = vmatmul.mubr.bf16.gmra.mrb[0].mxu0 %v1702
  %v2826 = vpop.f32.mrb[0].mxu0
  %v2827 = vadd.f32 0.0, %v2826
  %v2828 = vpop.f32.mrb[0].mxu0
  %v2829 = vpop.f32.mrb[0].mxu0
  %v2830 = vadd.f32 0.0, %v2829
  %v2831 = vpop.f32.mrb[0].mxu0
  %2832 = vmatprep.mubr.bf16.mxu0 %v1710
  %2833 = vmatmul.mubr.bf16.gmra.mrb[0].mxu0 %v1709
  %v2834 = vpop.f32.mrb[0].mxu0
  %v2835 = vadd.f32 0.0, %v2834
  %v2836 = vpop.f32.mrb[0].mxu0
  %v2837 = vpop.f32.mrb[0].mxu0
  %v2838 = vadd.f32 0.0, %v2837
  %v2839 = vpop.f32.mrb[0].mxu0
  %2840 = vmatprep.mubr.bf16.mxu0 %v1717
  %2841 = vmatmul.mubr.bf16.gmra.mrb[0].mxu0 %v1716
  %v2842 = vpop.f32.mrb[0].mxu0
  %v2843 = vadd.f32 0.0, %v2842
  %v2844 = vpop.f32.mrb[0].mxu0
  %v2845 = vpop.f32.mrb[0].mxu0
  %v2846 = vadd.f32 0.0, %v2845
  %v2847 = vpop.f32.mrb[0].mxu0
  %2848 = vmatprep.mubr.bf16.mxu0 %v1724
  %2849 = vmatmul.mubr.bf16.gmra.mrb[0].mxu0 %v1723
  %v2850 = vpop.f32.mrb[0].mxu0
  %v2851 = vadd.f32 0.0, %v2850
  %v2852 = vpop.f32.mrb[0].mxu0
  %v2853 = vpop.f32.mrb[0].mxu0
  %v2854 = vadd.f32 0.0, %v2853
  %v2855 = vpop.f32.mrb[0].mxu0
  %2856 = vmatprep.mubr.bf16.mxu0 %v1731
  %2857 = vmatmul.mubr.bf16.gmra.mrb[0].mxu0 %v1730
  %v2858 = vpop.f32.mrb[0].mxu0
  %v2859 = vadd.f32 0.0, %v2858
  %v2860 = vpop.f32.mrb[0].mxu0
  %v2861 = vpop.f32.mrb[0].mxu0
  %v2862 = vadd.f32 0.0, %v2861
  %v2863 = vpop.f32.mrb[0].mxu0
  %2864 = vmatprep.mubr.bf16.mxu0 %v1738
  %2865 = vmatmul.mubr.bf16.gmra.mrb[0].mxu0 %v1737
  %v2866 = vpop.f32.mrb[0].mxu0
  %v2867 = vadd.f32 0.0, %v2866
  %v2868 = vpop.f32.mrb[0].mxu0
  %v2869 = vpop.f32.mrb[0].mxu0
  %v2870 = vadd.f32 0.0, %v2869
  %v2871 = vpop.f32.mrb[0].mxu0
  %2872 = vmatprep.mubr.bf16.mxu0 %v1745
  %2873 = vmatmul.mubr.bf16.gmra.mrb[0].mxu0 %v1744
  %v2874 = vpop.f32.mrb[0].mxu0
  %v2875 = vadd.f32 0.0, %v2874
  %v2876 = vpop.f32.mrb[0].mxu0
  %v2877 = vpop.f32.mrb[0].mxu0
  %v2878 = vadd.f32 0.0, %v2877
  %v2879 = vpop.f32.mrb[0].mxu0
  %2880 = vmatprep.mubr.bf16.mxu0 %v1752
  %2881 = vmatmul.mubr.bf16.gmra.mrb[0].mxu0 %v1751
  %v2882 = vpop.f32.mrb[0].mxu0
  %v2883 = vadd.f32 0.0, %v2882
  %v2884 = vpop.f32.mrb[0].mxu0
  %v2885 = vpop.f32.mrb[0].mxu0
  %v2886 = vadd.f32 0.0, %v2885
  %v2887 = vpop.f32.mrb[0].mxu0
  %2888 = vmatprep.mubr.bf16.mxu0 %v1759
  %2889 = vmatmul.mubr.bf16.gmra.mrb[0].mxu0 %v1758
  %v2890 = vpop.f32.mrb[0].mxu0
  %v2891 = vadd.f32 0.0, %v2890
  %v2892 = vpop.f32.mrb[0].mxu0
  %v2893 = vpop.f32.mrb[0].mxu0
  %v2894 = vadd.f32 0.0, %v2893
  %v2895 = vpop.f32.mrb[0].mxu0
  %2896 = vmatprep.mubr.bf16.mxu0 %v1766
  %2897 = vmatmul.mubr.bf16.gmra.mrb[0].mxu0 %v1765
  %v2898 = vpop.f32.mrb[0].mxu0
  %v2899 = vadd.f32 0.0, %v2898
  %v2900 = vpop.f32.mrb[0].mxu0
  %v2901 = vpop.f32.mrb[0].mxu0
  %v2902 = vadd.f32 0.0, %v2901
  %v2903 = vpop.f32.mrb[0].mxu0
  %2904 = vmatprep.mubr.bf16.mxu0 %v1773
  %2905 = vmatmul.mubr.bf16.gmra.mrb[0].mxu0 %v1772
  %v2906 = vpop.f32.mrb[0].mxu0
  %v2907 = vadd.f32 0.0, %v2906
  %v2908 = vpop.f32.mrb[0].mxu0
  %v2909 = vpop.f32.mrb[0].mxu0
  %v2910 = vadd.f32 0.0, %v2909
  %v2911 = vpop.f32.mrb[0].mxu0
  %2912 = vmatprep.mubr.bf16.mxu0 %v1780
  %2913 = vmatmul.mubr.bf16.gmra.mrb[0].mxu0 %v1779
  %v2914 = vpop.f32.mrb[0].mxu0
  %v2915 = vadd.f32 0.0, %v2914
  %v2916 = vpop.f32.mrb[0].mxu0
  %v2917 = vpop.f32.mrb[0].mxu0
  %v2918 = vadd.f32 0.0, %v2917
  %v2919 = vpop.f32.mrb[0].mxu0
  %2920 = vmatprep.mubr.bf16.mxu0 %v1787
  %2921 = vmatmul.mubr.bf16.gmra.mrb[0].mxu0 %v1786
  %v2922 = vpop.f32.mrb[0].mxu0
  %v2923 = vadd.f32 0.0, %v2922
  %v2924 = vpop.f32.mrb[0].mxu0
  %v2925 = vpop.f32.mrb[0].mxu0
  %v2926 = vadd.f32 0.0, %v2925
  %v2927 = vpop.f32.mrb[0].mxu0
  %2928 = vmatprep.mubr.bf16.mxu0 %v1794
  %2929 = vmatmul.mubr.bf16.gmra.mrb[0].mxu0 %v1793
  %v2930 = vpop.f32.mrb[0].mxu0
  %v2931 = vadd.f32 0.0, %v2930
  %v2932 = vpop.f32.mrb[0].mxu0
  %v2933 = vpop.f32.mrb[0].mxu0
  %v2934 = vadd.f32 0.0, %v2933
  %v2935 = vpop.f32.mrb[0].mxu0
  %2936 = vmatprep.mubr.bf16.mxu0 %v1801
  %2937 = vmatmul.mubr.bf16.gmra.mrb[0].mxu0 %v1800
  %v2938 = vpop.f32.mrb[0].mxu0
  %v2939 = vadd.f32 0.0, %v2938
  %v2940 = vpop.f32.mrb[0].mxu0
  %v2941 = vpop.f32.mrb[0].mxu0
  %v2942 = vadd.f32 0.0, %v2941
  %v2943 = vpop.f32.mrb[0].mxu0
  %2944 = vmatprep.mubr.bf16.mxu0 %v1808
  %2945 = vmatmul.mubr.bf16.gmra.mrb[0].mxu0 %v1807
  %v2946 = vpop.f32.mrb[0].mxu0
  %v2947 = vadd.f32 0.0, %v2946
  %v2948 = vpop.f32.mrb[0].mxu0
  %v2949 = vpop.f32.mrb[0].mxu0
  %v2950 = vadd.f32 0.0, %v2949
  %v2951 = vpop.f32.mrb[0].mxu0
  %2952 = vmatprep.mubr.bf16.mxu0 %v1815
  %2953 = vmatmul.mubr.bf16.gmra.mrb[0].mxu0 %v1814
  %v2954 = vpop.f32.mrb[0].mxu0
  %v2955 = vadd.f32 0.0, %v2954
  %v2956 = vpop.f32.mrb[0].mxu0
  %v2957 = vpop.f32.mrb[0].mxu0
  %v2958 = vadd.f32 0.0, %v2957
  %v2959 = vpop.f32.mrb[0].mxu0
  %2960 = vmatprep.mubr.bf16.mxu0 %v1822
  %2961 = vmatmul.mubr.bf16.gmra.mrb[0].mxu0 %v1821
  %v2962 = vpop.f32.mrb[0].mxu0
  %v2963 = vadd.f32 0.0, %v2962
  %v2964 = vpop.f32.mrb[0].mxu0
  %v2965 = vpop.f32.mrb[0].mxu0
  %v2966 = vadd.f32 0.0, %v2965
  %v2967 = vpop.f32.mrb[0].mxu0
  %2968 = vmatprep.mubr.bf16.mxu0 %v1829
  %2969 = vmatmul.mubr.bf16.gmra.mrb[0].mxu0 %v1828
  %v2970 = vpop.f32.mrb[0].mxu0
  %v2971 = vadd.f32 0.0, %v2970
  %v2972 = vpop.f32.mrb[0].mxu0
  %v2973 = vpop.f32.mrb[0].mxu0
  %v2974 = vadd.f32 0.0, %v2973
  %v2975 = vpop.f32.mrb[0].mxu0
  %2976 = vmatprep.mubr.bf16.mxu0 %v1836
  %2977 = vmatmul.mubr.bf16.gmra.mrb[0].mxu0 %v1835
  %v2978 = vpop.f32.mrb[0].mxu0
  %v2979 = vadd.f32 0.0, %v2978
  %v2980 = vpop.f32.mrb[0].mxu0
  %v2981 = vpop.f32.mrb[0].mxu0
  %v2982 = vadd.f32 0.0, %v2981
  %v2983 = vpop.f32.mrb[0].mxu0
  %2984 = vmatprep.mubr.bf16.mxu0 %v1843
  %2985 = vmatmul.mubr.bf16.gmra.mrb[0].mxu0 %v1842
  %v2986 = vpop.f32.mrb[0].mxu0
  %v2987 = vadd.f32 0.0, %v2986
  %v2988 = vpop.f32.mrb[0].mxu0
  %v2989 = vpop.f32.mrb[0].mxu0
  %v2990 = vadd.f32 0.0, %v2989
  %v2991 = vpop.f32.mrb[0].mxu0
  %2992 = vmatprep.mubr.bf16.mxu0 %v1850
  %2993 = vmatmul.mubr.bf16.gmra.mrb[0].mxu0 %v1849
  %v2994 = vpop.f32.mrb[0].mxu0
  %v2995 = vadd.f32 0.0, %v2994
  %v2996 = vpop.f32.mrb[0].mxu0
  %v2997 = vpop.f32.mrb[0].mxu0
  %v2998 = vadd.f32 0.0, %v2997
  %v2999 = vpop.f32.mrb[0].mxu0
  %3000 = vmatprep.mubr.bf16.mxu0 %v1857
  %3001 = vmatmul.mubr.bf16.gmra.mrb[0].mxu0 %v1856
  %v3002 = vpop.f32.mrb[0].mxu0
  %v3003 = vadd.f32 0.0, %v3002
  %v3004 = vpop.f32.mrb[0].mxu0
  %v3005 = vpop.f32.mrb[0].mxu0
  %v3006 = vadd.f32 0.0, %v3005
  %v3007 = vpop.f32.mrb[0].mxu0
  %3008 = vmatprep.mubr.bf16.mxu0 %v1864
  %3009 = vmatmul.mubr.bf16.gmra.mrb[0].mxu0 %v1863
  %v3010 = vpop.f32.mrb[0].mxu0
  %v3011 = vadd.f32 0.0, %v3010
  %v3012 = vpop.f32.mrb[0].mxu0
  %v3013 = vpop.f32.mrb[0].mxu0
  %v3014 = vadd.f32 0.0, %v3013
  %v3015 = vpop.f32.mrb[0].mxu0
  %3016 = vmatprep.mubr.bf16.mxu0 %v1871
  %3017 = vmatmul.mubr.bf16.gmra.mrb[0].mxu0 %v1870
  %v3018 = vpop.f32.mrb[0].mxu0
  %v3019 = vadd.f32 0.0, %v3018
  %v3020 = vpop.f32.mrb[0].mxu0
  %v3021 = vpop.f32.mrb[0].mxu0
  %v3022 = vadd.f32 0.0, %v3021
  %v3023 = vpop.f32.mrb[0].mxu0
  %3024 = vmatprep.mubr.bf16.mxu0 %v1878
  %3025 = vmatmul.mubr.bf16.gmra.mrb[0].mxu0 %v1877
  %v3026 = vpop.f32.mrb[0].mxu0
  %v3027 = vadd.f32 0.0, %v3026
  %v3028 = vpop.f32.mrb[0].mxu0
  %v3029 = vpop.f32.mrb[0].mxu0
  %v3030 = vadd.f32 0.0, %v3029
  %v3031 = vpop.f32.mrb[0].mxu0
  %3032 = vmatprep.mubr.bf16.mxu0 %v1885
  %3033 = vmatmul.mubr.bf16.gmra.mrb[0].mxu0 %v1884
  %v3034 = vpop.f32.mrb[0].mxu0
  %v3035 = vadd.f32 0.0, %v3034
  %v3036 = vpop.f32.mrb[0].mxu0
  %v3037 = vpop.f32.mrb[0].mxu0
  %v3038 = vadd.f32 0.0, %v3037
  %v3039 = vpop.f32.mrb[0].mxu0
  %3040 = vdwg.mxu0
  %3041 = vmatprep.subr.bf16.mxu0 0
  %3042 = vmatpush1.bf16.msra.mxu0 %v2395
  %3043 = vmatprep.subr.bf16.mxu0 0
  %3044 = vmatpush1.bf16.msra.mxu0 %v2396
  %3045 = vmatprep.subr.bf16.mxu0 0
  %3046 = vmatpush1.bf16.msra.mxu0 %v2397
  %3047 = vmatprep.subr.bf16.mxu0 0
  %3048 = vmatpush1.bf16.msra.mxu0 %v2398
  %3049 = vmatprep.subr.bf16.mxu0 0
  %3050 = vmatpush1.bf16.msra.mxu0 %v2399
  %3051 = vmatprep.subr.bf16.mxu0 0
  %3052 = vmatpush1.bf16.msra.mxu0 %v2400
  %3053 = vmatprep.subr.bf16.mxu0 0
  %3054 = vmatpush1.bf16.msra.mxu0 %v2401
  %3055 = vmatprep.subr.bf16.mxu0 0
  %3056 = vmatpush1.bf16.msra.mxu0 %v2402
  %3057 = vmatprep.subr.bf16.mxu0 0
  %3058 = vmatpush1.bf16.msra.mxu0 %v2403
  %3059 = vmatprep.subr.bf16.mxu0 0
  %3060 = vmatpush1.bf16.msra.mxu0 %v2404
  %3061 = vmatprep.subr.bf16.mxu0 0
  %3062 = vmatpush1.bf16.msra.mxu0 %v2405
  %3063 = vmatprep.subr.bf16.mxu0 0
  %3064 = vmatpush1.bf16.msra.mxu0 %v2406
  %3065 = vmatprep.subr.bf16.mxu0 0
  %3066 = vmatpush1.bf16.msra.mxu0 %v2407
  %3067 = vmatprep.subr.bf16.mxu0 0
  %3068 = vmatpush1.bf16.msra.mxu0 %v2408
  %3069 = vmatprep.subr.bf16.mxu0 0
  %3070 = vmatpush1.bf16.msra.mxu0 %v2409
  %3071 = vmatprep.subr.bf16.mxu0 0
  %3072 = vmatpush1.bf16.msra.mxu0 %v2410
  %3073 = vmatprep.mubr.bf16.mxu0 %v1558
  %3074 = vmatmul.mubr.bf16.gmra.mrb[0].mxu0 %v1557
  %v3075 = vpop.f32.mrb[0].mxu0
  %v3076 = vadd.f32 %v2659, %v3075
  %v3077 = vpop.f32.mrb[0].mxu0
  %v3078 = vpop.f32.mrb[0].mxu0
  %v3079 = vadd.f32 %v2662, %v3078
  %v3080 = vpop.f32.mrb[0].mxu0
  %3081 = vmatprep.mubr.bf16.mxu0 %v1565
  %3082 = vmatmul.mubr.bf16.gmra.mrb[0].mxu0 %v1564
  %v3083 = vpop.f32.mrb[0].mxu0
  %v3084 = vadd.f32 %v2667, %v3083
  %v3085 = vpop.f32.mrb[0].mxu0
  %v3086 = vpop.f32.mrb[0].mxu0
  %v3087 = vadd.f32 %v2670, %v3086
  %v3088 = vpop.f32.mrb[0].mxu0
  %3089 = vmatprep.mubr.bf16.mxu0 %v1572
  %3090 = vmatmul.mubr.bf16.gmra.mrb[0].mxu0 %v1571
  %v3091 = vpop.f32.mrb[0].mxu0
  %v3092 = vadd.f32 %v2675, %v3091
  %v3093 = vpop.f32.mrb[0].mxu0
  %v3094 = vpop.f32.mrb[0].mxu0
  %v3095 = vadd.f32 %v2678, %v3094
  %v3096 = vpop.f32.mrb[0].mxu0
  %3097 = vmatprep.mubr.bf16.mxu0 %v1579
  %3098 = vmatmul.mubr.bf16.gmra.mrb[0].mxu0 %v1578
  %v3099 = vpop.f32.mrb[0].mxu0
  %v3100 = vadd.f32 %v2683, %v3099
  %v3101 = vpop.f32.mrb[0].mxu0
  %v3102 = vpop.f32.mrb[0].mxu0
  %v3103 = vadd.f32 %v2686, %v3102
  %v3104 = vpop.f32.mrb[0].mxu0
  %3105 = vmatprep.mubr.bf16.mxu0 %v1586
  %3106 = vmatmul.mubr.bf16.gmra.mrb[0].mxu0 %v1585
  %v3107 = vpop.f32.mrb[0].mxu0
  %v3108 = vadd.f32 %v2691, %v3107
  %v3109 = vpop.f32.mrb[0].mxu0
  %v3110 = vpop.f32.mrb[0].mxu0
  %v3111 = vadd.f32 %v2694, %v3110
  %v3112 = vpop.f32.mrb[0].mxu0
  %3113 = vmatprep.mubr.bf16.mxu0 %v1593
  %3114 = vmatmul.mubr.bf16.gmra.mrb[0].mxu0 %v1592
  %v3115 = vpop.f32.mrb[0].mxu0
  %v3116 = vadd.f32 %v2699, %v3115
  %v3117 = vpop.f32.mrb[0].mxu0
  %v3118 = vpop.f32.mrb[0].mxu0
  %v3119 = vadd.f32 %v2702, %v3118
  %v3120 = vpop.f32.mrb[0].mxu0
  %3121 = vmatprep.mubr.bf16.mxu0 %v1600
  %3122 = vmatmul.mubr.bf16.gmra.mrb[0].mxu0 %v1599
  %v3123 = vpop.f32.mrb[0].mxu0
  %v3124 = vadd.f32 %v2707, %v3123
  %v3125 = vpop.f32.mrb[0].mxu0
  %v3126 = vpop.f32.mrb[0].mxu0
  %v3127 = vadd.f32 %v2710, %v3126
  %v3128 = vpop.f32.mrb[0].mxu0
  %3129 = vmatprep.mubr.bf16.mxu0 %v1607
  %3130 = vmatmul.mubr.bf16.gmra.mrb[0].mxu0 %v1606
  %v3131 = vpop.f32.mrb[0].mxu0
  %v3132 = vadd.f32 %v2715, %v3131
  %v3133 = vpop.f32.mrb[0].mxu0
  %v3134 = vpop.f32.mrb[0].mxu0
  %v3135 = vadd.f32 %v2718, %v3134
  %v3136 = vpop.f32.mrb[0].mxu0
  %3137 = vmatprep.mubr.bf16.mxu0 %v1614
  %3138 = vmatmul.mubr.bf16.gmra.mrb[0].mxu0 %v1613
  %v3139 = vpop.f32.mrb[0].mxu0
  %v3140 = vadd.f32 %v2723, %v3139
  %v3141 = vpop.f32.mrb[0].mxu0
  %v3142 = vpop.f32.mrb[0].mxu0
  %v3143 = vadd.f32 %v2726, %v3142
  %v3144 = vpop.f32.mrb[0].mxu0
  %3145 = vmatprep.mubr.bf16.mxu0 %v1621
  %3146 = vmatmul.mubr.bf16.gmra.mrb[0].mxu0 %v1620
  %v3147 = vpop.f32.mrb[0].mxu0
  %v3148 = vadd.f32 %v2731, %v3147
  %v3149 = vpop.f32.mrb[0].mxu0
  %v3150 = vpop.f32.mrb[0].mxu0
  %v3151 = vadd.f32 %v2734, %v3150
  %v3152 = vpop.f32.mrb[0].mxu0
  %3153 = vmatprep.mubr.bf16.mxu0 %v1628
  %3154 = vmatmul.mubr.bf16.gmra.mrb[0].mxu0 %v1627
  %v3155 = vpop.f32.mrb[0].mxu0
  %v3156 = vadd.f32 %v2739, %v3155
  %v3157 = vpop.f32.mrb[0].mxu0
  %v3158 = vpop.f32.mrb[0].mxu0
  %v3159 = vadd.f32 %v2742, %v3158
  %v3160 = vpop.f32.mrb[0].mxu0
  %3161 = vmatprep.mubr.bf16.mxu0 %v1635
  %3162 = vmatmul.mubr.bf16.gmra.mrb[0].mxu0 %v1634
  %v3163 = vpop.f32.mrb[0].mxu0
  %v3164 = vadd.f32 %v2747, %v3163
  %v3165 = vpop.f32.mrb[0].mxu0
  %v3166 = vpop.f32.mrb[0].mxu0
  %v3167 = vadd.f32 %v2750, %v3166
  %v3168 = vpop.f32.mrb[0].mxu0
  %3169 = vmatprep.mubr.bf16.mxu0 %v1642
  %3170 = vmatmul.mubr.bf16.gmra.mrb[0].mxu0 %v1641
  %v3171 = vpop.f32.mrb[0].mxu0
  %v3172 = vadd.f32 %v2755, %v3171
  %v3173 = vpop.f32.mrb[0].mxu0
  %v3174 = vpop.f32.mrb[0].mxu0
  %v3175 = vadd.f32 %v2758, %v3174
  %v3176 = vpop.f32.mrb[0].mxu0
  %3177 = vmatprep.mubr.bf16.mxu0 %v1649
  %3178 = vmatmul.mubr.bf16.gmra.mrb[0].mxu0 %v1648
  %v3179 = vpop.f32.mrb[0].mxu0
  %v3180 = vadd.f32 %v2763, %v3179
  %v3181 = vpop.f32.mrb[0].mxu0
  %v3182 = vpop.f32.mrb[0].mxu0
  %v3183 = vadd.f32 %v2766, %v3182
  %v3184 = vpop.f32.mrb[0].mxu0
  %3185 = vmatprep.mubr.bf16.mxu0 %v1656
  %3186 = vmatmul.mubr.bf16.gmra.mrb[0].mxu0 %v1655
  %v3187 = vpop.f32.mrb[0].mxu0
  %v3188 = vadd.f32 %v2771, %v3187
  %v3189 = vpop.f32.mrb[0].mxu0
  %v3190 = vpop.f32.mrb[0].mxu0
  %v3191 = vadd.f32 %v2774, %v3190
  %v3192 = vpop.f32.mrb[0].mxu0
  %3193 = vmatprep.mubr.bf16.mxu0 %v1663
  %3194 = vmatmul.mubr.bf16.gmra.mrb[0].mxu0 %v1662
  %v3195 = vpop.f32.mrb[0].mxu0
  %v3196 = vadd.f32 %v2779, %v3195
  %v3197 = vpop.f32.mrb[0].mxu0
  %v3198 = vpop.f32.mrb[0].mxu0
  %v3199 = vadd.f32 %v2782, %v3198
  %v3200 = vpop.f32.mrb[0].mxu0
  %3201 = vmatprep.mubr.bf16.mxu0 %v1670
  %3202 = vmatmul.mubr.bf16.gmra.mrb[0].mxu0 %v1669
  %v3203 = vpop.f32.mrb[0].mxu0
  %v3204 = vadd.f32 %v2787, %v3203
  %v3205 = vpop.f32.mrb[0].mxu0
  %v3206 = vpop.f32.mrb[0].mxu0
  %v3207 = vadd.f32 %v2790, %v3206
  %v3208 = vpop.f32.mrb[0].mxu0
  %3209 = vmatprep.mubr.bf16.mxu0 %v1677
  %3210 = vmatmul.mubr.bf16.gmra.mrb[0].mxu0 %v1676
  %v3211 = vpop.f32.mrb[0].mxu0
  %v3212 = vadd.f32 %v2795, %v3211
  %v3213 = vpop.f32.mrb[0].mxu0
  %v3214 = vpop.f32.mrb[0].mxu0
  %v3215 = vadd.f32 %v2798, %v3214
  %v3216 = vpop.f32.mrb[0].mxu0
  %3217 = vmatprep.mubr.bf16.mxu0 %v1684
  %3218 = vmatmul.mubr.bf16.gmra.mrb[0].mxu0 %v1683
  %v3219 = vpop.f32.mrb[0].mxu0
  %v3220 = vadd.f32 %v2803, %v3219
  %v3221 = vpop.f32.mrb[0].mxu0
  %v3222 = vpop.f32.mrb[0].mxu0
  %v3223 = vadd.f32 %v2806, %v3222
  %v3224 = vpop.f32.mrb[0].mxu0
  %3225 = vmatprep.mubr.bf16.mxu0 %v1691
  %3226 = vmatmul.mubr.bf16.gmra.mrb[0].mxu0 %v1690
  %v3227 = vpop.f32.mrb[0].mxu0
  %v3228 = vadd.f32 %v2811, %v3227
  %v3229 = vpop.f32.mrb[0].mxu0
  %v3230 = vpop.f32.mrb[0].mxu0
  %v3231 = vadd.f32 %v2814, %v3230
  %v3232 = vpop.f32.mrb[0].mxu0
  %3233 = vmatprep.mubr.bf16.mxu0 %v1698
  %3234 = vmatmul.mubr.bf16.gmra.mrb[0].mxu0 %v1697
  %v3235 = vpop.f32.mrb[0].mxu0
  %v3236 = vadd.f32 %v2819, %v3235
  %v3237 = vpop.f32.mrb[0].mxu0
  %v3238 = vpop.f32.mrb[0].mxu0
  %v3239 = vadd.f32 %v2822, %v3238
  %v3240 = vpop.f32.mrb[0].mxu0
  %3241 = vmatprep.mubr.bf16.mxu0 %v1705
  %3242 = vmatmul.mubr.bf16.gmra.mrb[0].mxu0 %v1704
  %v3243 = vpop.f32.mrb[0].mxu0
  %v3244 = vadd.f32 %v2827, %v3243
  %v3245 = vpop.f32.mrb[0].mxu0
  %v3246 = vpop.f32.mrb[0].mxu0
  %v3247 = vadd.f32 %v2830, %v3246
  %v3248 = vpop.f32.mrb[0].mxu0
  %3249 = vmatprep.mubr.bf16.mxu0 %v1712
  %3250 = vmatmul.mubr.bf16.gmra.mrb[0].mxu0 %v1711
  %v3251 = vpop.f32.mrb[0].mxu0
  %v3252 = vadd.f32 %v2835, %v3251
  %v3253 = vpop.f32.mrb[0].mxu0
  %v3254 = vpop.f32.mrb[0].mxu0
  %v3255 = vadd.f32 %v2838, %v3254
  %v3256 = vpop.f32.mrb[0].mxu0
  %3257 = vmatprep.mubr.bf16.mxu0 %v1719
  %3258 = vmatmul.mubr.bf16.gmra.mrb[0].mxu0 %v1718
  %v3259 = vpop.f32.mrb[0].mxu0
  %v3260 = vadd.f32 %v2843, %v3259
  %v3261 = vpop.f32.mrb[0].mxu0
  %v3262 = vpop.f32.mrb[0].mxu0
  %v3263 = vadd.f32 %v2846, %v3262
  %v3264 = vpop.f32.mrb[0].mxu0
  %3265 = vmatprep.mubr.bf16.mxu0 %v1726
  %3266 = vmatmul.mubr.bf16.gmra.mrb[0].mxu0 %v1725
  %v3267 = vpop.f32.mrb[0].mxu0
  %v3268 = vadd.f32 %v2851, %v3267
  %v3269 = vpop.f32.mrb[0].mxu0
  %v3270 = vpop.f32.mrb[0].mxu0
  %v3271 = vadd.f32 %v2854, %v3270
  %v3272 = vpop.f32.mrb[0].mxu0
  %3273 = vmatprep.mubr.bf16.mxu0 %v1733
  %3274 = vmatmul.mubr.bf16.gmra.mrb[0].mxu0 %v1732
  %v3275 = vpop.f32.mrb[0].mxu0
  %v3276 = vadd.f32 %v2859, %v3275
  %v3277 = vpop.f32.mrb[0].mxu0
  %v3278 = vpop.f32.mrb[0].mxu0
  %v3279 = vadd.f32 %v2862, %v3278
  %v3280 = vpop.f32.mrb[0].mxu0
  %3281 = vmatprep.mubr.bf16.mxu0 %v1740
  %3282 = vmatmul.mubr.bf16.gmra.mrb[0].mxu0 %v1739
  %v3283 = vpop.f32.mrb[0].mxu0
  %v3284 = vadd.f32 %v2867, %v3283
  %v3285 = vpop.f32.mrb[0].mxu0
  %v3286 = vpop.f32.mrb[0].mxu0
  %v3287 = vadd.f32 %v2870, %v3286
  %v3288 = vpop.f32.mrb[0].mxu0
  %3289 = vmatprep.mubr.bf16.mxu0 %v1747
  %3290 = vmatmul.mubr.bf16.gmra.mrb[0].mxu0 %v1746
  %v3291 = vpop.f32.mrb[0].mxu0
  %v3292 = vadd.f32 %v2875, %v3291
  %v3293 = vpop.f32.mrb[0].mxu0
  %v3294 = vpop.f32.mrb[0].mxu0
  %v3295 = vadd.f32 %v2878, %v3294
  %v3296 = vpop.f32.mrb[0].mxu0
  %3297 = vmatprep.mubr.bf16.mxu0 %v1754
  %3298 = vmatmul.mubr.bf16.gmra.mrb[0].mxu0 %v1753
  %v3299 = vpop.f32.mrb[0].mxu0
  %v3300 = vadd.f32 %v2883, %v3299
  %v3301 = vpop.f32.mrb[0].mxu0
  %v3302 = vpop.f32.mrb[0].mxu0
  %v3303 = vadd.f32 %v2886, %v3302
  %v3304 = vpop.f32.mrb[0].mxu0
  %3305 = vmatprep.mubr.bf16.mxu0 %v1761
  %3306 = vmatmul.mubr.bf16.gmra.mrb[0].mxu0 %v1760
  %v3307 = vpop.f32.mrb[0].mxu0
  %v3308 = vadd.f32 %v2891, %v3307
  %v3309 = vpop.f32.mrb[0].mxu0
  %v3310 = vpop.f32.mrb[0].mxu0
  %v3311 = vadd.f32 %v2894, %v3310
  %v3312 = vpop.f32.mrb[0].mxu0
  %3313 = vmatprep.mubr.bf16.mxu0 %v1768
  %3314 = vmatmul.mubr.bf16.gmra.mrb[0].mxu0 %v1767
  %v3315 = vpop.f32.mrb[0].mxu0
  %v3316 = vadd.f32 %v2899, %v3315
  %v3317 = vpop.f32.mrb[0].mxu0
  %v3318 = vpop.f32.mrb[0].mxu0
  %v3319 = vadd.f32 %v2902, %v3318
  %v3320 = vpop.f32.mrb[0].mxu0
  %3321 = vmatprep.mubr.bf16.mxu0 %v1775
  %3322 = vmatmul.mubr.bf16.gmra.mrb[0].mxu0 %v1774
  %v3323 = vpop.f32.mrb[0].mxu0
  %v3324 = vadd.f32 %v2907, %v3323
  %v3325 = vpop.f32.mrb[0].mxu0
  %v3326 = vpop.f32.mrb[0].mxu0
  %v3327 = vadd.f32 %v2910, %v3326
  %v3328 = vpop.f32.mrb[0].mxu0
  %3329 = vmatprep.mubr.bf16.mxu0 %v1782
  %3330 = vmatmul.mubr.bf16.gmra.mrb[0].mxu0 %v1781
  %v3331 = vpop.f32.mrb[0].mxu0
  %v3332 = vadd.f32 %v2915, %v3331
  %v3333 = vpop.f32.mrb[0].mxu0
  %v3334 = vpop.f32.mrb[0].mxu0
  %v3335 = vadd.f32 %v2918, %v3334
  %v3336 = vpop.f32.mrb[0].mxu0
  %3337 = vmatprep.mubr.bf16.mxu0 %v1789
  %3338 = vmatmul.mubr.bf16.gmra.mrb[0].mxu0 %v1788
  %v3339 = vpop.f32.mrb[0].mxu0
  %v3340 = vadd.f32 %v2923, %v3339
  %v3341 = vpop.f32.mrb[0].mxu0
  %v3342 = vpop.f32.mrb[0].mxu0
  %v3343 = vadd.f32 %v2926, %v3342
  %v3344 = vpop.f32.mrb[0].mxu0
  %3345 = vmatprep.mubr.bf16.mxu0 %v1796
  %3346 = vmatmul.mubr.bf16.gmra.mrb[0].mxu0 %v1795
  %v3347 = vpop.f32.mrb[0].mxu0
  %v3348 = vadd.f32 %v2931, %v3347
  %v3349 = vpop.f32.mrb[0].mxu0
  %v3350 = vpop.f32.mrb[0].mxu0
  %v3351 = vadd.f32 %v2934, %v3350
  %v3352 = vpop.f32.mrb[0].mxu0
  %3353 = vmatprep.mubr.bf16.mxu0 %v1803
  %3354 = vmatmul.mubr.bf16.gmra.mrb[0].mxu0 %v1802
  %v3355 = vpop.f32.mrb[0].mxu0
  %v3356 = vadd.f32 %v2939, %v3355
  %v3357 = vpop.f32.mrb[0].mxu0
  %v3358 = vpop.f32.mrb[0].mxu0
  %v3359 = vadd.f32 %v2942, %v3358
  %v3360 = vpop.f32.mrb[0].mxu0
  %3361 = vmatprep.mubr.bf16.mxu0 %v1810
  %3362 = vmatmul.mubr.bf16.gmra.mrb[0].mxu0 %v1809
  %v3363 = vpop.f32.mrb[0].mxu0
  %v3364 = vadd.f32 %v2947, %v3363
  %v3365 = vpop.f32.mrb[0].mxu0
  %v3366 = vpop.f32.mrb[0].mxu0
  %v3367 = vadd.f32 %v2950, %v3366
  %v3368 = vpop.f32.mrb[0].mxu0
  %3369 = vmatprep.mubr.bf16.mxu0 %v1817
  %3370 = vmatmul.mubr.bf16.gmra.mrb[0].mxu0 %v1816
  %v3371 = vpop.f32.mrb[0].mxu0
  %v3372 = vadd.f32 %v2955, %v3371
  %v3373 = vpop.f32.mrb[0].mxu0
  %v3374 = vpop.f32.mrb[0].mxu0
  %v3375 = vadd.f32 %v2958, %v3374
  %v3376 = vpop.f32.mrb[0].mxu0
  %3377 = vmatprep.mubr.bf16.mxu0 %v1824
  %3378 = vmatmul.mubr.bf16.gmra.mrb[0].mxu0 %v1823
  %v3379 = vpop.f32.mrb[0].mxu0
  %v3380 = vadd.f32 %v2963, %v3379
  %v3381 = vpop.f32.mrb[0].mxu0
  %v3382 = vpop.f32.mrb[0].mxu0
  %v3383 = vadd.f32 %v2966, %v3382
  %v3384 = vpop.f32.mrb[0].mxu0
  %3385 = vmatprep.mubr.bf16.mxu0 %v1831
  %3386 = vmatmul.mubr.bf16.gmra.mrb[0].mxu0 %v1830
  %v3387 = vpop.f32.mrb[0].mxu0
  %v3388 = vadd.f32 %v2971, %v3387
  %v3389 = vpop.f32.mrb[0].mxu0
  %v3390 = vpop.f32.mrb[0].mxu0
  %v3391 = vadd.f32 %v2974, %v3390
  %v3392 = vpop.f32.mrb[0].mxu0
  %3393 = vmatprep.mubr.bf16.mxu0 %v1838
  %3394 = vmatmul.mubr.bf16.gmra.mrb[0].mxu0 %v1837
  %v3395 = vpop.f32.mrb[0].mxu0
  %v3396 = vadd.f32 %v2979, %v3395
  %v3397 = vpop.f32.mrb[0].mxu0
  %v3398 = vpop.f32.mrb[0].mxu0
  %v3399 = vadd.f32 %v2982, %v3398
  %v3400 = vpop.f32.mrb[0].mxu0
  %3401 = vmatprep.mubr.bf16.mxu0 %v1845
  %3402 = vmatmul.mubr.bf16.gmra.mrb[0].mxu0 %v1844
  %v3403 = vpop.f32.mrb[0].mxu0
  %v3404 = vadd.f32 %v2987, %v3403
  %v3405 = vpop.f32.mrb[0].mxu0
  %v3406 = vpop.f32.mrb[0].mxu0
  %v3407 = vadd.f32 %v2990, %v3406
  %v3408 = vpop.f32.mrb[0].mxu0
  %3409 = vmatprep.mubr.bf16.mxu0 %v1852
  %3410 = vmatmul.mubr.bf16.gmra.mrb[0].mxu0 %v1851
  %v3411 = vpop.f32.mrb[0].mxu0
  %v3412 = vadd.f32 %v2995, %v3411
  %v3413 = vpop.f32.mrb[0].mxu0
  %v3414 = vpop.f32.mrb[0].mxu0
  %v3415 = vadd.f32 %v2998, %v3414
  %v3416 = vpop.f32.mrb[0].mxu0
  %3417 = vmatprep.mubr.bf16.mxu0 %v1859
  %3418 = vmatmul.mubr.bf16.gmra.mrb[0].mxu0 %v1858
  %v3419 = vpop.f32.mrb[0].mxu0
  %v3420 = vadd.f32 %v3003, %v3419
  %v3421 = vpop.f32.mrb[0].mxu0
  %v3422 = vpop.f32.mrb[0].mxu0
  %v3423 = vadd.f32 %v3006, %v3422
  %v3424 = vpop.f32.mrb[0].mxu0
  %3425 = vmatprep.mubr.bf16.mxu0 %v1866
  %3426 = vmatmul.mubr.bf16.gmra.mrb[0].mxu0 %v1865
  %v3427 = vpop.f32.mrb[0].mxu0
  %v3428 = vadd.f32 %v3011, %v3427
  %v3429 = vpop.f32.mrb[0].mxu0
  %v3430 = vpop.f32.mrb[0].mxu0
  %v3431 = vadd.f32 %v3014, %v3430
  %v3432 = vpop.f32.mrb[0].mxu0
  %3433 = vmatprep.mubr.bf16.mxu0 %v1873
  %3434 = vmatmul.mubr.bf16.gmra.mrb[0].mxu0 %v1872
  %v3435 = vpop.f32.mrb[0].mxu0
  %v3436 = vadd.f32 %v3019, %v3435
  %v3437 = vpop.f32.mrb[0].mxu0
  %v3438 = vpop.f32.mrb[0].mxu0
  %v3439 = vadd.f32 %v3022, %v3438
  %v3440 = vpop.f32.mrb[0].mxu0
  %3441 = vmatprep.mubr.bf16.mxu0 %v1880
  %3442 = vmatmul.mubr.bf16.gmra.mrb[0].mxu0 %v1879
  %v3443 = vpop.f32.mrb[0].mxu0
  %v3444 = vadd.f32 %v3027, %v3443
  %v3445 = vpop.f32.mrb[0].mxu0
  %v3446 = vpop.f32.mrb[0].mxu0
  %v3447 = vadd.f32 %v3030, %v3446
  %v3448 = vpop.f32.mrb[0].mxu0
  %3449 = vmatprep.mubr.bf16.mxu0 %v1887
  %3450 = vmatmul.mubr.bf16.gmra.mrb[0].mxu0 %v1886
  %v3451 = vpop.f32.mrb[0].mxu0
  %v3452 = vadd.f32 %v3035, %v3451
  %v3453 = vpop.f32.mrb[0].mxu0
  %v3454 = vpop.f32.mrb[0].mxu0
  %v3455 = vadd.f32 %v3038, %v3454
  %v3456 = vpop.f32.mrb[0].mxu0
  %3457 = vdwg.mxu0
  %3458 = vmatprep.subr.bf16.mxu0 0
  %3459 = vmatpush1.bf16.msra.mxu0 %v2411
  %3460 = vmatprep.subr.bf16.mxu0 0
  %3461 = vmatpush1.bf16.msra.mxu0 %v2412
  %3462 = vmatprep.subr.bf16.mxu0 0
  %3463 = vmatpush1.bf16.msra.mxu0 %v2413
  %3464 = vmatprep.subr.bf16.mxu0 0
  %3465 = vmatpush1.bf16.msra.mxu0 %v2414
  %3466 = vmatprep.subr.bf16.mxu0 0
  %3467 = vmatpush1.bf16.msra.mxu0 %v2415
  %3468 = vmatprep.subr.bf16.mxu0 0
  %3469 = vmatpush1.bf16.msra.mxu0 %v2416
  %3470 = vmatprep.subr.bf16.mxu0 0
  %3471 = vmatpush1.bf16.msra.mxu0 %v2417
  %3472 = vmatprep.subr.bf16.mxu0 0
  %3473 = vmatpush1.bf16.msra.mxu0 %v2418
  %3474 = vmatprep.subr.bf16.mxu0 0
  %3475 = vmatpush1.bf16.msra.mxu0 %v2419
  %3476 = vmatprep.subr.bf16.mxu0 0
  %3477 = vmatpush1.bf16.msra.mxu0 %v2420
  %3478 = vmatprep.subr.bf16.mxu0 0
  %3479 = vmatpush1.bf16.msra.mxu0 %v2421
  %3480 = vmatprep.subr.bf16.mxu0 0
  %3481 = vmatpush1.bf16.msra.mxu0 %v2422
  %3482 = vmatprep.subr.bf16.mxu0 0
  %3483 = vmatpush1.bf16.msra.mxu0 %v2423
  %3484 = vmatprep.subr.bf16.mxu0 0
  %3485 = vmatpush1.bf16.msra.mxu0 %v2424
  %3486 = vmatprep.subr.bf16.mxu0 0
  %3487 = vmatpush1.bf16.msra.mxu0 %v2425
  %3488 = vmatprep.subr.bf16.mxu0 0
  %3489 = vmatpush1.bf16.msra.mxu0 %v2426
  %3490 = vmatprep.mubr.bf16.mxu0 %v1560
  %3491 = vmatmul.mubr.bf16.gmra.mrb[0].mxu0 %v1559
  %v3492 = vpop.f32.mrb[0].mxu0
  %v3493 = vadd.f32 %v3076, %v3492
  %v3494 = vpop.f32.mrb[0].mxu0
  %v3495 = vpop.f32.mrb[0].mxu0
  %v3496 = vadd.f32 %v3079, %v3495
  %v3497 = vpop.f32.mrb[0].mxu0
  %3498 = vmatprep.mubr.bf16.mxu0 %v1567
  %3499 = vmatmul.mubr.bf16.gmra.mrb[0].mxu0 %v1566
  %v3500 = vpop.f32.mrb[0].mxu0
  %v3501 = vadd.f32 %v3084, %v3500
  %v3502 = vpop.f32.mrb[0].mxu0
  %v3503 = vpop.f32.mrb[0].mxu0
  %v3504 = vadd.f32 %v3087, %v3503
  %v3505 = vpop.f32.mrb[0].mxu0
  %3506 = vmatprep.mubr.bf16.mxu0 %v1574
  %3507 = vmatmul.mubr.bf16.gmra.mrb[0].mxu0 %v1573
  %v3508 = vpop.f32.mrb[0].mxu0
  %v3509 = vadd.f32 %v3092, %v3508
  %v3510 = vpop.f32.mrb[0].mxu0
  %v3511 = vpop.f32.mrb[0].mxu0
  %v3512 = vadd.f32 %v3095, %v3511
  %v3513 = vpop.f32.mrb[0].mxu0
  %3514 = vmatprep.mubr.bf16.mxu0 %v1581
  %3515 = vmatmul.mubr.bf16.gmra.mrb[0].mxu0 %v1580
  %v3516 = vpop.f32.mrb[0].mxu0
  %v3517 = vadd.f32 %v3100, %v3516
  %v3518 = vpop.f32.mrb[0].mxu0
  %v3519 = vpop.f32.mrb[0].mxu0
  %v3520 = vadd.f32 %v3103, %v3519
  %v3521 = vpop.f32.mrb[0].mxu0
  %3522 = vmatprep.mubr.bf16.mxu0 %v1588
  %3523 = vmatmul.mubr.bf16.gmra.mrb[0].mxu0 %v1587
  %v3524 = vpop.f32.mrb[0].mxu0
  %v3525 = vadd.f32 %v3108, %v3524
  %v3526 = vpop.f32.mrb[0].mxu0
  %v3527 = vpop.f32.mrb[0].mxu0
  %v3528 = vadd.f32 %v3111, %v3527
  %v3529 = vpop.f32.mrb[0].mxu0
  %3530 = vmatprep.mubr.bf16.mxu0 %v1595
  %3531 = vmatmul.mubr.bf16.gmra.mrb[0].mxu0 %v1594
  %v3532 = vpop.f32.mrb[0].mxu0
  %v3533 = vadd.f32 %v3116, %v3532
  %v3534 = vpop.f32.mrb[0].mxu0
  %v3535 = vpop.f32.mrb[0].mxu0
  %v3536 = vadd.f32 %v3119, %v3535
  %v3537 = vpop.f32.mrb[0].mxu0
  %3538 = vmatprep.mubr.bf16.mxu0 %v1602
  %3539 = vmatmul.mubr.bf16.gmra.mrb[0].mxu0 %v1601
  %v3540 = vpop.f32.mrb[0].mxu0
  %v3541 = vadd.f32 %v3124, %v3540
  %v3542 = vpop.f32.mrb[0].mxu0
  %v3543 = vpop.f32.mrb[0].mxu0
  %v3544 = vadd.f32 %v3127, %v3543
  %v3545 = vpop.f32.mrb[0].mxu0
  %3546 = vmatprep.mubr.bf16.mxu0 %v1609
  %3547 = vmatmul.mubr.bf16.gmra.mrb[0].mxu0 %v1608
  %v3548 = vpop.f32.mrb[0].mxu0
  %v3549 = vadd.f32 %v3132, %v3548
  %v3550 = vpop.f32.mrb[0].mxu0
  %v3551 = vpop.f32.mrb[0].mxu0
  %v3552 = vadd.f32 %v3135, %v3551
  %v3553 = vpop.f32.mrb[0].mxu0
  %3554 = vmatprep.mubr.bf16.mxu0 %v1616
  %3555 = vmatmul.mubr.bf16.gmra.mrb[0].mxu0 %v1615
  %v3556 = vpop.f32.mrb[0].mxu0
  %v3557 = vadd.f32 %v3140, %v3556
  %v3558 = vpop.f32.mrb[0].mxu0
  %v3559 = vpop.f32.mrb[0].mxu0
  %v3560 = vadd.f32 %v3143, %v3559
  %v3561 = vpop.f32.mrb[0].mxu0
  %3562 = vmatprep.mubr.bf16.mxu0 %v1623
  %3563 = vmatmul.mubr.bf16.gmra.mrb[0].mxu0 %v1622
  %v3564 = vpop.f32.mrb[0].mxu0
  %v3565 = vadd.f32 %v3148, %v3564
  %v3566 = vpop.f32.mrb[0].mxu0
  %v3567 = vpop.f32.mrb[0].mxu0
  %v3568 = vadd.f32 %v3151, %v3567
  %v3569 = vpop.f32.mrb[0].mxu0
  %3570 = vmatprep.mubr.bf16.mxu0 %v1630
  %3571 = vmatmul.mubr.bf16.gmra.mrb[0].mxu0 %v1629
  %v3572 = vpop.f32.mrb[0].mxu0
  %v3573 = vadd.f32 %v3156, %v3572
  %v3574 = vpop.f32.mrb[0].mxu0
  %v3575 = vpop.f32.mrb[0].mxu0
  %v3576 = vadd.f32 %v3159, %v3575
  %v3577 = vpop.f32.mrb[0].mxu0
  %3578 = vmatprep.mubr.bf16.mxu0 %v1637
  %3579 = vmatmul.mubr.bf16.gmra.mrb[0].mxu0 %v1636
  %v3580 = vpop.f32.mrb[0].mxu0
  %v3581 = vadd.f32 %v3164, %v3580
  %v3582 = vpop.f32.mrb[0].mxu0
  %v3583 = vpop.f32.mrb[0].mxu0
  %v3584 = vadd.f32 %v3167, %v3583
  %v3585 = vpop.f32.mrb[0].mxu0
  %3586 = vmatprep.mubr.bf16.mxu0 %v1644
  %3587 = vmatmul.mubr.bf16.gmra.mrb[0].mxu0 %v1643
  %v3588 = vpop.f32.mrb[0].mxu0
  %v3589 = vadd.f32 %v3172, %v3588
  %v3590 = vpop.f32.mrb[0].mxu0
  %v3591 = vpop.f32.mrb[0].mxu0
  %v3592 = vadd.f32 %v3175, %v3591
  %v3593 = vpop.f32.mrb[0].mxu0
  %3594 = vmatprep.mubr.bf16.mxu0 %v1651
  %3595 = vmatmul.mubr.bf16.gmra.mrb[0].mxu0 %v1650
  %v3596 = vpop.f32.mrb[0].mxu0
  %v3597 = vadd.f32 %v3180, %v3596
  %v3598 = vpop.f32.mrb[0].mxu0
  %v3599 = vpop.f32.mrb[0].mxu0
  %v3600 = vadd.f32 %v3183, %v3599
  %v3601 = vpop.f32.mrb[0].mxu0
  %3602 = vmatprep.mubr.bf16.mxu0 %v1658
  %3603 = vmatmul.mubr.bf16.gmra.mrb[0].mxu0 %v1657
  %v3604 = vpop.f32.mrb[0].mxu0
  %v3605 = vadd.f32 %v3188, %v3604
  %v3606 = vpop.f32.mrb[0].mxu0
  %v3607 = vpop.f32.mrb[0].mxu0
  %v3608 = vadd.f32 %v3191, %v3607
  %v3609 = vpop.f32.mrb[0].mxu0
  %3610 = vmatprep.mubr.bf16.mxu0 %v1665
  %3611 = vmatmul.mubr.bf16.gmra.mrb[0].mxu0 %v1664
  %v3612 = vpop.f32.mrb[0].mxu0
  %v3613 = vadd.f32 %v3196, %v3612
  %v3614 = vpop.f32.mrb[0].mxu0
  %v3615 = vpop.f32.mrb[0].mxu0
  %v3616 = vadd.f32 %v3199, %v3615
  %v3617 = vpop.f32.mrb[0].mxu0
  %3618 = vmatprep.mubr.bf16.mxu0 %v1672
  %3619 = vmatmul.mubr.bf16.gmra.mrb[0].mxu0 %v1671
  %v3620 = vpop.f32.mrb[0].mxu0
  %v3621 = vadd.f32 %v3204, %v3620
  %v3622 = vpop.f32.mrb[0].mxu0
  %v3623 = vpop.f32.mrb[0].mxu0
  %v3624 = vadd.f32 %v3207, %v3623
  %v3625 = vpop.f32.mrb[0].mxu0
  %3626 = vmatprep.mubr.bf16.mxu0 %v1679
  %3627 = vmatmul.mubr.bf16.gmra.mrb[0].mxu0 %v1678
  %v3628 = vpop.f32.mrb[0].mxu0
  %v3629 = vadd.f32 %v3212, %v3628
  %v3630 = vpop.f32.mrb[0].mxu0
  %v3631 = vpop.f32.mrb[0].mxu0
  %v3632 = vadd.f32 %v3215, %v3631
  %v3633 = vpop.f32.mrb[0].mxu0
  %3634 = vmatprep.mubr.bf16.mxu0 %v1686
  %3635 = vmatmul.mubr.bf16.gmra.mrb[0].mxu0 %v1685
  %v3636 = vpop.f32.mrb[0].mxu0
  %v3637 = vadd.f32 %v3220, %v3636
  %v3638 = vpop.f32.mrb[0].mxu0
  %v3639 = vpop.f32.mrb[0].mxu0
  %v3640 = vadd.f32 %v3223, %v3639
  %v3641 = vpop.f32.mrb[0].mxu0
  %3642 = vmatprep.mubr.bf16.mxu0 %v1693
  %3643 = vmatmul.mubr.bf16.gmra.mrb[0].mxu0 %v1692
  %v3644 = vpop.f32.mrb[0].mxu0
  %v3645 = vadd.f32 %v3228, %v3644
  %v3646 = vpop.f32.mrb[0].mxu0
  %v3647 = vpop.f32.mrb[0].mxu0
  %v3648 = vadd.f32 %v3231, %v3647
  %v3649 = vpop.f32.mrb[0].mxu0
  %3650 = vmatprep.mubr.bf16.mxu0 %v1700
  %3651 = vmatmul.mubr.bf16.gmra.mrb[0].mxu0 %v1699
  %v3652 = vpop.f32.mrb[0].mxu0
  %v3653 = vadd.f32 %v3236, %v3652
  %v3654 = vpop.f32.mrb[0].mxu0
  %v3655 = vpop.f32.mrb[0].mxu0
  %v3656 = vadd.f32 %v3239, %v3655
  %v3657 = vpop.f32.mrb[0].mxu0
  %3658 = vmatprep.mubr.bf16.mxu0 %v1707
  %3659 = vmatmul.mubr.bf16.gmra.mrb[0].mxu0 %v1706
  %v3660 = vpop.f32.mrb[0].mxu0
  %v3661 = vadd.f32 %v3244, %v3660
  %v3662 = vpop.f32.mrb[0].mxu0
  %v3663 = vpop.f32.mrb[0].mxu0
  %v3664 = vadd.f32 %v3247, %v3663
  %v3665 = vpop.f32.mrb[0].mxu0
  %3666 = vmatprep.mubr.bf16.mxu0 %v1714
  %3667 = vmatmul.mubr.bf16.gmra.mrb[0].mxu0 %v1713
  %v3668 = vpop.f32.mrb[0].mxu0
  %v3669 = vadd.f32 %v3252, %v3668
  %v3670 = vpop.f32.mrb[0].mxu0
  %v3671 = vpop.f32.mrb[0].mxu0
  %v3672 = vadd.f32 %v3255, %v3671
  %v3673 = vpop.f32.mrb[0].mxu0
  %3674 = vmatprep.mubr.bf16.mxu0 %v1721
  %3675 = vmatmul.mubr.bf16.gmra.mrb[0].mxu0 %v1720
  %v3676 = vpop.f32.mrb[0].mxu0
  %v3677 = vadd.f32 %v3260, %v3676
  %v3678 = vpop.f32.mrb[0].mxu0
  %v3679 = vpop.f32.mrb[0].mxu0
  %v3680 = vadd.f32 %v3263, %v3679
  %v3681 = vpop.f32.mrb[0].mxu0
  %3682 = vmatprep.mubr.bf16.mxu0 %v1728
  %3683 = vmatmul.mubr.bf16.gmra.mrb[0].mxu0 %v1727
  %v3684 = vpop.f32.mrb[0].mxu0
  %v3685 = vadd.f32 %v3268, %v3684
  %v3686 = vpop.f32.mrb[0].mxu0
  %v3687 = vpop.f32.mrb[0].mxu0
  %v3688 = vadd.f32 %v3271, %v3687
  %v3689 = vpop.f32.mrb[0].mxu0
  %3690 = vmatprep.mubr.bf16.mxu0 %v1735
  %3691 = vmatmul.mubr.bf16.gmra.mrb[0].mxu0 %v1734
  %v3692 = vpop.f32.mrb[0].mxu0
  %v3693 = vadd.f32 %v3276, %v3692
  %v3694 = vpop.f32.mrb[0].mxu0
  %v3695 = vpop.f32.mrb[0].mxu0
  %v3696 = vadd.f32 %v3279, %v3695
  %v3697 = vpop.f32.mrb[0].mxu0
  %3698 = vmatprep.mubr.bf16.mxu0 %v1742
  %3699 = vmatmul.mubr.bf16.gmra.mrb[0].mxu0 %v1741
  %v3700 = vpop.f32.mrb[0].mxu0
  %v3701 = vadd.f32 %v3284, %v3700
  %v3702 = vpop.f32.mrb[0].mxu0
  %v3703 = vpop.f32.mrb[0].mxu0
  %v3704 = vadd.f32 %v3287, %v3703
  %v3705 = vpop.f32.mrb[0].mxu0
  %3706 = vmatprep.mubr.bf16.mxu0 %v1749
  %3707 = vmatmul.mubr.bf16.gmra.mrb[0].mxu0 %v1748
  %v3708 = vpop.f32.mrb[0].mxu0
  %v3709 = vadd.f32 %v3292, %v3708
  %v3710 = vpop.f32.mrb[0].mxu0
  %v3711 = vpop.f32.mrb[0].mxu0
  %v3712 = vadd.f32 %v3295, %v3711
  %v3713 = vpop.f32.mrb[0].mxu0
  %3714 = vmatprep.mubr.bf16.mxu0 %v1756
  %3715 = vmatmul.mubr.bf16.gmra.mrb[0].mxu0 %v1755
  %v3716 = vpop.f32.mrb[0].mxu0
  %v3717 = vadd.f32 %v3300, %v3716
  %v3718 = vpop.f32.mrb[0].mxu0
  %v3719 = vpop.f32.mrb[0].mxu0
  %v3720 = vadd.f32 %v3303, %v3719
  %v3721 = vpop.f32.mrb[0].mxu0
  %3722 = vmatprep.mubr.bf16.mxu0 %v1763
  %3723 = vmatmul.mubr.bf16.gmra.mrb[0].mxu0 %v1762
  %v3724 = vpop.f32.mrb[0].mxu0
  %v3725 = vadd.f32 %v3308, %v3724
  %v3726 = vpop.f32.mrb[0].mxu0
  %v3727 = vpop.f32.mrb[0].mxu0
  %v3728 = vadd.f32 %v3311, %v3727
  %v3729 = vpop.f32.mrb[0].mxu0
  %3730 = vmatprep.mubr.bf16.mxu0 %v1770
  %3731 = vmatmul.mubr.bf16.gmra.mrb[0].mxu0 %v1769
  %v3732 = vpop.f32.mrb[0].mxu0
  %v3733 = vadd.f32 %v3316, %v3732
  %v3734 = vpop.f32.mrb[0].mxu0
  %v3735 = vpop.f32.mrb[0].mxu0
  %v3736 = vadd.f32 %v3319, %v3735
  %v3737 = vpop.f32.mrb[0].mxu0
  %3738 = vmatprep.mubr.bf16.mxu0 %v1777
  %3739 = vmatmul.mubr.bf16.gmra.mrb[0].mxu0 %v1776
  %v3740 = vpop.f32.mrb[0].mxu0
  %v3741 = vadd.f32 %v3324, %v3740
  %v3742 = vpop.f32.mrb[0].mxu0
  %v3743 = vpop.f32.mrb[0].mxu0
  %v3744 = vadd.f32 %v3327, %v3743
  %v3745 = vpop.f32.mrb[0].mxu0
  %3746 = vmatprep.mubr.bf16.mxu0 %v1784
  %3747 = vmatmul.mubr.bf16.gmra.mrb[0].mxu0 %v1783
  %v3748 = vpop.f32.mrb[0].mxu0
  %v3749 = vadd.f32 %v3332, %v3748
  %v3750 = vpop.f32.mrb[0].mxu0
  %v3751 = vpop.f32.mrb[0].mxu0
  %v3752 = vadd.f32 %v3335, %v3751
  %v3753 = vpop.f32.mrb[0].mxu0
  %3754 = vmatprep.mubr.bf16.mxu0 %v1791
  %3755 = vmatmul.mubr.bf16.gmra.mrb[0].mxu0 %v1790
  %v3756 = vpop.f32.mrb[0].mxu0
  %v3757 = vadd.f32 %v3340, %v3756
  %v3758 = vpop.f32.mrb[0].mxu0
  %v3759 = vpop.f32.mrb[0].mxu0
  %v3760 = vadd.f32 %v3343, %v3759
  %v3761 = vpop.f32.mrb[0].mxu0
  %3762 = vmatprep.mubr.bf16.mxu0 %v1798
  %3763 = vmatmul.mubr.bf16.gmra.mrb[0].mxu0 %v1797
  %v3764 = vpop.f32.mrb[0].mxu0
  %v3765 = vadd.f32 %v3348, %v3764
  %v3766 = vpop.f32.mrb[0].mxu0
  %v3767 = vpop.f32.mrb[0].mxu0
  %v3768 = vadd.f32 %v3351, %v3767
  %v3769 = vpop.f32.mrb[0].mxu0
  %3770 = vmatprep.mubr.bf16.mxu0 %v1805
  %3771 = vmatmul.mubr.bf16.gmra.mrb[0].mxu0 %v1804
  %v3772 = vpop.f32.mrb[0].mxu0
  %v3773 = vadd.f32 %v3356, %v3772
  %v3774 = vpop.f32.mrb[0].mxu0
  %v3775 = vpop.f32.mrb[0].mxu0
  %v3776 = vadd.f32 %v3359, %v3775
  %v3777 = vpop.f32.mrb[0].mxu0
  %3778 = vmatprep.mubr.bf16.mxu0 %v1812
  %3779 = vmatmul.mubr.bf16.gmra.mrb[0].mxu0 %v1811
  %v3780 = vpop.f32.mrb[0].mxu0
  %v3781 = vadd.f32 %v3364, %v3780
  %v3782 = vpop.f32.mrb[0].mxu0
  %v3783 = vpop.f32.mrb[0].mxu0
  %v3784 = vadd.f32 %v3367, %v3783
  %v3785 = vpop.f32.mrb[0].mxu0
  %3786 = vmatprep.mubr.bf16.mxu0 %v1819
  %3787 = vmatmul.mubr.bf16.gmra.mrb[0].mxu0 %v1818
  %v3788 = vpop.f32.mrb[0].mxu0
  %v3789 = vadd.f32 %v3372, %v3788
  %v3790 = vpop.f32.mrb[0].mxu0
  %v3791 = vpop.f32.mrb[0].mxu0
  %v3792 = vadd.f32 %v3375, %v3791
  %v3793 = vpop.f32.mrb[0].mxu0
  %3794 = vmatprep.mubr.bf16.mxu0 %v1826
  %3795 = vmatmul.mubr.bf16.gmra.mrb[0].mxu0 %v1825
  %v3796 = vpop.f32.mrb[0].mxu0
  %v3797 = vadd.f32 %v3380, %v3796
  %v3798 = vpop.f32.mrb[0].mxu0
  %v3799 = vpop.f32.mrb[0].mxu0
  %v3800 = vadd.f32 %v3383, %v3799
  %v3801 = vpop.f32.mrb[0].mxu0
  %3802 = vmatprep.mubr.bf16.mxu0 %v1833
  %3803 = vmatmul.mubr.bf16.gmra.mrb[0].mxu0 %v1832
  %v3804 = vpop.f32.mrb[0].mxu0
  %v3805 = vadd.f32 %v3388, %v3804
  %v3806 = vpop.f32.mrb[0].mxu0
  %v3807 = vpop.f32.mrb[0].mxu0
  %v3808 = vadd.f32 %v3391, %v3807
  %v3809 = vpop.f32.mrb[0].mxu0
  %3810 = vmatprep.mubr.bf16.mxu0 %v1840
  %3811 = vmatmul.mubr.bf16.gmra.mrb[0].mxu0 %v1839
  %v3812 = vpop.f32.mrb[0].mxu0
  %v3813 = vadd.f32 %v3396, %v3812
  %v3814 = vpop.f32.mrb[0].mxu0
  %v3815 = vpop.f32.mrb[0].mxu0
  %v3816 = vadd.f32 %v3399, %v3815
  %v3817 = vpop.f32.mrb[0].mxu0
  %3818 = vmatprep.mubr.bf16.mxu0 %v1847
  %3819 = vmatmul.mubr.bf16.gmra.mrb[0].mxu0 %v1846
  %v3820 = vpop.f32.mrb[0].mxu0
  %v3821 = vadd.f32 %v3404, %v3820
  %v3822 = vpop.f32.mrb[0].mxu0
  %v3823 = vpop.f32.mrb[0].mxu0
  %v3824 = vadd.f32 %v3407, %v3823
  %v3825 = vpop.f32.mrb[0].mxu0
  %3826 = vmatprep.mubr.bf16.mxu0 %v1854
  %3827 = vmatmul.mubr.bf16.gmra.mrb[0].mxu0 %v1853
  %v3828 = vpop.f32.mrb[0].mxu0
  %v3829 = vadd.f32 %v3412, %v3828
  %v3830 = vpop.f32.mrb[0].mxu0
  %v3831 = vpop.f32.mrb[0].mxu0
  %v3832 = vadd.f32 %v3415, %v3831
  %v3833 = vpop.f32.mrb[0].mxu0
  %3834 = vmatprep.mubr.bf16.mxu0 %v1861
  %3835 = vmatmul.mubr.bf16.gmra.mrb[0].mxu0 %v1860
  %v3836 = vpop.f32.mrb[0].mxu0
  %v3837 = vadd.f32 %v3420, %v3836
  %v3838 = vpop.f32.mrb[0].mxu0
  %v3839 = vpop.f32.mrb[0].mxu0
  %v3840 = vadd.f32 %v3423, %v3839
  %v3841 = vpop.f32.mrb[0].mxu0
  %3842 = vmatprep.mubr.bf16.mxu0 %v1868
  %3843 = vmatmul.mubr.bf16.gmra.mrb[0].mxu0 %v1867
  %v3844 = vpop.f32.mrb[0].mxu0
  %v3845 = vadd.f32 %v3428, %v3844
  %v3846 = vpop.f32.mrb[0].mxu0
  %v3847 = vpop.f32.mrb[0].mxu0
  %v3848 = vadd.f32 %v3431, %v3847
  %v3849 = vpop.f32.mrb[0].mxu0
  %3850 = vmatprep.mubr.bf16.mxu0 %v1875
  %3851 = vmatmul.mubr.bf16.gmra.mrb[0].mxu0 %v1874
  %v3852 = vpop.f32.mrb[0].mxu0
  %v3853 = vadd.f32 %v3436, %v3852
  %v3854 = vpop.f32.mrb[0].mxu0
  %v3855 = vpop.f32.mrb[0].mxu0
  %v3856 = vadd.f32 %v3439, %v3855
  %v3857 = vpop.f32.mrb[0].mxu0
  %3858 = vmatprep.mubr.bf16.mxu0 %v1882
  %3859 = vmatmul.mubr.bf16.gmra.mrb[0].mxu0 %v1881
  %v3860 = vpop.f32.mrb[0].mxu0
  %v3861 = vadd.f32 %v3444, %v3860
  %v3862 = vpop.f32.mrb[0].mxu0
  %v3863 = vpop.f32.mrb[0].mxu0
  %v3864 = vadd.f32 %v3447, %v3863
  %v3865 = vpop.f32.mrb[0].mxu0
  %3866 = vmatprep.mubr.bf16.mxu0 %v1889
  %3867 = vmatmul.mubr.bf16.gmra.mrb[0].mxu0 %v1888
  %v3868 = vpop.f32.mrb[0].mxu0
  %v3869 = vadd.f32 %v3452, %v3868
  %v3870 = vpop.f32.mrb[0].mxu0
  %v3871 = vpop.f32.mrb[0].mxu0
  %v3872 = vadd.f32 %v3455, %v3871
  %v3873 = vpop.f32.mrb[0].mxu0
  %3874 = vdwg.mxu0
  %3875 = vmatprep.subr.bf16.mxu0 0
  %3876 = vmatpush1.bf16.msra.mxu0 %v2427
  %3877 = vmatprep.subr.bf16.mxu0 0
  %3878 = vmatpush1.bf16.msra.mxu0 %v2428
  %3879 = vmatprep.subr.bf16.mxu0 0
  %3880 = vmatpush1.bf16.msra.mxu0 0
  %3881 = vmatprep.subr.bf16.mxu0 0
  %3882 = vmatpush1.bf16.msra.mxu0 0
  %3883 = vmatprep.subr.bf16.mxu0 0
  %3884 = vmatpush1.bf16.msra.mxu0 0
  %3885 = vmatprep.subr.bf16.mxu0 0
  %3886 = vmatpush1.bf16.msra.mxu0 0
  %3887 = vmatprep.subr.bf16.mxu0 0
  %3888 = vmatpush1.bf16.msra.mxu0 0
  %3889 = vmatprep.subr.bf16.mxu0 0
  %3890 = vmatpush1.bf16.msra.mxu0 0
  %3891 = vmatprep.subr.bf16.mxu0 0
  %3892 = vmatpush1.bf16.msra.mxu0 0
  %3893 = vmatprep.subr.bf16.mxu0 0
  %3894 = vmatpush1.bf16.msra.mxu0 0
  %3895 = vmatprep.subr.bf16.mxu0 0
  %3896 = vmatpush1.bf16.msra.mxu0 0
  %3897 = vmatprep.subr.bf16.mxu0 0
  %3898 = vmatpush1.bf16.msra.mxu0 0
  %3899 = vmatprep.subr.bf16.mxu0 0
  %3900 = vmatpush1.bf16.msra.mxu0 0
  %3901 = vmatprep.subr.bf16.mxu0 0
  %3902 = vmatpush1.bf16.msra.mxu0 0
  %3903 = vmatprep.subr.bf16.mxu0 0
  %3904 = vmatpush1.bf16.msra.mxu0 0
  %3905 = vmatprep.subr.bf16.mxu0 0
  %3906 = vmatpush1.bf16.msra.mxu0 0
  %3907 = vmatprep.mubr.bf16.mxu0 0
  %3908 = vmatmul.mubr.bf16.gmra.mrb[0].mxu0 %v2481
  %v3909 = vpop.f32.mrb[0].mxu0
  %v3910 = vadd.f32 %v3493, %v3909
  %v3911 = vpop.f32.mrb[0].mxu0
  %v3912 = vpop.f32.mrb[0].mxu0
  %v3913 = vadd.f32 %v3496, %v3912
  %v3914 = vpop.f32.mrb[0].mxu0
  %3915 = vmatprep.mubr.bf16.mxu0 0
  %3916 = vmatmul.mubr.bf16.gmra.mrb[0].mxu0 %v2484
  %v3917 = vpop.f32.mrb[0].mxu0
  %v3918 = vadd.f32 %v3501, %v3917
  %v3919 = vpop.f32.mrb[0].mxu0
  %v3920 = vpop.f32.mrb[0].mxu0
  %v3921 = vadd.f32 %v3504, %v3920
  %v3922 = vpop.f32.mrb[0].mxu0
  %3923 = vmatprep.mubr.bf16.mxu0 0
  %3924 = vmatmul.mubr.bf16.gmra.mrb[0].mxu0 %v2487
  %v3925 = vpop.f32.mrb[0].mxu0
  %v3926 = vadd.f32 %v3509, %v3925
  %v3927 = vpop.f32.mrb[0].mxu0
  %v3928 = vpop.f32.mrb[0].mxu0
  %v3929 = vadd.f32 %v3512, %v3928
  %v3930 = vpop.f32.mrb[0].mxu0
  %3931 = vmatprep.mubr.bf16.mxu0 0
  %3932 = vmatmul.mubr.bf16.gmra.mrb[0].mxu0 %v2490
  %v3933 = vpop.f32.mrb[0].mxu0
  %v3934 = vadd.f32 %v3517, %v3933
  %v3935 = vpop.f32.mrb[0].mxu0
  %v3936 = vpop.f32.mrb[0].mxu0
  %v3937 = vadd.f32 %v3520, %v3936
  %v3938 = vpop.f32.mrb[0].mxu0
  %3939 = vmatprep.mubr.bf16.mxu0 0
  %3940 = vmatmul.mubr.bf16.gmra.mrb[0].mxu0 %v2493
  %v3941 = vpop.f32.mrb[0].mxu0
  %v3942 = vadd.f32 %v3525, %v3941
  %v3943 = vpop.f32.mrb[0].mxu0
  %v3944 = vpop.f32.mrb[0].mxu0
  %v3945 = vadd.f32 %v3528, %v3944
  %v3946 = vpop.f32.mrb[0].mxu0
  %3947 = vmatprep.mubr.bf16.mxu0 0
  %3948 = vmatmul.mubr.bf16.gmra.mrb[0].mxu0 %v2496
  %v3949 = vpop.f32.mrb[0].mxu0
  %v3950 = vadd.f32 %v3533, %v3949
  %v3951 = vpop.f32.mrb[0].mxu0
  %v3952 = vpop.f32.mrb[0].mxu0
  %v3953 = vadd.f32 %v3536, %v3952
  %v3954 = vpop.f32.mrb[0].mxu0
  %3955 = vmatprep.mubr.bf16.mxu0 0
  %3956 = vmatmul.mubr.bf16.gmra.mrb[0].mxu0 %v2499
  %v3957 = vpop.f32.mrb[0].mxu0
  %v3958 = vadd.f32 %v3541, %v3957
  %v3959 = vpop.f32.mrb[0].mxu0
  %v3960 = vpop.f32.mrb[0].mxu0
  %v3961 = vadd.f32 %v3544, %v3960
  %v3962 = vpop.f32.mrb[0].mxu0
  %3963 = vmatprep.mubr.bf16.mxu0 0
  %3964 = vmatmul.mubr.bf16.gmra.mrb[0].mxu0 %v2502
  %v3965 = vpop.f32.mrb[0].mxu0
  %v3966 = vadd.f32 %v3549, %v3965
  %v3967 = vpop.f32.mrb[0].mxu0
  %v3968 = vpop.f32.mrb[0].mxu0
  %v3969 = vadd.f32 %v3552, %v3968
  %v3970 = vpop.f32.mrb[0].mxu0
  %3971 = vmatprep.mubr.bf16.mxu0 0
  %3972 = vmatmul.mubr.bf16.gmra.mrb[0].mxu0 %v2505
  %v3973 = vpop.f32.mrb[0].mxu0
  %v3974 = vadd.f32 %v3557, %v3973
  %v3975 = vpop.f32.mrb[0].mxu0
  %v3976 = vpop.f32.mrb[0].mxu0
  %v3977 = vadd.f32 %v3560, %v3976
  %v3978 = vpop.f32.mrb[0].mxu0
  %3979 = vmatprep.mubr.bf16.mxu0 0
  %3980 = vmatmul.mubr.bf16.gmra.mrb[0].mxu0 %v2508
  %v3981 = vpop.f32.mrb[0].mxu0
  %v3982 = vadd.f32 %v3565, %v3981
  %v3983 = vpop.f32.mrb[0].mxu0
  %v3984 = vpop.f32.mrb[0].mxu0
  %v3985 = vadd.f32 %v3568, %v3984
  %v3986 = vpop.f32.mrb[0].mxu0
  %3987 = vmatprep.mubr.bf16.mxu0 0
  %3988 = vmatmul.mubr.bf16.gmra.mrb[0].mxu0 %v2511
  %v3989 = vpop.f32.mrb[0].mxu0
  %v3990 = vadd.f32 %v3573, %v3989
  %v3991 = vpop.f32.mrb[0].mxu0
  %v3992 = vpop.f32.mrb[0].mxu0
  %v3993 = vadd.f32 %v3576, %v3992
  %v3994 = vpop.f32.mrb[0].mxu0
  %3995 = vmatprep.mubr.bf16.mxu0 0
  %3996 = vmatmul.mubr.bf16.gmra.mrb[0].mxu0 %v2514
  %v3997 = vpop.f32.mrb[0].mxu0
  %v3998 = vadd.f32 %v3581, %v3997
  %v3999 = vpop.f32.mrb[0].mxu0
  %v4000 = vpop.f32.mrb[0].mxu0
  %v4001 = vadd.f32 %v3584, %v4000
  %v4002 = vpop.f32.mrb[0].mxu0
  %4003 = vmatprep.mubr.bf16.mxu0 0
  %4004 = vmatmul.mubr.bf16.gmra.mrb[0].mxu0 %v2517
  %v4005 = vpop.f32.mrb[0].mxu0
  %v4006 = vadd.f32 %v3589, %v4005
  %v4007 = vpop.f32.mrb[0].mxu0
  %v4008 = vpop.f32.mrb[0].mxu0
  %v4009 = vadd.f32 %v3592, %v4008
  %v4010 = vpop.f32.mrb[0].mxu0
  %4011 = vmatprep.mubr.bf16.mxu0 0
  %4012 = vmatmul.mubr.bf16.gmra.mrb[0].mxu0 %v2520
  %v4013 = vpop.f32.mrb[0].mxu0
  %v4014 = vadd.f32 %v3597, %v4013
  %v4015 = vpop.f32.mrb[0].mxu0
  %v4016 = vpop.f32.mrb[0].mxu0
  %v4017 = vadd.f32 %v3600, %v4016
  %v4018 = vpop.f32.mrb[0].mxu0
  %4019 = vmatprep.mubr.bf16.mxu0 0
  %4020 = vmatmul.mubr.bf16.gmra.mrb[0].mxu0 %v2523
  %v4021 = vpop.f32.mrb[0].mxu0
  %v4022 = vadd.f32 %v3605, %v4021
  %v4023 = vpop.f32.mrb[0].mxu0
  %v4024 = vpop.f32.mrb[0].mxu0
  %v4025 = vadd.f32 %v3608, %v4024
  %v4026 = vpop.f32.mrb[0].mxu0
  %4027 = vmatprep.mubr.bf16.mxu0 0
  %4028 = vmatmul.mubr.bf16.gmra.mrb[0].mxu0 %v2526
  %v4029 = vpop.f32.mrb[0].mxu0
  %v4030 = vadd.f32 %v3613, %v4029
  %v4031 = vpop.f32.mrb[0].mxu0
  %v4032 = vpop.f32.mrb[0].mxu0
  %v4033 = vadd.f32 %v3616, %v4032
  %v4034 = vpop.f32.mrb[0].mxu0
  %4035 = vmatprep.mubr.bf16.mxu0 0
  %4036 = vmatmul.mubr.bf16.gmra.mrb[0].mxu0 %v2529
  %v4037 = vpop.f32.mrb[0].mxu0
  %v4038 = vadd.f32 %v3621, %v4037
  %v4039 = vpop.f32.mrb[0].mxu0
  %v4040 = vpop.f32.mrb[0].mxu0
  %v4041 = vadd.f32 %v3624, %v4040
  %v4042 = vpop.f32.mrb[0].mxu0
  %4043 = vmatprep.mubr.bf16.mxu0 0
  %4044 = vmatmul.mubr.bf16.gmra.mrb[0].mxu0 %v2532
  %v4045 = vpop.f32.mrb[0].mxu0
  %v4046 = vadd.f32 %v3629, %v4045
  %v4047 = vpop.f32.mrb[0].mxu0
  %v4048 = vpop.f32.mrb[0].mxu0
  %v4049 = vadd.f32 %v3632, %v4048
  %v4050 = vpop.f32.mrb[0].mxu0
  %4051 = vmatprep.mubr.bf16.mxu0 0
  %4052 = vmatmul.mubr.bf16.gmra.mrb[0].mxu0 %v2535
  %v4053 = vpop.f32.mrb[0].mxu0
  %v4054 = vadd.f32 %v3637, %v4053
  %v4055 = vpop.f32.mrb[0].mxu0
  %v4056 = vpop.f32.mrb[0].mxu0
  %v4057 = vadd.f32 %v3640, %v4056
  %v4058 = vpop.f32.mrb[0].mxu0
  %4059 = vmatprep.mubr.bf16.mxu0 0
  %4060 = vmatmul.mubr.bf16.gmra.mrb[0].mxu0 %v2538
  %v4061 = vpop.f32.mrb[0].mxu0
  %v4062 = vadd.f32 %v3645, %v4061
  %v4063 = vpop.f32.mrb[0].mxu0
  %v4064 = vpop.f32.mrb[0].mxu0
  %v4065 = vadd.f32 %v3648, %v4064
  %v4066 = vpop.f32.mrb[0].mxu0
  %4067 = vmatprep.mubr.bf16.mxu0 0
  %4068 = vmatmul.mubr.bf16.gmra.mrb[0].mxu0 %v2541
  %v4069 = vpop.f32.mrb[0].mxu0
  %v4070 = vadd.f32 %v3653, %v4069
  %v4071 = vpop.f32.mrb[0].mxu0
  %v4072 = vpop.f32.mrb[0].mxu0
  %v4073 = vadd.f32 %v3656, %v4072
  %v4074 = vpop.f32.mrb[0].mxu0
  %4075 = vmatprep.mubr.bf16.mxu0 0
  %4076 = vmatmul.mubr.bf16.gmra.mrb[0].mxu0 %v2544
  %v4077 = vpop.f32.mrb[0].mxu0
  %v4078 = vadd.f32 %v3661, %v4077
  %v4079 = vpop.f32.mrb[0].mxu0
  %v4080 = vpop.f32.mrb[0].mxu0
  %v4081 = vadd.f32 %v3664, %v4080
  %v4082 = vpop.f32.mrb[0].mxu0
  %4083 = vmatprep.mubr.bf16.mxu0 0
  %4084 = vmatmul.mubr.bf16.gmra.mrb[0].mxu0 %v2547
  %v4085 = vpop.f32.mrb[0].mxu0
  %v4086 = vadd.f32 %v3669, %v4085
  %v4087 = vpop.f32.mrb[0].mxu0
  %v4088 = vpop.f32.mrb[0].mxu0
  %v4089 = vadd.f32 %v3672, %v4088
  %v4090 = vpop.f32.mrb[0].mxu0
  %4091 = vmatprep.mubr.bf16.mxu0 0
  %4092 = vmatmul.mubr.bf16.gmra.mrb[0].mxu0 %v2550
  %v4093 = vpop.f32.mrb[0].mxu0
  %v4094 = vadd.f32 %v3677, %v4093
  %v4095 = vpop.f32.mrb[0].mxu0
  %v4096 = vpop.f32.mrb[0].mxu0
  %v4097 = vadd.f32 %v3680, %v4096
  %v4098 = vpop.f32.mrb[0].mxu0
  %4099 = vmatprep.mubr.bf16.mxu0 0
  %4100 = vmatmul.mubr.bf16.gmra.mrb[0].mxu0 %v2553
  %v4101 = vpop.f32.mrb[0].mxu0
  %v4102 = vadd.f32 %v3685, %v4101
  %v4103 = vpop.f32.mrb[0].mxu0
  %v4104 = vpop.f32.mrb[0].mxu0
  %v4105 = vadd.f32 %v3688, %v4104
  %v4106 = vpop.f32.mrb[0].mxu0
  %4107 = vmatprep.mubr.bf16.mxu0 0
  %4108 = vmatmul.mubr.bf16.gmra.mrb[0].mxu0 %v2556
  %v4109 = vpop.f32.mrb[0].mxu0
  %v4110 = vadd.f32 %v3693, %v4109
  %v4111 = vpop.f32.mrb[0].mxu0
  %v4112 = vpop.f32.mrb[0].mxu0
  %v4113 = vadd.f32 %v3696, %v4112
  %v4114 = vpop.f32.mrb[0].mxu0
  %4115 = vmatprep.mubr.bf16.mxu0 0
  %4116 = vmatmul.mubr.bf16.gmra.mrb[0].mxu0 %v2559
  %v4117 = vpop.f32.mrb[0].mxu0
  %v4118 = vadd.f32 %v3701, %v4117
  %v4119 = vpop.f32.mrb[0].mxu0
  %v4120 = vpop.f32.mrb[0].mxu0
  %v4121 = vadd.f32 %v3704, %v4120
  %v4122 = vpop.f32.mrb[0].mxu0
  %4123 = vmatprep.mubr.bf16.mxu0 0
  %4124 = vmatmul.mubr.bf16.gmra.mrb[0].mxu0 %v2562
  %v4125 = vpop.f32.mrb[0].mxu0
  %v4126 = vadd.f32 %v3709, %v4125
  %v4127 = vpop.f32.mrb[0].mxu0
  %v4128 = vpop.f32.mrb[0].mxu0
  %v4129 = vadd.f32 %v3712, %v4128
  %v4130 = vpop.f32.mrb[0].mxu0
  %4131 = vmatprep.mubr.bf16.mxu0 0
  %4132 = vmatmul.mubr.bf16.gmra.mrb[0].mxu0 %v2565
  %v4133 = vpop.f32.mrb[0].mxu0
  %v4134 = vadd.f32 %v3717, %v4133
  %v4135 = vpop.f32.mrb[0].mxu0
  %v4136 = vpop.f32.mrb[0].mxu0
  %v4137 = vadd.f32 %v3720, %v4136
  %v4138 = vpop.f32.mrb[0].mxu0
  %4139 = vmatprep.mubr.bf16.mxu0 0
  %4140 = vmatmul.mubr.bf16.gmra.mrb[0].mxu0 %v2568
  %v4141 = vpop.f32.mrb[0].mxu0
  %v4142 = vadd.f32 %v3725, %v4141
  %v4143 = vpop.f32.mrb[0].mxu0
  %v4144 = vpop.f32.mrb[0].mxu0
  %v4145 = vadd.f32 %v3728, %v4144
  %v4146 = vpop.f32.mrb[0].mxu0
  %4147 = vmatprep.mubr.bf16.mxu0 0
  %4148 = vmatmul.mubr.bf16.gmra.mrb[0].mxu0 %v2571
  %v4149 = vpop.f32.mrb[0].mxu0
  %v4150 = vadd.f32 %v3733, %v4149
  %v4151 = vpop.f32.mrb[0].mxu0
  %v4152 = vpop.f32.mrb[0].mxu0
  %v4153 = vadd.f32 %v3736, %v4152
  %v4154 = vpop.f32.mrb[0].mxu0
  %4155 = vmatprep.mubr.bf16.mxu0 0
  %4156 = vmatmul.mubr.bf16.gmra.mrb[0].mxu0 %v2574
  %v4157 = vpop.f32.mrb[0].mxu0
  %v4158 = vadd.f32 %v3741, %v4157
  %v4159 = vpop.f32.mrb[0].mxu0
  %v4160 = vpop.f32.mrb[0].mxu0
  %v4161 = vadd.f32 %v3744, %v4160
  %v4162 = vpop.f32.mrb[0].mxu0
  %4163 = vmatprep.mubr.bf16.mxu0 0
  %4164 = vmatmul.mubr.bf16.gmra.mrb[0].mxu0 %v2577
  %v4165 = vpop.f32.mrb[0].mxu0
  %v4166 = vadd.f32 %v3749, %v4165
  %v4167 = vpop.f32.mrb[0].mxu0
  %v4168 = vpop.f32.mrb[0].mxu0
  %v4169 = vadd.f32 %v3752, %v4168
  %v4170 = vpop.f32.mrb[0].mxu0
  %4171 = vmatprep.mubr.bf16.mxu0 0
  %4172 = vmatmul.mubr.bf16.gmra.mrb[0].mxu0 %v2580
  %v4173 = vpop.f32.mrb[0].mxu0
  %v4174 = vadd.f32 %v3757, %v4173
  %v4175 = vpop.f32.mrb[0].mxu0
  %v4176 = vpop.f32.mrb[0].mxu0
  %v4177 = vadd.f32 %v3760, %v4176
  %v4178 = vpop.f32.mrb[0].mxu0
  %4179 = vmatprep.mubr.bf16.mxu0 0
  %4180 = vmatmul.mubr.bf16.gmra.mrb[0].mxu0 %v2583
  %v4181 = vpop.f32.mrb[0].mxu0
  %v4182 = vadd.f32 %v3765, %v4181
  %v4183 = vpop.f32.mrb[0].mxu0
  %v4184 = vpop.f32.mrb[0].mxu0
  %v4185 = vadd.f32 %v3768, %v4184
  %v4186 = vpop.f32.mrb[0].mxu0
  %4187 = vmatprep.mubr.bf16.mxu0 0
  %4188 = vmatmul.mubr.bf16.gmra.mrb[0].mxu0 %v2586
  %v4189 = vpop.f32.mrb[0].mxu0
  %v4190 = vadd.f32 %v3773, %v4189
  %v4191 = vpop.f32.mrb[0].mxu0
  %v4192 = vpop.f32.mrb[0].mxu0
  %v4193 = vadd.f32 %v3776, %v4192
  %v4194 = vpop.f32.mrb[0].mxu0
  %4195 = vmatprep.mubr.bf16.mxu0 0
  %4196 = vmatmul.mubr.bf16.gmra.mrb[0].mxu0 %v2589
  %v4197 = vpop.f32.mrb[0].mxu0
  %v4198 = vadd.f32 %v3781, %v4197
  %v4199 = vpop.f32.mrb[0].mxu0
  %v4200 = vpop.f32.mrb[0].mxu0
  %v4201 = vadd.f32 %v3784, %v4200
  %v4202 = vpop.f32.mrb[0].mxu0
  %4203 = vmatprep.mubr.bf16.mxu0 0
  %4204 = vmatmul.mubr.bf16.gmra.mrb[0].mxu0 %v2592
  %v4205 = vpop.f32.mrb[0].mxu0
  %v4206 = vadd.f32 %v3789, %v4205
  %v4207 = vpop.f32.mrb[0].mxu0
  %v4208 = vpop.f32.mrb[0].mxu0
  %v4209 = vadd.f32 %v3792, %v4208
  %v4210 = vpop.f32.mrb[0].mxu0
  %4211 = vmatprep.mubr.bf16.mxu0 0
  %4212 = vmatmul.mubr.bf16.gmra.mrb[0].mxu0 %v2595
  %v4213 = vpop.f32.mrb[0].mxu0
  %v4214 = vadd.f32 %v3797, %v4213
  %v4215 = vpop.f32.mrb[0].mxu0
  %v4216 = vpop.f32.mrb[0].mxu0
  %v4217 = vadd.f32 %v3800, %v4216
  %v4218 = vpop.f32.mrb[0].mxu0
  %4219 = vmatprep.mubr.bf16.mxu0 0
  %4220 = vmatmul.mubr.bf16.gmra.mrb[0].mxu0 %v2598
  %v4221 = vpop.f32.mrb[0].mxu0
  %v4222 = vadd.f32 %v3805, %v4221
  %v4223 = vpop.f32.mrb[0].mxu0
  %v4224 = vpop.f32.mrb[0].mxu0
  %v4225 = vadd.f32 %v3808, %v4224
  %v4226 = vpop.f32.mrb[0].mxu0
  %4227 = vmatprep.mubr.bf16.mxu0 0
  %4228 = vmatmul.mubr.bf16.gmra.mrb[0].mxu0 %v2601
  %v4229 = vpop.f32.mrb[0].mxu0
  %v4230 = vadd.f32 %v3813, %v4229
  %v4231 = vpop.f32.mrb[0].mxu0
  %v4232 = vpop.f32.mrb[0].mxu0
  %v4233 = vadd.f32 %v3816, %v4232
  %v4234 = vpop.f32.mrb[0].mxu0
  %4235 = vmatprep.mubr.bf16.mxu0 0
  %4236 = vmatmul.mubr.bf16.gmra.mrb[0].mxu0 %v2604
  %v4237 = vpop.f32.mrb[0].mxu0
  %v4238 = vadd.f32 %v3821, %v4237
  %v4239 = vpop.f32.mrb[0].mxu0
  %v4240 = vpop.f32.mrb[0].mxu0
  %v4241 = vadd.f32 %v3824, %v4240
  %v4242 = vpop.f32.mrb[0].mxu0
  %4243 = vmatprep.mubr.bf16.mxu0 0
  %4244 = vmatmul.mubr.bf16.gmra.mrb[0].mxu0 %v2607
  %v4245 = vpop.f32.mrb[0].mxu0
  %v4246 = vadd.f32 %v3829, %v4245
  %v4247 = vpop.f32.mrb[0].mxu0
  %v4248 = vpop.f32.mrb[0].mxu0
  %v4249 = vadd.f32 %v3832, %v4248
  %v4250 = vpop.f32.mrb[0].mxu0
  %4251 = vmatprep.mubr.bf16.mxu0 0
  %4252 = vmatmul.mubr.bf16.gmra.mrb[0].mxu0 %v2610
  %v4253 = vpop.f32.mrb[0].mxu0
  %v4254 = vadd.f32 %v3837, %v4253
  %v4255 = vpop.f32.mrb[0].mxu0
  %v4256 = vpop.f32.mrb[0].mxu0
  %v4257 = vadd.f32 %v3840, %v4256
  %v4258 = vpop.f32.mrb[0].mxu0
  %4259 = vmatprep.mubr.bf16.mxu0 0
  %4260 = vmatmul.mubr.bf16.gmra.mrb[0].mxu0 %v2613
  %v4261 = vpop.f32.mrb[0].mxu0
  %v4262 = vadd.f32 %v3845, %v4261
  %v4263 = vpop.f32.mrb[0].mxu0
  %v4264 = vpop.f32.mrb[0].mxu0
  %v4265 = vadd.f32 %v3848, %v4264
  %v4266 = vpop.f32.mrb[0].mxu0
  %4267 = vmatprep.mubr.bf16.mxu0 0
  %4268 = vmatmul.mubr.bf16.gmra.mrb[0].mxu0 %v2616
  %v4269 = vpop.f32.mrb[0].mxu0
  %v4270 = vadd.f32 %v3853, %v4269
  %v4271 = vpop.f32.mrb[0].mxu0
  %v4272 = vpop.f32.mrb[0].mxu0
  %v4273 = vadd.f32 %v3856, %v4272
  %v4274 = vpop.f32.mrb[0].mxu0
  %4275 = vmatprep.mubr.bf16.mxu0 0
  %4276 = vmatmul.mubr.bf16.gmra.mrb[0].mxu0 %v2619
  %v4277 = vpop.f32.mrb[0].mxu0
  %v4278 = vadd.f32 %v3861, %v4277
  %v4279 = vpop.f32.mrb[0].mxu0
  %v4280 = vpop.f32.mrb[0].mxu0
  %v4281 = vadd.f32 %v3864, %v4280
  %v4282 = vpop.f32.mrb[0].mxu0
  %4283 = vmatprep.mubr.bf16.mxu0 0
  %4284 = vmatmul.mubr.bf16.gmra.mrb[0].mxu0 %v2622
  %v4285 = vpop.f32.mrb[0].mxu0
  %v4286 = vadd.f32 %v3869, %v4285
  %v4287 = vpop.f32.mrb[0].mxu0
  %v4288 = vpop.f32.mrb[0].mxu0
  %v4289 = vadd.f32 %v3872, %v4288
  %v4290 = vpop.f32.mrb[0].mxu0
  %4291 = vdwg.mxu0
  %vm4292 = vcmask 523264
  %v4293 = vsel %vm4292, %v3910, -inf
  %v4294 = vsel %vm4292, %v4006, -inf
  %v4295 = vmax.f32 %v4293, %v4294
  %v4296 = vsel %vm4292, %v4102, -inf
  %v4297 = vmax.f32 %v4295, %v4296
  %v4298 = vsel %vm4292, %v4198, -inf
  %v4299 = vmax.f32 %v4297, %v4298
  %v4300 = vsel %vm4292, %v3913, -inf
  %v4301 = vsel %vm4292, %v4009, -inf
  %v4302 = vmax.f32 %v4300, %v4301
  %v4303 = vsel %vm4292, %v4105, -inf
  %v4304 = vmax.f32 %v4302, %v4303
  %v4305 = vsel %vm4292, %v4201, -inf
  %v4306 = vmax.f32 %v4304, %v4305
  %v4307 = vsel %vm4292, %v3918, -inf
  %v4308 = vsel %vm4292, %v4014, -inf
  %v4309 = vmax.f32 %v4307, %v4308
  %v4310 = vsel %vm4292, %v4110, -inf
  %v4311 = vmax.f32 %v4309, %v4310
  %v4312 = vsel %vm4292, %v4206, -inf
  %v4313 = vmax.f32 %v4311, %v4312
  %v4314 = vsel %vm4292, %v3921, -inf
  %v4315 = vsel %vm4292, %v4017, -inf
  %v4316 = vmax.f32 %v4314, %v4315
  %v4317 = vsel %vm4292, %v4113, -inf
  %v4318 = vmax.f32 %v4316, %v4317
  %v4319 = vsel %vm4292, %v4209, -inf
  %v4320 = vmax.f32 %v4318, %v4319
  %v4321 = vsel %vm4292, %v3926, -inf
  %v4322 = vsel %vm4292, %v4022, -inf
  %v4323 = vmax.f32 %v4321, %v4322
  %v4324 = vsel %vm4292, %v4118, -inf
  %v4325 = vmax.f32 %v4323, %v4324
  %v4326 = vsel %vm4292, %v4214, -inf
  %v4327 = vmax.f32 %v4325, %v4326
  %v4328 = vsel %vm4292, %v3929, -inf
  %v4329 = vsel %vm4292, %v4025, -inf
  %v4330 = vmax.f32 %v4328, %v4329
  %v4331 = vsel %vm4292, %v4121, -inf
  %v4332 = vmax.f32 %v4330, %v4331
  %v4333 = vsel %vm4292, %v4217, -inf
  %v4334 = vmax.f32 %v4332, %v4333
  %v4335 = vsel %vm4292, %v3934, -inf
  %v4336 = vsel %vm4292, %v4030, -inf
  %v4337 = vmax.f32 %v4335, %v4336
  %v4338 = vsel %vm4292, %v4126, -inf
  %v4339 = vmax.f32 %v4337, %v4338
  %v4340 = vsel %vm4292, %v4222, -inf
  %v4341 = vmax.f32 %v4339, %v4340
  %v4342 = vsel %vm4292, %v3937, -inf
  %v4343 = vsel %vm4292, %v4033, -inf
  %v4344 = vmax.f32 %v4342, %v4343
  %v4345 = vsel %vm4292, %v4129, -inf
  %v4346 = vmax.f32 %v4344, %v4345
  %v4347 = vsel %vm4292, %v4225, -inf
  %v4348 = vmax.f32 %v4346, %v4347
  %v4349 = vsel %vm4292, %v3942, -inf
  %v4350 = vsel %vm4292, %v4038, -inf
  %v4351 = vmax.f32 %v4349, %v4350
  %v4352 = vsel %vm4292, %v4134, -inf
  %v4353 = vmax.f32 %v4351, %v4352
  %v4354 = vsel %vm4292, %v4230, -inf
  %v4355 = vmax.f32 %v4353, %v4354
  %v4356 = vsel %vm4292, %v3945, -inf
  %v4357 = vsel %vm4292, %v4041, -inf
  %v4358 = vmax.f32 %v4356, %v4357
  %v4359 = vsel %vm4292, %v4137, -inf
  %v4360 = vmax.f32 %v4358, %v4359
  %v4361 = vsel %vm4292, %v4233, -inf
  %v4362 = vmax.f32 %v4360, %v4361
  %v4363 = vsel %vm4292, %v3950, -inf
  %v4364 = vsel %vm4292, %v4046, -inf
  %v4365 = vmax.f32 %v4363, %v4364
  %v4366 = vsel %vm4292, %v4142, -inf
  %v4367 = vmax.f32 %v4365, %v4366
  %v4368 = vsel %vm4292, %v4238, -inf
  %v4369 = vmax.f32 %v4367, %v4368
  %v4370 = vsel %vm4292, %v3953, -inf
  %v4371 = vsel %vm4292, %v4049, -inf
  %v4372 = vmax.f32 %v4370, %v4371
  %v4373 = vsel %vm4292, %v4145, -inf
  %v4374 = vmax.f32 %v4372, %v4373
  %v4375 = vsel %vm4292, %v4241, -inf
  %v4376 = vmax.f32 %v4374, %v4375
  %v4377 = vsel %vm4292, %v3958, -inf
  %v4378 = vsel %vm4292, %v4054, -inf
  %v4379 = vmax.f32 %v4377, %v4378
  %v4380 = vsel %vm4292, %v4150, -inf
  %v4381 = vmax.f32 %v4379, %v4380
  %v4382 = vsel %vm4292, %v4246, -inf
  %v4383 = vmax.f32 %v4381, %v4382
  %v4384 = vsel %vm4292, %v3961, -inf
  %v4385 = vsel %vm4292, %v4057, -inf
  %v4386 = vmax.f32 %v4384, %v4385
  %v4387 = vsel %vm4292, %v4153, -inf
  %v4388 = vmax.f32 %v4386, %v4387
  %v4389 = vsel %vm4292, %v4249, -inf
  %v4390 = vmax.f32 %v4388, %v4389
  %v4391 = vsel %vm4292, %v3966, -inf
  %v4392 = vsel %vm4292, %v4062, -inf
  %v4393 = vmax.f32 %v4391, %v4392
  %v4394 = vsel %vm4292, %v4158, -inf
  %v4395 = vmax.f32 %v4393, %v4394
  %v4396 = vsel %vm4292, %v4254, -inf
  %v4397 = vmax.f32 %v4395, %v4396
  %v4398 = vsel %vm4292, %v3969, -inf
  %v4399 = vsel %vm4292, %v4065, -inf
  %v4400 = vmax.f32 %v4398, %v4399
  %v4401 = vsel %vm4292, %v4161, -inf
  %v4402 = vmax.f32 %v4400, %v4401
  %v4403 = vsel %vm4292, %v4257, -inf
  %v4404 = vmax.f32 %v4402, %v4403
  %v4405 = vsel %vm4292, %v3974, -inf
  %v4406 = vsel %vm4292, %v4070, -inf
  %v4407 = vmax.f32 %v4405, %v4406
  %v4408 = vsel %vm4292, %v4166, -inf
  %v4409 = vmax.f32 %v4407, %v4408
  %v4410 = vsel %vm4292, %v4262, -inf
  %v4411 = vmax.f32 %v4409, %v4410
  %v4412 = vsel %vm4292, %v3977, -inf
  %v4413 = vsel %vm4292, %v4073, -inf
  %v4414 = vmax.f32 %v4412, %v4413
  %v4415 = vsel %vm4292, %v4169, -inf
  %v4416 = vmax.f32 %v4414, %v4415
  %v4417 = vsel %vm4292, %v4265, -inf
  %v4418 = vmax.f32 %v4416, %v4417
  %v4419 = vsel %vm4292, %v3982, -inf
  %v4420 = vsel %vm4292, %v4078, -inf
  %v4421 = vmax.f32 %v4419, %v4420
  %v4422 = vsel %vm4292, %v4174, -inf
  %v4423 = vmax.f32 %v4421, %v4422
  %v4424 = vsel %vm4292, %v4270, -inf
  %v4425 = vmax.f32 %v4423, %v4424
  %v4426 = vsel %vm4292, %v3985, -inf
  %v4427 = vsel %vm4292, %v4081, -inf
  %v4428 = vmax.f32 %v4426, %v4427
  %v4429 = vsel %vm4292, %v4177, -inf
  %v4430 = vmax.f32 %v4428, %v4429
  %v4431 = vsel %vm4292, %v4273, -inf
  %v4432 = vmax.f32 %v4430, %v4431
  %v4433 = vsel %vm4292, %v3990, -inf
  %v4434 = vsel %vm4292, %v4086, -inf
  %v4435 = vmax.f32 %v4433, %v4434
  %v4436 = vsel %vm4292, %v4182, -inf
  %v4437 = vmax.f32 %v4435, %v4436
  %v4438 = vsel %vm4292, %v4278, -inf
  %v4439 = vmax.f32 %v4437, %v4438
  %v4440 = vsel %vm4292, %v3993, -inf
  %v4441 = vsel %vm4292, %v4089, -inf
  %v4442 = vmax.f32 %v4440, %v4441
  %v4443 = vsel %vm4292, %v4185, -inf
  %v4444 = vmax.f32 %v4442, %v4443
  %v4445 = vsel %vm4292, %v4281, -inf
  %v4446 = vmax.f32 %v4444, %v4445
  %v4447 = vsel %vm4292, %v3998, -inf
  %v4448 = vsel %vm4292, %v4094, -inf
  %v4449 = vmax.f32 %v4447, %v4448
  %v4450 = vsel %vm4292, %v4190, -inf
  %v4451 = vmax.f32 %v4449, %v4450
  %v4452 = vsel %vm4292, %v4286, -inf
  %v4453 = vmax.f32 %v4451, %v4452
  %v4454 = vsel %vm4292, %v4001, -inf
  %v4455 = vsel %vm4292, %v4097, -inf
  %v4456 = vmax.f32 %v4454, %v4455
  %v4457 = vsel %vm4292, %v4193, -inf
  %v4458 = vmax.f32 %v4456, %v4457
  %v4459 = vsel %vm4292, %v4289, -inf
  %v4460 = vmax.f32 %v4458, %v4459
  %v4461 = vld [vmem:[%s2] sm:$0x1]
  %v4463 = vlaneseq
  %v4464 = vshrl.u32 %v4463, 7
  %v4465 = vsub.s32 0, %v4464
  %v4466 = vrot.slane %v4461, %v4465
  %v4468 = vadd.f32 %v4299, %v4466
  %v4469 = vadd.f32 %v4306, %v4466
  %v4470 = vadd.f32 %v4313, %v4466
  %v4471 = vadd.f32 %v4320, %v4466
  %v4472 = vadd.f32 %v4327, %v4466
  %v4473 = vadd.f32 %v4334, %v4466
  %v4474 = vadd.f32 %v4341, %v4466
  %v4475 = vadd.f32 %v4348, %v4466
  %v4476 = vadd.f32 %v4355, %v4466
  %v4477 = vadd.f32 %v4362, %v4466
  %v4478 = vadd.f32 %v4369, %v4466
  %v4479 = vadd.f32 %v4376, %v4466
  %v4480 = vadd.f32 %v4383, %v4466
  %v4481 = vadd.f32 %v4390, %v4466
  %v4482 = vadd.f32 %v4397, %v4466
  %v4483 = vadd.f32 %v4404, %v4466
  %v4484 = vadd.f32 %v4411, %v4466
  %v4485 = vadd.f32 %v4418, %v4466
  %v4486 = vadd.f32 %v4425, %v4466
  %v4487 = vadd.f32 %v4432, %v4466
  %v4488 = vadd.f32 %v4439, %v4466
  %v4489 = vadd.f32 %v4446, %v4466
  %v4490 = vadd.f32 %v4453, %v4466
  %v4491 = vadd.f32 %v4460, %v4466
  %v4492 = vmax.f32 %v4468, 0.0
  %v4493 = vmax.f32 %v4469, 0.0
  %v4494 = vmax.f32 %v4470, 0.0
  %v4495 = vmax.f32 %v4471, 0.0
  %v4496 = vmax.f32 %v4472, 0.0
  %v4497 = vmax.f32 %v4473, 0.0
  %v4498 = vmax.f32 %v4474, 0.0
  %v4499 = vmax.f32 %v4475, 0.0
  %v4500 = vmax.f32 %v4476, 0.0
  %v4501 = vmax.f32 %v4477, 0.0
  %v4502 = vmax.f32 %v4478, 0.0
  %v4503 = vmax.f32 %v4479, 0.0
  %v4504 = vmax.f32 %v4480, 0.0
  %v4505 = vmax.f32 %v4481, 0.0
  %v4506 = vmax.f32 %v4482, 0.0
  %v4507 = vmax.f32 %v4483, 0.0
  %v4508 = vmax.f32 %v4484, 0.0
  %v4509 = vmax.f32 %v4485, 0.0
  %v4510 = vmax.f32 %v4486, 0.0
  %v4511 = vmax.f32 %v4487, 0.0
  %v4512 = vmax.f32 %v4488, 0.0
  %v4513 = vmax.f32 %v4489, 0.0
  %v4514 = vmax.f32 %v4490, 0.0
  %v4515 = vmax.f32 %v4491, 0.0
  %v4516 = vpack.c.bf16 %v4493, %v4492
  %v4517 = vpack.c.bf16 %v4495, %v4494
  %v4518 = vpack.c.bf16 %v4497, %v4496
  %v4519 = vpack.c.bf16 %v4499, %v4498
  %v4520 = vpack.c.bf16 %v4501, %v4500
  %v4521 = vpack.c.bf16 %v4503, %v4502
  %v4522 = vpack.c.bf16 %v4505, %v4504
  %v4523 = vpack.c.bf16 %v4507, %v4506
  %v4524 = vpack.c.bf16 %v4509, %v4508
  %v4525 = vpack.c.bf16 %v4511, %v4510
  %v4526 = vpack.c.bf16 %v4513, %v4512
  %v4527 = vpack.c.bf16 %v4515, %v4514
  %v4540 = vunpack.c.l.b16 %v4516
  %v4541 = vunpack.c.h.b16 %v4516
  %v4542 = vunpack.c.l.b16 %v4517
  %v4543 = vunpack.c.h.b16 %v4517
  %v4544 = vunpack.c.l.b16 %v4518
  %v4545 = vunpack.c.h.b16 %v4518
  %v4546 = vunpack.c.l.b16 %v4519
  %v4547 = vunpack.c.h.b16 %v4519
  %v4548 = vunpack.c.l.b16 %v4520
  %v4549 = vunpack.c.h.b16 %v4520
  %v4550 = vunpack.c.l.b16 %v4521
  %v4551 = vunpack.c.h.b16 %v4521
  %v4552 = vunpack.c.l.b16 %v4522
  %v4553 = vunpack.c.h.b16 %v4522
  %v4554 = vunpack.c.l.b16 %v4523
  %v4555 = vunpack.c.h.b16 %v4523
  %v4556 = vunpack.c.l.b16 %v4524
  %v4557 = vunpack.c.h.b16 %v4524
  %v4558 = vunpack.c.l.b16 %v4525
  %v4559 = vunpack.c.h.b16 %v4525
  %v4560 = vunpack.c.l.b16 %v4526
  %v4561 = vunpack.c.h.b16 %v4526
  %v4562 = vunpack.c.l.b16 %v4527
  %v4563 = vunpack.c.h.b16 %v4527
  %v4564 = vpack.c.b16 %v4540, %v4540
  %v4565 = vpack.c.b16 %v4541, %v4541
  %v4566 = vpack.c.b16 %v4542, %v4542
  %v4567 = vpack.c.b16 %v4543, %v4543
  %v4568 = vpack.c.b16 %v4544, %v4544
  %v4569 = vpack.c.b16 %v4545, %v4545
  %v4570 = vpack.c.b16 %v4546, %v4546
  %v4571 = vpack.c.b16 %v4547, %v4547
  %v4572 = vpack.c.b16 %v4548, %v4548
  %v4573 = vpack.c.b16 %v4549, %v4549
  %v4574 = vpack.c.b16 %v4550, %v4550
  %v4575 = vpack.c.b16 %v4551, %v4551
  %v4576 = vpack.c.b16 %v4552, %v4552
  %v4577 = vpack.c.b16 %v4553, %v4553
  %v4578 = vpack.c.b16 %v4554, %v4554
  %v4579 = vpack.c.b16 %v4555, %v4555
  %v4580 = vpack.c.b16 %v4556, %v4556
  %v4581 = vpack.c.b16 %v4557, %v4557
  %v4582 = vpack.c.b16 %v4558, %v4558
  %v4583 = vpack.c.b16 %v4559, %v4559
  %v4584 = vpack.c.b16 %v4560, %v4560
  %v4585 = vpack.c.b16 %v4561, %v4561
  %v4586 = vpack.c.b16 %v4562, %v4562
  %v4587 = vpack.c.b16 %v4563, %v4563
  %vm4612 = vcmask 519168
  %4613 = vst.msk [vmem:[%s3] sm:$0xf] %vm4612, %v4564
  %4614 = vst.msk [vmem:[%s3 + $0x4] sm:$0xf] %vm4612, %v4565
  %4615 = vst.msk [vmem:[%s3 + $0x8] sm:$0xf] %vm4612, %v4566
  %4616 = vst.msk [vmem:[%s3 + $0xc] sm:$0xf] %vm4612, %v4567
  %4617 = vst.msk [vmem:[%s3 + $0x10] sm:$0xf] %vm4612, %v4568
  %4618 = vst.msk [vmem:[%s3 + $0x14] sm:$0xf] %vm4612, %v4569
  %4619 = vst.msk [vmem:[%s3 + $0x18] sm:$0xf] %vm4612, %v4570
  %4620 = vst.msk [vmem:[%s3 + $0x1c] sm:$0xf] %vm4612, %v4571
  %4621 = vst.msk [vmem:[%s3 + $0x20] sm:$0xf] %vm4612, %v4572
  %4622 = vst.msk [vmem:[%s3 + $0x24] sm:$0xf] %vm4612, %v4573
  %4623 = vst.msk [vmem:[%s3 + $0x28] sm:$0xf] %vm4612, %v4574
  %4624 = vst.msk [vmem:[%s3 + $0x2c] sm:$0xf] %vm4612, %v4575
  %4625 = vst.msk [vmem:[%s3 + $0x30] sm:$0xf] %vm4612, %v4576
  %4626 = vst.msk [vmem:[%s3 + $0x34] sm:$0xf] %vm4612, %v4577
  %4627 = vst.msk [vmem:[%s3 + $0x38] sm:$0xf] %vm4612, %v4578
  %4628 = vst.msk [vmem:[%s3 + $0x3c] sm:$0xf] %vm4612, %v4579
  %4629 = vst.msk [vmem:[%s3 + $0x40] sm:$0xf] %vm4612, %v4580
  %4630 = vst.msk [vmem:[%s3 + $0x44] sm:$0xf] %vm4612, %v4581
  %4631 = vst.msk [vmem:[%s3 + $0x48] sm:$0xf] %vm4612, %v4582
  %4632 = vst.msk [vmem:[%s3 + $0x4c] sm:$0xf] %vm4612, %v4583
  %4633 = vst.msk [vmem:[%s3 + $0x50] sm:$0xf] %vm4612, %v4584
  %4634 = vst.msk [vmem:[%s3 + $0x54] sm:$0xf] %vm4612, %v4585
  %4635 = vst.msk [vmem:[%s3 + $0x58] sm:$0xf] %vm4612, %v4586
  %4636 = vst.msk [vmem:[%s3 + $0x5c] sm:$0xf] %vm4612, %v4587
  // Predicated region
  $region14: #{net_forward.4} parent=0 // pred_check
    _
  $region15: #{net_forward.4} parent=0 // pred_check_branch
    %4638 = sbr.rel (0) target = $region17
  $region16: #{net_forward.4} parent=0 // pred_region
    _
  $region17: #{net_forward.4} parent=0 // pred_fallthru
    _
  // Predicated region
  $region18: #{net_forward.4} parent=0 // pred_check
    _
  $region19: #{net_forward.4} parent=0 // pred_check_branch
    %4640 = sbr.rel (0) target = $region21
  $region20: #{net_forward.4} parent=0 // pred_region
    _
  $region21: #{net_forward.4} parent=0 // pred_fallthru
    _

// kernel: net_forward.5
$region0: #{net_forward.5}
  #allocation0 [shape = 'u32[]', space=smem, size = 0x4, offset = 0x4, fixed_abs, tag = 'smem constant byte address 0x4 - core index']
  #allocation1 [shape = 'u32[144,128]{1,0:T(1,128)}', space=vmem, size = 0x12000, scoped, tag = 'internal scratch']
  %s0 = inlined_call_operand.vmem [shape: bf16[32,1600], index: 0, kind: input, shape index: {}]
  %s1 = inlined_call_operand.vmem [shape: bf16[1600,128], index: 1, kind: input, shape index: {}]
  %s2 = inlined_call_operand.vmem [shape: f32[1,128], index: 2, kind: input, shape index: {}]
  %s3 = inlined_call_operand.vmem [shape: bf16[512,512], index: 3, kind: input, shape index: {}]
  %s4 = inlined_call_operand.vmem [shape: f32[1,512], index: 4, kind: input, shape index: {}]
  %s5 = inlined_call_operand.vmem [shape: bf16[512,2], index: 5, kind: input, shape index: {}]
  %s6 = inlined_call_operand.vmem [shape: f32[1,2], index: 6, kind: input, shape index: {}]
  %s7 = inlined_call_operand.hbm [shape: f32[2,2], index: 7, kind: output, shape index: {}]
  %s8 = sld [smem:[#allocation0]]
  $region38: #{net_forward.5} parent=0
    _
  %s10 = ssub.s32 1, %s8
  %s11 = scalar_select 0, %s10, %s8
  $region1: #{net_forward.5} parent=0
    #allocation2 [shape = 'u8[1024]{0}', space=vmem, size = 0x400, scoped, tag = 'output window, operand 0, single buffered']
    #allocation3 [shape = 's32[1]{0}', space=sflag, size = 0x4, scoped, tag = 'scoped memory for net_forward.5']
    %12 = vsyncpa [#allocation3], 0
    // Predicated region
    $region2: #{net_forward.5} parent=1 // pred_check
      _
    $region3: #{net_forward.5} parent=1 // pred_check_branch
      %14 = sbr.rel (0) target = $region5
    $region4: #{net_forward.5} parent=1 // pred_region
      _
    $region5: #{net_forward.5} parent=1 // pred_fallthru
      _
    // Predicated region
    $region6: #{net_forward.5} parent=1 // pred_check
      _
    $region7: #{net_forward.5} parent=1 // pred_check_branch
      %16 = sbr.rel (0) target = $region9
    $region8: #{net_forward.5} parent=1 // pred_region
      _
    $region9: #{net_forward.5} parent=1 // pred_fallthru
      _
    // Predicated region
    $region10: #{net_forward.5} parent=1 // pred_check
      _
    $region11: #{net_forward.5} parent=1 // pred_check_branch
      %18 = sbr.rel (0) target = $region13
    $region12: #{net_forward.5} parent=1 // pred_region
      _
    $region13: #{net_forward.5} parent=1 // pred_fallthru
      _
    // Predicated region
    $region14: #{net_forward.5} parent=1 // pred_check
      _
    $region15: #{net_forward.5} parent=1 // pred_check_branch
      %20 = sbr.rel (0) target = $region17
    $region16: #{net_forward.5} parent=1 // pred_region
      _
    $region17: #{net_forward.5} parent=1 // pred_fallthru
      _
    // Predicated region
    $region18: #{net_forward.5} parent=1 // pred_check
      _
    $region19: #{net_forward.5} parent=1 // pred_check_branch
      %22 = sbr.rel (0) target = $region21
    $region20: #{net_forward.5} parent=1 // pred_region
      _
    $region21: #{net_forward.5} parent=1 // pred_fallthru
      _
    // Predicated region
    $region22: #{net_forward.5} parent=1 // pred_check
      _
    $region23: #{net_forward.5} parent=1 // pred_check_branch
      %24 = sbr.rel (0) target = $region25
    $region24: #{net_forward.5} parent=1 // pred_region
      _
    $region25: #{net_forward.5} parent=1 // pred_fallthru
      _
    // Predicated region
    $region26: #{net_forward.5} parent=1 // pred_check
      _
    $region27: #{net_forward.5} parent=1 // pred_check_branch
      %26 = sbr.rel (0) target = $region29
    $region28: #{net_forward.5} parent=1 // pred_region
      _
    $region29: #{net_forward.5} parent=1 // pred_fallthru
      _
    %v28 = vld [vmem:[%s0] sm:$0xff]
    %v29 = vld [vmem:[%s0 + $0x8] sm:$0xff]
    %v30 = vld [vmem:[%s0 + $0x10] sm:$0xff]
    %v31 = vld [vmem:[%s0 + $0x18] sm:$0xff]
    %v32 = vld [vmem:[%s0 + $0x20] sm:$0xff]
    %v33 = vld [vmem:[%s0 + $0x28] sm:$0xff]
    %v34 = vld [vmem:[%s0 + $0x30] sm:$0xf]
    %v35 = vld [vmem:[%s0 + $0x34] sm:$0xff]
    %v36 = vld [vmem:[%s0 + $0x3c] sm:$0xff]
    %v37 = vld [vmem:[%s0 + $0x44] sm:$0xff]
    %v38 = vld [vmem:[%s0 + $0x4c] sm:$0xff]
    %v39 = vld [vmem:[%s0 + $0x54] sm:$0xff]
    %v40 = vld [vmem:[%s0 + $0x5c] sm:$0xff]
    %v41 = vld [vmem:[%s0 + $0x64] sm:$0xf]
    %v42 = vld [vmem:[%s0 + $0x68] sm:$0xff]
    %v43 = vld [vmem:[%s0 + $0x70] sm:$0xff]
    %v44 = vld [vmem:[%s0 + $0x78] sm:$0xff]
    %v45 = vld [vmem:[%s0 + $0x80] sm:$0xff]
    %v46 = vld [vmem:[%s0 + $0x88] sm:$0xff]
    %v47 = vld [vmem:[%s0 + $0x90] sm:$0xff]
    %v48 = vld [vmem:[%s0 + $0x98] sm:$0xf]
    %v49 = vld [vmem:[%s0 + $0x9c] sm:$0xff]
    %v50 = vld [vmem:[%s0 + $0xa4] sm:$0xff]
    %v51 = vld [vmem:[%s0 + $0xac] sm:$0xff]
    %v52 = vld [vmem:[%s0 + $0xb4] sm:$0xff]
    %v53 = vld [vmem:[%s0 + $0xbc] sm:$0xff]
    %v54 = vld [vmem:[%s0 + $0xc4] sm:$0xff]
    %v55 = vld [vmem:[%s0 + $0xcc] sm:$0xf]
    %v56 = vld [vmem:[%s1] sm:$0xf]
    %v57 = vld [vmem:[%s1 + $0x4] sm:$0xf]
    %v58 = vld [vmem:[%s1 + $0x8] sm:$0xf]
    %v59 = vld [vmem:[%s1 + $0xc] sm:$0xf]
    %v60 = vld [vmem:[%s1 + $0x10] sm:$0xf]
    %v61 = vld [vmem:[%s1 + $0x14] sm:$0xf]
    %v62 = vld [vmem:[%s1 + $0x18] sm:$0xf]
    %v63 = vld [vmem:[%s1 + $0x1c] sm:$0xf]
    %v64 = vld [vmem:[%s1 + $0x20] sm:$0xf]
    %v65 = vld [vmem:[%s1 + $0x24] sm:$0xf]
    %v66 = vld [vmem:[%s1 + $0x28] sm:$0xf]
    %v67 = vld [vmem:[%s1 + $0x2c] sm:$0xf]
    %v68 = vld [vmem:[%s1 + $0x30] sm:$0xf]
    %v69 = vld [vmem:[%s1 + $0x34] sm:$0xf]
    %v70 = vld [vmem:[%s1 + $0x38] sm:$0xf]
    %v71 = vld [vmem:[%s1 + $0x3c] sm:$0xf]
    %v72 = vld [vmem:[%s1 + $0x40] sm:$0xf]
    %v73 = vld [vmem:[%s1 + $0x44] sm:$0xf]
    %v74 = vld [vmem:[%s1 + $0x48] sm:$0xf]
    %v75 = vld [vmem:[%s1 + $0x4c] sm:$0xf]
    %v76 = vld [vmem:[%s1 + $0x50] sm:$0xf]
    %v77 = vld [vmem:[%s1 + $0x54] sm:$0xf]
    %v78 = vld [vmem:[%s1 + $0x58] sm:$0xf]
    %v79 = vld [vmem:[%s1 + $0x5c] sm:$0xf]
    %v80 = vld [vmem:[%s1 + $0x60] sm:$0xf]
    %v81 = vld [vmem:[%s1 + $0x64] sm:$0xf]
    %v82 = vld [vmem:[%s1 + $0x68] sm:$0xf]
    %v83 = vld [vmem:[%s1 + $0x6c] sm:$0xf]
    %v84 = vld [vmem:[%s1 + $0x70] sm:$0xf]
    %v85 = vld [vmem:[%s1 + $0x74] sm:$0xf]
    %v86 = vld [vmem:[%s1 + $0x78] sm:$0xf]
    %v87 = vld [vmem:[%s1 + $0x7c] sm:$0xf]
    %v88 = vld [vmem:[%s1 + $0x80] sm:$0xf]
    %v89 = vld [vmem:[%s1 + $0x84] sm:$0xf]
    %v90 = vld [vmem:[%s1 + $0x88] sm:$0xf]
    %v91 = vld [vmem:[%s1 + $0x8c] sm:$0xf]
    %v92 = vld [vmem:[%s1 + $0x90] sm:$0xf]
    %v93 = vld [vmem:[%s1 + $0x94] sm:$0xf]
    %v94 = vld [vmem:[%s1 + $0x98] sm:$0xf]
    %v95 = vld [vmem:[%s1 + $0x9c] sm:$0xf]
    %v96 = vld [vmem:[%s1 + $0xa0] sm:$0xf]
    %v97 = vld [vmem:[%s1 + $0xa4] sm:$0xf]
    %v98 = vld [vmem:[%s1 + $0xa8] sm:$0xf]
    %v99 = vld [vmem:[%s1 + $0xac] sm:$0xf]
    %v100 = vld [vmem:[%s1 + $0xb0] sm:$0xf]
    %v101 = vld [vmem:[%s1 + $0xb4] sm:$0xf]
    %v102 = vld [vmem:[%s1 + $0xb8] sm:$0xf]
    %v103 = vld [vmem:[%s1 + $0xbc] sm:$0xf]
    %v104 = vld [vmem:[%s1 + $0xc0] sm:$0xf]
    %v105 = vld [vmem:[%s1 + $0xc4] sm:$0xf]
    %v106 = vld [vmem:[%s1 + $0xc8] sm:$0xf]
    %v107 = vld [vmem:[%s1 + $0xcc] sm:$0xf]
    %v108 = vld [vmem:[%s1 + $0xd0] sm:$0xf]
    %v109 = vld [vmem:[%s1 + $0xd4] sm:$0xf]
    %v110 = vld [vmem:[%s1 + $0xd8] sm:$0xf]
    %v111 = vld [vmem:[%s1 + $0xdc] sm:$0xf]
    %v112 = vld [vmem:[%s1 + $0xe0] sm:$0xf]
    %v113 = vld [vmem:[%s1 + $0xe4] sm:$0xf]
    %v114 = vld [vmem:[%s1 + $0xe8] sm:$0xf]
    %v115 = vld [vmem:[%s1 + $0xec] sm:$0xf]
    %v116 = vld [vmem:[%s1 + $0xf0] sm:$0xf]
    %v117 = vld [vmem:[%s1 + $0xf4] sm:$0xf]
    %v118 = vld [vmem:[%s1 + $0xf8] sm:$0xf]
    %v119 = vld [vmem:[%s1 + $0xfc] sm:$0xf]
    %v120 = vld [vmem:[%s1 + $0x100] sm:$0xf]
    %v121 = vld [vmem:[%s1 + $0x104] sm:$0xf]
    %v122 = vld [vmem:[%s1 + $0x108] sm:$0xf]
    %v123 = vld [vmem:[%s1 + $0x10c] sm:$0xf]
    %v124 = vld [vmem:[%s1 + $0x110] sm:$0xf]
    %v125 = vld [vmem:[%s1 + $0x114] sm:$0xf]
    %v126 = vld [vmem:[%s1 + $0x118] sm:$0xf]
    %v127 = vld [vmem:[%s1 + $0x11c] sm:$0xf]
    %v128 = vld [vmem:[%s1 + $0x120] sm:$0xf]
    %v129 = vld [vmem:[%s1 + $0x124] sm:$0xf]
    %v130 = vld [vmem:[%s1 + $0x128] sm:$0xf]
    %v131 = vld [vmem:[%s1 + $0x12c] sm:$0xf]
    %v132 = vld [vmem:[%s1 + $0x130] sm:$0xf]
    %v133 = vld [vmem:[%s1 + $0x134] sm:$0xf]
    %v134 = vld [vmem:[%s1 + $0x138] sm:$0xf]
    %v135 = vld [vmem:[%s1 + $0x13c] sm:$0xf]
    %v136 = vld [vmem:[%s1 + $0x140] sm:$0xf]
    %v137 = vld [vmem:[%s1 + $0x144] sm:$0xf]
    %v138 = vld [vmem:[%s1 + $0x148] sm:$0xf]
    %v139 = vld [vmem:[%s1 + $0x14c] sm:$0xf]
    %v140 = vld [vmem:[%s1 + $0x150] sm:$0xf]
    %v141 = vld [vmem:[%s1 + $0x154] sm:$0xf]
    %v142 = vld [vmem:[%s1 + $0x158] sm:$0xf]
    %v143 = vld [vmem:[%s1 + $0x15c] sm:$0xf]
    %v144 = vld [vmem:[%s1 + $0x160] sm:$0xf]
    %v145 = vld [vmem:[%s1 + $0x164] sm:$0xf]
    %v146 = vld [vmem:[%s1 + $0x168] sm:$0xf]
    %v147 = vld [vmem:[%s1 + $0x16c] sm:$0xf]
    %v148 = vld [vmem:[%s1 + $0x170] sm:$0xf]
    %v149 = vld [vmem:[%s1 + $0x174] sm:$0xf]
    %v150 = vld [vmem:[%s1 + $0x178] sm:$0xf]
    %v151 = vld [vmem:[%s1 + $0x17c] sm:$0xf]
    %v152 = vld [vmem:[%s1 + $0x180] sm:$0xf]
    %v153 = vld [vmem:[%s1 + $0x184] sm:$0xf]
    %v154 = vld [vmem:[%s1 + $0x188] sm:$0xf]
    %v155 = vld [vmem:[%s1 + $0x18c] sm:$0xf]
    %v156 = vld [vmem:[%s1 + $0x190] sm:$0xf]
    %v157 = vld [vmem:[%s1 + $0x194] sm:$0xf]
    %v158 = vld [vmem:[%s1 + $0x198] sm:$0xf]
    %v159 = vld [vmem:[%s1 + $0x19c] sm:$0xf]
    %v160 = vld [vmem:[%s1 + $0x1a0] sm:$0xf]
    %v161 = vld [vmem:[%s1 + $0x1a4] sm:$0xf]
    %v162 = vld [vmem:[%s1 + $0x1a8] sm:$0xf]
    %v163 = vld [vmem:[%s1 + $0x1ac] sm:$0xf]
    %v164 = vld [vmem:[%s1 + $0x1b0] sm:$0xf]
    %v165 = vld [vmem:[%s1 + $0x1b4] sm:$0xf]
    %v166 = vld [vmem:[%s1 + $0x1b8] sm:$0xf]
    %v167 = vld [vmem:[%s1 + $0x1bc] sm:$0xf]
    %v168 = vld [vmem:[%s1 + $0x1c0] sm:$0xf]
    %v169 = vld [vmem:[%s1 + $0x1c4] sm:$0xf]
    %v170 = vld [vmem:[%s1 + $0x1c8] sm:$0xf]
    %v171 = vld [vmem:[%s1 + $0x1cc] sm:$0xf]
    %v172 = vld [vmem:[%s1 + $0x1d0] sm:$0xf]
    %v173 = vld [vmem:[%s1 + $0x1d4] sm:$0xf]
    %v174 = vld [vmem:[%s1 + $0x1d8] sm:$0xf]
    %v175 = vld [vmem:[%s1 + $0x1dc] sm:$0xf]
    %v176 = vld [vmem:[%s1 + $0x1e0] sm:$0xf]
    %v177 = vld [vmem:[%s1 + $0x1e4] sm:$0xf]
    %v178 = vld [vmem:[%s1 + $0x1e8] sm:$0xf]
    %v179 = vld [vmem:[%s1 + $0x1ec] sm:$0xf]
    %v180 = vld [vmem:[%s1 + $0x1f0] sm:$0xf]
    %v181 = vld [vmem:[%s1 + $0x1f4] sm:$0xf]
    %v182 = vld [vmem:[%s1 + $0x1f8] sm:$0xf]
    %v183 = vld [vmem:[%s1 + $0x1fc] sm:$0xf]
    %v184 = vld [vmem:[%s1 + $0x200] sm:$0xf]
    %v185 = vld [vmem:[%s1 + $0x204] sm:$0xf]
    %v186 = vld [vmem:[%s1 + $0x208] sm:$0xf]
    %v187 = vld [vmem:[%s1 + $0x20c] sm:$0xf]
    %v188 = vld [vmem:[%s1 + $0x210] sm:$0xf]
    %v189 = vld [vmem:[%s1 + $0x214] sm:$0xf]
    %v190 = vld [vmem:[%s1 + $0x218] sm:$0xf]
    %v191 = vld [vmem:[%s1 + $0x21c] sm:$0xf]
    %v192 = vld [vmem:[%s1 + $0x220] sm:$0xf]
    %v193 = vld [vmem:[%s1 + $0x224] sm:$0xf]
    %v194 = vld [vmem:[%s1 + $0x228] sm:$0xf]
    %v195 = vld [vmem:[%s1 + $0x22c] sm:$0xf]
    %v196 = vld [vmem:[%s1 + $0x230] sm:$0xf]
    %v197 = vld [vmem:[%s1 + $0x234] sm:$0xf]
    %v198 = vld [vmem:[%s1 + $0x238] sm:$0xf]
    %v199 = vld [vmem:[%s1 + $0x23c] sm:$0xf]
    %v200 = vld [vmem:[%s1 + $0x240] sm:$0xf]
    %v201 = vld [vmem:[%s1 + $0x244] sm:$0xf]
    %v202 = vld [vmem:[%s1 + $0x248] sm:$0xf]
    %v203 = vld [vmem:[%s1 + $0x24c] sm:$0xf]
    %v204 = vld [vmem:[%s1 + $0x250] sm:$0xf]
    %v205 = vld [vmem:[%s1 + $0x254] sm:$0xf]
    %v206 = vld [vmem:[%s1 + $0x258] sm:$0xf]
    %v207 = vld [vmem:[%s1 + $0x25c] sm:$0xf]
    %v208 = vld [vmem:[%s1 + $0x260] sm:$0xf]
    %v209 = vld [vmem:[%s1 + $0x264] sm:$0xf]
    %v210 = vld [vmem:[%s1 + $0x268] sm:$0xf]
    %v211 = vld [vmem:[%s1 + $0x26c] sm:$0xf]
    %v212 = vld [vmem:[%s1 + $0x270] sm:$0xf]
    %v213 = vld [vmem:[%s1 + $0x274] sm:$0xf]
    %v214 = vld [vmem:[%s1 + $0x278] sm:$0xf]
    %v215 = vld [vmem:[%s1 + $0x27c] sm:$0xf]
    %v216 = vld [vmem:[%s1 + $0x280] sm:$0xf]
    %v217 = vld [vmem:[%s1 + $0x284] sm:$0xf]
    %v218 = vld [vmem:[%s1 + $0x288] sm:$0xf]
    %v219 = vld [vmem:[%s1 + $0x28c] sm:$0xf]
    %v220 = vld [vmem:[%s1 + $0x290] sm:$0xf]
    %v221 = vld [vmem:[%s1 + $0x294] sm:$0xf]
    %v222 = vld [vmem:[%s1 + $0x298] sm:$0xf]
    %v223 = vld [vmem:[%s1 + $0x29c] sm:$0xf]
    %v224 = vld [vmem:[%s1 + $0x2a0] sm:$0xf]
    %v225 = vld [vmem:[%s1 + $0x2a4] sm:$0xf]
    %v226 = vld [vmem:[%s1 + $0x2a8] sm:$0xf]
    %v227 = vld [vmem:[%s1 + $0x2ac] sm:$0xf]
    %v228 = vld [vmem:[%s1 + $0x2b0] sm:$0xf]
    %v229 = vld [vmem:[%s1 + $0x2b4] sm:$0xf]
    %v230 = vld [vmem:[%s1 + $0x2b8] sm:$0xf]
    %v231 = vld [vmem:[%s1 + $0x2bc] sm:$0xf]
    %v232 = vld [vmem:[%s1 + $0x2c0] sm:$0xf]
    %v233 = vld [vmem:[%s1 + $0x2c4] sm:$0xf]
    %v234 = vld [vmem:[%s1 + $0x2c8] sm:$0xf]
    %v235 = vld [vmem:[%s1 + $0x2cc] sm:$0xf]
    %v236 = vld [vmem:[%s1 + $0x2d0] sm:$0xf]
    %v237 = vld [vmem:[%s1 + $0x2d4] sm:$0xf]
    %v238 = vld [vmem:[%s1 + $0x2d8] sm:$0xf]
    %v239 = vld [vmem:[%s1 + $0x2dc] sm:$0xf]
    %v240 = vld [vmem:[%s1 + $0x2e0] sm:$0xf]
    %v241 = vld [vmem:[%s1 + $0x2e4] sm:$0xf]
    %v242 = vld [vmem:[%s1 + $0x2e8] sm:$0xf]
    %v243 = vld [vmem:[%s1 + $0x2ec] sm:$0xf]
    %v244 = vld [vmem:[%s1 + $0x2f0] sm:$0xf]
    %v245 = vld [vmem:[%s1 + $0x2f4] sm:$0xf]
    %v246 = vld [vmem:[%s1 + $0x2f8] sm:$0xf]
    %v247 = vld [vmem:[%s1 + $0x2fc] sm:$0xf]
    %v248 = vld [vmem:[%s1 + $0x300] sm:$0xf]
    %v249 = vld [vmem:[%s1 + $0x304] sm:$0xf]
    %v250 = vld [vmem:[%s1 + $0x308] sm:$0xf]
    %v251 = vld [vmem:[%s1 + $0x30c] sm:$0xf]
    %v252 = vld [vmem:[%s1 + $0x310] sm:$0xf]
    %v253 = vld [vmem:[%s1 + $0x314] sm:$0xf]
    %v254 = vld [vmem:[%s1 + $0x318] sm:$0xf]
    %v255 = vld [vmem:[%s1 + $0x31c] sm:$0xf]
    %v284 = vunpack.c.l.b16 %v28
    %v285 = vunpack.c.h.b16 %v28
    %v286 = vunpack.c.l.b16 %v29
    %v287 = vunpack.c.h.b16 %v29
    %v288 = vunpack.c.l.b16 %v30
    %v289 = vunpack.c.h.b16 %v30
    %v290 = vunpack.c.l.b16 %v31
    %v291 = vunpack.c.h.b16 %v31
    %v292 = vunpack.c.l.b16 %v32
    %v293 = vunpack.c.h.b16 %v32
    %v294 = vunpack.c.l.b16 %v33
    %v295 = vunpack.c.h.b16 %v33
    %v296 = vunpack.c.l.b16 %v34
    %v297 = vunpack.c.l.b16 %v35
    %v298 = vunpack.c.h.b16 %v35
    %v299 = vunpack.c.l.b16 %v36
    %v300 = vunpack.c.h.b16 %v36
    %v301 = vunpack.c.l.b16 %v37
    %v302 = vunpack.c.h.b16 %v37
    %v303 = vunpack.c.l.b16 %v38
    %v304 = vunpack.c.h.b16 %v38
    %v305 = vunpack.c.l.b16 %v39
    %v306 = vunpack.c.h.b16 %v39
    %v307 = vunpack.c.l.b16 %v40
    %v308 = vunpack.c.h.b16 %v40
    %v309 = vunpack.c.l.b16 %v41
    %v310 = vunpack.c.l.b16 %v42
    %v311 = vunpack.c.h.b16 %v42
    %v312 = vunpack.c.l.b16 %v43
    %v313 = vunpack.c.h.b16 %v43
    %v314 = vunpack.c.l.b16 %v44
    %v315 = vunpack.c.h.b16 %v44
    %v316 = vunpack.c.l.b16 %v45
    %v317 = vunpack.c.h.b16 %v45
    %v318 = vunpack.c.l.b16 %v46
    %v319 = vunpack.c.h.b16 %v46
    %v320 = vunpack.c.l.b16 %v47
    %v321 = vunpack.c.h.b16 %v47
    %v322 = vunpack.c.l.b16 %v48
    %v323 = vunpack.c.l.b16 %v49
    %v324 = vunpack.c.h.b16 %v49
    %v325 = vunpack.c.l.b16 %v50
    %v326 = vunpack.c.h.b16 %v50
    %v327 = vunpack.c.l.b16 %v51
    %v328 = vunpack.c.h.b16 %v51
    %v329 = vunpack.c.l.b16 %v52
    %v330 = vunpack.c.h.b16 %v52
    %v331 = vunpack.c.l.b16 %v53
    %v332 = vunpack.c.h.b16 %v53
    %v333 = vunpack.c.l.b16 %v54
    %v334 = vunpack.c.h.b16 %v54
    %v335 = vunpack.c.l.b16 %v55
    %v336 = vpack.c.b16 %v297, %v284
    %v337 = vpack.c.b16 %v298, %v285
    %v338 = vpack.c.b16 %v299, %v286
    %v339 = vpack.c.b16 %v300, %v287
    %v340 = vpack.c.b16 %v301, %v288
    %v341 = vpack.c.b16 %v302, %v289
    %v342 = vpack.c.b16 %v303, %v290
    %v343 = vpack.c.b16 %v304, %v291
    %v344 = vpack.c.b16 %v305, %v292
    %v345 = vpack.c.b16 %v306, %v293
    %v346 = vpack.c.b16 %v307, %v294
    %v347 = vpack.c.b16 %v308, %v295
    %v348 = vpack.c.b16 %v309, %v296
    %v349 = vpack.c.b16 %v323, %v310
    %v350 = vpack.c.b16 %v324, %v311
    %v351 = vpack.c.b16 %v325, %v312
    %v352 = vpack.c.b16 %v326, %v313
    %v353 = vpack.c.b16 %v327, %v314
    %v354 = vpack.c.b16 %v328, %v315
    %v355 = vpack.c.b16 %v329, %v316
    %v356 = vpack.c.b16 %v330, %v317
    %v357 = vpack.c.b16 %v331, %v318
    %v358 = vpack.c.b16 %v332, %v319
    %v359 = vpack.c.b16 %v333, %v320
    %v360 = vpack.c.b16 %v334, %v321
    %v361 = vpack.c.b16 %v335, %v322
    %v586 = vunpack.c.l.b16 %v56
    %v587 = vunpack.c.l.b16 %v57
    %v588 = vunpack.c.l.b16 %v58
    %v589 = vunpack.c.l.b16 %v59
    %v590 = vunpack.c.l.b16 %v60
    %v591 = vunpack.c.l.b16 %v61
    %v592 = vunpack.c.l.b16 %v62
    %v593 = vunpack.c.l.b16 %v63
    %v594 = vunpack.c.l.b16 %v64
    %v595 = vunpack.c.l.b16 %v65
    %v596 = vunpack.c.l.b16 %v66
    %v597 = vunpack.c.l.b16 %v67
    %v598 = vunpack.c.l.b16 %v68
    %v599 = vunpack.c.l.b16 %v69
    %v600 = vunpack.c.l.b16 %v70
    %v601 = vunpack.c.l.b16 %v71
    %v602 = vunpack.c.l.b16 %v72
    %v603 = vunpack.c.l.b16 %v73
    %v604 = vunpack.c.l.b16 %v74
    %v605 = vunpack.c.l.b16 %v75
    %v606 = vunpack.c.l.b16 %v76
    %v607 = vunpack.c.l.b16 %v77
    %v608 = vunpack.c.l.b16 %v78
    %v609 = vunpack.c.l.b16 %v79
    %v610 = vunpack.c.l.b16 %v80
    %v611 = vunpack.c.l.b16 %v81
    %v612 = vunpack.c.l.b16 %v82
    %v613 = vunpack.c.l.b16 %v83
    %v614 = vunpack.c.l.b16 %v84
    %v615 = vunpack.c.l.b16 %v85
    %v616 = vunpack.c.l.b16 %v86
    %v617 = vunpack.c.l.b16 %v87
    %v618 = vunpack.c.l.b16 %v88
    %v619 = vunpack.c.l.b16 %v89
    %v620 = vunpack.c.l.b16 %v90
    %v621 = vunpack.c.l.b16 %v91
    %v622 = vunpack.c.l.b16 %v92
    %v623 = vunpack.c.l.b16 %v93
    %v624 = vunpack.c.l.b16 %v94
    %v625 = vunpack.c.l.b16 %v95
    %v626 = vunpack.c.l.b16 %v96
    %v627 = vunpack.c.l.b16 %v97
    %v628 = vunpack.c.l.b16 %v98
    %v629 = vunpack.c.l.b16 %v99
    %v630 = vunpack.c.l.b16 %v100
    %v631 = vunpack.c.l.b16 %v101
    %v632 = vunpack.c.l.b16 %v102
    %v633 = vunpack.c.l.b16 %v103
    %v634 = vunpack.c.l.b16 %v104
    %v635 = vunpack.c.l.b16 %v105
    %v636 = vunpack.c.l.b16 %v106
    %v637 = vunpack.c.l.b16 %v107
    %v638 = vunpack.c.l.b16 %v108
    %v639 = vunpack.c.l.b16 %v109
    %v640 = vunpack.c.l.b16 %v110
    %v641 = vunpack.c.l.b16 %v111
    %v642 = vunpack.c.l.b16 %v112
    %v643 = vunpack.c.l.b16 %v113
    %v644 = vunpack.c.l.b16 %v114
    %v645 = vunpack.c.l.b16 %v115
    %v646 = vunpack.c.l.b16 %v116
    %v647 = vunpack.c.l.b16 %v117
    %v648 = vunpack.c.l.b16 %v118
    %v649 = vunpack.c.l.b16 %v119
    %v650 = vunpack.c.l.b16 %v120
    %v651 = vunpack.c.l.b16 %v121
    %v652 = vunpack.c.l.b16 %v122
    %v653 = vunpack.c.l.b16 %v123
    %v654 = vunpack.c.l.b16 %v124
    %v655 = vunpack.c.l.b16 %v125
    %v656 = vunpack.c.l.b16 %v126
    %v657 = vunpack.c.l.b16 %v127
    %v658 = vunpack.c.l.b16 %v128
    %v659 = vunpack.c.l.b16 %v129
    %v660 = vunpack.c.l.b16 %v130
    %v661 = vunpack.c.l.b16 %v131
    %v662 = vunpack.c.l.b16 %v132
    %v663 = vunpack.c.l.b16 %v133
    %v664 = vunpack.c.l.b16 %v134
    %v665 = vunpack.c.l.b16 %v135
    %v666 = vunpack.c.l.b16 %v136
    %v667 = vunpack.c.l.b16 %v137
    %v668 = vunpack.c.l.b16 %v138
    %v669 = vunpack.c.l.b16 %v139
    %v670 = vunpack.c.l.b16 %v140
    %v671 = vunpack.c.l.b16 %v141
    %v672 = vunpack.c.l.b16 %v142
    %v673 = vunpack.c.l.b16 %v143
    %v674 = vunpack.c.l.b16 %v144
    %v675 = vunpack.c.l.b16 %v145
    %v676 = vunpack.c.l.b16 %v146
    %v677 = vunpack.c.l.b16 %v147
    %v678 = vunpack.c.l.b16 %v148
    %v679 = vunpack.c.l.b16 %v149
    %v680 = vunpack.c.l.b16 %v150
    %v681 = vunpack.c.l.b16 %v151
    %v682 = vunpack.c.l.b16 %v152
    %v683 = vunpack.c.l.b16 %v153
    %v684 = vunpack.c.l.b16 %v154
    %v685 = vunpack.c.l.b16 %v155
    %v686 = vunpack.c.l.b16 %v156
    %v687 = vunpack.c.l.b16 %v157
    %v688 = vunpack.c.l.b16 %v158
    %v689 = vunpack.c.l.b16 %v159
    %v690 = vunpack.c.l.b16 %v160
    %v691 = vunpack.c.l.b16 %v161
    %v692 = vunpack.c.l.b16 %v162
    %v693 = vunpack.c.l.b16 %v163
    %v694 = vunpack.c.l.b16 %v164
    %v695 = vunpack.c.l.b16 %v165
    %v696 = vunpack.c.l.b16 %v166
    %v697 = vunpack.c.l.b16 %v167
    %v698 = vunpack.c.l.b16 %v168
    %v699 = vunpack.c.l.b16 %v169
    %v700 = vunpack.c.l.b16 %v170
    %v701 = vunpack.c.l.b16 %v171
    %v702 = vunpack.c.l.b16 %v172
    %v703 = vunpack.c.l.b16 %v173
    %v704 = vunpack.c.l.b16 %v174
    %v705 = vunpack.c.l.b16 %v175
    %v706 = vunpack.c.l.b16 %v176
    %v707 = vunpack.c.l.b16 %v177
    %v708 = vunpack.c.l.b16 %v178
    %v709 = vunpack.c.l.b16 %v179
    %v710 = vunpack.c.l.b16 %v180
    %v711 = vunpack.c.l.b16 %v181
    %v712 = vunpack.c.l.b16 %v182
    %v713 = vunpack.c.l.b16 %v183
    %v714 = vunpack.c.l.b16 %v184
    %v715 = vunpack.c.l.b16 %v185
    %v716 = vunpack.c.l.b16 %v186
    %v717 = vunpack.c.l.b16 %v187
    %v718 = vunpack.c.l.b16 %v188
    %v719 = vunpack.c.l.b16 %v189
    %v720 = vunpack.c.l.b16 %v190
    %v721 = vunpack.c.l.b16 %v191
    %v722 = vunpack.c.l.b16 %v192
    %v723 = vunpack.c.l.b16 %v193
    %v724 = vunpack.c.l.b16 %v194
    %v725 = vunpack.c.l.b16 %v195
    %v726 = vunpack.c.l.b16 %v196
    %v727 = vunpack.c.l.b16 %v197
    %v728 = vunpack.c.l.b16 %v198
    %v729 = vunpack.c.l.b16 %v199
    %v730 = vunpack.c.l.b16 %v200
    %v731 = vunpack.c.l.b16 %v201
    %v732 = vunpack.c.l.b16 %v202
    %v733 = vunpack.c.l.b16 %v203
    %v734 = vunpack.c.l.b16 %v204
    %v735 = vunpack.c.l.b16 %v205
    %v736 = vunpack.c.l.b16 %v206
    %v737 = vunpack.c.l.b16 %v207
    %v738 = vunpack.c.l.b16 %v208
    %v739 = vunpack.c.l.b16 %v209
    %v740 = vunpack.c.l.b16 %v210
    %v741 = vunpack.c.l.b16 %v211
    %v742 = vunpack.c.l.b16 %v212
    %v743 = vunpack.c.l.b16 %v213
    %v744 = vunpack.c.l.b16 %v214
    %v745 = vunpack.c.l.b16 %v215
    %v746 = vunpack.c.l.b16 %v216
    %v747 = vunpack.c.l.b16 %v217
    %v748 = vunpack.c.l.b16 %v218
    %v749 = vunpack.c.l.b16 %v219
    %v750 = vunpack.c.l.b16 %v220
    %v751 = vunpack.c.l.b16 %v221
    %v752 = vunpack.c.l.b16 %v222
    %v753 = vunpack.c.l.b16 %v223
    %v754 = vunpack.c.l.b16 %v224
    %v755 = vunpack.c.l.b16 %v225
    %v756 = vunpack.c.l.b16 %v226
    %v757 = vunpack.c.l.b16 %v227
    %v758 = vunpack.c.l.b16 %v228
    %v759 = vunpack.c.l.b16 %v229
    %v760 = vunpack.c.l.b16 %v230
    %v761 = vunpack.c.l.b16 %v231
    %v762 = vunpack.c.l.b16 %v232
    %v763 = vunpack.c.l.b16 %v233
    %v764 = vunpack.c.l.b16 %v234
    %v765 = vunpack.c.l.b16 %v235
    %v766 = vunpack.c.l.b16 %v236
    %v767 = vunpack.c.l.b16 %v237
    %v768 = vunpack.c.l.b16 %v238
    %v769 = vunpack.c.l.b16 %v239
    %v770 = vunpack.c.l.b16 %v240
    %v771 = vunpack.c.l.b16 %v241
    %v772 = vunpack.c.l.b16 %v242
    %v773 = vunpack.c.l.b16 %v243
    %v774 = vunpack.c.l.b16 %v244
    %v775 = vunpack.c.l.b16 %v245
    %v776 = vunpack.c.l.b16 %v246
    %v777 = vunpack.c.l.b16 %v247
    %v778 = vunpack.c.l.b16 %v248
    %v779 = vunpack.c.l.b16 %v249
    %v780 = vunpack.c.l.b16 %v250
    %v781 = vunpack.c.l.b16 %v251
    %v782 = vunpack.c.l.b16 %v252
    %v783 = vunpack.c.l.b16 %v253
    %v784 = vunpack.c.l.b16 %v254
    %v785 = vunpack.c.l.b16 %v255
    %v786 = vpack.c.b16 %v587, %v586
    %v787 = vpack.c.b16 %v589, %v588
    %v788 = vpack.c.b16 %v591, %v590
    %v789 = vpack.c.b16 %v593, %v592
    %v790 = vpack.c.b16 %v595, %v594
    %v791 = vpack.c.b16 %v597, %v596
    %v792 = vpack.c.b16 %v599, %v598
    %v793 = vpack.c.b16 %v601, %v600
    %v794 = vpack.c.b16 %v603, %v602
    %v795 = vpack.c.b16 %v605, %v604
    %v796 = vpack.c.b16 %v607, %v606
    %v797 = vpack.c.b16 %v609, %v608
    %v798 = vpack.c.b16 %v611, %v610
    %v799 = vpack.c.b16 %v613, %v612
    %v800 = vpack.c.b16 %v615, %v614
    %v801 = vpack.c.b16 %v617, %v616
    %v802 = vpack.c.b16 %v619, %v618
    %v803 = vpack.c.b16 %v621, %v620
    %v804 = vpack.c.b16 %v623, %v622
    %v805 = vpack.c.b16 %v625, %v624
    %v806 = vpack.c.b16 %v627, %v626
    %v807 = vpack.c.b16 %v629, %v628
    %v808 = vpack.c.b16 %v631, %v630
    %v809 = vpack.c.b16 %v633, %v632
    %v810 = vpack.c.b16 %v635, %v634
    %v811 = vpack.c.b16 %v637, %v636
    %v812 = vpack.c.b16 %v639, %v638
    %v813 = vpack.c.b16 %v641, %v640
    %v814 = vpack.c.b16 %v643, %v642
    %v815 = vpack.c.b16 %v645, %v644
    %v816 = vpack.c.b16 %v647, %v646
    %v817 = vpack.c.b16 %v649, %v648
    %v818 = vpack.c.b16 %v651, %v650
    %v819 = vpack.c.b16 %v653, %v652
    %v820 = vpack.c.b16 %v655, %v654
    %v821 = vpack.c.b16 %v657, %v656
    %v822 = vpack.c.b16 %v659, %v658
    %v823 = vpack.c.b16 %v661, %v660
    %v824 = vpack.c.b16 %v663, %v662
    %v825 = vpack.c.b16 %v665, %v664
    %v826 = vpack.c.b16 %v667, %v666
    %v827 = vpack.c.b16 %v669, %v668
    %v828 = vpack.c.b16 %v671, %v670
    %v829 = vpack.c.b16 %v673, %v672
    %v830 = vpack.c.b16 %v675, %v674
    %v831 = vpack.c.b16 %v677, %v676
    %v832 = vpack.c.b16 %v679, %v678
    %v833 = vpack.c.b16 %v681, %v680
    %v834 = vpack.c.b16 %v683, %v682
    %v835 = vpack.c.b16 %v685, %v684
    %v836 = vpack.c.b16 %v687, %v686
    %v837 = vpack.c.b16 %v689, %v688
    %v838 = vpack.c.b16 %v691, %v690
    %v839 = vpack.c.b16 %v693, %v692
    %v840 = vpack.c.b16 %v695, %v694
    %v841 = vpack.c.b16 %v697, %v696
    %v842 = vpack.c.b16 %v699, %v698
    %v843 = vpack.c.b16 %v701, %v700
    %v844 = vpack.c.b16 %v703, %v702
    %v845 = vpack.c.b16 %v705, %v704
    %v846 = vpack.c.b16 %v707, %v706
    %v847 = vpack.c.b16 %v709, %v708
    %v848 = vpack.c.b16 %v711, %v710
    %v849 = vpack.c.b16 %v713, %v712
    %v850 = vpack.c.b16 %v715, %v714
    %v851 = vpack.c.b16 %v717, %v716
    %v852 = vpack.c.b16 %v719, %v718
    %v853 = vpack.c.b16 %v721, %v720
    %v854 = vpack.c.b16 %v723, %v722
    %v855 = vpack.c.b16 %v725, %v724
    %v856 = vpack.c.b16 %v727, %v726
    %v857 = vpack.c.b16 %v729, %v728
    %v858 = vpack.c.b16 %v731, %v730
    %v859 = vpack.c.b16 %v733, %v732
    %v860 = vpack.c.b16 %v735, %v734
    %v861 = vpack.c.b16 %v737, %v736
    %v862 = vpack.c.b16 %v739, %v738
    %v863 = vpack.c.b16 %v741, %v740
    %v864 = vpack.c.b16 %v743, %v742
    %v865 = vpack.c.b16 %v745, %v744
    %v866 = vpack.c.b16 %v747, %v746
    %v867 = vpack.c.b16 %v749, %v748
    %v868 = vpack.c.b16 %v751, %v750
    %v869 = vpack.c.b16 %v753, %v752
    %v870 = vpack.c.b16 %v755, %v754
    %v871 = vpack.c.b16 %v757, %v756
    %v872 = vpack.c.b16 %v759, %v758
    %v873 = vpack.c.b16 %v761, %v760
    %v874 = vpack.c.b16 %v763, %v762
    %v875 = vpack.c.b16 %v765, %v764
    %v876 = vpack.c.b16 %v767, %v766
    %v877 = vpack.c.b16 %v769, %v768
    %v878 = vpack.c.b16 %v771, %v770
    %v879 = vpack.c.b16 %v773, %v772
    %v880 = vpack.c.b16 %v775, %v774
    %v881 = vpack.c.b16 %v777, %v776
    %v882 = vpack.c.b16 %v779, %v778
    %v883 = vpack.c.b16 %v781, %v780
    %v884 = vpack.c.b16 %v783, %v782
    %v885 = vpack.c.b16 %v785, %v784
    %vm986 = vcmask 523264
    %v988 = vsel %vm986, %v348, 0
    %v991 = vsel %vm986, %v361, 0
    %993 = vmatprep.subr.bf16.mxu0 0
    %994 = vmatpush1.bf16.msra.mxu0 %v786
    %995 = vmatprep.subr.bf16.mxu0 0
    %996 = vmatpush1.bf16.msra.mxu0 %v787
    %997 = vmatprep.subr.bf16.mxu0 0
    %998 = vmatpush1.bf16.msra.mxu0 %v788
    %999 = vmatprep.subr.bf16.mxu0 0
    %1000 = vmatpush1.bf16.msra.mxu0 %v789
    %1001 = vmatprep.subr.bf16.mxu0 0
    %1002 = vmatpush1.bf16.msra.mxu0 %v790
    %1003 = vmatprep.subr.bf16.mxu0 0
    %1004 = vmatpush1.bf16.msra.mxu0 %v791
    %1005 = vmatprep.subr.bf16.mxu0 0
    %1006 = vmatpush1.bf16.msra.mxu0 %v792
    %1007 = vmatprep.subr.bf16.mxu0 0
    %1008 = vmatpush1.bf16.msra.mxu0 %v793
    %1009 = vmatprep.subr.bf16.mxu0 0
    %1010 = vmatpush1.bf16.msra.mxu0 %v794
    %1011 = vmatprep.subr.bf16.mxu0 0
    %1012 = vmatpush1.bf16.msra.mxu0 %v795
    %1013 = vmatprep.subr.bf16.mxu0 0
    %1014 = vmatpush1.bf16.msra.mxu0 %v796
    %1015 = vmatprep.subr.bf16.mxu0 0
    %1016 = vmatpush1.bf16.msra.mxu0 %v797
    %1017 = vmatprep.subr.bf16.mxu0 0
    %1018 = vmatpush1.bf16.msra.mxu0 %v798
    %1019 = vmatprep.subr.bf16.mxu0 0
    %1020 = vmatpush1.bf16.msra.mxu0 %v799
    %1021 = vmatprep.subr.bf16.mxu0 0
    %1022 = vmatpush1.bf16.msra.mxu0 %v800
    %1023 = vmatprep.subr.bf16.mxu0 0
    %1024 = vmatpush1.bf16.msra.mxu0 %v801
    %1025 = vmatprep.mubr.bf16.mxu0 %v337
    %1026 = vmatmul.mubr.bf16.gmra.mrb[0].mxu0 %v336
    %v1027 = vpop.f32.mrb[0].mxu0
    %v1028 = vadd.f32 0.0, %v1027
    %v1029 = vpop.f32.mrb[0].mxu0
    %v1030 = vpop.f32.mrb[0].mxu0
    %v1031 = vadd.f32 0.0, %v1030
    %v1032 = vpop.f32.mrb[0].mxu0
    %1033 = vmatprep.mubr.bf16.mxu0 %v350
    %1034 = vmatmul.mubr.bf16.gmra.mrb[0].mxu0 %v349
    %v1035 = vpop.f32.mrb[0].mxu0
    %v1036 = vadd.f32 0.0, %v1035
    %v1037 = vpop.f32.mrb[0].mxu0
    %v1038 = vpop.f32.mrb[0].mxu0
    %v1039 = vadd.f32 0.0, %v1038
    %v1040 = vpop.f32.mrb[0].mxu0
    %1041 = vdwg.mxu0
    %1042 = vmatprep.subr.bf16.mxu0 0
    %1043 = vmatpush1.bf16.msra.mxu0 %v802
    %1044 = vmatprep.subr.bf16.mxu0 0
    %1045 = vmatpush1.bf16.msra.mxu0 %v803
    %1046 = vmatprep.subr.bf16.mxu0 0
    %1047 = vmatpush1.bf16.msra.mxu0 %v804
    %1048 = vmatprep.subr.bf16.mxu0 0
    %1049 = vmatpush1.bf16.msra.mxu0 %v805
    %1050 = vmatprep.subr.bf16.mxu0 0
    %1051 = vmatpush1.bf16.msra.mxu0 %v806
    %1052 = vmatprep.subr.bf16.mxu0 0
    %1053 = vmatpush1.bf16.msra.mxu0 %v807
    %1054 = vmatprep.subr.bf16.mxu0 0
    %1055 = vmatpush1.bf16.msra.mxu0 %v808
    %1056 = vmatprep.subr.bf16.mxu0 0
    %1057 = vmatpush1.bf16.msra.mxu0 %v809
    %1058 = vmatprep.subr.bf16.mxu0 0
    %1059 = vmatpush1.bf16.msra.mxu0 %v810
    %1060 = vmatprep.subr.bf16.mxu0 0
    %1061 = vmatpush1.bf16.msra.mxu0 %v811
    %1062 = vmatprep.subr.bf16.mxu0 0
    %1063 = vmatpush1.bf16.msra.mxu0 %v812
    %1064 = vmatprep.subr.bf16.mxu0 0
    %1065 = vmatpush1.bf16.msra.mxu0 %v813
    %1066 = vmatprep.subr.bf16.mxu0 0
    %1067 = vmatpush1.bf16.msra.mxu0 %v814
    %1068 = vmatprep.subr.bf16.mxu0 0
    %1069 = vmatpush1.bf16.msra.mxu0 %v815
    %1070 = vmatprep.subr.bf16.mxu0 0
    %1071 = vmatpush1.bf16.msra.mxu0 %v816
    %1072 = vmatprep.subr.bf16.mxu0 0
    %1073 = vmatpush1.bf16.msra.mxu0 %v817
    %1074 = vmatprep.mubr.bf16.mxu0 %v339
    %1075 = vmatmul.mubr.bf16.gmra.mrb[0].mxu0 %v338
    %v1076 = vpop.f32.mrb[0].mxu0
    %v1077 = vadd.f32 %v1028, %v1076
    %v1078 = vpop.f32.mrb[0].mxu0
    %v1079 = vpop.f32.mrb[0].mxu0
    %v1080 = vadd.f32 %v1031, %v1079
    %v1081 = vpop.f32.mrb[0].mxu0
    %1082 = vmatprep.mubr.bf16.mxu0 %v352
    %1083 = vmatmul.mubr.bf16.gmra.mrb[0].mxu0 %v351
    %v1084 = vpop.f32.mrb[0].mxu0
    %v1085 = vadd.f32 %v1036, %v1084
    %v1086 = vpop.f32.mrb[0].mxu0
    %v1087 = vpop.f32.mrb[0].mxu0
    %v1088 = vadd.f32 %v1039, %v1087
    %v1089 = vpop.f32.mrb[0].mxu0
    %1090 = vdwg.mxu0
    %1091 = vmatprep.subr.bf16.mxu0 0
    %1092 = vmatpush1.bf16.msra.mxu0 %v818
    %1093 = vmatprep.subr.bf16.mxu0 0
    %1094 = vmatpush1.bf16.msra.mxu0 %v819
    %1095 = vmatprep.subr.bf16.mxu0 0
    %1096 = vmatpush1.bf16.msra.mxu0 %v820
    %1097 = vmatprep.subr.bf16.mxu0 0
    %1098 = vmatpush1.bf16.msra.mxu0 %v821
    %1099 = vmatprep.subr.bf16.mxu0 0
    %1100 = vmatpush1.bf16.msra.mxu0 %v822
    %1101 = vmatprep.subr.bf16.mxu0 0
    %1102 = vmatpush1.bf16.msra.mxu0 %v823
    %1103 = vmatprep.subr.bf16.mxu0 0
    %1104 = vmatpush1.bf16.msra.mxu0 %v824
    %1105 = vmatprep.subr.bf16.mxu0 0
    %1106 = vmatpush1.bf16.msra.mxu0 %v825
    %1107 = vmatprep.subr.bf16.mxu0 0
    %1108 = vmatpush1.bf16.msra.mxu0 %v826
    %1109 = vmatprep.subr.bf16.mxu0 0
    %1110 = vmatpush1.bf16.msra.mxu0 %v827
    %1111 = vmatprep.subr.bf16.mxu0 0
    %1112 = vmatpush1.bf16.msra.mxu0 %v828
    %1113 = vmatprep.subr.bf16.mxu0 0
    %1114 = vmatpush1.bf16.msra.mxu0 %v829
    %1115 = vmatprep.subr.bf16.mxu0 0
    %1116 = vmatpush1.bf16.msra.mxu0 %v830
    %1117 = vmatprep.subr.bf16.mxu0 0
    %1118 = vmatpush1.bf16.msra.mxu0 %v831
    %1119 = vmatprep.subr.bf16.mxu0 0
    %1120 = vmatpush1.bf16.msra.mxu0 %v832
    %1121 = vmatprep.subr.bf16.mxu0 0
    %1122 = vmatpush1.bf16.msra.mxu0 %v833
    %1123 = vmatprep.mubr.bf16.mxu0 %v341
    %1124 = vmatmul.mubr.bf16.gmra.mrb[0].mxu0 %v340
    %v1125 = vpop.f32.mrb[0].mxu0
    %v1126 = vadd.f32 %v1077, %v1125
    %v1127 = vpop.f32.mrb[0].mxu0
    %v1128 = vpop.f32.mrb[0].mxu0
    %v1129 = vadd.f32 %v1080, %v1128
    %v1130 = vpop.f32.mrb[0].mxu0
    %1131 = vmatprep.mubr.bf16.mxu0 %v354
    %1132 = vmatmul.mubr.bf16.gmra.mrb[0].mxu0 %v353
    %v1133 = vpop.f32.mrb[0].mxu0
    %v1134 = vadd.f32 %v1085, %v1133
    %v1135 = vpop.f32.mrb[0].mxu0
    %v1136 = vpop.f32.mrb[0].mxu0
    %v1137 = vadd.f32 %v1088, %v1136
    %v1138 = vpop.f32.mrb[0].mxu0
    %1139 = vdwg.mxu0
    %1140 = vmatprep.subr.bf16.mxu0 0
    %1141 = vmatpush1.bf16.msra.mxu0 %v834
    %1142 = vmatprep.subr.bf16.mxu0 0
    %1143 = vmatpush1.bf16.msra.mxu0 %v835
    %1144 = vmatprep.subr.bf16.mxu0 0
    %1145 = vmatpush1.bf16.msra.mxu0 %v836
    %1146 = vmatprep.subr.bf16.mxu0 0
    %1147 = vmatpush1.bf16.msra.mxu0 %v837
    %1148 = vmatprep.subr.bf16.mxu0 0
    %1149 = vmatpush1.bf16.msra.mxu0 %v838
    %1150 = vmatprep.subr.bf16.mxu0 0
    %1151 = vmatpush1.bf16.msra.mxu0 %v839
    %1152 = vmatprep.subr.bf16.mxu0 0
    %1153 = vmatpush1.bf16.msra.mxu0 %v840
    %1154 = vmatprep.subr.bf16.mxu0 0
    %1155 = vmatpush1.bf16.msra.mxu0 %v841
    %1156 = vmatprep.subr.bf16.mxu0 0
    %1157 = vmatpush1.bf16.msra.mxu0 %v842
    %1158 = vmatprep.subr.bf16.mxu0 0
    %1159 = vmatpush1.bf16.msra.mxu0 %v843
    %1160 = vmatprep.subr.bf16.mxu0 0
    %1161 = vmatpush1.bf16.msra.mxu0 %v844
    %1162 = vmatprep.subr.bf16.mxu0 0
    %1163 = vmatpush1.bf16.msra.mxu0 %v845
    %1164 = vmatprep.subr.bf16.mxu0 0
    %1165 = vmatpush1.bf16.msra.mxu0 %v846
    %1166 = vmatprep.subr.bf16.mxu0 0
    %1167 = vmatpush1.bf16.msra.mxu0 %v847
    %1168 = vmatprep.subr.bf16.mxu0 0
    %1169 = vmatpush1.bf16.msra.mxu0 %v848
    %1170 = vmatprep.subr.bf16.mxu0 0
    %1171 = vmatpush1.bf16.msra.mxu0 %v849
    %1172 = vmatprep.mubr.bf16.mxu0 %v343
    %1173 = vmatmul.mubr.bf16.gmra.mrb[0].mxu0 %v342
    %v1174 = vpop.f32.mrb[0].mxu0
    %v1175 = vadd.f32 %v1126, %v1174
    %v1176 = vpop.f32.mrb[0].mxu0
    %v1177 = vpop.f32.mrb[0].mxu0
    %v1178 = vadd.f32 %v1129, %v1177
    %v1179 = vpop.f32.mrb[0].mxu0
    %1180 = vmatprep.mubr.bf16.mxu0 %v356
    %1181 = vmatmul.mubr.bf16.gmra.mrb[0].mxu0 %v355
    %v1182 = vpop.f32.mrb[0].mxu0
    %v1183 = vadd.f32 %v1134, %v1182
    %v1184 = vpop.f32.mrb[0].mxu0
    %v1185 = vpop.f32.mrb[0].mxu0
    %v1186 = vadd.f32 %v1137, %v1185
    %v1187 = vpop.f32.mrb[0].mxu0
    %1188 = vdwg.mxu0
    %1189 = vmatprep.subr.bf16.mxu0 0
    %1190 = vmatpush1.bf16.msra.mxu0 %v850
    %1191 = vmatprep.subr.bf16.mxu0 0
    %1192 = vmatpush1.bf16.msra.mxu0 %v851
    %1193 = vmatprep.subr.bf16.mxu0 0
    %1194 = vmatpush1.bf16.msra.mxu0 %v852
    %1195 = vmatprep.subr.bf16.mxu0 0
    %1196 = vmatpush1.bf16.msra.mxu0 %v853
    %1197 = vmatprep.subr.bf16.mxu0 0
    %1198 = vmatpush1.bf16.msra.mxu0 %v854
    %1199 = vmatprep.subr.bf16.mxu0 0
    %1200 = vmatpush1.bf16.msra.mxu0 %v855
    %1201 = vmatprep.subr.bf16.mxu0 0
    %1202 = vmatpush1.bf16.msra.mxu0 %v856
    %1203 = vmatprep.subr.bf16.mxu0 0
    %1204 = vmatpush1.bf16.msra.mxu0 %v857
    %1205 = vmatprep.subr.bf16.mxu0 0
    %1206 = vmatpush1.bf16.msra.mxu0 %v858
    %1207 = vmatprep.subr.bf16.mxu0 0
    %1208 = vmatpush1.bf16.msra.mxu0 %v859
    %1209 = vmatprep.subr.bf16.mxu0 0
    %1210 = vmatpush1.bf16.msra.mxu0 %v860
    %1211 = vmatprep.subr.bf16.mxu0 0
    %1212 = vmatpush1.bf16.msra.mxu0 %v861
    %1213 = vmatprep.subr.bf16.mxu0 0
    %1214 = vmatpush1.bf16.msra.mxu0 %v862
    %1215 = vmatprep.subr.bf16.mxu0 0
    %1216 = vmatpush1.bf16.msra.mxu0 %v863
    %1217 = vmatprep.subr.bf16.mxu0 0
    %1218 = vmatpush1.bf16.msra.mxu0 %v864
    %1219 = vmatprep.subr.bf16.mxu0 0
    %1220 = vmatpush1.bf16.msra.mxu0 %v865
    %1221 = vmatprep.mubr.bf16.mxu0 %v345
    %1222 = vmatmul.mubr.bf16.gmra.mrb[0].mxu0 %v344
    %v1223 = vpop.f32.mrb[0].mxu0
    %v1224 = vadd.f32 %v1175, %v1223
    %v1225 = vpop.f32.mrb[0].mxu0
    %v1226 = vpop.f32.mrb[0].mxu0
    %v1227 = vadd.f32 %v1178, %v1226
    %v1228 = vpop.f32.mrb[0].mxu0
    %1229 = vmatprep.mubr.bf16.mxu0 %v358
    %1230 = vmatmul.mubr.bf16.gmra.mrb[0].mxu0 %v357
    %v1231 = vpop.f32.mrb[0].mxu0
    %v1232 = vadd.f32 %v1183, %v1231
    %v1233 = vpop.f32.mrb[0].mxu0
    %v1234 = vpop.f32.mrb[0].mxu0
    %v1235 = vadd.f32 %v1186, %v1234
    %v1236 = vpop.f32.mrb[0].mxu0
    %1237 = vdwg.mxu0
    %1238 = vmatprep.subr.bf16.mxu0 0
    %1239 = vmatpush1.bf16.msra.mxu0 %v866
    %1240 = vmatprep.subr.bf16.mxu0 0
    %1241 = vmatpush1.bf16.msra.mxu0 %v867
    %1242 = vmatprep.subr.bf16.mxu0 0
    %1243 = vmatpush1.bf16.msra.mxu0 %v868
    %1244 = vmatprep.subr.bf16.mxu0 0
    %1245 = vmatpush1.bf16.msra.mxu0 %v869
    %1246 = vmatprep.subr.bf16.mxu0 0
    %1247 = vmatpush1.bf16.msra.mxu0 %v870
    %1248 = vmatprep.subr.bf16.mxu0 0
    %1249 = vmatpush1.bf16.msra.mxu0 %v871
    %1250 = vmatprep.subr.bf16.mxu0 0
    %1251 = vmatpush1.bf16.msra.mxu0 %v872
    %1252 = vmatprep.subr.bf16.mxu0 0
    %1253 = vmatpush1.bf16.msra.mxu0 %v873
    %1254 = vmatprep.subr.bf16.mxu0 0
    %1255 = vmatpush1.bf16.msra.mxu0 %v874
    %1256 = vmatprep.subr.bf16.mxu0 0
    %1257 = vmatpush1.bf16.msra.mxu0 %v875
    %1258 = vmatprep.subr.bf16.mxu0 0
    %1259 = vmatpush1.bf16.msra.mxu0 %v876
    %1260 = vmatprep.subr.bf16.mxu0 0
    %1261 = vmatpush1.bf16.msra.mxu0 %v877
    %1262 = vmatprep.subr.bf16.mxu0 0
    %1263 = vmatpush1.bf16.msra.mxu0 %v878
    %1264 = vmatprep.subr.bf16.mxu0 0
    %1265 = vmatpush1.bf16.msra.mxu0 %v879
    %1266 = vmatprep.subr.bf16.mxu0 0
    %1267 = vmatpush1.bf16.msra.mxu0 %v880
    %1268 = vmatprep.subr.bf16.mxu0 0
    %1269 = vmatpush1.bf16.msra.mxu0 %v881
    %1270 = vmatprep.mubr.bf16.mxu0 %v347
    %1271 = vmatmul.mubr.bf16.gmra.mrb[0].mxu0 %v346
    %v1272 = vpop.f32.mrb[0].mxu0
    %v1273 = vadd.f32 %v1224, %v1272
    %v1274 = vpop.f32.mrb[0].mxu0
    %v1275 = vpop.f32.mrb[0].mxu0
    %v1276 = vadd.f32 %v1227, %v1275
    %v1277 = vpop.f32.mrb[0].mxu0
    %1278 = vmatprep.mubr.bf16.mxu0 %v360
    %1279 = vmatmul.mubr.bf16.gmra.mrb[0].mxu0 %v359
    %v1280 = vpop.f32.mrb[0].mxu0
    %v1281 = vadd.f32 %v1232, %v1280
    %v1282 = vpop.f32.mrb[0].mxu0
    %v1283 = vpop.f32.mrb[0].mxu0
    %v1284 = vadd.f32 %v1235, %v1283
    %v1285 = vpop.f32.mrb[0].mxu0
    %1286 = vdwg.mxu0
    %1287 = vmatprep.subr.bf16.mxu0 0
    %1288 = vmatpush1.bf16.msra.mxu0 %v882
    %1289 = vmatprep.subr.bf16.mxu0 0
    %1290 = vmatpush1.bf16.msra.mxu0 %v883
    %1291 = vmatprep.subr.bf16.mxu0 0
    %1292 = vmatpush1.bf16.msra.mxu0 %v884
    %1293 = vmatprep.subr.bf16.mxu0 0
    %1294 = vmatpush1.bf16.msra.mxu0 %v885
    %1295 = vmatprep.subr.bf16.mxu0 0
    %1296 = vmatpush1.bf16.msra.mxu0 0
    %1297 = vmatprep.subr.bf16.mxu0 0
    %1298 = vmatpush1.bf16.msra.mxu0 0
    %1299 = vmatprep.subr.bf16.mxu0 0
    %1300 = vmatpush1.bf16.msra.mxu0 0
    %1301 = vmatprep.subr.bf16.mxu0 0
    %1302 = vmatpush1.bf16.msra.mxu0 0
    %1303 = vmatprep.subr.bf16.mxu0 0
    %1304 = vmatpush1.bf16.msra.mxu0 0
    %1305 = vmatprep.subr.bf16.mxu0 0
    %1306 = vmatpush1.bf16.msra.mxu0 0
    %1307 = vmatprep.subr.bf16.mxu0 0
    %1308 = vmatpush1.bf16.msra.mxu0 0
    %1309 = vmatprep.subr.bf16.mxu0 0
    %1310 = vmatpush1.bf16.msra.mxu0 0
    %1311 = vmatprep.subr.bf16.mxu0 0
    %1312 = vmatpush1.bf16.msra.mxu0 0
    %1313 = vmatprep.subr.bf16.mxu0 0
    %1314 = vmatpush1.bf16.msra.mxu0 0
    %1315 = vmatprep.subr.bf16.mxu0 0
    %1316 = vmatpush1.bf16.msra.mxu0 0
    %1317 = vmatprep.subr.bf16.mxu0 0
    %1318 = vmatpush1.bf16.msra.mxu0 0
    %1319 = vmatprep.mubr.bf16.mxu0 0
    %1320 = vmatmul.mubr.bf16.gmra.mrb[0].mxu0 %v988
    %v1321 = vpop.f32.mrb[0].mxu0
    %v1322 = vadd.f32 %v1273, %v1321
    %v1323 = vpop.f32.mrb[0].mxu0
    %v1324 = vpop.f32.mrb[0].mxu0
    %v1325 = vadd.f32 %v1276, %v1324
    %v1326 = vpop.f32.mrb[0].mxu0
    %1327 = vmatprep.mubr.bf16.mxu0 0
    %1328 = vmatmul.mubr.bf16.gmra.mrb[0].mxu0 %v991
    %v1329 = vpop.f32.mrb[0].mxu0
    %v1330 = vadd.f32 %v1281, %v1329
    %v1331 = vpop.f32.mrb[0].mxu0
    %v1332 = vpop.f32.mrb[0].mxu0
    %v1333 = vadd.f32 %v1284, %v1332
    %v1334 = vpop.f32.mrb[0].mxu0
    %1335 = vdwg.mxu0
    %v1336 = vmax.f32 %v1322, %v1325
    %v1337 = vmax.f32 %v1330, %v1333
    %v1338 = vmax.f32 %v1336, %v1337
    %v1339 = vld [vmem:[%s2] sm:$0x1]
    %v1341 = vlaneseq
    %v1342 = vshrl.u32 %v1341, 7
    %v1343 = vsub.s32 0, %v1342
    %v1344 = vrot.slane %v1339, %v1343
    %v1346 = vadd.f32 %v1338, %v1344
    %v1347 = vmax.f32 %v1346, 0.0
    %v1349 = vrot.slane %v1347, 2
    %v1351 = vrot.slane %v1347, 4
    %v1353 = vrot.slane %v1347, 6
    %v1355 = vpack.c.bf16 %v1347, %v1347
    %v1356 = vpack.c.bf16 %v1349, %v1349
    %v1357 = vpack.c.bf16 %v1351, %v1351
    %v1358 = vpack.c.bf16 %v1353, %v1353
    %v1359 = vld [vmem:[%s3] sm:$0xff]
    %v1360 = vld [vmem:[%s3 + $0x8] sm:$0xff]
    %v1361 = vld [vmem:[%s3 + $0x10] sm:$0xff]
    %v1362 = vld [vmem:[%s3 + $0x18] sm:$0xff]
    %v1363 = vld [vmem:[%s3 + $0x20] sm:$0xff]
    %v1364 = vld [vmem:[%s3 + $0x28] sm:$0xff]
    %v1365 = vld [vmem:[%s3 + $0x30] sm:$0xff]
    %v1366 = vld [vmem:[%s3 + $0x38] sm:$0xff]
    %v1367 = vld [vmem:[%s3 + $0x40] sm:$0xff]
    %v1368 = vld [vmem:[%s3 + $0x48] sm:$0xff]
    %v1369 = vld [vmem:[%s3 + $0x50] sm:$0xff]
    %v1370 = vld [vmem:[%s3 + $0x58] sm:$0xff]
    %v1371 = vld [vmem:[%s3 + $0x60] sm:$0xff]
    %v1372 = vld [vmem:[%s3 + $0x68] sm:$0xff]
    %v1373 = vld [vmem:[%s3 + $0x70] sm:$0xff]
    %v1374 = vld [vmem:[%s3 + $0x78] sm:$0xff]
    %v1375 = vld [vmem:[%s3 + $0x80] sm:$0xff]
    %v1376 = vld [vmem:[%s3 + $0x88] sm:$0xff]
    %v1377 = vld [vmem:[%s3 + $0x90] sm:$0xff]
    %v1378 = vld [vmem:[%s3 + $0x98] sm:$0xff]
    %v1379 = vld [vmem:[%s3 + $0xa0] sm:$0xff]
    %v1380 = vld [vmem:[%s3 + $0xa8] sm:$0xff]
    %v1381 = vld [vmem:[%s3 + $0xb0] sm:$0xff]
    %v1382 = vld [vmem:[%s3 + $0xb8] sm:$0xff]
    %v1383 = vld [vmem:[%s3 + $0xc0] sm:$0xff]
    %v1384 = vld [vmem:[%s3 + $0xc8] sm:$0xff]
    %v1385 = vld [vmem:[%s3 + $0xd0] sm:$0xff]
    %v1386 = vld [vmem:[%s3 + $0xd8] sm:$0xff]
    %v1387 = vld [vmem:[%s3 + $0xe0] sm:$0xff]
    %v1388 = vld [vmem:[%s3 + $0xe8] sm:$0xff]
    %v1389 = vld [vmem:[%s3 + $0xf0] sm:$0xff]
    %v1390 = vld [vmem:[%s3 + $0xf8] sm:$0xff]
    %v1391 = vld [vmem:[%s3 + $0x100] sm:$0xff]
    %v1392 = vld [vmem:[%s3 + $0x108] sm:$0xff]
    %v1393 = vld [vmem:[%s3 + $0x110] sm:$0xff]
    %v1394 = vld [vmem:[%s3 + $0x118] sm:$0xff]
    %v1395 = vld [vmem:[%s3 + $0x120] sm:$0xff]
    %v1396 = vld [vmem:[%s3 + $0x128] sm:$0xff]
    %v1397 = vld [vmem:[%s3 + $0x130] sm:$0xff]
    %v1398 = vld [vmem:[%s3 + $0x138] sm:$0xff]
    %v1399 = vld [vmem:[%s3 + $0x140] sm:$0xff]
    %v1400 = vld [vmem:[%s3 + $0x148] sm:$0xff]
    %v1401 = vld [vmem:[%s3 + $0x150] sm:$0xff]
    %v1402 = vld [vmem:[%s3 + $0x158] sm:$0xff]
    %v1403 = vld [vmem:[%s3 + $0x160] sm:$0xff]
    %v1404 = vld [vmem:[%s3 + $0x168] sm:$0xff]
    %v1405 = vld [vmem:[%s3 + $0x170] sm:$0xff]
    %v1406 = vld [vmem:[%s3 + $0x178] sm:$0xff]
    %v1407 = vld [vmem:[%s3 + $0x180] sm:$0xff]
    %v1408 = vld [vmem:[%s3 + $0x188] sm:$0xff]
    %v1409 = vld [vmem:[%s3 + $0x190] sm:$0xff]
    %v1410 = vld [vmem:[%s3 + $0x198] sm:$0xff]
    %v1411 = vld [vmem:[%s3 + $0x1a0] sm:$0xff]
    %v1412 = vld [vmem:[%s3 + $0x1a8] sm:$0xff]
    %v1413 = vld [vmem:[%s3 + $0x1b0] sm:$0xff]
    %v1414 = vld [vmem:[%s3 + $0x1b8] sm:$0xff]
    %v1415 = vld [vmem:[%s3 + $0x1c0] sm:$0xff]
    %v1416 = vld [vmem:[%s3 + $0x1c8] sm:$0xff]
    %v1417 = vld [vmem:[%s3 + $0x1d0] sm:$0xff]
    %v1418 = vld [vmem:[%s3 + $0x1d8] sm:$0xff]
    %v1419 = vld [vmem:[%s3 + $0x1e0] sm:$0xff]
    %v1420 = vld [vmem:[%s3 + $0x1e8] sm:$0xff]
    %v1421 = vld [vmem:[%s3 + $0x1f0] sm:$0xff]
    %v1422 = vld [vmem:[%s3 + $0x1f8] sm:$0xff]
    %v1423 = vld [vmem:[%s3 + $0x200] sm:$0xff]
    %v1424 = vld [vmem:[%s3 + $0x208] sm:$0xff]
    %v1425 = vld [vmem:[%s3 + $0x210] sm:$0xff]
    %v1426 = vld [vmem:[%s3 + $0x218] sm:$0xff]
    %v1427 = vld [vmem:[%s3 + $0x220] sm:$0xff]
    %v1428 = vld [vmem:[%s3 + $0x228] sm:$0xff]
    %v1429 = vld [vmem:[%s3 + $0x230] sm:$0xff]
    %v1430 = vld [vmem:[%s3 + $0x238] sm:$0xff]
    %v1431 = vld [vmem:[%s3 + $0x240] sm:$0xff]
    %v1432 = vld [vmem:[%s3 + $0x248] sm:$0xff]
    %v1433 = vld [vmem:[%s3 + $0x250] sm:$0xff]
    %v1434 = vld [vmem:[%s3 + $0x258] sm:$0xff]
    %v1435 = vld [vmem:[%s3 + $0x260] sm:$0xff]
    %v1436 = vld [vmem:[%s3 + $0x268] sm:$0xff]
    %v1437 = vld [vmem:[%s3 + $0x270] sm:$0xff]
    %v1438 = vld [vmem:[%s3 + $0x278] sm:$0xff]
    %v1439 = vld [vmem:[%s3 + $0x280] sm:$0xff]
    %v1440 = vld [vmem:[%s3 + $0x288] sm:$0xff]
    %v1441 = vld [vmem:[%s3 + $0x290] sm:$0xff]
    %v1442 = vld [vmem:[%s3 + $0x298] sm:$0xff]
    %v1443 = vld [vmem:[%s3 + $0x2a0] sm:$0xff]
    %v1444 = vld [vmem:[%s3 + $0x2a8] sm:$0xff]
    %v1445 = vld [vmem:[%s3 + $0x2b0] sm:$0xff]
    %v1446 = vld [vmem:[%s3 + $0x2b8] sm:$0xff]
    %v1447 = vld [vmem:[%s3 + $0x2c0] sm:$0xff]
    %v1448 = vld [vmem:[%s3 + $0x2c8] sm:$0xff]
    %v1449 = vld [vmem:[%s3 + $0x2d0] sm:$0xff]
    %v1450 = vld [vmem:[%s3 + $0x2d8] sm:$0xff]
    %v1451 = vld [vmem:[%s3 + $0x2e0] sm:$0xff]
    %v1452 = vld [vmem:[%s3 + $0x2e8] sm:$0xff]
    %v1453 = vld [vmem:[%s3 + $0x2f0] sm:$0xff]
    %v1454 = vld [vmem:[%s3 + $0x2f8] sm:$0xff]
    %v1455 = vld [vmem:[%s3 + $0x300] sm:$0xff]
    %v1456 = vld [vmem:[%s3 + $0x308] sm:$0xff]
    %v1457 = vld [vmem:[%s3 + $0x310] sm:$0xff]
    %v1458 = vld [vmem:[%s3 + $0x318] sm:$0xff]
    %v1459 = vld [vmem:[%s3 + $0x320] sm:$0xff]
    %v1460 = vld [vmem:[%s3 + $0x328] sm:$0xff]
    %v1461 = vld [vmem:[%s3 + $0x330] sm:$0xff]
    %v1462 = vld [vmem:[%s3 + $0x338] sm:$0xff]
    %v1463 = vld [vmem:[%s3 + $0x340] sm:$0xff]
    %v1464 = vld [vmem:[%s3 + $0x348] sm:$0xff]
    %v1465 = vld [vmem:[%s3 + $0x350] sm:$0xff]
    %v1466 = vld [vmem:[%s3 + $0x358] sm:$0xff]
    %v1467 = vld [vmem:[%s3 + $0x360] sm:$0xff]
    %v1468 = vld [vmem:[%s3 + $0x368] sm:$0xff]
    %v1469 = vld [vmem:[%s3 + $0x370] sm:$0xff]
    %v1470 = vld [vmem:[%s3 + $0x378] sm:$0xff]
    %v1471 = vld [vmem:[%s3 + $0x380] sm:$0xff]
    %v1472 = vld [vmem:[%s3 + $0x388] sm:$0xff]
    %v1473 = vld [vmem:[%s3 + $0x390] sm:$0xff]
    %v1474 = vld [vmem:[%s3 + $0x398] sm:$0xff]
    %v1475 = vld [vmem:[%s3 + $0x3a0] sm:$0xff]
    %v1476 = vld [vmem:[%s3 + $0x3a8] sm:$0xff]
    %v1477 = vld [vmem:[%s3 + $0x3b0] sm:$0xff]
    %v1478 = vld [vmem:[%s3 + $0x3b8] sm:$0xff]
    %v1479 = vld [vmem:[%s3 + $0x3c0] sm:$0xff]
    %v1480 = vld [vmem:[%s3 + $0x3c8] sm:$0xff]
    %v1481 = vld [vmem:[%s3 + $0x3d0] sm:$0xff]
    %v1482 = vld [vmem:[%s3 + $0x3d8] sm:$0xff]
    %v1483 = vld [vmem:[%s3 + $0x3e0] sm:$0xff]
    %v1484 = vld [vmem:[%s3 + $0x3e8] sm:$0xff]
    %v1485 = vld [vmem:[%s3 + $0x3f0] sm:$0xff]
    %v1486 = vld [vmem:[%s3 + $0x3f8] sm:$0xff]
    %v1487 = vld [vmem:[%s4] sm:$0xf]
    %v1489 = vlaneseq
    %v1490 = vshrl.u32 %v1489, 7
    %v1491 = vsub.s32 0, %v1490
    %v1492 = vrot.slane %v1487, %v1491
    %v1493 = vlaneseq
    %v1494 = vshrl.u32 %v1493, 7
    %v1495 = vsub.s32 1, %v1494
    %v1496 = vrot.slane %v1487, %v1495
    %v1497 = vlaneseq
    %v1498 = vshrl.u32 %v1497, 7
    %v1499 = vsub.s32 2, %v1498
    %v1500 = vrot.slane %v1487, %v1499
    %v1501 = vlaneseq
    %v1502 = vshrl.u32 %v1501, 7
    %v1503 = vsub.s32 3, %v1502
    %v1504 = vrot.slane %v1487, %v1503
    %v1637 = vunpack.c.l.b16 %v1359
    %v1638 = vunpack.c.h.b16 %v1359
    %v1639 = vunpack.c.l.b16 %v1360
    %v1640 = vunpack.c.h.b16 %v1360
    %v1641 = vunpack.c.l.b16 %v1361
    %v1642 = vunpack.c.h.b16 %v1361
    %v1643 = vunpack.c.l.b16 %v1362
    %v1644 = vunpack.c.h.b16 %v1362
    %v1645 = vunpack.c.l.b16 %v1363
    %v1646 = vunpack.c.h.b16 %v1363
    %v1647 = vunpack.c.l.b16 %v1364
    %v1648 = vunpack.c.h.b16 %v1364
    %v1649 = vunpack.c.l.b16 %v1365
    %v1650 = vunpack.c.h.b16 %v1365
    %v1651 = vunpack.c.l.b16 %v1366
    %v1652 = vunpack.c.h.b16 %v1366
    %v1653 = vunpack.c.l.b16 %v1367
    %v1654 = vunpack.c.h.b16 %v1367
    %v1655 = vunpack.c.l.b16 %v1368
    %v1656 = vunpack.c.h.b16 %v1368
    %v1657 = vunpack.c.l.b16 %v1369
    %v1658 = vunpack.c.h.b16 %v1369
    %v1659 = vunpack.c.l.b16 %v1370
    %v1660 = vunpack.c.h.b16 %v1370
    %v1661 = vunpack.c.l.b16 %v1371
    %v1662 = vunpack.c.h.b16 %v1371
    %v1663 = vunpack.c.l.b16 %v1372
    %v1664 = vunpack.c.h.b16 %v1372
    %v1665 = vunpack.c.l.b16 %v1373
    %v1666 = vunpack.c.h.b16 %v1373
    %v1667 = vunpack.c.l.b16 %v1374
    %v1668 = vunpack.c.h.b16 %v1374
    %v1669 = vunpack.c.l.b16 %v1375
    %v1670 = vunpack.c.h.b16 %v1375
    %v1671 = vunpack.c.l.b16 %v1376
    %v1672 = vunpack.c.h.b16 %v1376
    %v1673 = vunpack.c.l.b16 %v1377
    %v1674 = vunpack.c.h.b16 %v1377
    %v1675 = vunpack.c.l.b16 %v1378
    %v1676 = vunpack.c.h.b16 %v1378
    %v1677 = vunpack.c.l.b16 %v1379
    %v1678 = vunpack.c.h.b16 %v1379
    %v1679 = vunpack.c.l.b16 %v1380
    %v1680 = vunpack.c.h.b16 %v1380
    %v1681 = vunpack.c.l.b16 %v1381
    %v1682 = vunpack.c.h.b16 %v1381
    %v1683 = vunpack.c.l.b16 %v1382
    %v1684 = vunpack.c.h.b16 %v1382
    %v1685 = vunpack.c.l.b16 %v1383
    %v1686 = vunpack.c.h.b16 %v1383
    %v1687 = vunpack.c.l.b16 %v1384
    %v1688 = vunpack.c.h.b16 %v1384
    %v1689 = vunpack.c.l.b16 %v1385
    %v1690 = vunpack.c.h.b16 %v1385
    %v1691 = vunpack.c.l.b16 %v1386
    %v1692 = vunpack.c.h.b16 %v1386
    %v1693 = vunpack.c.l.b16 %v1387
    %v1694 = vunpack.c.h.b16 %v1387
    %v1695 = vunpack.c.l.b16 %v1388
    %v1696 = vunpack.c.h.b16 %v1388
    %v1697 = vunpack.c.l.b16 %v1389
    %v1698 = vunpack.c.h.b16 %v1389
    %v1699 = vunpack.c.l.b16 %v1390
    %v1700 = vunpack.c.h.b16 %v1390
    %v1701 = vunpack.c.l.b16 %v1391
    %v1702 = vunpack.c.h.b16 %v1391
    %v1703 = vunpack.c.l.b16 %v1392
    %v1704 = vunpack.c.h.b16 %v1392
    %v1705 = vunpack.c.l.b16 %v1393
    %v1706 = vunpack.c.h.b16 %v1393
    %v1707 = vunpack.c.l.b16 %v1394
    %v1708 = vunpack.c.h.b16 %v1394
    %v1709 = vunpack.c.l.b16 %v1395
    %v1710 = vunpack.c.h.b16 %v1395
    %v1711 = vunpack.c.l.b16 %v1396
    %v1712 = vunpack.c.h.b16 %v1396
    %v1713 = vunpack.c.l.b16 %v1397
    %v1714 = vunpack.c.h.b16 %v1397
    %v1715 = vunpack.c.l.b16 %v1398
    %v1716 = vunpack.c.h.b16 %v1398
    %v1717 = vunpack.c.l.b16 %v1399
    %v1718 = vunpack.c.h.b16 %v1399
    %v1719 = vunpack.c.l.b16 %v1400
    %v1720 = vunpack.c.h.b16 %v1400
    %v1721 = vunpack.c.l.b16 %v1401
    %v1722 = vunpack.c.h.b16 %v1401
    %v1723 = vunpack.c.l.b16 %v1402
    %v1724 = vunpack.c.h.b16 %v1402
    %v1725 = vunpack.c.l.b16 %v1403
    %v1726 = vunpack.c.h.b16 %v1403
    %v1727 = vunpack.c.l.b16 %v1404
    %v1728 = vunpack.c.h.b16 %v1404
    %v1729 = vunpack.c.l.b16 %v1405
    %v1730 = vunpack.c.h.b16 %v1405
    %v1731 = vunpack.c.l.b16 %v1406
    %v1732 = vunpack.c.h.b16 %v1406
    %v1733 = vunpack.c.l.b16 %v1407
    %v1734 = vunpack.c.h.b16 %v1407
    %v1735 = vunpack.c.l.b16 %v1408
    %v1736 = vunpack.c.h.b16 %v1408
    %v1737 = vunpack.c.l.b16 %v1409
    %v1738 = vunpack.c.h.b16 %v1409
    %v1739 = vunpack.c.l.b16 %v1410
    %v1740 = vunpack.c.h.b16 %v1410
    %v1741 = vunpack.c.l.b16 %v1411
    %v1742 = vunpack.c.h.b16 %v1411
    %v1743 = vunpack.c.l.b16 %v1412
    %v1744 = vunpack.c.h.b16 %v1412
    %v1745 = vunpack.c.l.b16 %v1413
    %v1746 = vunpack.c.h.b16 %v1413
    %v1747 = vunpack.c.l.b16 %v1414
    %v1748 = vunpack.c.h.b16 %v1414
    %v1749 = vunpack.c.l.b16 %v1415
    %v1750 = vunpack.c.h.b16 %v1415
    %v1751 = vunpack.c.l.b16 %v1416
    %v1752 = vunpack.c.h.b16 %v1416
    %v1753 = vunpack.c.l.b16 %v1417
    %v1754 = vunpack.c.h.b16 %v1417
    %v1755 = vunpack.c.l.b16 %v1418
    %v1756 = vunpack.c.h.b16 %v1418
    %v1757 = vunpack.c.l.b16 %v1419
    %v1758 = vunpack.c.h.b16 %v1419
    %v1759 = vunpack.c.l.b16 %v1420
    %v1760 = vunpack.c.h.b16 %v1420
    %v1761 = vunpack.c.l.b16 %v1421
    %v1762 = vunpack.c.h.b16 %v1421
    %v1763 = vunpack.c.l.b16 %v1422
    %v1764 = vunpack.c.h.b16 %v1422
    %v1765 = vunpack.c.l.b16 %v1423
    %v1766 = vunpack.c.h.b16 %v1423
    %v1767 = vunpack.c.l.b16 %v1424
    %v1768 = vunpack.c.h.b16 %v1424
    %v1769 = vunpack.c.l.b16 %v1425
    %v1770 = vunpack.c.h.b16 %v1425
    %v1771 = vunpack.c.l.b16 %v1426
    %v1772 = vunpack.c.h.b16 %v1426
    %v1773 = vunpack.c.l.b16 %v1427
    %v1774 = vunpack.c.h.b16 %v1427
    %v1775 = vunpack.c.l.b16 %v1428
    %v1776 = vunpack.c.h.b16 %v1428
    %v1777 = vunpack.c.l.b16 %v1429
    %v1778 = vunpack.c.h.b16 %v1429
    %v1779 = vunpack.c.l.b16 %v1430
    %v1780 = vunpack.c.h.b16 %v1430
    %v1781 = vunpack.c.l.b16 %v1431
    %v1782 = vunpack.c.h.b16 %v1431
    %v1783 = vunpack.c.l.b16 %v1432
    %v1784 = vunpack.c.h.b16 %v1432
    %v1785 = vunpack.c.l.b16 %v1433
    %v1786 = vunpack.c.h.b16 %v1433
    %v1787 = vunpack.c.l.b16 %v1434
    %v1788 = vunpack.c.h.b16 %v1434
    %v1789 = vunpack.c.l.b16 %v1435
    %v1790 = vunpack.c.h.b16 %v1435
    %v1791 = vunpack.c.l.b16 %v1436
    %v1792 = vunpack.c.h.b16 %v1436
    %v1793 = vunpack.c.l.b16 %v1437
    %v1794 = vunpack.c.h.b16 %v1437
    %v1795 = vunpack.c.l.b16 %v1438
    %v1796 = vunpack.c.h.b16 %v1438
    %v1797 = vunpack.c.l.b16 %v1439
    %v1798 = vunpack.c.h.b16 %v1439
    %v1799 = vunpack.c.l.b16 %v1440
    %v1800 = vunpack.c.h.b16 %v1440
    %v1801 = vunpack.c.l.b16 %v1441
    %v1802 = vunpack.c.h.b16 %v1441
    %v1803 = vunpack.c.l.b16 %v1442
    %v1804 = vunpack.c.h.b16 %v1442
    %v1805 = vunpack.c.l.b16 %v1443
    %v1806 = vunpack.c.h.b16 %v1443
    %v1807 = vunpack.c.l.b16 %v1444
    %v1808 = vunpack.c.h.b16 %v1444
    %v1809 = vunpack.c.l.b16 %v1445
    %v1810 = vunpack.c.h.b16 %v1445
    %v1811 = vunpack.c.l.b16 %v1446
    %v1812 = vunpack.c.h.b16 %v1446
    %v1813 = vunpack.c.l.b16 %v1447
    %v1814 = vunpack.c.h.b16 %v1447
    %v1815 = vunpack.c.l.b16 %v1448
    %v1816 = vunpack.c.h.b16 %v1448
    %v1817 = vunpack.c.l.b16 %v1449
    %v1818 = vunpack.c.h.b16 %v1449
    %v1819 = vunpack.c.l.b16 %v1450
    %v1820 = vunpack.c.h.b16 %v1450
    %v1821 = vunpack.c.l.b16 %v1451
    %v1822 = vunpack.c.h.b16 %v1451
    %v1823 = vunpack.c.l.b16 %v1452
    %v1824 = vunpack.c.h.b16 %v1452
    %v1825 = vunpack.c.l.b16 %v1453
    %v1826 = vunpack.c.h.b16 %v1453
    %v1827 = vunpack.c.l.b16 %v1454
    %v1828 = vunpack.c.h.b16 %v1454
    %v1829 = vunpack.c.l.b16 %v1455
    %v1830 = vunpack.c.h.b16 %v1455
    %v1831 = vunpack.c.l.b16 %v1456
    %v1832 = vunpack.c.h.b16 %v1456
    %v1833 = vunpack.c.l.b16 %v1457
    %v1834 = vunpack.c.h.b16 %v1457
    %v1835 = vunpack.c.l.b16 %v1458
    %v1836 = vunpack.c.h.b16 %v1458
    %v1837 = vunpack.c.l.b16 %v1459
    %v1838 = vunpack.c.h.b16 %v1459
    %v1839 = vunpack.c.l.b16 %v1460
    %v1840 = vunpack.c.h.b16 %v1460
    %v1841 = vunpack.c.l.b16 %v1461
    %v1842 = vunpack.c.h.b16 %v1461
    %v1843 = vunpack.c.l.b16 %v1462
    %v1844 = vunpack.c.h.b16 %v1462
    %v1845 = vunpack.c.l.b16 %v1463
    %v1846 = vunpack.c.h.b16 %v1463
    %v1847 = vunpack.c.l.b16 %v1464
    %v1848 = vunpack.c.h.b16 %v1464
    %v1849 = vunpack.c.l.b16 %v1465
    %v1850 = vunpack.c.h.b16 %v1465
    %v1851 = vunpack.c.l.b16 %v1466
    %v1852 = vunpack.c.h.b16 %v1466
    %v1853 = vunpack.c.l.b16 %v1467
    %v1854 = vunpack.c.h.b16 %v1467
    %v1855 = vunpack.c.l.b16 %v1468
    %v1856 = vunpack.c.h.b16 %v1468
    %v1857 = vunpack.c.l.b16 %v1469
    %v1858 = vunpack.c.h.b16 %v1469
    %v1859 = vunpack.c.l.b16 %v1470
    %v1860 = vunpack.c.h.b16 %v1470
    %v1861 = vunpack.c.l.b16 %v1471
    %v1862 = vunpack.c.h.b16 %v1471
    %v1863 = vunpack.c.l.b16 %v1472
    %v1864 = vunpack.c.h.b16 %v1472
    %v1865 = vunpack.c.l.b16 %v1473
    %v1866 = vunpack.c.h.b16 %v1473
    %v1867 = vunpack.c.l.b16 %v1474
    %v1868 = vunpack.c.h.b16 %v1474
    %v1869 = vunpack.c.l.b16 %v1475
    %v1870 = vunpack.c.h.b16 %v1475
    %v1871 = vunpack.c.l.b16 %v1476
    %v1872 = vunpack.c.h.b16 %v1476
    %v1873 = vunpack.c.l.b16 %v1477
    %v1874 = vunpack.c.h.b16 %v1477
    %v1875 = vunpack.c.l.b16 %v1478
    %v1876 = vunpack.c.h.b16 %v1478
    %v1877 = vunpack.c.l.b16 %v1479
    %v1878 = vunpack.c.h.b16 %v1479
    %v1879 = vunpack.c.l.b16 %v1480
    %v1880 = vunpack.c.h.b16 %v1480
    %v1881 = vunpack.c.l.b16 %v1481
    %v1882 = vunpack.c.h.b16 %v1481
    %v1883 = vunpack.c.l.b16 %v1482
    %v1884 = vunpack.c.h.b16 %v1482
    %v1885 = vunpack.c.l.b16 %v1483
    %v1886 = vunpack.c.h.b16 %v1483
    %v1887 = vunpack.c.l.b16 %v1484
    %v1888 = vunpack.c.h.b16 %v1484
    %v1889 = vunpack.c.l.b16 %v1485
    %v1890 = vunpack.c.h.b16 %v1485
    %v1891 = vunpack.c.l.b16 %v1486
    %v1892 = vunpack.c.h.b16 %v1486
    %v1893 = vpack.c.b16 %v1641, %v1637
    %v1894 = vpack.c.b16 %v1642, %v1638
    %v1895 = vpack.c.b16 %v1643, %v1639
    %v1896 = vpack.c.b16 %v1644, %v1640
    %v1897 = vpack.c.b16 %v1649, %v1645
    %v1898 = vpack.c.b16 %v1650, %v1646
    %v1899 = vpack.c.b16 %v1651, %v1647
    %v1900 = vpack.c.b16 %v1652, %v1648
    %v1901 = vpack.c.b16 %v1657, %v1653
    %v1902 = vpack.c.b16 %v1658, %v1654
    %v1903 = vpack.c.b16 %v1659, %v1655
    %v1904 = vpack.c.b16 %v1660, %v1656
    %v1905 = vpack.c.b16 %v1665, %v1661
    %v1906 = vpack.c.b16 %v1666, %v1662
    %v1907 = vpack.c.b16 %v1667, %v1663
    %v1908 = vpack.c.b16 %v1668, %v1664
    %v1909 = vpack.c.b16 %v1673, %v1669
    %v1910 = vpack.c.b16 %v1674, %v1670
    %v1911 = vpack.c.b16 %v1675, %v1671
    %v1912 = vpack.c.b16 %v1676, %v1672
    %v1913 = vpack.c.b16 %v1681, %v1677
    %v1914 = vpack.c.b16 %v1682, %v1678
    %v1915 = vpack.c.b16 %v1683, %v1679
    %v1916 = vpack.c.b16 %v1684, %v1680
    %v1917 = vpack.c.b16 %v1689, %v1685
    %v1918 = vpack.c.b16 %v1690, %v1686
    %v1919 = vpack.c.b16 %v1691, %v1687
    %v1920 = vpack.c.b16 %v1692, %v1688
    %v1921 = vpack.c.b16 %v1697, %v1693
    %v1922 = vpack.c.b16 %v1698, %v1694
    %v1923 = vpack.c.b16 %v1699, %v1695
    %v1924 = vpack.c.b16 %v1700, %v1696
    %v1925 = vpack.c.b16 %v1705, %v1701
    %v1926 = vpack.c.b16 %v1706, %v1702
    %v1927 = vpack.c.b16 %v1707, %v1703
    %v1928 = vpack.c.b16 %v1708, %v1704
    %v1929 = vpack.c.b16 %v1713, %v1709
    %v1930 = vpack.c.b16 %v1714, %v1710
    %v1931 = vpack.c.b16 %v1715, %v1711
    %v1932 = vpack.c.b16 %v1716, %v1712
    %v1933 = vpack.c.b16 %v1721, %v1717
    %v1934 = vpack.c.b16 %v1722, %v1718
    %v1935 = vpack.c.b16 %v1723, %v1719
    %v1936 = vpack.c.b16 %v1724, %v1720
    %v1937 = vpack.c.b16 %v1729, %v1725
    %v1938 = vpack.c.b16 %v1730, %v1726
    %v1939 = vpack.c.b16 %v1731, %v1727
    %v1940 = vpack.c.b16 %v1732, %v1728
    %v1941 = vpack.c.b16 %v1737, %v1733
    %v1942 = vpack.c.b16 %v1738, %v1734
    %v1943 = vpack.c.b16 %v1739, %v1735
    %v1944 = vpack.c.b16 %v1740, %v1736
    %v1945 = vpack.c.b16 %v1745, %v1741
    %v1946 = vpack.c.b16 %v1746, %v1742
    %v1947 = vpack.c.b16 %v1747, %v1743
    %v1948 = vpack.c.b16 %v1748, %v1744
    %v1949 = vpack.c.b16 %v1753, %v1749
    %v1950 = vpack.c.b16 %v1754, %v1750
    %v1951 = vpack.c.b16 %v1755, %v1751
    %v1952 = vpack.c.b16 %v1756, %v1752
    %v1953 = vpack.c.b16 %v1761, %v1757
    %v1954 = vpack.c.b16 %v1762, %v1758
    %v1955 = vpack.c.b16 %v1763, %v1759
    %v1956 = vpack.c.b16 %v1764, %v1760
    %v1957 = vpack.c.b16 %v1769, %v1765
    %v1958 = vpack.c.b16 %v1770, %v1766
    %v1959 = vpack.c.b16 %v1771, %v1767
    %v1960 = vpack.c.b16 %v1772, %v1768
    %v1961 = vpack.c.b16 %v1777, %v1773
    %v1962 = vpack.c.b16 %v1778, %v1774
    %v1963 = vpack.c.b16 %v1779, %v1775
    %v1964 = vpack.c.b16 %v1780, %v1776
    %v1965 = vpack.c.b16 %v1785, %v1781
    %v1966 = vpack.c.b16 %v1786, %v1782
    %v1967 = vpack.c.b16 %v1787, %v1783
    %v1968 = vpack.c.b16 %v1788, %v1784
    %v1969 = vpack.c.b16 %v1793, %v1789
    %v1970 = vpack.c.b16 %v1794, %v1790
    %v1971 = vpack.c.b16 %v1795, %v1791
    %v1972 = vpack.c.b16 %v1796, %v1792
    %v1973 = vpack.c.b16 %v1801, %v1797
    %v1974 = vpack.c.b16 %v1802, %v1798
    %v1975 = vpack.c.b16 %v1803, %v1799
    %v1976 = vpack.c.b16 %v1804, %v1800
    %v1977 = vpack.c.b16 %v1809, %v1805
    %v1978 = vpack.c.b16 %v1810, %v1806
    %v1979 = vpack.c.b16 %v1811, %v1807
    %v1980 = vpack.c.b16 %v1812, %v1808
    %v1981 = vpack.c.b16 %v1817, %v1813
    %v1982 = vpack.c.b16 %v1818, %v1814
    %v1983 = vpack.c.b16 %v1819, %v1815
    %v1984 = vpack.c.b16 %v1820, %v1816
    %v1985 = vpack.c.b16 %v1825, %v1821
    %v1986 = vpack.c.b16 %v1826, %v1822
    %v1987 = vpack.c.b16 %v1827, %v1823
    %v1988 = vpack.c.b16 %v1828, %v1824
    %v1989 = vpack.c.b16 %v1833, %v1829
    %v1990 = vpack.c.b16 %v1834, %v1830
    %v1991 = vpack.c.b16 %v1835, %v1831
    %v1992 = vpack.c.b16 %v1836, %v1832
    %v1993 = vpack.c.b16 %v1841, %v1837
    %v1994 = vpack.c.b16 %v1842, %v1838
    %v1995 = vpack.c.b16 %v1843, %v1839
    %v1996 = vpack.c.b16 %v1844, %v1840
    %v1997 = vpack.c.b16 %v1849, %v1845
    %v1998 = vpack.c.b16 %v1850, %v1846
    %v1999 = vpack.c.b16 %v1851, %v1847
    %v2000 = vpack.c.b16 %v1852, %v1848
    %v2001 = vpack.c.b16 %v1857, %v1853
    %v2002 = vpack.c.b16 %v1858, %v1854
    %v2003 = vpack.c.b16 %v1859, %v1855
    %v2004 = vpack.c.b16 %v1860, %v1856
    %v2005 = vpack.c.b16 %v1865, %v1861
    %v2006 = vpack.c.b16 %v1866, %v1862
    %v2007 = vpack.c.b16 %v1867, %v1863
    %v2008 = vpack.c.b16 %v1868, %v1864
    %v2009 = vpack.c.b16 %v1873, %v1869
    %v2010 = vpack.c.b16 %v1874, %v1870
    %v2011 = vpack.c.b16 %v1875, %v1871
    %v2012 = vpack.c.b16 %v1876, %v1872
    %v2013 = vpack.c.b16 %v1881, %v1877
    %v2014 = vpack.c.b16 %v1882, %v1878
    %v2015 = vpack.c.b16 %v1883, %v1879
    %v2016 = vpack.c.b16 %v1884, %v1880
    %v2017 = vpack.c.b16 %v1889, %v1885
    %v2018 = vpack.c.b16 %v1890, %v1886
    %v2019 = vpack.c.b16 %v1891, %v1887
    %v2020 = vpack.c.b16 %v1892, %v1888
    %2149 = vmatprep.subr.bf16.mxu0 %v1894
    %2150 = vmatpush1.bf16.msra.mxu0 %v1893
    %2151 = vmatprep.subr.bf16.mxu0 %v1898
    %2152 = vmatpush1.bf16.msra.mxu0 %v1897
    %2153 = vmatprep.subr.bf16.mxu0 %v1902
    %2154 = vmatpush1.bf16.msra.mxu0 %v1901
    %2155 = vmatprep.subr.bf16.mxu0 %v1906
    %2156 = vmatpush1.bf16.msra.mxu0 %v1905
    %2157 = vmatprep.subr.bf16.mxu0 %v1910
    %2158 = vmatpush1.bf16.msra.mxu0 %v1909
    %2159 = vmatprep.subr.bf16.mxu0 %v1914
    %2160 = vmatpush1.bf16.msra.mxu0 %v1913
    %2161 = vmatprep.subr.bf16.mxu0 %v1918
    %2162 = vmatpush1.bf16.msra.mxu0 %v1917
    %2163 = vmatprep.subr.bf16.mxu0 %v1922
    %2164 = vmatpush1.bf16.msra.mxu0 %v1921
    %2165 = vmatprep.subr.bf16.mxu0 %v1926
    %2166 = vmatpush1.bf16.msra.mxu0 %v1925
    %2167 = vmatprep.subr.bf16.mxu0 %v1930
    %2168 = vmatpush1.bf16.msra.mxu0 %v1929
    %2169 = vmatprep.subr.bf16.mxu0 %v1934
    %2170 = vmatpush1.bf16.msra.mxu0 %v1933
    %2171 = vmatprep.subr.bf16.mxu0 %v1938
    %2172 = vmatpush1.bf16.msra.mxu0 %v1937
    %2173 = vmatprep.subr.bf16.mxu0 %v1942
    %2174 = vmatpush1.bf16.msra.mxu0 %v1941
    %2175 = vmatprep.subr.bf16.mxu0 %v1946
    %2176 = vmatpush1.bf16.msra.mxu0 %v1945
    %2177 = vmatprep.subr.bf16.mxu0 %v1950
    %2178 = vmatpush1.bf16.msra.mxu0 %v1949
    %2179 = vmatprep.subr.bf16.mxu0 %v1954
    %2180 = vmatpush1.bf16.msra.mxu0 %v1953
    %2181 = vmatprep.mubr.bf16.mxu0 %v1356
    %2182 = vmatmul.mubr.bf16.gmra.mrb[0].mxu0 %v1355
    %v2183 = vpop.f32.mrb[0].mxu0
    %v2184 = vadd.f32 %v1492, %v2183
    %v2185 = vpop.f32.mrb[0].mxu0
    %v2186 = vadd.f32 %v1496, %v2185
    %v2187 = vpop.f32.mrb[0].mxu0
    %v2188 = vpop.f32.mrb[0].mxu0
    %2189 = vdwg.mxu0
    %2190 = vmatprep.subr.bf16.mxu0 %v1958
    %2191 = vmatpush1.bf16.msra.mxu0 %v1957
    %2192 = vmatprep.subr.bf16.mxu0 %v1962
    %2193 = vmatpush1.bf16.msra.mxu0 %v1961
    %2194 = vmatprep.subr.bf16.mxu0 %v1966
    %2195 = vmatpush1.bf16.msra.mxu0 %v1965
    %2196 = vmatprep.subr.bf16.mxu0 %v1970
    %2197 = vmatpush1.bf16.msra.mxu0 %v1969
    %2198 = vmatprep.subr.bf16.mxu0 %v1974
    %2199 = vmatpush1.bf16.msra.mxu0 %v1973
    %2200 = vmatprep.subr.bf16.mxu0 %v1978
    %2201 = vmatpush1.bf16.msra.mxu0 %v1977
    %2202 = vmatprep.subr.bf16.mxu0 %v1982
    %2203 = vmatpush1.bf16.msra.mxu0 %v1981
    %2204 = vmatprep.subr.bf16.mxu0 %v1986
    %2205 = vmatpush1.bf16.msra.mxu0 %v1985
    %2206 = vmatprep.subr.bf16.mxu0 %v1990
    %2207 = vmatpush1.bf16.msra.mxu0 %v1989
    %2208 = vmatprep.subr.bf16.mxu0 %v1994
    %2209 = vmatpush1.bf16.msra.mxu0 %v1993
    %2210 = vmatprep.subr.bf16.mxu0 %v1998
    %2211 = vmatpush1.bf16.msra.mxu0 %v1997
    %2212 = vmatprep.subr.bf16.mxu0 %v2002
    %2213 = vmatpush1.bf16.msra.mxu0 %v2001
    %2214 = vmatprep.subr.bf16.mxu0 %v2006
    %2215 = vmatpush1.bf16.msra.mxu0 %v2005
    %2216 = vmatprep.subr.bf16.mxu0 %v2010
    %2217 = vmatpush1.bf16.msra.mxu0 %v2009
    %2218 = vmatprep.subr.bf16.mxu0 %v2014
    %2219 = vmatpush1.bf16.msra.mxu0 %v2013
    %2220 = vmatprep.subr.bf16.mxu0 %v2018
    %2221 = vmatpush1.bf16.msra.mxu0 %v2017
    %2222 = vmatprep.mubr.bf16.mxu0 %v1358
    %2223 = vmatmul.mubr.bf16.gmra.mrb[0].mxu0 %v1357
    %v2224 = vpop.f32.mrb[0].mxu0
    %v2225 = vadd.f32 %v2184, %v2224
    %v2226 = vpop.f32.mrb[0].mxu0
    %v2227 = vadd.f32 %v2186, %v2226
    %v2228 = vpop.f32.mrb[0].mxu0
    %v2229 = vpop.f32.mrb[0].mxu0
    %2230 = vdwg.mxu0
    %2231 = vmatprep.subr.bf16.mxu0 %v1896
    %2232 = vmatpush1.bf16.msra.mxu0 %v1895
    %2233 = vmatprep.subr.bf16.mxu0 %v1900
    %2234 = vmatpush1.bf16.msra.mxu0 %v1899
    %2235 = vmatprep.subr.bf16.mxu0 %v1904
    %2236 = vmatpush1.bf16.msra.mxu0 %v1903
    %2237 = vmatprep.subr.bf16.mxu0 %v1908
    %2238 = vmatpush1.bf16.msra.mxu0 %v1907
    %2239 = vmatprep.subr.bf16.mxu0 %v1912
    %2240 = vmatpush1.bf16.msra.mxu0 %v1911
    %2241 = vmatprep.subr.bf16.mxu0 %v1916
    %2242 = vmatpush1.bf16.msra.mxu0 %v1915
    %2243 = vmatprep.subr.bf16.mxu0 %v1920
    %2244 = vmatpush1.bf16.msra.mxu0 %v1919
    %2245 = vmatprep.subr.bf16.mxu0 %v1924
    %2246 = vmatpush1.bf16.msra.mxu0 %v1923
    %2247 = vmatprep.subr.bf16.mxu0 %v1928
    %2248 = vmatpush1.bf16.msra.mxu0 %v1927
    %2249 = vmatprep.subr.bf16.mxu0 %v1932
    %2250 = vmatpush1.bf16.msra.mxu0 %v1931
    %2251 = vmatprep.subr.bf16.mxu0 %v1936
    %2252 = vmatpush1.bf16.msra.mxu0 %v1935
    %2253 = vmatprep.subr.bf16.mxu0 %v1940
    %2254 = vmatpush1.bf16.msra.mxu0 %v1939
    %2255 = vmatprep.subr.bf16.mxu0 %v1944
    %2256 = vmatpush1.bf16.msra.mxu0 %v1943
    %2257 = vmatprep.subr.bf16.mxu0 %v1948
    %2258 = vmatpush1.bf16.msra.mxu0 %v1947
    %2259 = vmatprep.subr.bf16.mxu0 %v1952
    %2260 = vmatpush1.bf16.msra.mxu0 %v1951
    %2261 = vmatprep.subr.bf16.mxu0 %v1956
    %2262 = vmatpush1.bf16.msra.mxu0 %v1955
    %2263 = vmatprep.mubr.bf16.mxu0 %v1356
    %2264 = vmatmul.mubr.bf16.gmra.mrb[0].mxu0 %v1355
    %v2265 = vpop.f32.mrb[0].mxu0
    %v2266 = vadd.f32 %v1500, %v2265
    %v2267 = vpop.f32.mrb[0].mxu0
    %v2268 = vadd.f32 %v1504, %v2267
    %v2269 = vpop.f32.mrb[0].mxu0
    %v2270 = vpop.f32.mrb[0].mxu0
    %2271 = vdwg.mxu0
    %2272 = vmatprep.subr.bf16.mxu0 %v1960
    %2273 = vmatpush1.bf16.msra.mxu0 %v1959
    %2274 = vmatprep.subr.bf16.mxu0 %v1964
    %2275 = vmatpush1.bf16.msra.mxu0 %v1963
    %2276 = vmatprep.subr.bf16.mxu0 %v1968
    %2277 = vmatpush1.bf16.msra.mxu0 %v1967
    %2278 = vmatprep.subr.bf16.mxu0 %v1972
    %2279 = vmatpush1.bf16.msra.mxu0 %v1971
    %2280 = vmatprep.subr.bf16.mxu0 %v1976
    %2281 = vmatpush1.bf16.msra.mxu0 %v1975
    %2282 = vmatprep.subr.bf16.mxu0 %v1980
    %2283 = vmatpush1.bf16.msra.mxu0 %v1979
    %2284 = vmatprep.subr.bf16.mxu0 %v1984
    %2285 = vmatpush1.bf16.msra.mxu0 %v1983
    %2286 = vmatprep.subr.bf16.mxu0 %v1988
    %2287 = vmatpush1.bf16.msra.mxu0 %v1987
    %2288 = vmatprep.subr.bf16.mxu0 %v1992
    %2289 = vmatpush1.bf16.msra.mxu0 %v1991
    %2290 = vmatprep.subr.bf16.mxu0 %v1996
    %2291 = vmatpush1.bf16.msra.mxu0 %v1995
    %2292 = vmatprep.subr.bf16.mxu0 %v2000
    %2293 = vmatpush1.bf16.msra.mxu0 %v1999
    %2294 = vmatprep.subr.bf16.mxu0 %v2004
    %2295 = vmatpush1.bf16.msra.mxu0 %v2003
    %2296 = vmatprep.subr.bf16.mxu0 %v2008
    %2297 = vmatpush1.bf16.msra.mxu0 %v2007
    %2298 = vmatprep.subr.bf16.mxu0 %v2012
    %2299 = vmatpush1.bf16.msra.mxu0 %v2011
    %2300 = vmatprep.subr.bf16.mxu0 %v2016
    %2301 = vmatpush1.bf16.msra.mxu0 %v2015
    %2302 = vmatprep.subr.bf16.mxu0 %v2020
    %2303 = vmatpush1.bf16.msra.mxu0 %v2019
    %2304 = vmatprep.mubr.bf16.mxu0 %v1358
    %2305 = vmatmul.mubr.bf16.gmra.mrb[0].mxu0 %v1357
    %v2306 = vpop.f32.mrb[0].mxu0
    %v2307 = vadd.f32 %v2266, %v2306
    %v2308 = vpop.f32.mrb[0].mxu0
    %v2309 = vadd.f32 %v2268, %v2308
    %v2310 = vpop.f32.mrb[0].mxu0
    %v2311 = vpop.f32.mrb[0].mxu0
    %2312 = vdwg.mxu0
    %v2313 = vmax.f32 %v2225, 0.0
    %v2314 = vmax.f32 %v2227, 0.0
    %v2315 = vmax.f32 %v2307, 0.0
    %v2316 = vmax.f32 %v2309, 0.0
    %v2317 = vpack.c.bf16 %v2313, %v2313
    %v2318 = vpack.c.bf16 %v2314, %v2314
    %v2319 = vpack.c.bf16 %v2315, %v2315
    %v2320 = vpack.c.bf16 %v2316, %v2316
    %v2321 = vld [vmem:[%s5] sm:$0xf]
    %v2322 = vld [vmem:[%s5 + $0x4] sm:$0xf]
    %v2323 = vld [vmem:[%s5 + $0x8] sm:$0xf]
    %v2324 = vld [vmem:[%s5 + $0xc] sm:$0xf]
    %v2325 = vld [vmem:[%s5 + $0x10] sm:$0xf]
    %v2326 = vld [vmem:[%s5 + $0x14] sm:$0xf]
    %v2327 = vld [vmem:[%s5 + $0x18] sm:$0xf]
    %v2328 = vld [vmem:[%s5 + $0x1c] sm:$0xf]
    %v2329 = vld [vmem:[%s5 + $0x20] sm:$0xf]
    %v2330 = vld [vmem:[%s5 + $0x24] sm:$0xf]
    %v2331 = vld [vmem:[%s5 + $0x28] sm:$0xf]
    %v2332 = vld [vmem:[%s5 + $0x2c] sm:$0xf]
    %v2333 = vld [vmem:[%s5 + $0x30] sm:$0xf]
    %v2334 = vld [vmem:[%s5 + $0x34] sm:$0xf]
    %v2335 = vld [vmem:[%s5 + $0x38] sm:$0xf]
    %v2336 = vld [vmem:[%s5 + $0x3c] sm:$0xf]
    %v2337 = vld [vmem:[%s5 + $0x40] sm:$0xf]
    %v2338 = vld [vmem:[%s5 + $0x44] sm:$0xf]
    %v2339 = vld [vmem:[%s5 + $0x48] sm:$0xf]
    %v2340 = vld [vmem:[%s5 + $0x4c] sm:$0xf]
    %v2341 = vld [vmem:[%s5 + $0x50] sm:$0xf]
    %v2342 = vld [vmem:[%s5 + $0x54] sm:$0xf]
    %v2343 = vld [vmem:[%s5 + $0x58] sm:$0xf]
    %v2344 = vld [vmem:[%s5 + $0x5c] sm:$0xf]
    %v2345 = vld [vmem:[%s5 + $0x60] sm:$0xf]
    %v2346 = vld [vmem:[%s5 + $0x64] sm:$0xf]
    %v2347 = vld [vmem:[%s5 + $0x68] sm:$0xf]
    %v2348 = vld [vmem:[%s5 + $0x6c] sm:$0xf]
    %v2349 = vld [vmem:[%s5 + $0x70] sm:$0xf]
    %v2350 = vld [vmem:[%s5 + $0x74] sm:$0xf]
    %v2351 = vld [vmem:[%s5 + $0x78] sm:$0xf]
    %v2352 = vld [vmem:[%s5 + $0x7c] sm:$0xf]
    %v2353 = vld [vmem:[%s5 + $0x80] sm:$0xf]
    %v2354 = vld [vmem:[%s5 + $0x84] sm:$0xf]
    %v2355 = vld [vmem:[%s5 + $0x88] sm:$0xf]
    %v2356 = vld [vmem:[%s5 + $0x8c] sm:$0xf]
    %v2357 = vld [vmem:[%s5 + $0x90] sm:$0xf]
    %v2358 = vld [vmem:[%s5 + $0x94] sm:$0xf]
    %v2359 = vld [vmem:[%s5 + $0x98] sm:$0xf]
    %v2360 = vld [vmem:[%s5 + $0x9c] sm:$0xf]
    %v2361 = vld [vmem:[%s5 + $0xa0] sm:$0xf]
    %v2362 = vld [vmem:[%s5 + $0xa4] sm:$0xf]
    %v2363 = vld [vmem:[%s5 + $0xa8] sm:$0xf]
    %v2364 = vld [vmem:[%s5 + $0xac] sm:$0xf]
    %v2365 = vld [vmem:[%s5 + $0xb0] sm:$0xf]
    %v2366 = vld [vmem:[%s5 + $0xb4] sm:$0xf]
    %v2367 = vld [vmem:[%s5 + $0xb8] sm:$0xf]
    %v2368 = vld [vmem:[%s5 + $0xbc] sm:$0xf]
    %v2369 = vld [vmem:[%s5 + $0xc0] sm:$0xf]
    %v2370 = vld [vmem:[%s5 + $0xc4] sm:$0xf]
    %v2371 = vld [vmem:[%s5 + $0xc8] sm:$0xf]
    %v2372 = vld [vmem:[%s5 + $0xcc] sm:$0xf]
    %v2373 = vld [vmem:[%s5 + $0xd0] sm:$0xf]
    %v2374 = vld [vmem:[%s5 + $0xd4] sm:$0xf]
    %v2375 = vld [vmem:[%s5 + $0xd8] sm:$0xf]
    %v2376 = vld [vmem:[%s5 + $0xdc] sm:$0xf]
    %v2377 = vld [vmem:[%s5 + $0xe0] sm:$0xf]
    %v2378 = vld [vmem:[%s5 + $0xe4] sm:$0xf]
    %v2379 = vld [vmem:[%s5 + $0xe8] sm:$0xf]
    %v2380 = vld [vmem:[%s5 + $0xec] sm:$0xf]
    %v2381 = vld [vmem:[%s5 + $0xf0] sm:$0xf]
    %v2382 = vld [vmem:[%s5 + $0xf4] sm:$0xf]
    %v2383 = vld [vmem:[%s5 + $0xf8] sm:$0xf]
    %v2384 = vld [vmem:[%s5 + $0xfc] sm:$0xf]
    %v2385 = vld [vmem:[%s6] sm:$0x1]
    %v2387 = vlaneseq
    %v2388 = vshrl.u32 %v2387, 7
    %v2389 = vsub.s32 0, %v2388
    %v2390 = vrot.slane %v2385, %v2389
    %v2456 = vunpack.c.l.b16 %v2321
    %v2457 = vunpack.c.l.b16 %v2322
    %v2458 = vunpack.c.l.b16 %v2323
    %v2459 = vunpack.c.l.b16 %v2324
    %v2460 = vunpack.c.l.b16 %v2325
    %v2461 = vunpack.c.l.b16 %v2326
    %v2462 = vunpack.c.l.b16 %v2327
    %v2463 = vunpack.c.l.b16 %v2328
    %v2464 = vunpack.c.l.b16 %v2329
    %v2465 = vunpack.c.l.b16 %v2330
    %v2466 = vunpack.c.l.b16 %v2331
    %v2467 = vunpack.c.l.b16 %v2332
    %v2468 = vunpack.c.l.b16 %v2333
    %v2469 = vunpack.c.l.b16 %v2334
    %v2470 = vunpack.c.l.b16 %v2335
    %v2471 = vunpack.c.l.b16 %v2336
    %v2472 = vunpack.c.l.b16 %v2337
    %v2473 = vunpack.c.l.b16 %v2338
    %v2474 = vunpack.c.l.b16 %v2339
    %v2475 = vunpack.c.l.b16 %v2340
    %v2476 = vunpack.c.l.b16 %v2341
    %v2477 = vunpack.c.l.b16 %v2342
    %v2478 = vunpack.c.l.b16 %v2343
    %v2479 = vunpack.c.l.b16 %v2344
    %v2480 = vunpack.c.l.b16 %v2345
    %v2481 = vunpack.c.l.b16 %v2346
    %v2482 = vunpack.c.l.b16 %v2347
    %v2483 = vunpack.c.l.b16 %v2348
    %v2484 = vunpack.c.l.b16 %v2349
    %v2485 = vunpack.c.l.b16 %v2350
    %v2486 = vunpack.c.l.b16 %v2351
    %v2487 = vunpack.c.l.b16 %v2352
    %v2488 = vunpack.c.l.b16 %v2353
    %v2489 = vunpack.c.l.b16 %v2354
    %v2490 = vunpack.c.l.b16 %v2355
    %v2491 = vunpack.c.l.b16 %v2356
    %v2492 = vunpack.c.l.b16 %v2357
    %v2493 = vunpack.c.l.b16 %v2358
    %v2494 = vunpack.c.l.b16 %v2359
    %v2495 = vunpack.c.l.b16 %v2360
    %v2496 = vunpack.c.l.b16 %v2361
    %v2497 = vunpack.c.l.b16 %v2362
    %v2498 = vunpack.c.l.b16 %v2363
    %v2499 = vunpack.c.l.b16 %v2364
    %v2500 = vunpack.c.l.b16 %v2365
    %v2501 = vunpack.c.l.b16 %v2366
    %v2502 = vunpack.c.l.b16 %v2367
    %v2503 = vunpack.c.l.b16 %v2368
    %v2504 = vunpack.c.l.b16 %v2369
    %v2505 = vunpack.c.l.b16 %v2370
    %v2506 = vunpack.c.l.b16 %v2371
    %v2507 = vunpack.c.l.b16 %v2372
    %v2508 = vunpack.c.l.b16 %v2373
    %v2509 = vunpack.c.l.b16 %v2374
    %v2510 = vunpack.c.l.b16 %v2375
    %v2511 = vunpack.c.l.b16 %v2376
    %v2512 = vunpack.c.l.b16 %v2377
    %v2513 = vunpack.c.l.b16 %v2378
    %v2514 = vunpack.c.l.b16 %v2379
    %v2515 = vunpack.c.l.b16 %v2380
    %v2516 = vunpack.c.l.b16 %v2381
    %v2517 = vunpack.c.l.b16 %v2382
    %v2518 = vunpack.c.l.b16 %v2383
    %v2519 = vunpack.c.l.b16 %v2384
    %v2520 = vpack.c.b16 %v2457, %v2456
    %v2521 = vpack.c.b16 %v2459, %v2458
    %v2522 = vpack.c.b16 %v2461, %v2460
    %v2523 = vpack.c.b16 %v2463, %v2462
    %v2524 = vpack.c.b16 %v2465, %v2464
    %v2525 = vpack.c.b16 %v2467, %v2466
    %v2526 = vpack.c.b16 %v2469, %v2468
    %v2527 = vpack.c.b16 %v2471, %v2470
    %v2528 = vpack.c.b16 %v2473, %v2472
    %v2529 = vpack.c.b16 %v2475, %v2474
    %v2530 = vpack.c.b16 %v2477, %v2476
    %v2531 = vpack.c.b16 %v2479, %v2478
    %v2532 = vpack.c.b16 %v2481, %v2480
    %v2533 = vpack.c.b16 %v2483, %v2482
    %v2534 = vpack.c.b16 %v2485, %v2484
    %v2535 = vpack.c.b16 %v2487, %v2486
    %v2536 = vpack.c.b16 %v2489, %v2488
    %v2537 = vpack.c.b16 %v2491, %v2490
    %v2538 = vpack.c.b16 %v2493, %v2492
    %v2539 = vpack.c.b16 %v2495, %v2494
    %v2540 = vpack.c.b16 %v2497, %v2496
    %v2541 = vpack.c.b16 %v2499, %v2498
    %v2542 = vpack.c.b16 %v2501, %v2500
    %v2543 = vpack.c.b16 %v2503, %v2502
    %v2544 = vpack.c.b16 %v2505, %v2504
    %v2545 = vpack.c.b16 %v2507, %v2506
    %v2546 = vpack.c.b16 %v2509, %v2508
    %v2547 = vpack.c.b16 %v2511, %v2510
    %v2548 = vpack.c.b16 %v2513, %v2512
    %v2549 = vpack.c.b16 %v2515, %v2514
    %v2550 = vpack.c.b16 %v2517, %v2516
    %v2551 = vpack.c.b16 %v2519, %v2518
    %2584 = vmatprep.subr.bf16.mxu0 0
    %2585 = vmatpush1.bf16.msra.mxu0 %v2520
    %2586 = vmatprep.subr.bf16.mxu0 0
    %2587 = vmatpush1.bf16.msra.mxu0 %v2521
    %2588 = vmatprep.subr.bf16.mxu0 0
    %2589 = vmatpush1.bf16.msra.mxu0 %v2522
    %2590 = vmatprep.subr.bf16.mxu0 0
    %2591 = vmatpush1.bf16.msra.mxu0 %v2523
    %2592 = vmatprep.subr.bf16.mxu0 0
    %2593 = vmatpush1.bf16.msra.mxu0 %v2524
    %2594 = vmatprep.subr.bf16.mxu0 0
    %2595 = vmatpush1.bf16.msra.mxu0 %v2525
    %2596 = vmatprep.subr.bf16.mxu0 0
    %2597 = vmatpush1.bf16.msra.mxu0 %v2526
    %2598 = vmatprep.subr.bf16.mxu0 0
    %2599 = vmatpush1.bf16.msra.mxu0 %v2527
    %2600 = vmatprep.subr.bf16.mxu0 0
    %2601 = vmatpush1.bf16.msra.mxu0 %v2528
    %2602 = vmatprep.subr.bf16.mxu0 0
    %2603 = vmatpush1.bf16.msra.mxu0 %v2529
    %2604 = vmatprep.subr.bf16.mxu0 0
    %2605 = vmatpush1.bf16.msra.mxu0 %v2530
    %2606 = vmatprep.subr.bf16.mxu0 0
    %2607 = vmatpush1.bf16.msra.mxu0 %v2531
    %2608 = vmatprep.subr.bf16.mxu0 0
    %2609 = vmatpush1.bf16.msra.mxu0 %v2532
    %2610 = vmatprep.subr.bf16.mxu0 0
    %2611 = vmatpush1.bf16.msra.mxu0 %v2533
    %2612 = vmatprep.subr.bf16.mxu0 0
    %2613 = vmatpush1.bf16.msra.mxu0 %v2534
    %2614 = vmatprep.subr.bf16.mxu0 0
    %2615 = vmatpush1.bf16.msra.mxu0 %v2535
    %2616 = vmatprep.mubr.bf16.mxu0 %v2318
    %2617 = vmatmul.mubr.bf16.gmra.mrb[0].mxu0 %v2317
    %v2618 = vpop.f32.mrb[0].mxu0
    %v2619 = vadd.f32 %v2390, %v2618
    %v2620 = vpop.f32.mrb[0].mxu0
    %v2621 = vpop.f32.mrb[0].mxu0
    %v2622 = vpop.f32.mrb[0].mxu0
    %2623 = vdwg.mxu0
    %2624 = vmatprep.subr.bf16.mxu0 0
    %2625 = vmatpush1.bf16.msra.mxu0 %v2536
    %2626 = vmatprep.subr.bf16.mxu0 0
    %2627 = vmatpush1.bf16.msra.mxu0 %v2537
    %2628 = vmatprep.subr.bf16.mxu0 0
    %2629 = vmatpush1.bf16.msra.mxu0 %v2538
    %2630 = vmatprep.subr.bf16.mxu0 0
    %2631 = vmatpush1.bf16.msra.mxu0 %v2539
    %2632 = vmatprep.subr.bf16.mxu0 0
    %2633 = vmatpush1.bf16.msra.mxu0 %v2540
    %2634 = vmatprep.subr.bf16.mxu0 0
    %2635 = vmatpush1.bf16.msra.mxu0 %v2541
    %2636 = vmatprep.subr.bf16.mxu0 0
    %2637 = vmatpush1.bf16.msra.mxu0 %v2542
    %2638 = vmatprep.subr.bf16.mxu0 0
    %2639 = vmatpush1.bf16.msra.mxu0 %v2543
    %2640 = vmatprep.subr.bf16.mxu0 0
    %2641 = vmatpush1.bf16.msra.mxu0 %v2544
    %2642 = vmatprep.subr.bf16.mxu0 0
    %2643 = vmatpush1.bf16.msra.mxu0 %v2545
    %2644 = vmatprep.subr.bf16.mxu0 0
    %2645 = vmatpush1.bf16.msra.mxu0 %v2546
    %2646 = vmatprep.subr.bf16.mxu0 0
    %2647 = vmatpush1.bf16.msra.mxu0 %v2547
    %2648 = vmatprep.subr.bf16.mxu0 0
    %2649 = vmatpush1.bf16.msra.mxu0 %v2548
    %2650 = vmatprep.subr.bf16.mxu0 0
    %2651 = vmatpush1.bf16.msra.mxu0 %v2549
    %2652 = vmatprep.subr.bf16.mxu0 0
    %2653 = vmatpush1.bf16.msra.mxu0 %v2550
    %2654 = vmatprep.subr.bf16.mxu0 0
    %2655 = vmatpush1.bf16.msra.mxu0 %v2551
    %2656 = vmatprep.mubr.bf16.mxu0 %v2320
    %2657 = vmatmul.mubr.bf16.gmra.mrb[0].mxu0 %v2319
    %v2658 = vpop.f32.mrb[0].mxu0
    %v2659 = vadd.f32 %v2619, %v2658
    %v2660 = vpop.f32.mrb[0].mxu0
    %v2661 = vpop.f32.mrb[0].mxu0
    %v2662 = vpop.f32.mrb[0].mxu0
    %2663 = vdwg.mxu0
    %vm2664 = vcmask 9216
    %v2665 = vsel %vm2664, %v2659, -inf
    %2666 = vmax.xlane.f32.xlu0 %v2665
    %v2667 = vpop.xlane.xlu0 %2666
    %v2668 = vsub.f32 %v2659, %v2667
    %v2669 = vmul.f32 %v2668, 1.442695
    %v2670 = vpow.pop %v2669
    %v2671 = vsel %vm2664, %v2670, 0.0
    %2672 = vadd.xlane.f32.xlu0 %v2671
    %v2673 = vpop.xlane.xlu0 %2672
    %v2674 = vrcp.pop %v2673
    %v2675 = vmul.f32 %v2670, %v2674
    %2676 = vst.msk [vmem:[#allocation2] sm:$0x3] %vm2664, %v2675
    // Predicated region
    $region30: #{net_forward.5} parent=1 // pred_check
      _
    $region31: #{net_forward.5} parent=1 // pred_check_branch
      %2678 = sbr.rel (0) target = $region33
    $region32: #{net_forward.5} parent=1 // pred_region
      %s2680 = ssub.s32 32, 32
      %2681 = vsyncadd [#allocation3], %s2680
      %s2683 = sshll.u32 [#allocation2], 4
      %s2684 = int_to_ptr.vmem [resolvable:$true] %s2683
      %2686 = dma.vmem_to_hbm [thread:$0]  %s2684, 32, %s7, [#allocation3]
    $region33: #{net_forward.5} parent=1 // pred_fallthru
      _
    // Predicated region
    $region34: #{net_forward.5} parent=1 // pred_check
      _
    $region35: #{net_forward.5} parent=1 // pred_check_branch
      %2688 = sbr.rel (0) target = $region37
    $region36: #{net_forward.5} parent=1 // pred_region
      %2689 = dma.done [#allocation3], 32
    $region37: #{net_forward.5} parent=1 // pred_fallthru
      _
    %2690 = vsyncpa [#allocation3], 1

</llo_original>
